<compile_context>
chip_gen: v7x
topology: tpu7x:2x2x1
jax: 0.10.0
libtpu: 0.0.40
codegen_flags: <defaults>
</compile_context>

<pallas_src>
import functools

import jax
import jax.numpy as jnp
from jax.experimental import pallas as pl
from jax.experimental.pallas import tpu as pltpu


# ---------------------------- static geometry ------------------------------
# fc1 expects 64*12*12 = 9216 features, which pins the input to 1x28x28.
H_IN = 28
A1 = H_IN - 2           # 26  conv1 output height/width
OH2 = A1 - 2            # 24  conv2 output height/width
PH = OH2 // 2           # 12  pooled height/width
C1, C2 = 32, 64
NV = 4                  # conv1 column-offset variants (w0 = 0..3)
TAPS = 9
RS = 16                 # padded pooled-column stride (q = 0..11 valid, 12..15 pad)
Y1_ROWS = A1 * RS       # 416  rows of the conv1 result (row = a*16 + q)
NROW2 = OH2 * RS        # 384  conv2 rows per parity (row = i*16 + q)
K1 = NV * TAPS          # 36   conv1 contraction size (block-diagonal weight)
LANES1 = NV * C1        # 128  conv1 result lanes (4 variants x 32 channels)
FEAT = PH * PH * C2     # 9216


# ----------------------------- Pallas kernels ------------------------------

def _backbone_kernel(p1_ref, w1_ref, b1_ref, w2e_ref, w2o_ref, b2_ref,
                     out_ref, y1_s, eh_s):
    """conv1 + ReLU + conv2 + bias + ReLU + 2x2 max-pool for one image."""
    # ---- conv1 + bias + ReLU: one K=36 matmul for all 4 column offsets ----
    # (block-diagonal weight) -> lane-dense (416, 128) result, single store.
    a1 = jnp.dot(p1_ref[0], w1_ref[...], preferred_element_type=jnp.float32)
    y1_s[...] = jnp.maximum(a1 + b1_ref[...], 0.0).astype(y1_s.dtype)

    # ---- conv2: per output-column parity, 3 accumulating K=128 matmuls -----
    # (one per kernel row di); accumulation stays in vregs (no VMEM RMW).
    def conv2_parity(w_ref):
        acc = jnp.dot(y1_s[0:NROW2, :], w_ref[0],
                      preferred_element_type=jnp.float32)
        acc = acc + jnp.dot(y1_s[RS:RS + NROW2, :], w_ref[1],
                            preferred_element_type=jnp.float32)
        acc = acc + jnp.dot(y1_s[2 * RS:2 * RS + NROW2, :], w_ref[2],
                            preferred_element_type=jnp.float32)
        return acc                                    # (384, 64) f32

    # Even output columns: pool vertically right away and park in a small
    # scratch so only one (384, 64) accumulator is ever live in vregs.
    e = conv2_parity(w2e_ref)
    for p in range(PH):
        r = 2 * p * RS
        eh_s[p * RS:(p + 1) * RS, :] = jnp.maximum(
            e[r:r + RS, :], e[r + RS:r + 2 * RS, :])

    # Odd output columns + final 2x2 max-pool + bias + ReLU (all slices start
    # on multiples of 8 sublanes thanks to the 16-row stride).
    o = conv2_parity(w2o_ref)
    b2 = b2_ref[...]
    for p in range(PH):
        r = 2 * p * RS
        m = jnp.maximum(
            jnp.maximum(o[r:r + RS, :], o[r + RS:r + 2 * RS, :]),
            eh_s[p * RS:(p + 1) * RS, :])
        out_ref[0, p, :, :] = jnp.maximum(m[0:PH, :] + b2,
                                          0.0).astype(out_ref.dtype)


def _head_kernel(f_ref, w1_ref, b1_ref, w2_ref, b2_ref, prob_ref, x1_ref):
    """fc1 + tanh + fc2 + softmax(dim=1) for one batch block."""
    h = jnp.tanh(
        jnp.dot(f_ref[...], w1_ref[...], preferred_element_type=jnp.float32)
        + b1_ref[...])
    x1_ref[...] = h
    logits = (jnp.dot(h.astype(jnp.bfloat16), w2_ref[...],
                      preferred_element_type=jnp.float32) + b2_ref[...])
    m = jnp.max(logits, axis=1, keepdims=True)
    e = jnp.exp(logits - m)
    prob_ref[...] = e / jnp.sum(e, axis=1, keepdims=True)


# ------------------------------- glue (JAX) --------------------------------

def _conv1_patches(x):
    """x: (N, 28, 28) -> (N, 416, 36) conv1 patch rows.

    Row a*16 + q (a = conv1 row, q = pooled column; q = 12..15 zero-padded),
    column 9*w0 + 3*di + dj holds x[a + di, 2q + w0 + dj].
    """
    N = x.shape[0]
    taps = []
    for w0 in range(NV):
        for di in range(3):
            for dj in range(3):
                c0 = w0 + dj
                taps.append(x[:, di:di + A1, c0:c0 + 2 * PH - 1:2])
    p = jnp.stack(taps, axis=-1)                       # (N, 26, 12, 36)
    p = jnp.pad(p, ((0, 0), (0, 0), (0, RS - PH), (0, 0)))
    return p.reshape(N, Y1_ROWS, K1)                   # (N, 416, 36)


def _prep_params(params):
    """One-time weight re-layouts (constant-folded under jit)."""
    # conv1: block-diagonal (36, 128); lane block w0 = conv1 channels for
    # output column offset w0.
    w1col = jnp.transpose(params["conv1_w"], (2, 3, 1, 0)).reshape(TAPS, C1)
    w1big = jnp.zeros((K1, LANES1), jnp.float32)
    for w0 in range(NV):
        w1big = w1big.at[TAPS * w0:TAPS * (w0 + 1),
                         C1 * w0:C1 * (w0 + 1)].set(w1col)
    b1big = jnp.tile(params["conv1_b"].reshape(1, C1), (1, NV))

    # conv2: per (parity, kernel row di) a (128, 64) weight whose 32-lane
    # block selects the matching conv1 column-offset variant.
    w2t = jnp.transpose(params["conv2_w"], (2, 3, 1, 0))   # (3, 3, 32, 64)
    w2e = jnp.zeros((3, LANES1, C2), jnp.float32)
    w2o = jnp.zeros((3, LANES1, C2), jnp.float32)
    for di in range(3):
        for dj in range(3):
            w2e = w2e.at[di, C1 * dj:C1 * (dj + 1), :].set(w2t[di, dj])
            w2o = w2o.at[di, C1 * (dj + 1):C1 * (dj + 2), :].set(w2t[di, dj])

    # Permute fc1 columns from torch's (c, h, w) flatten order to the
    # backbone's (h, w, c) feature order -> no runtime activation transpose.
    fc1 = params["fc1_w"].reshape(128, C2, PH, PH)
    fc1 = jnp.transpose(fc1, (2, 3, 1, 0)).reshape(FEAT, 128)

    return dict(
        w1=w1big.astype(jnp.bfloat16),
        b1=b1big.astype(jnp.float32),
        w2e=w2e.astype(jnp.bfloat16),
        w2o=w2o.astype(jnp.bfloat16),
        b2=params["conv2_b"].reshape(1, C2).astype(jnp.float32),
        fc1_w=fc1.astype(jnp.bfloat16),
        fc1_b=params["fc1_b"].reshape(1, 128).astype(jnp.float32),
        fc2_w=params["fc2_w"].T.astype(jnp.bfloat16),
        fc2_b=params["fc2_b"].reshape(1, 10).astype(jnp.float32),
    )


def generator_forward(params, x_nchw):
    N = x_nchw.shape[0]
    pp = _prep_params(params)
    x = x_nchw[:, 0, :, :].astype(jnp.float32)          # (N, 28, 28)
    p1 = _conv1_patches(x).astype(jnp.bfloat16)         # (N, 416, 36)

    # ---- fused conv1 + conv2 + max-pool, one image per grid step -----------
    feat = pl.pallas_call(
        _backbone_kernel,
        out_shape=jax.ShapeDtypeStruct((N, PH, PH, C2), jnp.bfloat16),
        grid=(N,),
        in_specs=[
            pl.BlockSpec((1, Y1_ROWS, K1), lambda n: (n, 0, 0)),
            pl.BlockSpec((K1, LANES1), lambda n: (0, 0)),
            pl.BlockSpec((1, LANES1), lambda n: (0, 0)),
            pl.BlockSpec((3, LANES1, C2), lambda n: (0, 0, 0)),
            pl.BlockSpec((3, LANES1, C2), lambda n: (0, 0, 0)),
            pl.BlockSpec((1, C2), lambda n: (0, 0)),
        ],
        out_specs=pl.BlockSpec((1, PH, PH, C2), lambda n: (n, 0, 0, 0)),
        scratch_shapes=[
            pltpu.VMEM((Y1_ROWS, LANES1), jnp.bfloat16),   # conv1 result
            pltpu.VMEM((PH * RS, C2), jnp.float32),        # even-col half-pool
        ],
        compiler_params=pltpu.CompilerParams(
            dimension_semantics=("parallel",),
            vmem_limit_bytes=32 * 1024 * 1024),
    )(p1, pp["w1"], pp["b1"], pp["w2e"], pp["w2o"], pp["b2"])

    # dropout1: identity in eval mode.
    # TODO(synk): training-mode Dropout2d (per-channel mask) not implemented.

    feat_flat = feat.reshape(N, FEAT)     # (h, w, c) order; contiguous reshape

    hb = N if N <= 128 else 128
    out, x1 = pl.pallas_call(
        _head_kernel,
        out_shape=(jax.ShapeDtypeStruct((N, 10), jnp.float32),
                   jax.ShapeDtypeStruct((N, 128), jnp.float32)),
        grid=(pl.cdiv(N, hb),),
        in_specs=[
            pl.BlockSpec((hb, FEAT), lambda i: (i, 0)),
            pl.BlockSpec((FEAT, 128), lambda i: (0, 0)),
            pl.BlockSpec((1, 128), lambda i: (0, 0)),
            pl.BlockSpec((128, 10), lambda i: (0, 0)),
            pl.BlockSpec((1, 10), lambda i: (0, 0)),
        ],
        out_specs=(pl.BlockSpec((hb, 10), lambda i: (i, 0)),
                   pl.BlockSpec((hb, 128), lambda i: (i, 0))),
        compiler_params=pltpu.CompilerParams(
            dimension_semantics=("parallel",),
            vmem_limit_bytes=32 * 1024 * 1024),
    )(feat_flat, pp["fc1_w"], pp["fc1_b"], pp["fc2_w"], pp["fc2_b"])
    return out, x1


# --------------------------- pure-JAX reference ----------------------------

def reference_forward(params, x_nchw):
    hi = jax.lax.Precision.HIGHEST
    y = jax.lax.conv_general_dilated(
        x_nchw, params["conv1_w"], (1, 1), "VALID",
        dimension_numbers=("NCHW", "OIHW", "NCHW"), precision=hi)
    y = jax.nn.relu(y + params["conv1_b"][None, :, None, None])
    y = jax.lax.conv_general_dilated(
        y, params["conv2_w"], (1, 1), "VALID",
        dimension_numbers=("NCHW", "OIHW", "NCHW"), precision=hi)
    y = jax.nn.relu(y + params["conv2_b"][None, :, None, None])
    N, C, H, W = y.shape
    y = y.reshape(N, C, H // 2, 2, W // 2, 2).max(axis=(3, 5))
    flat = y.reshape(N, -1)
    h = jnp.tanh(jnp.dot(flat, params["fc1_w"].T, precision=hi)
                 + params["fc1_b"])
    logits = jnp.dot(h, params["fc2_w"].T, precision=hi) + params["fc2_b"]
    return jax.nn.softmax(logits, axis=1), h


# --------------------------------- main -------------------------------------

if __name__ == "__main__":
    key = jax.random.PRNGKey(0)
    ks = jax.random.split(key, 8)

    # fc1 expects 9216 = 64 * 12 * 12 features => input must be (N, 1, 28, 28)
    params = {
        "conv1_w": 0.2 * jax.random.normal(ks[0], (32, 1, 3, 3), jnp.float32),
        "conv1_b": 0.1 * jax.random.normal(ks[1], (32,), jnp.float32),
        "conv2_w": 0.05 * jax.random.normal(ks[2], (64, 32, 3, 3), jnp.float32),
        "conv2_b": 0.1 * jax.random.normal(ks[3], (64,), jnp.float32),
        "fc1_w": 0.01 * jax.random.normal(ks[4], (128, 9216), jnp.float32),
        "fc1_b": 0.1 * jax.random.normal(ks[5], (128,), jnp.float32),
        "fc2_w": 0.1 * jax.random.normal(ks[6], (10, 128), jnp.float32),
        "fc2_b": jnp.zeros((10,), jnp.float32),
    }
    x = jax.random.normal(ks[7], (2, 1, 28, 28), jnp.float32)

    fwd = jax.jit(functools.partial(generator_forward, params))
    out, x1 = fwd(x)
    jax.block_until_ready((out, x1))

    ref_out, ref_x1 = reference_forward(params, x)
    assert out.shape == (2, 10) and x1.shape == (2, 128)
    assert jnp.allclose(out, ref_out, atol=1e-2, rtol=1e-2)
    assert jnp.allclose(x1, ref_x1, atol=1e-2, rtol=1e-2)

    print("KERNEL_OK")
</pallas_src>

<mosaic_0001>
module attributes {stable_mosaic.version = 11 : i64} {
  func.func @_backbone_kernel(%arg0: i32, %arg1: memref<1x416x36xbf16, #tpu.memory_space<vmem>>, %arg2: memref<36x128xbf16, #tpu.memory_space<vmem>>, %arg3: memref<1x128xf32, #tpu.memory_space<vmem>>, %arg4: memref<3x128x64xbf16, #tpu.memory_space<vmem>>, %arg5: memref<3x128x64xbf16, #tpu.memory_space<vmem>>, %arg6: memref<1x64xf32, #tpu.memory_space<vmem>>, %arg7: memref<1x12x12x64xbf16, #tpu.memory_space<vmem>>, %arg8: memref<416x128xbf16, #tpu.memory_space<vmem>>, %arg9: memref<192x64xf32, #tpu.memory_space<vmem>>) attributes {dimension_semantics = [#tpu.dimension_semantics<parallel>], iteration_bounds = array<i64: 2>, scalar_prefetch = 0 : i64, scratch_operands = 2 : i64, tpu.core_type = #tpu.core_type<tc>, window_params = [{transform_indices = @transform_0, window_bounds = array<i64: 1, 416, 36>}, {pipeline_mode = #tpu.pipeline_mode<synchronous>, transform_indices = @transform_1, window_bounds = array<i64: 36, 128>}, {pipeline_mode = #tpu.pipeline_mode<synchronous>, transform_indices = @transform_2, window_bounds = array<i64: 1, 128>}, {pipeline_mode = #tpu.pipeline_mode<synchronous>, transform_indices = @transform_3, window_bounds = array<i64: 3, 128, 64>}, {pipeline_mode = #tpu.pipeline_mode<synchronous>, transform_indices = @transform_4, window_bounds = array<i64: 3, 128, 64>}, {pipeline_mode = #tpu.pipeline_mode<synchronous>, transform_indices = @transform_5, window_bounds = array<i64: 1, 64>}, {transform_indices = @transform_6, window_bounds = array<i64: 1, 12, 12, 64>}]} {
    %c0 = arith.constant 0 : index
    %c0_0 = arith.constant 0 : index
    %c0_1 = arith.constant 0 : index
    %0 = vector.load %arg1[%c0, %c0_0, %c0_1] : memref<1x416x36xbf16, #tpu.memory_space<vmem>>, vector<1x416x36xbf16>
    %1 = vector.shape_cast %0 : vector<1x416x36xbf16> to vector<416x36xbf16>
    %c0_2 = arith.constant 0 : index
    %c0_3 = arith.constant 0 : index
    %2 = vector.load %arg2[%c0_2, %c0_3] : memref<36x128xbf16, #tpu.memory_space<vmem>>, vector<36x128xbf16>
    %cst = arith.constant dense<0.000000e+00> : vector<416x128xf32>
    %3 = tpu.matmul %1, %2, %cst {dimension_numbers = #tpu.dot_dimension_numbers<[1], [0], [0], [1], [0, 0, 1, 1], [], []>} : vector<416x36xbf16>, vector<36x128xbf16>, vector<416x128xf32> -> vector<416x128xf32>
    %c0_4 = arith.constant 0 : index
    %c0_5 = arith.constant 0 : index
    %4 = vector.load %arg3[%c0_4, %c0_5] : memref<1x128xf32, #tpu.memory_space<vmem>>, vector<1x128xf32>
    %5 = vector.broadcast %4 : vector<1x128xf32> to vector<416x128xf32>
    %6 = arith.addf %3, %5 : vector<416x128xf32>
    %cst_6 = arith.constant 0.000000e+00 : f32
    %7 = vector.broadcast %cst_6 : f32 to vector<416x128xf32>
    %8 = arith.maximumf %6, %7 : vector<416x128xf32>
    %9 = arith.truncf %8 : vector<416x128xf32> to vector<416x128xbf16>
    %c0_7 = arith.constant 0 : index
    %c0_8 = arith.constant 0 : index
    %10 = vector.load %arg8[%c0_7, %c0_8] : memref<416x128xbf16, #tpu.memory_space<vmem>>, vector<416x128xbf16>
    tpu.vector_store %arg8[%c0_7, %c0_8], %9 {strides = array<i32>} : memref<416x128xbf16, #tpu.memory_space<vmem>>, vector<416x128xbf16>,
    %c0_9 = arith.constant 0 : index
    %c0_10 = arith.constant 0 : index
    %11 = vector.load %arg8[%c0_9, %c0_10] : memref<416x128xbf16, #tpu.memory_space<vmem>>, vector<384x128xbf16>
    %c0_11 = arith.constant 0 : index
    %c0_12 = arith.constant 0 : index
    %c0_13 = arith.constant 0 : index
    %12 = vector.load %arg4[%c0_11, %c0_12, %c0_13] : memref<3x128x64xbf16, #tpu.memory_space<vmem>>, vector<1x128x64xbf16>
    %13 = vector.shape_cast %12 : vector<1x128x64xbf16> to vector<128x64xbf16>
    %cst_14 = arith.constant dense<0.000000e+00> : vector<384x64xf32>
    %14 = tpu.matmul %11, %13, %cst_14 {dimension_numbers = #tpu.dot_dimension_numbers<[1], [0], [0], [1], [0, 0, 1, 1], [], []>} : vector<384x128xbf16>, vector<128x64xbf16>, vector<384x64xf32> -> vector<384x64xf32>
    %c16 = arith.constant 16 : index
    %c0_15 = arith.constant 0 : index
    %15 = vector.load %arg8[%c16, %c0_15] : memref<416x128xbf16, #tpu.memory_space<vmem>>, vector<384x128xbf16>
    %c1 = arith.constant 1 : index
    %c0_16 = arith.constant 0 : index
    %c0_17 = arith.constant 0 : index
    %16 = vector.load %arg4[%c1, %c0_16, %c0_17] : memref<3x128x64xbf16, #tpu.memory_space<vmem>>, vector<1x128x64xbf16>
    %17 = vector.shape_cast %16 : vector<1x128x64xbf16> to vector<128x64xbf16>
    %cst_18 = arith.constant dense<0.000000e+00> : vector<384x64xf32>
    %18 = tpu.matmul %15, %17, %cst_18 {dimension_numbers = #tpu.dot_dimension_numbers<[1], [0], [0], [1], [0, 0, 1, 1], [], []>} : vector<384x128xbf16>, vector<128x64xbf16>, vector<384x64xf32> -> vector<384x64xf32>
    %19 = arith.addf %14, %18 : vector<384x64xf32>
    %c32 = arith.constant 32 : index
    %c0_19 = arith.constant 0 : index
    %20 = vector.load %arg8[%c32, %c0_19] : memref<416x128xbf16, #tpu.memory_space<vmem>>, vector<384x128xbf16>
    %c2 = arith.constant 2 : index
    %c0_20 = arith.constant 0 : index
    %c0_21 = arith.constant 0 : index
    %21 = vector.load %arg4[%c2, %c0_20, %c0_21] : memref<3x128x64xbf16, #tpu.memory_space<vmem>>, vector<1x128x64xbf16>
    %22 = vector.shape_cast %21 : vector<1x128x64xbf16> to vector<128x64xbf16>
    %cst_22 = arith.constant dense<0.000000e+00> : vector<384x64xf32>
    %23 = tpu.matmul %20, %22, %cst_22 {dimension_numbers = #tpu.dot_dimension_numbers<[1], [0], [0], [1], [0, 0, 1, 1], [], []>} : vector<384x128xbf16>, vector<128x64xbf16>, vector<384x64xf32> -> vector<384x64xf32>
    %24 = arith.addf %19, %23 : vector<384x64xf32>
    %25 = vector.extract_strided_slice %24 {offsets = [0, 0], sizes = [16, 64], strides = [1, 1]} : vector<384x64xf32> to vector<16x64xf32>
    %26 = vector.extract_strided_slice %24 {offsets = [16, 0], sizes = [16, 64], strides = [1, 1]} : vector<384x64xf32> to vector<16x64xf32>
    %27 = arith.maximumf %25, %26 : vector<16x64xf32>
    %c0_23 = arith.constant 0 : index
    %c0_24 = arith.constant 0 : index
    %28 = vector.load %arg9[%c0_23, %c0_24] : memref<192x64xf32, #tpu.memory_space<vmem>>, vector<16x64xf32>
    tpu.vector_store %arg9[%c0_23, %c0_24], %27 {strides = array<i32>} : memref<192x64xf32, #tpu.memory_space<vmem>>, vector<16x64xf32>,
    %29 = vector.extract_strided_slice %24 {offsets = [32, 0], sizes = [16, 64], strides = [1, 1]} : vector<384x64xf32> to vector<16x64xf32>
    %30 = vector.extract_strided_slice %24 {offsets = [48, 0], sizes = [16, 64], strides = [1, 1]} : vector<384x64xf32> to vector<16x64xf32>
    %31 = arith.maximumf %29, %30 : vector<16x64xf32>
    %c16_25 = arith.constant 16 : index
    %c0_26 = arith.constant 0 : index
    %32 = vector.load %arg9[%c16_25, %c0_26] : memref<192x64xf32, #tpu.memory_space<vmem>>, vector<16x64xf32>
    tpu.vector_store %arg9[%c16_25, %c0_26], %31 {strides = array<i32>} : memref<192x64xf32, #tpu.memory_space<vmem>>, vector<16x64xf32>,
    %33 = vector.extract_strided_slice %24 {offsets = [64, 0], sizes = [16, 64], strides = [1, 1]} : vector<384x64xf32> to vector<16x64xf32>
    %34 = vector.extract_strided_slice %24 {offsets = [80, 0], sizes = [16, 64], strides = [1, 1]} : vector<384x64xf32> to vector<16x64xf32>
    %35 = arith.maximumf %33, %34 : vector<16x64xf32>
    %c32_27 = arith.constant 32 : index
    %c0_28 = arith.constant 0 : index
    %36 = vector.load %arg9[%c32_27, %c0_28] : memref<192x64xf32, #tpu.memory_space<vmem>>, vector<16x64xf32>
    tpu.vector_store %arg9[%c32_27, %c0_28], %35 {strides = array<i32>} : memref<192x64xf32, #tpu.memory_space<vmem>>, vector<16x64xf32>,
    %37 = vector.extract_strided_slice %24 {offsets = [96, 0], sizes = [16, 64], strides = [1, 1]} : vector<384x64xf32> to vector<16x64xf32>
    %38 = vector.extract_strided_slice %24 {offsets = [112, 0], sizes = [16, 64], strides = [1, 1]} : vector<384x64xf32> to vector<16x64xf32>
    %39 = arith.maximumf %37, %38 : vector<16x64xf32>
    %c48 = arith.constant 48 : index
    %c0_29 = arith.constant 0 : index
    %40 = vector.load %arg9[%c48, %c0_29] : memref<192x64xf32, #tpu.memory_space<vmem>>, vector<16x64xf32>
    tpu.vector_store %arg9[%c48, %c0_29], %39 {strides = array<i32>} : memref<192x64xf32, #tpu.memory_space<vmem>>, vector<16x64xf32>,
    %41 = vector.extract_strided_slice %24 {offsets = [128, 0], sizes = [16, 64], strides = [1, 1]} : vector<384x64xf32> to vector<16x64xf32>
    %42 = vector.extract_strided_slice %24 {offsets = [144, 0], sizes = [16, 64], strides = [1, 1]} : vector<384x64xf32> to vector<16x64xf32>
    %43 = arith.maximumf %41, %42 : vector<16x64xf32>
    %c64 = arith.constant 64 : index
    %c0_30 = arith.constant 0 : index
    %44 = vector.load %arg9[%c64, %c0_30] : memref<192x64xf32, #tpu.memory_space<vmem>>, vector<16x64xf32>
    tpu.vector_store %arg9[%c64, %c0_30], %43 {strides = array<i32>} : memref<192x64xf32, #tpu.memory_space<vmem>>, vector<16x64xf32>,
    %45 = vector.extract_strided_slice %24 {offsets = [160, 0], sizes = [16, 64], strides = [1, 1]} : vector<384x64xf32> to vector<16x64xf32>
    %46 = vector.extract_strided_slice %24 {offsets = [176, 0], sizes = [16, 64], strides = [1, 1]} : vector<384x64xf32> to vector<16x64xf32>
    %47 = arith.maximumf %45, %46 : vector<16x64xf32>
    %c80 = arith.constant 80 : index
    %c0_31 = arith.constant 0 : index
    %48 = vector.load %arg9[%c80, %c0_31] : memref<192x64xf32, #tpu.memory_space<vmem>>, vector<16x64xf32>
    tpu.vector_store %arg9[%c80, %c0_31], %47 {strides = array<i32>} : memref<192x64xf32, #tpu.memory_space<vmem>>, vector<16x64xf32>,
    %49 = vector.extract_strided_slice %24 {offsets = [192, 0], sizes = [16, 64], strides = [1, 1]} : vector<384x64xf32> to vector<16x64xf32>
    %50 = vector.extract_strided_slice %24 {offsets = [208, 0], sizes = [16, 64], strides = [1, 1]} : vector<384x64xf32> to vector<16x64xf32>
    %51 = arith.maximumf %49, %50 : vector<16x64xf32>
    %c96 = arith.constant 96 : index
    %c0_32 = arith.constant 0 : index
    %52 = vector.load %arg9[%c96, %c0_32] : memref<192x64xf32, #tpu.memory_space<vmem>>, vector<16x64xf32>
    tpu.vector_store %arg9[%c96, %c0_32], %51 {strides = array<i32>} : memref<192x64xf32, #tpu.memory_space<vmem>>, vector<16x64xf32>,
    %53 = vector.extract_strided_slice %24 {offsets = [224, 0], sizes = [16, 64], strides = [1, 1]} : vector<384x64xf32> to vector<16x64xf32>
    %54 = vector.extract_strided_slice %24 {offsets = [240, 0], sizes = [16, 64], strides = [1, 1]} : vector<384x64xf32> to vector<16x64xf32>
    %55 = arith.maximumf %53, %54 : vector<16x64xf32>
    %c112 = arith.constant 112 : index
    %c0_33 = arith.constant 0 : index
    %56 = vector.load %arg9[%c112, %c0_33] : memref<192x64xf32, #tpu.memory_space<vmem>>, vector<16x64xf32>
    tpu.vector_store %arg9[%c112, %c0_33], %55 {strides = array<i32>} : memref<192x64xf32, #tpu.memory_space<vmem>>, vector<16x64xf32>,
    %57 = vector.extract_strided_slice %24 {offsets = [256, 0], sizes = [16, 64], strides = [1, 1]} : vector<384x64xf32> to vector<16x64xf32>
    %58 = vector.extract_strided_slice %24 {offsets = [272, 0], sizes = [16, 64], strides = [1, 1]} : vector<384x64xf32> to vector<16x64xf32>
    %59 = arith.maximumf %57, %58 : vector<16x64xf32>
    %c128 = arith.constant 128 : index
    %c0_34 = arith.constant 0 : index
    %60 = vector.load %arg9[%c128, %c0_34] : memref<192x64xf32, #tpu.memory_space<vmem>>, vector<16x64xf32>
    tpu.vector_store %arg9[%c128, %c0_34], %59 {strides = array<i32>} : memref<192x64xf32, #tpu.memory_space<vmem>>, vector<16x64xf32>,
    %61 = vector.extract_strided_slice %24 {offsets = [288, 0], sizes = [16, 64], strides = [1, 1]} : vector<384x64xf32> to vector<16x64xf32>
    %62 = vector.extract_strided_slice %24 {offsets = [304, 0], sizes = [16, 64], strides = [1, 1]} : vector<384x64xf32> to vector<16x64xf32>
    %63 = arith.maximumf %61, %62 : vector<16x64xf32>
    %c144 = arith.constant 144 : index
    %c0_35 = arith.constant 0 : index
    %64 = vector.load %arg9[%c144, %c0_35] : memref<192x64xf32, #tpu.memory_space<vmem>>, vector<16x64xf32>
    tpu.vector_store %arg9[%c144, %c0_35], %63 {strides = array<i32>} : memref<192x64xf32, #tpu.memory_space<vmem>>, vector<16x64xf32>,
    %65 = vector.extract_strided_slice %24 {offsets = [320, 0], sizes = [16, 64], strides = [1, 1]} : vector<384x64xf32> to vector<16x64xf32>
    %66 = vector.extract_strided_slice %24 {offsets = [336, 0], sizes = [16, 64], strides = [1, 1]} : vector<384x64xf32> to vector<16x64xf32>
    %67 = arith.maximumf %65, %66 : vector<16x64xf32>
    %c160 = arith.constant 160 : index
    %c0_36 = arith.constant 0 : index
    %68 = vector.load %arg9[%c160, %c0_36] : memref<192x64xf32, #tpu.memory_space<vmem>>, vector<16x64xf32>
    tpu.vector_store %arg9[%c160, %c0_36], %67 {strides = array<i32>} : memref<192x64xf32, #tpu.memory_space<vmem>>, vector<16x64xf32>,
    %69 = vector.extract_strided_slice %24 {offsets = [352, 0], sizes = [16, 64], strides = [1, 1]} : vector<384x64xf32> to vector<16x64xf32>
    %70 = vector.extract_strided_slice %24 {offsets = [368, 0], sizes = [16, 64], strides = [1, 1]} : vector<384x64xf32> to vector<16x64xf32>
    %71 = arith.maximumf %69, %70 : vector<16x64xf32>
    %c176 = arith.constant 176 : index
    %c0_37 = arith.constant 0 : index
    %72 = vector.load %arg9[%c176, %c0_37] : memref<192x64xf32, #tpu.memory_space<vmem>>, vector<16x64xf32>
    tpu.vector_store %arg9[%c176, %c0_37], %71 {strides = array<i32>} : memref<192x64xf32, #tpu.memory_space<vmem>>, vector<16x64xf32>,
    %c0_38 = arith.constant 0 : index
    %c0_39 = arith.constant 0 : index
    %73 = vector.load %arg8[%c0_38, %c0_39] : memref<416x128xbf16, #tpu.memory_space<vmem>>, vector<384x128xbf16>
    %c0_40 = arith.constant 0 : index
    %c0_41 = arith.constant 0 : index
    %c0_42 = arith.constant 0 : index
    %74 = vector.load %arg5[%c0_40, %c0_41, %c0_42] : memref<3x128x64xbf16, #tpu.memory_space<vmem>>, vector<1x128x64xbf16>
    %75 = vector.shape_cast %74 : vector<1x128x64xbf16> to vector<128x64xbf16>
    %cst_43 = arith.constant dense<0.000000e+00> : vector<384x64xf32>
    %76 = tpu.matmul %73, %75, %cst_43 {dimension_numbers = #tpu.dot_dimension_numbers<[1], [0], [0], [1], [0, 0, 1, 1], [], []>} : vector<384x128xbf16>, vector<128x64xbf16>, vector<384x64xf32> -> vector<384x64xf32>
    %c16_44 = arith.constant 16 : index
    %c0_45 = arith.constant 0 : index
    %77 = vector.load %arg8[%c16_44, %c0_45] : memref<416x128xbf16, #tpu.memory_space<vmem>>, vector<384x128xbf16>
    %c1_46 = arith.constant 1 : index
    %c0_47 = arith.constant 0 : index
    %c0_48 = arith.constant 0 : index
    %78 = vector.load %arg5[%c1_46, %c0_47, %c0_48] : memref<3x128x64xbf16, #tpu.memory_space<vmem>>, vector<1x128x64xbf16>
    %79 = vector.shape_cast %78 : vector<1x128x64xbf16> to vector<128x64xbf16>
    %cst_49 = arith.constant dense<0.000000e+00> : vector<384x64xf32>
    %80 = tpu.matmul %77, %79, %cst_49 {dimension_numbers = #tpu.dot_dimension_numbers<[1], [0], [0], [1], [0, 0, 1, 1], [], []>} : vector<384x128xbf16>, vector<128x64xbf16>, vector<384x64xf32> -> vector<384x64xf32>
    %81 = arith.addf %76, %80 : vector<384x64xf32>
    %c32_50 = arith.constant 32 : index
    %c0_51 = arith.constant 0 : index
    %82 = vector.load %arg8[%c32_50, %c0_51] : memref<416x128xbf16, #tpu.memory_space<vmem>>, vector<384x128xbf16>
    %c2_52 = arith.constant 2 : index
    %c0_53 = arith.constant 0 : index
    %c0_54 = arith.constant 0 : index
    %83 = vector.load %arg5[%c2_52, %c0_53, %c0_54] : memref<3x128x64xbf16, #tpu.memory_space<vmem>>, vector<1x128x64xbf16>
    %84 = vector.shape_cast %83 : vector<1x128x64xbf16> to vector<128x64xbf16>
    %cst_55 = arith.constant dense<0.000000e+00> : vector<384x64xf32>
    %85 = tpu.matmul %82, %84, %cst_55 {dimension_numbers = #tpu.dot_dimension_numbers<[1], [0], [0], [1], [0, 0, 1, 1], [], []>} : vector<384x128xbf16>, vector<128x64xbf16>, vector<384x64xf32> -> vector<384x64xf32>
    %86 = arith.addf %81, %85 : vector<384x64xf32>
    %c0_56 = arith.constant 0 : index
    %c0_57 = arith.constant 0 : index
    %87 = vector.load %arg6[%c0_56, %c0_57] : memref<1x64xf32, #tpu.memory_space<vmem>>, vector<1x64xf32>
    %88 = vector.extract_strided_slice %86 {offsets = [0, 0], sizes = [16, 64], strides = [1, 1]} : vector<384x64xf32> to vector<16x64xf32>
    %89 = vector.extract_strided_slice %86 {offsets = [16, 0], sizes = [16, 64], strides = [1, 1]} : vector<384x64xf32> to vector<16x64xf32>
    %90 = arith.maximumf %88, %89 : vector<16x64xf32>
    %c0_58 = arith.constant 0 : index
    %c0_59 = arith.constant 0 : index
    %91 = vector.load %arg9[%c0_58, %c0_59] : memref<192x64xf32, #tpu.memory_space<vmem>>, vector<16x64xf32>
    %92 = arith.maximumf %90, %91 : vector<16x64xf32>
    %93 = vector.extract_strided_slice %92 {offsets = [0, 0], sizes = [12, 64], strides = [1, 1]} : vector<16x64xf32> to vector<12x64xf32>
    %94 = vector.broadcast %87 : vector<1x64xf32> to vector<12x64xf32>
    %95 = arith.addf %93, %94 : vector<12x64xf32>
    %cst_60 = arith.constant 0.000000e+00 : f32
    %96 = vector.broadcast %cst_60 : f32 to vector<12x64xf32>
    %97 = arith.maximumf %95, %96 : vector<12x64xf32>
    %98 = arith.truncf %97 : vector<12x64xf32> to vector<12x64xbf16>
    %c0_61 = arith.constant 0 : index
    %c0_62 = arith.constant 0 : index
    %c0_63 = arith.constant 0 : index
    %c0_64 = arith.constant 0 : index
    %99 = vector.load %arg7[%c0_61, %c0_62, %c0_63, %c0_64] : memref<1x12x12x64xbf16, #tpu.memory_space<vmem>>, vector<1x1x12x64xbf16>
    %100 = vector.shape_cast %99 : vector<1x1x12x64xbf16> to vector<12x64xbf16>
    %101 = vector.shape_cast %98 : vector<12x64xbf16> to vector<1x1x12x64xbf16>
    tpu.vector_store %arg7[%c0_61, %c0_62, %c0_63, %c0_64], %101 {strides = array<i32>} : memref<1x12x12x64xbf16, #tpu.memory_space<vmem>>, vector<1x1x12x64xbf16>,
    %102 = vector.extract_strided_slice %86 {offsets = [32, 0], sizes = [16, 64], strides = [1, 1]} : vector<384x64xf32> to vector<16x64xf32>
    %103 = vector.extract_strided_slice %86 {offsets = [48, 0], sizes = [16, 64], strides = [1, 1]} : vector<384x64xf32> to vector<16x64xf32>
    %104 = arith.maximumf %102, %103 : vector<16x64xf32>
    %c16_65 = arith.constant 16 : index
    %c0_66 = arith.constant 0 : index
    %105 = vector.load %arg9[%c16_65, %c0_66] : memref<192x64xf32, #tpu.memory_space<vmem>>, vector<16x64xf32>
    %106 = arith.maximumf %104, %105 : vector<16x64xf32>
    %107 = vector.extract_strided_slice %106 {offsets = [0, 0], sizes = [12, 64], strides = [1, 1]} : vector<16x64xf32> to vector<12x64xf32>
    %108 = vector.broadcast %87 : vector<1x64xf32> to vector<12x64xf32>
    %109 = arith.addf %107, %108 : vector<12x64xf32>
    %cst_67 = arith.constant 0.000000e+00 : f32
    %110 = vector.broadcast %cst_67 : f32 to vector<12x64xf32>
    %111 = arith.maximumf %109, %110 : vector<12x64xf32>
    %112 = arith.truncf %111 : vector<12x64xf32> to vector<12x64xbf16>
    %c0_68 = arith.constant 0 : index
    %c1_69 = arith.constant 1 : index
    %c0_70 = arith.constant 0 : index
    %c0_71 = arith.constant 0 : index
    %113 = vector.load %arg7[%c0_68, %c1_69, %c0_70, %c0_71] : memref<1x12x12x64xbf16, #tpu.memory_space<vmem>>, vector<1x1x12x64xbf16>
    %114 = vector.shape_cast %113 : vector<1x1x12x64xbf16> to vector<12x64xbf16>
    %115 = vector.shape_cast %112 : vector<12x64xbf16> to vector<1x1x12x64xbf16>
    tpu.vector_store %arg7[%c0_68, %c1_69, %c0_70, %c0_71], %115 {strides = array<i32>} : memref<1x12x12x64xbf16, #tpu.memory_space<vmem>>, vector<1x1x12x64xbf16>,
    %116 = vector.extract_strided_slice %86 {offsets = [64, 0], sizes = [16, 64], strides = [1, 1]} : vector<384x64xf32> to vector<16x64xf32>
    %117 = vector.extract_strided_slice %86 {offsets = [80, 0], sizes = [16, 64], strides = [1, 1]} : vector<384x64xf32> to vector<16x64xf32>
    %118 = arith.maximumf %116, %117 : vector<16x64xf32>
    %c32_72 = arith.constant 32 : index
    %c0_73 = arith.constant 0 : index
    %119 = vector.load %arg9[%c32_72, %c0_73] : memref<192x64xf32, #tpu.memory_space<vmem>>, vector<16x64xf32>
    %120 = arith.maximumf %118, %119 : vector<16x64xf32>
    %121 = vector.extract_strided_slice %120 {offsets = [0, 0], sizes = [12, 64], strides = [1, 1]} : vector<16x64xf32> to vector<12x64xf32>
    %122 = vector.broadcast %87 : vector<1x64xf32> to vector<12x64xf32>
    %123 = arith.addf %121, %122 : vector<12x64xf32>
    %cst_74 = arith.constant 0.000000e+00 : f32
    %124 = vector.broadcast %cst_74 : f32 to vector<12x64xf32>
    %125 = arith.maximumf %123, %124 : vector<12x64xf32>
    %126 = arith.truncf %125 : vector<12x64xf32> to vector<12x64xbf16>
    %c0_75 = arith.constant 0 : index
    %c2_76 = arith.constant 2 : index
    %c0_77 = arith.constant 0 : index
    %c0_78 = arith.constant 0 : index
    %127 = vector.load %arg7[%c0_75, %c2_76, %c0_77, %c0_78] : memref<1x12x12x64xbf16, #tpu.memory_space<vmem>>, vector<1x1x12x64xbf16>
    %128 = vector.shape_cast %127 : vector<1x1x12x64xbf16> to vector<12x64xbf16>
    %129 = vector.shape_cast %126 : vector<12x64xbf16> to vector<1x1x12x64xbf16>
    tpu.vector_store %arg7[%c0_75, %c2_76, %c0_77, %c0_78], %129 {strides = array<i32>} : memref<1x12x12x64xbf16, #tpu.memory_space<vmem>>, vector<1x1x12x64xbf16>,
    %130 = vector.extract_strided_slice %86 {offsets = [96, 0], sizes = [16, 64], strides = [1, 1]} : vector<384x64xf32> to vector<16x64xf32>
    %131 = vector.extract_strided_slice %86 {offsets = [112, 0], sizes = [16, 64], strides = [1, 1]} : vector<384x64xf32> to vector<16x64xf32>
    %132 = arith.maximumf %130, %131 : vector<16x64xf32>
    %c48_79 = arith.constant 48 : index
    %c0_80 = arith.constant 0 : index
    %133 = vector.load %arg9[%c48_79, %c0_80] : memref<192x64xf32, #tpu.memory_space<vmem>>, vector<16x64xf32>
    %134 = arith.maximumf %132, %133 : vector<16x64xf32>
    %135 = vector.extract_strided_slice %134 {offsets = [0, 0], sizes = [12, 64], strides = [1, 1]} : vector<16x64xf32> to vector<12x64xf32>
    %136 = vector.broadcast %87 : vector<1x64xf32> to vector<12x64xf32>
    %137 = arith.addf %135, %136 : vector<12x64xf32>
    %cst_81 = arith.constant 0.000000e+00 : f32
    %138 = vector.broadcast %cst_81 : f32 to vector<12x64xf32>
    %139 = arith.maximumf %137, %138 : vector<12x64xf32>
    %140 = arith.truncf %139 : vector<12x64xf32> to vector<12x64xbf16>
    %c0_82 = arith.constant 0 : index
    %c3 = arith.constant 3 : index
    %c0_83 = arith.constant 0 : index
    %c0_84 = arith.constant 0 : index
    %141 = vector.load %arg7[%c0_82, %c3, %c0_83, %c0_84] : memref<1x12x12x64xbf16, #tpu.memory_space<vmem>>, vector<1x1x12x64xbf16>
    %142 = vector.shape_cast %141 : vector<1x1x12x64xbf16> to vector<12x64xbf16>
    %143 = vector.shape_cast %140 : vector<12x64xbf16> to vector<1x1x12x64xbf16>
    tpu.vector_store %arg7[%c0_82, %c3, %c0_83, %c0_84], %143 {strides = array<i32>} : memref<1x12x12x64xbf16, #tpu.memory_space<vmem>>, vector<1x1x12x64xbf16>,
    %144 = vector.extract_strided_slice %86 {offsets = [128, 0], sizes = [16, 64], strides = [1, 1]} : vector<384x64xf32> to vector<16x64xf32>
    %145 = vector.extract_strided_slice %86 {offsets = [144, 0], sizes = [16, 64], strides = [1, 1]} : vector<384x64xf32> to vector<16x64xf32>
    %146 = arith.maximumf %144, %145 : vector<16x64xf32>
    %c64_85 = arith.constant 64 : index
    %c0_86 = arith.constant 0 : index
    %147 = vector.load %arg9[%c64_85, %c0_86] : memref<192x64xf32, #tpu.memory_space<vmem>>, vector<16x64xf32>
    %148 = arith.maximumf %146, %147 : vector<16x64xf32>
    %149 = vector.extract_strided_slice %148 {offsets = [0, 0], sizes = [12, 64], strides = [1, 1]} : vector<16x64xf32> to vector<12x64xf32>
    %150 = vector.broadcast %87 : vector<1x64xf32> to vector<12x64xf32>
    %151 = arith.addf %149, %150 : vector<12x64xf32>
    %cst_87 = arith.constant 0.000000e+00 : f32
    %152 = vector.broadcast %cst_87 : f32 to vector<12x64xf32>
    %153 = arith.maximumf %151, %152 : vector<12x64xf32>
    %154 = arith.truncf %153 : vector<12x64xf32> to vector<12x64xbf16>
    %c0_88 = arith.constant 0 : index
    %c4 = arith.constant 4 : index
    %c0_89 = arith.constant 0 : index
    %c0_90 = arith.constant 0 : index
    %155 = vector.load %arg7[%c0_88, %c4, %c0_89, %c0_90] : memref<1x12x12x64xbf16, #tpu.memory_space<vmem>>, vector<1x1x12x64xbf16>
    %156 = vector.shape_cast %155 : vector<1x1x12x64xbf16> to vector<12x64xbf16>
    %157 = vector.shape_cast %154 : vector<12x64xbf16> to vector<1x1x12x64xbf16>
    tpu.vector_store %arg7[%c0_88, %c4, %c0_89, %c0_90], %157 {strides = array<i32>} : memref<1x12x12x64xbf16, #tpu.memory_space<vmem>>, vector<1x1x12x64xbf16>,
    %158 = vector.extract_strided_slice %86 {offsets = [160, 0], sizes = [16, 64], strides = [1, 1]} : vector<384x64xf32> to vector<16x64xf32>
    %159 = vector.extract_strided_slice %86 {offsets = [176, 0], sizes = [16, 64], strides = [1, 1]} : vector<384x64xf32> to vector<16x64xf32>
    %160 = arith.maximumf %158, %159 : vector<16x64xf32>
    %c80_91 = arith.constant 80 : index
    %c0_92 = arith.constant 0 : index
    %161 = vector.load %arg9[%c80_91, %c0_92] : memref<192x64xf32, #tpu.memory_space<vmem>>, vector<16x64xf32>
    %162 = arith.maximumf %160, %161 : vector<16x64xf32>
    %163 = vector.extract_strided_slice %162 {offsets = [0, 0], sizes = [12, 64], strides = [1, 1]} : vector<16x64xf32> to vector<12x64xf32>
    %164 = vector.broadcast %87 : vector<1x64xf32> to vector<12x64xf32>
    %165 = arith.addf %163, %164 : vector<12x64xf32>
    %cst_93 = arith.constant 0.000000e+00 : f32
    %166 = vector.broadcast %cst_93 : f32 to vector<12x64xf32>
    %167 = arith.maximumf %165, %166 : vector<12x64xf32>
    %168 = arith.truncf %167 : vector<12x64xf32> to vector<12x64xbf16>
    %c0_94 = arith.constant 0 : index
    %c5 = arith.constant 5 : index
    %c0_95 = arith.constant 0 : index
    %c0_96 = arith.constant 0 : index
    %169 = vector.load %arg7[%c0_94, %c5, %c0_95, %c0_96] : memref<1x12x12x64xbf16, #tpu.memory_space<vmem>>, vector<1x1x12x64xbf16>
    %170 = vector.shape_cast %169 : vector<1x1x12x64xbf16> to vector<12x64xbf16>
    %171 = vector.shape_cast %168 : vector<12x64xbf16> to vector<1x1x12x64xbf16>
    tpu.vector_store %arg7[%c0_94, %c5, %c0_95, %c0_96], %171 {strides = array<i32>} : memref<1x12x12x64xbf16, #tpu.memory_space<vmem>>, vector<1x1x12x64xbf16>,
    %172 = vector.extract_strided_slice %86 {offsets = [192, 0], sizes = [16, 64], strides = [1, 1]} : vector<384x64xf32> to vector<16x64xf32>
    %173 = vector.extract_strided_slice %86 {offsets = [208, 0], sizes = [16, 64], strides = [1, 1]} : vector<384x64xf32> to vector<16x64xf32>
    %174 = arith.maximumf %172, %173 : vector<16x64xf32>
    %c96_97 = arith.constant 96 : index
    %c0_98 = arith.constant 0 : index
    %175 = vector.load %arg9[%c96_97, %c0_98] : memref<192x64xf32, #tpu.memory_space<vmem>>, vector<16x64xf32>
    %176 = arith.maximumf %174, %175 : vector<16x64xf32>
    %177 = vector.extract_strided_slice %176 {offsets = [0, 0], sizes = [12, 64], strides = [1, 1]} : vector<16x64xf32> to vector<12x64xf32>
    %178 = vector.broadcast %87 : vector<1x64xf32> to vector<12x64xf32>
    %179 = arith.addf %177, %178 : vector<12x64xf32>
    %cst_99 = arith.constant 0.000000e+00 : f32
    %180 = vector.broadcast %cst_99 : f32 to vector<12x64xf32>
    %181 = arith.maximumf %179, %180 : vector<12x64xf32>
    %182 = arith.truncf %181 : vector<12x64xf32> to vector<12x64xbf16>
    %c0_100 = arith.constant 0 : index
    %c6 = arith.constant 6 : index
    %c0_101 = arith.constant 0 : index
    %c0_102 = arith.constant 0 : index
    %183 = vector.load %arg7[%c0_100, %c6, %c0_101, %c0_102] : memref<1x12x12x64xbf16, #tpu.memory_space<vmem>>, vector<1x1x12x64xbf16>
    %184 = vector.shape_cast %183 : vector<1x1x12x64xbf16> to vector<12x64xbf16>
    %185 = vector.shape_cast %182 : vector<12x64xbf16> to vector<1x1x12x64xbf16>
    tpu.vector_store %arg7[%c0_100, %c6, %c0_101, %c0_102], %185 {strides = array<i32>} : memref<1x12x12x64xbf16, #tpu.memory_space<vmem>>, vector<1x1x12x64xbf16>,
    %186 = vector.extract_strided_slice %86 {offsets = [224, 0], sizes = [16, 64], strides = [1, 1]} : vector<384x64xf32> to vector<16x64xf32>
    %187 = vector.extract_strided_slice %86 {offsets = [240, 0], sizes = [16, 64], strides = [1, 1]} : vector<384x64xf32> to vector<16x64xf32>
    %188 = arith.maximumf %186, %187 : vector<16x64xf32>
    %c112_103 = arith.constant 112 : index
    %c0_104 = arith.constant 0 : index
    %189 = vector.load %arg9[%c112_103, %c0_104] : memref<192x64xf32, #tpu.memory_space<vmem>>, vector<16x64xf32>
    %190 = arith.maximumf %188, %189 : vector<16x64xf32>
    %191 = vector.extract_strided_slice %190 {offsets = [0, 0], sizes = [12, 64], strides = [1, 1]} : vector<16x64xf32> to vector<12x64xf32>
    %192 = vector.broadcast %87 : vector<1x64xf32> to vector<12x64xf32>
    %193 = arith.addf %191, %192 : vector<12x64xf32>
    %cst_105 = arith.constant 0.000000e+00 : f32
    %194 = vector.broadcast %cst_105 : f32 to vector<12x64xf32>
    %195 = arith.maximumf %193, %194 : vector<12x64xf32>
    %196 = arith.truncf %195 : vector<12x64xf32> to vector<12x64xbf16>
    %c0_106 = arith.constant 0 : index
    %c7 = arith.constant 7 : index
    %c0_107 = arith.constant 0 : index
    %c0_108 = arith.constant 0 : index
    %197 = vector.load %arg7[%c0_106, %c7, %c0_107, %c0_108] : memref<1x12x12x64xbf16, #tpu.memory_space<vmem>>, vector<1x1x12x64xbf16>
    %198 = vector.shape_cast %197 : vector<1x1x12x64xbf16> to vector<12x64xbf16>
    %199 = vector.shape_cast %196 : vector<12x64xbf16> to vector<1x1x12x64xbf16>
    tpu.vector_store %arg7[%c0_106, %c7, %c0_107, %c0_108], %199 {strides = array<i32>} : memref<1x12x12x64xbf16, #tpu.memory_space<vmem>>, vector<1x1x12x64xbf16>,
    %200 = vector.extract_strided_slice %86 {offsets = [256, 0], sizes = [16, 64], strides = [1, 1]} : vector<384x64xf32> to vector<16x64xf32>
    %201 = vector.extract_strided_slice %86 {offsets = [272, 0], sizes = [16, 64], strides = [1, 1]} : vector<384x64xf32> to vector<16x64xf32>
    %202 = arith.maximumf %200, %201 : vector<16x64xf32>
    %c128_109 = arith.constant 128 : index
    %c0_110 = arith.constant 0 : index
    %203 = vector.load %arg9[%c128_109, %c0_110] : memref<192x64xf32, #tpu.memory_space<vmem>>, vector<16x64xf32>
    %204 = arith.maximumf %202, %203 : vector<16x64xf32>
    %205 = vector.extract_strided_slice %204 {offsets = [0, 0], sizes = [12, 64], strides = [1, 1]} : vector<16x64xf32> to vector<12x64xf32>
    %206 = vector.broadcast %87 : vector<1x64xf32> to vector<12x64xf32>
    %207 = arith.addf %205, %206 : vector<12x64xf32>
    %cst_111 = arith.constant 0.000000e+00 : f32
    %208 = vector.broadcast %cst_111 : f32 to vector<12x64xf32>
    %209 = arith.maximumf %207, %208 : vector<12x64xf32>
    %210 = arith.truncf %209 : vector<12x64xf32> to vector<12x64xbf16>
    %c0_112 = arith.constant 0 : index
    %c8 = arith.constant 8 : index
    %c0_113 = arith.constant 0 : index
    %c0_114 = arith.constant 0 : index
    %211 = vector.load %arg7[%c0_112, %c8, %c0_113, %c0_114] : memref<1x12x12x64xbf16, #tpu.memory_space<vmem>>, vector<1x1x12x64xbf16>
    %212 = vector.shape_cast %211 : vector<1x1x12x64xbf16> to vector<12x64xbf16>
    %213 = vector.shape_cast %210 : vector<12x64xbf16> to vector<1x1x12x64xbf16>
    tpu.vector_store %arg7[%c0_112, %c8, %c0_113, %c0_114], %213 {strides = array<i32>} : memref<1x12x12x64xbf16, #tpu.memory_space<vmem>>, vector<1x1x12x64xbf16>,
    %214 = vector.extract_strided_slice %86 {offsets = [288, 0], sizes = [16, 64], strides = [1, 1]} : vector<384x64xf32> to vector<16x64xf32>
    %215 = vector.extract_strided_slice %86 {offsets = [304, 0], sizes = [16, 64], strides = [1, 1]} : vector<384x64xf32> to vector<16x64xf32>
    %216 = arith.maximumf %214, %215 : vector<16x64xf32>
    %c144_115 = arith.constant 144 : index
    %c0_116 = arith.constant 0 : index
    %217 = vector.load %arg9[%c144_115, %c0_116] : memref<192x64xf32, #tpu.memory_space<vmem>>, vector<16x64xf32>
    %218 = arith.maximumf %216, %217 : vector<16x64xf32>
    %219 = vector.extract_strided_slice %218 {offsets = [0, 0], sizes = [12, 64], strides = [1, 1]} : vector<16x64xf32> to vector<12x64xf32>
    %220 = vector.broadcast %87 : vector<1x64xf32> to vector<12x64xf32>
    %221 = arith.addf %219, %220 : vector<12x64xf32>
    %cst_117 = arith.constant 0.000000e+00 : f32
    %222 = vector.broadcast %cst_117 : f32 to vector<12x64xf32>
    %223 = arith.maximumf %221, %222 : vector<12x64xf32>
    %224 = arith.truncf %223 : vector<12x64xf32> to vector<12x64xbf16>
    %c0_118 = arith.constant 0 : index
    %c9 = arith.constant 9 : index
    %c0_119 = arith.constant 0 : index
    %c0_120 = arith.constant 0 : index
    %225 = vector.load %arg7[%c0_118, %c9, %c0_119, %c0_120] : memref<1x12x12x64xbf16, #tpu.memory_space<vmem>>, vector<1x1x12x64xbf16>
    %226 = vector.shape_cast %225 : vector<1x1x12x64xbf16> to vector<12x64xbf16>
    %227 = vector.shape_cast %224 : vector<12x64xbf16> to vector<1x1x12x64xbf16>
    tpu.vector_store %arg7[%c0_118, %c9, %c0_119, %c0_120], %227 {strides = array<i32>} : memref<1x12x12x64xbf16, #tpu.memory_space<vmem>>, vector<1x1x12x64xbf16>,
    %228 = vector.extract_strided_slice %86 {offsets = [320, 0], sizes = [16, 64], strides = [1, 1]} : vector<384x64xf32> to vector<16x64xf32>
    %229 = vector.extract_strided_slice %86 {offsets = [336, 0], sizes = [16, 64], strides = [1, 1]} : vector<384x64xf32> to vector<16x64xf32>
    %230 = arith.maximumf %228, %229 : vector<16x64xf32>
    %c160_121 = arith.constant 160 : index
    %c0_122 = arith.constant 0 : index
    %231 = vector.load %arg9[%c160_121, %c0_122] : memref<192x64xf32, #tpu.memory_space<vmem>>, vector<16x64xf32>
    %232 = arith.maximumf %230, %231 : vector<16x64xf32>
    %233 = vector.extract_strided_slice %232 {offsets = [0, 0], sizes = [12, 64], strides = [1, 1]} : vector<16x64xf32> to vector<12x64xf32>
    %234 = vector.broadcast %87 : vector<1x64xf32> to vector<12x64xf32>
    %235 = arith.addf %233, %234 : vector<12x64xf32>
    %cst_123 = arith.constant 0.000000e+00 : f32
    %236 = vector.broadcast %cst_123 : f32 to vector<12x64xf32>
    %237 = arith.maximumf %235, %236 : vector<12x64xf32>
    %238 = arith.truncf %237 : vector<12x64xf32> to vector<12x64xbf16>
    %c0_124 = arith.constant 0 : index
    %c10 = arith.constant 10 : index
    %c0_125 = arith.constant 0 : index
    %c0_126 = arith.constant 0 : index
    %239 = vector.load %arg7[%c0_124, %c10, %c0_125, %c0_126] : memref<1x12x12x64xbf16, #tpu.memory_space<vmem>>, vector<1x1x12x64xbf16>
    %240 = vector.shape_cast %239 : vector<1x1x12x64xbf16> to vector<12x64xbf16>
    %241 = vector.shape_cast %238 : vector<12x64xbf16> to vector<1x1x12x64xbf16>
    tpu.vector_store %arg7[%c0_124, %c10, %c0_125, %c0_126], %241 {strides = array<i32>} : memref<1x12x12x64xbf16, #tpu.memory_space<vmem>>, vector<1x1x12x64xbf16>,
    %242 = vector.extract_strided_slice %86 {offsets = [352, 0], sizes = [16, 64], strides = [1, 1]} : vector<384x64xf32> to vector<16x64xf32>
    %243 = vector.extract_strided_slice %86 {offsets = [368, 0], sizes = [16, 64], strides = [1, 1]} : vector<384x64xf32> to vector<16x64xf32>
    %244 = arith.maximumf %242, %243 : vector<16x64xf32>
    %c176_127 = arith.constant 176 : index
    %c0_128 = arith.constant 0 : index
    %245 = vector.load %arg9[%c176_127, %c0_128] : memref<192x64xf32, #tpu.memory_space<vmem>>, vector<16x64xf32>
    %246 = arith.maximumf %244, %245 : vector<16x64xf32>
    %247 = vector.extract_strided_slice %246 {offsets = [0, 0], sizes = [12, 64], strides = [1, 1]} : vector<16x64xf32> to vector<12x64xf32>
    %248 = vector.broadcast %87 : vector<1x64xf32> to vector<12x64xf32>
    %249 = arith.addf %247, %248 : vector<12x64xf32>
    %cst_129 = arith.constant 0.000000e+00 : f32
    %250 = vector.broadcast %cst_129 : f32 to vector<12x64xf32>
    %251 = arith.maximumf %249, %250 : vector<12x64xf32>
    %252 = arith.truncf %251 : vector<12x64xf32> to vector<12x64xbf16>
    %c0_130 = arith.constant 0 : index
    %c11 = arith.constant 11 : index
    %c0_131 = arith.constant 0 : index
    %c0_132 = arith.constant 0 : index
    %253 = vector.load %arg7[%c0_130, %c11, %c0_131, %c0_132] : memref<1x12x12x64xbf16, #tpu.memory_space<vmem>>, vector<1x1x12x64xbf16>
    %254 = vector.shape_cast %253 : vector<1x1x12x64xbf16> to vector<12x64xbf16>
    %255 = vector.shape_cast %252 : vector<12x64xbf16> to vector<1x1x12x64xbf16>
    tpu.vector_store %arg7[%c0_130, %c11, %c0_131, %c0_132], %255 {strides = array<i32>} : memref<1x12x12x64xbf16, #tpu.memory_space<vmem>>, vector<1x1x12x64xbf16>,
    return
  }
  func.func @transform_0(%arg0: i32) -> (i32, i32, i32) {
    %c0_i32 = arith.constant 0 : i32
    %c0_i32_0 = arith.constant 0 : i32
    %c0_i32_1 = arith.constant 0 : i32
    return %arg0, %c0_i32, %c0_i32_0 : i32, i32, i32
  }
  func.func @transform_1(%arg0: i32) -> (i32, i32) {
    %c0_i32 = arith.constant 0 : i32
    %c0_i32_0 = arith.constant 0 : i32
    %c0_i32_1 = arith.constant 0 : i32
    return %c0_i32, %c0_i32_0 : i32, i32
  }
  func.func @transform_2(%arg0: i32) -> (i32, i32) {
    %c0_i32 = arith.constant 0 : i32
    %c0_i32_0 = arith.constant 0 : i32
    %c0_i32_1 = arith.constant 0 : i32
    return %c0_i32, %c0_i32_0 : i32, i32
  }
  func.func @transform_3(%arg0: i32) -> (i32, i32, i32) {
    %c0_i32 = arith.constant 0 : i32
    %c0_i32_0 = arith.constant 0 : i32
    %c0_i32_1 = arith.constant 0 : i32
    %c0_i32_2 = arith.constant 0 : i32
    return %c0_i32, %c0_i32_0, %c0_i32_1 : i32, i32, i32
  }
  func.func @transform_4(%arg0: i32) -> (i32, i32, i32) {
    %c0_i32 = arith.constant 0 : i32
    %c0_i32_0 = arith.constant 0 : i32
    %c0_i32_1 = arith.constant 0 : i32
    %c0_i32_2 = arith.constant 0 : i32
    return %c0_i32, %c0_i32_0, %c0_i32_1 : i32, i32, i32
  }
  func.func @transform_5(%arg0: i32) -> (i32, i32) {
    %c0_i32 = arith.constant 0 : i32
    %c0_i32_0 = arith.constant 0 : i32
    %c0_i32_1 = arith.constant 0 : i32
    return %c0_i32, %c0_i32_0 : i32, i32
  }
  func.func @transform_6(%arg0: i32) -> (i32, i32, i32, i32) {
    %c0_i32 = arith.constant 0 : i32
    %c0_i32_0 = arith.constant 0 : i32
    %c0_i32_1 = arith.constant 0 : i32
    %c0_i32_2 = arith.constant 0 : i32
    return %arg0, %c0_i32, %c0_i32_0, %c0_i32_1 : i32, i32, i32, i32
  }
}

module attributes {stable_mosaic.version = 11 : i64} {
  func.func @_head_kernel(%arg0: i32, %arg1: memref<2x9216xbf16, #tpu.memory_space<vmem>>, %arg2: memref<9216x128xbf16, #tpu.memory_space<vmem>>, %arg3: memref<1x128xf32, #tpu.memory_space<vmem>>, %arg4: memref<128x10xbf16, #tpu.memory_space<vmem>>, %arg5: memref<1x10xf32, #tpu.memory_space<vmem>>, %arg6: memref<2x10xf32, #tpu.memory_space<vmem>>, %arg7: memref<2x128xf32, #tpu.memory_space<vmem>>) attributes {dimension_semantics = [#tpu.dimension_semantics<parallel>], iteration_bounds = array<i64: 1>, scalar_prefetch = 0 : i64, scratch_operands = 0 : i64, tpu.core_type = #tpu.core_type<tc>, window_params = [{transform_indices = @transform_0, window_bounds = array<i64: 2, 9216>}, {pipeline_mode = #tpu.pipeline_mode<synchronous>, transform_indices = @transform_1, window_bounds = array<i64: 9216, 128>}, {pipeline_mode = #tpu.pipeline_mode<synchronous>, transform_indices = @transform_2, window_bounds = array<i64: 1, 128>}, {pipeline_mode = #tpu.pipeline_mode<synchronous>, transform_indices = @transform_3, window_bounds = array<i64: 128, 10>}, {pipeline_mode = #tpu.pipeline_mode<synchronous>, transform_indices = @transform_4, window_bounds = array<i64: 1, 10>}, {transform_indices = @transform_5, window_bounds = array<i64: 2, 10>}, {transform_indices = @transform_6, window_bounds = array<i64: 2, 128>}]} {
    %c0 = arith.constant 0 : index
    %c0_0 = arith.constant 0 : index
    %0 = vector.load %arg1[%c0, %c0_0] : memref<2x9216xbf16, #tpu.memory_space<vmem>>, vector<2x9216xbf16>
    %c0_1 = arith.constant 0 : index
    %c0_2 = arith.constant 0 : index
    %1 = vector.load %arg2[%c0_1, %c0_2] : memref<9216x128xbf16, #tpu.memory_space<vmem>>, vector<9216x128xbf16>
    %cst = arith.constant dense<0.000000e+00> : vector<2x128xf32>
    %2 = tpu.matmul %0, %1, %cst {dimension_numbers = #tpu.dot_dimension_numbers<[1], [0], [0], [1], [0, 0, 1, 1], [], []>} : vector<2x9216xbf16>, vector<9216x128xbf16>, vector<2x128xf32> -> vector<2x128xf32>
    %c0_3 = arith.constant 0 : index
    %c0_4 = arith.constant 0 : index
    %3 = vector.load %arg3[%c0_3, %c0_4] : memref<1x128xf32, #tpu.memory_space<vmem>>, vector<1x128xf32>
    %4 = vector.broadcast %3 : vector<1x128xf32> to vector<2x128xf32>
    %5 = arith.addf %2, %4 : vector<2x128xf32>
    %6 = math.tanh %5 : vector<2x128xf32>
    %c0_5 = arith.constant 0 : index
    %c0_6 = arith.constant 0 : index
    %7 = vector.load %arg7[%c0_5, %c0_6] : memref<2x128xf32, #tpu.memory_space<vmem>>, vector<2x128xf32>
    tpu.vector_store %arg7[%c0_5, %c0_6], %6 {strides = array<i32>} : memref<2x128xf32, #tpu.memory_space<vmem>>, vector<2x128xf32>,
    %8 = arith.truncf %6 : vector<2x128xf32> to vector<2x128xbf16>
    %c0_7 = arith.constant 0 : index
    %c0_8 = arith.constant 0 : index
    %9 = vector.load %arg4[%c0_7, %c0_8] : memref<128x10xbf16, #tpu.memory_space<vmem>>, vector<128x10xbf16>
    %cst_9 = arith.constant dense<0.000000e+00> : vector<2x10xf32>
    %10 = tpu.matmul %8, %9, %cst_9 {dimension_numbers = #tpu.dot_dimension_numbers<[1], [0], [0], [1], [0, 0, 1, 1], [], []>} : vector<2x128xbf16>, vector<128x10xbf16>, vector<2x10xf32> -> vector<2x10xf32>
    %c0_10 = arith.constant 0 : index
    %c0_11 = arith.constant 0 : index
    %11 = vector.load %arg5[%c0_10, %c0_11] : memref<1x10xf32, #tpu.memory_space<vmem>>, vector<1x10xf32>
    %12 = vector.broadcast %11 : vector<1x10xf32> to vector<2x10xf32>
    %13 = arith.addf %10, %12 : vector<2x10xf32>
    %cst_12 = arith.constant dense<0xFF800000> : vector<2xf32>
    %14 = vector.multi_reduction <maximumf>, %13, %cst_12 [1] : vector<2x10xf32> to vector<2xf32>
    %15 = vector.shape_cast %14 : vector<2xf32> to vector<2x1xf32>
    %16 = vector.broadcast %15 : vector<2x1xf32> to vector<2x10xf32>
    %17 = arith.subf %13, %16 : vector<2x10xf32>
    %18 = math.exp %17 : vector<2x10xf32>
    %cst_13 = arith.constant dense<0.000000e+00> : vector<2xf32>
    %19 = vector.multi_reduction <add>, %18, %cst_13 [1] : vector<2x10xf32> to vector<2xf32>
    %20 = vector.shape_cast %19 : vector<2xf32> to vector<2x1xf32>
    %21 = vector.broadcast %20 : vector<2x1xf32> to vector<2x10xf32>
    %22 = arith.divf %18, %21 : vector<2x10xf32>
    %c0_14 = arith.constant 0 : index
    %c0_15 = arith.constant 0 : index
    %23 = vector.load %arg6[%c0_14, %c0_15] : memref<2x10xf32, #tpu.memory_space<vmem>>, vector<2x10xf32>
    tpu.vector_store %arg6[%c0_14, %c0_15], %22 {strides = array<i32>} : memref<2x10xf32, #tpu.memory_space<vmem>>, vector<2x10xf32>,
    return
  }
  func.func @transform_0(%arg0: i32) -> (i32, i32) {
    %c0_i32 = arith.constant 0 : i32
    %c0_i32_0 = arith.constant 0 : i32
    return %arg0, %c0_i32 : i32, i32
  }
  func.func @transform_1(%arg0: i32) -> (i32, i32) {
    %c0_i32 = arith.constant 0 : i32
    %c0_i32_0 = arith.constant 0 : i32
    %c0_i32_1 = arith.constant 0 : i32
    return %c0_i32, %c0_i32_0 : i32, i32
  }
  func.func @transform_2(%arg0: i32) -> (i32, i32) {
    %c0_i32 = arith.constant 0 : i32
    %c0_i32_0 = arith.constant 0 : i32
    %c0_i32_1 = arith.constant 0 : i32
    return %c0_i32, %c0_i32_0 : i32, i32
  }
  func.func @transform_3(%arg0: i32) -> (i32, i32) {
    %c0_i32 = arith.constant 0 : i32
    %c0_i32_0 = arith.constant 0 : i32
    %c0_i32_1 = arith.constant 0 : i32
    return %c0_i32, %c0_i32_0 : i32, i32
  }
  func.func @transform_4(%arg0: i32) -> (i32, i32) {
    %c0_i32 = arith.constant 0 : i32
    %c0_i32_0 = arith.constant 0 : i32
    %c0_i32_1 = arith.constant 0 : i32
    return %c0_i32, %c0_i32_0 : i32, i32
  }
  func.func @transform_5(%arg0: i32) -> (i32, i32) {
    %c0_i32 = arith.constant 0 : i32
    %c0_i32_0 = arith.constant 0 : i32
    return %arg0, %c0_i32 : i32, i32
  }
  func.func @transform_6(%arg0: i32) -> (i32, i32) {
    %c0_i32 = arith.constant 0 : i32
    %c0_i32_0 = arith.constant 0 : i32
    return %arg0, %c0_i32 : i32, i32
  }
}

</mosaic_0001>

<llo_original>
// kernel: generator_forward.2
$region0: #{generator_forward.2}
  #allocation0 [shape = 'u32[]', space=smem, size = 0x4, offset = 0x4, fixed_abs, tag = 'smem constant byte address 0x4 - core index']
  #allocation1 [shape = 'u32[144,128]{1,0:T(1,128)}', space=vmem, size = 0x12000, scoped, tag = 'internal scratch']
  #allocation2 [shape = 'bf16[416,128]{1,0:T(16,128)(2,1)}', space=vmem, size = 0x1a000, scoped, tag = 'scratch operand']
  #allocation3 [shape = 'f32[192,64]{1,0:T(8,128)}', space=vmem, size = 0x18000, scoped, tag = 'scratch operand']
  %s0 = inlined_call_operand.vmem [shape: bf16[2,416,36], index: 0, kind: input, shape index: {}]
  %s1 = inlined_call_operand.vmem [shape: bf16[36,128], index: 1, kind: input, shape index: {}]
  %s2 = inlined_call_operand.vmem [shape: f32[1,128], index: 2, kind: input, shape index: {}]
  %s3 = inlined_call_operand.vmem [shape: bf16[3,128,64], index: 3, kind: input, shape index: {}]
  %s4 = inlined_call_operand.vmem [shape: bf16[3,128,64], index: 4, kind: input, shape index: {}]
  %s5 = inlined_call_operand.vmem [shape: f32[1,64], index: 5, kind: input, shape index: {}]
  %s6 = inlined_call_operand.vmem [shape: bf16[2,12,12,64], index: 6, kind: output, shape index: {}]
  %s7 = sld [smem:[#allocation0]]
  $region57: #{generator_forward.2} parent=0
    _
  %s9 = ssub.s32 1, %s7
  %s10 = scalar_select 0, %s9, %s7
  loop: start=0, step=1, limit=4
  $region2: #{generator_forward.2} parent=0 // loop_pre_header
    _
  $region3: #{generator_forward.2} parent=0 // loop_header
    %s12 = sphi 0, %s16
    %p13 = scmp.ge.s32.totalorder %s12, 4
    %s22 = sphi 0, %s24
    %s25 = sphi 0, %s22
    %s26 = sphi 0, %s25
    %s42 = sphi 0, %s26
    %s46 = sphi 0, %s46
    %s48 = sphi 0, %s46
    %s49 = sphi 0, %s48
    %s63 = sphi 0, %s49
    %s67 = sphi 0, %s67
    %s69 = sphi 0, %s67
    %s70 = sphi 0, %s69
    %s84 = sphi 0, %s70
    %s88 = sphi 0, %s88
    %s90 = sphi 0, %s88
    %s91 = sphi 0, %s90
    %s105 = sphi 0, %s91
    %s109 = sphi 0, %s109
    %s111 = sphi 0, %s109
    %s112 = sphi 0, %s111
    %s126 = sphi 0, %s112
    %s130 = sphi 0, %s130
    %s132 = sphi 0, %s130
    %s133 = sphi 0, %s132
    %s147 = sphi 0, %s133
    %s153 = sphi 0, %s155
    %s156 = sphi 0, %s153
    %s157 = sphi 0, %s156
    %s173 = sphi 0, %s157
  $region4: #{generator_forward.2} parent=0 // loop_header_branch
    %15 = sbr.rel (%p13) target = $region8
  $region5: #{generator_forward.2} parent=0 // loop_body
    %s17 = ssub.s32 %s12, 1
    %s18 = ssub.s32 %s12, 2
    %s19 = sadd.s32 %s12, 1
    %s20 = ssub.s32 %s12, %s19
    %p21 = scmp.eq.s32.totalorder %s20, 0
    %s23 = sadd.s32 %s22, 1
    %s24 = scalar_select %p21, %s22, %s23
    %p27 = pneg %p21
    %p28 = scmp.eq.s32.totalorder %s12, 1
    %p29 = por %p27, %p28
    %p30 = scmp.ne.s32.totalorder %s22, %s25
    %p31 = scmp.eq.s32.totalorder %s12, 0
    %p32 = por %p30, %p31
    %p33 = scmp.ne.s32.totalorder %s22, %s25
    %p34 = scmp.eq.s32.totalorder %s17, 1
    %p35 = por %p33, %p34
    %p36 = scmp.ne.s32.totalorder %s25, %s26
    %p37 = scmp.eq.s32.totalorder %s17, 0
    %p38 = por %p36, %p37
    %p39 = scmp.ne.s32.totalorder %s25, %s26
    %p40 = scmp.eq.s32.totalorder %s18, 1
    %p41 = por %p39, %p40
    %p43 = scmp.ne.s32.totalorder %s26, %s42
    %p44 = scmp.eq.s32.totalorder %s18, 0
    %p45 = por %p43, %p44
    %s47 = sadd.s32 %s46, 1
    %p50 = scmp.eq.s32.totalorder %s12, 1
    %p51 = scmp.ne.s32.totalorder %s46, %s48
    %p52 = scmp.eq.s32.totalorder %s12, 0
    %p53 = por %p51, %p52
    %p54 = scmp.ne.s32.totalorder %s46, %s48
    %p55 = scmp.eq.s32.totalorder %s17, 1
    %p56 = por %p54, %p55
    %p57 = scmp.ne.s32.totalorder %s48, %s49
    %p58 = scmp.eq.s32.totalorder %s17, 0
    %p59 = por %p57, %p58
    %p60 = scmp.ne.s32.totalorder %s48, %s49
    %p61 = scmp.eq.s32.totalorder %s18, 1
    %p62 = por %p60, %p61
    %p64 = scmp.ne.s32.totalorder %s49, %s63
    %p65 = scmp.eq.s32.totalorder %s18, 0
    %p66 = por %p64, %p65
    %s68 = sadd.s32 %s67, 1
    %p71 = scmp.eq.s32.totalorder %s12, 1
    %p72 = scmp.ne.s32.totalorder %s67, %s69
    %p73 = scmp.eq.s32.totalorder %s12, 0
    %p74 = por %p72, %p73
    %p75 = scmp.ne.s32.totalorder %s67, %s69
    %p76 = scmp.eq.s32.totalorder %s17, 1
    %p77 = por %p75, %p76
    %p78 = scmp.ne.s32.totalorder %s69, %s70
    %p79 = scmp.eq.s32.totalorder %s17, 0
    %p80 = por %p78, %p79
    %p81 = scmp.ne.s32.totalorder %s69, %s70
    %p82 = scmp.eq.s32.totalorder %s18, 1
    %p83 = por %p81, %p82
    %p85 = scmp.ne.s32.totalorder %s70, %s84
    %p86 = scmp.eq.s32.totalorder %s18, 0
    %p87 = por %p85, %p86
    %s89 = sadd.s32 %s88, 1
    %p92 = scmp.eq.s32.totalorder %s12, 1
    %p93 = scmp.ne.s32.totalorder %s88, %s90
    %p94 = scmp.eq.s32.totalorder %s12, 0
    %p95 = por %p93, %p94
    %p96 = scmp.ne.s32.totalorder %s88, %s90
    %p97 = scmp.eq.s32.totalorder %s17, 1
    %p98 = por %p96, %p97
    %p99 = scmp.ne.s32.totalorder %s90, %s91
    %p100 = scmp.eq.s32.totalorder %s17, 0
    %p101 = por %p99, %p100
    %p102 = scmp.ne.s32.totalorder %s90, %s91
    %p103 = scmp.eq.s32.totalorder %s18, 1
    %p104 = por %p102, %p103
    %p106 = scmp.ne.s32.totalorder %s91, %s105
    %p107 = scmp.eq.s32.totalorder %s18, 0
    %p108 = por %p106, %p107
    %s110 = sadd.s32 %s109, 1
    %p113 = scmp.eq.s32.totalorder %s12, 1
    %p114 = scmp.ne.s32.totalorder %s109, %s111
    %p115 = scmp.eq.s32.totalorder %s12, 0
    %p116 = por %p114, %p115
    %p117 = scmp.ne.s32.totalorder %s109, %s111
    %p118 = scmp.eq.s32.totalorder %s17, 1
    %p119 = por %p117, %p118
    %p120 = scmp.ne.s32.totalorder %s111, %s112
    %p121 = scmp.eq.s32.totalorder %s17, 0
    %p122 = por %p120, %p121
    %p123 = scmp.ne.s32.totalorder %s111, %s112
    %p124 = scmp.eq.s32.totalorder %s18, 1
    %p125 = por %p123, %p124
    %p127 = scmp.ne.s32.totalorder %s112, %s126
    %p128 = scmp.eq.s32.totalorder %s18, 0
    %p129 = por %p127, %p128
    %s131 = sadd.s32 %s130, 1
    %p134 = scmp.eq.s32.totalorder %s12, 1
    %p135 = scmp.ne.s32.totalorder %s130, %s132
    %p136 = scmp.eq.s32.totalorder %s12, 0
    %p137 = por %p135, %p136
    %p138 = scmp.ne.s32.totalorder %s130, %s132
    %p139 = scmp.eq.s32.totalorder %s17, 1
    %p140 = por %p138, %p139
    %p141 = scmp.ne.s32.totalorder %s132, %s133
    %p142 = scmp.eq.s32.totalorder %s17, 0
    %p143 = por %p141, %p142
    %p144 = scmp.ne.s32.totalorder %s132, %s133
    %p145 = scmp.eq.s32.totalorder %s18, 1
    %p146 = por %p144, %p145
    %p148 = scmp.ne.s32.totalorder %s133, %s147
    %p149 = scmp.eq.s32.totalorder %s18, 0
    %p150 = por %p148, %p149
    %s151 = ssub.s32 %s12, %s19
    %p152 = scmp.eq.s32.totalorder %s151, 0
    %s154 = sadd.s32 %s153, 1
    %s155 = scalar_select %p152, %s153, %s154
    %p158 = pneg %p152
    %p159 = scmp.eq.s32.totalorder %s12, 1
    %p160 = por %p158, %p159
    %p161 = scmp.ne.s32.totalorder %s153, %s156
    %p162 = scmp.eq.s32.totalorder %s12, 0
    %p163 = por %p161, %p162
    %p164 = scmp.ne.s32.totalorder %s153, %s156
    %p165 = scmp.eq.s32.totalorder %s17, 1
    %p166 = por %p164, %p165
    %p167 = scmp.ne.s32.totalorder %s156, %s157
    %p168 = scmp.eq.s32.totalorder %s17, 0
    %p169 = por %p167, %p168
    %p170 = scmp.ne.s32.totalorder %s156, %s157
    %p171 = scmp.eq.s32.totalorder %s18, 1
    %p172 = por %p170, %p171
    %p174 = scmp.ne.s32.totalorder %s157, %s173
    %p175 = scmp.eq.s32.totalorder %s18, 0
    %p176 = por %p174, %p175
    %p177 = scmp.le.s32.totalorder 1, %s12
    %p178 = scmp.lt.s32.totalorder %s12, 3
    %p179 = pnand %p177, %p178
    %p180 = pneg %p179
    // Predicated region
    $region9: #{generator_forward.2} parent=5 // pred_check
      _
    $region10: #{generator_forward.2} parent=5 // pred_check_branch
      %182 = sbr.rel (%p179) target = $region12
    $region11: #{generator_forward.2} parent=5 // pred_region
      %s183 = ssub.s32 %s12, 1
      // Predicated region
      $region13: #{generator_forward.2} parent=11 // pred_check
        %p184 = pneg %p59
      $region14: #{generator_forward.2} parent=11 // pred_check_branch
        %186 = sbr.rel (%p184) target = $region16
      $region15: #{generator_forward.2} parent=11 // pred_region
        _
      $region16: #{generator_forward.2} parent=11 // pred_fallthru
        _
      // Predicated region
      $region17: #{generator_forward.2} parent=11 // pred_check
        %p187 = pneg %p80
      $region18: #{generator_forward.2} parent=11 // pred_check_branch
        %189 = sbr.rel (%p187) target = $region20
      $region19: #{generator_forward.2} parent=11 // pred_region
        _
      $region20: #{generator_forward.2} parent=11 // pred_fallthru
        _
      // Predicated region
      $region21: #{generator_forward.2} parent=11 // pred_check
        %p190 = pneg %p101
      $region22: #{generator_forward.2} parent=11 // pred_check_branch
        %192 = sbr.rel (%p190) target = $region24
      $region23: #{generator_forward.2} parent=11 // pred_region
        _
      $region24: #{generator_forward.2} parent=11 // pred_fallthru
        _
      // Predicated region
      $region25: #{generator_forward.2} parent=11 // pred_check
        %p193 = pneg %p122
      $region26: #{generator_forward.2} parent=11 // pred_check_branch
        %195 = sbr.rel (%p193) target = $region28
      $region27: #{generator_forward.2} parent=11 // pred_region
        _
      $region28: #{generator_forward.2} parent=11 // pred_fallthru
        _
      // Predicated region
      $region29: #{generator_forward.2} parent=11 // pred_check
        %p196 = pneg %p143
      $region30: #{generator_forward.2} parent=11 // pred_check_branch
        %198 = sbr.rel (%p196) target = $region32
      $region31: #{generator_forward.2} parent=11 // pred_region
        _
      $region32: #{generator_forward.2} parent=11 // pred_fallthru
        _
    $region12: #{generator_forward.2} parent=5 // pred_fallthru
      _
    %p199 = scmp.lt.s32.totalorder %s12, 2
    // Predicated region
    $region33: #{generator_forward.2} parent=5 // pred_check
      %p200 = pneg %p199
    $region34: #{generator_forward.2} parent=5 // pred_check_branch
      %202 = sbr.rel (%p200) target = $region36
    $region35: #{generator_forward.2} parent=5 // pred_region
      // Predicated region
      $region37: #{generator_forward.2} parent=35 // pred_check
        %p203 = pneg %p32
      $region38: #{generator_forward.2} parent=35 // pred_check_branch
        %205 = sbr.rel (%p203) target = $region40
      $region39: #{generator_forward.2} parent=35 // pred_region
        %p206 = scmp.lt.s32.totalorder %s12, 1
        %s207 = scalar_select %p206, %s12, 1
        %s208 = smul.addr %s207, 52
        %s209 = smul.addr %s208, 4
        %s210 = scalar_lea.vmem %s0, %s209
      $region40: #{generator_forward.2} parent=35 // pred_fallthru
        _
    $region36: #{generator_forward.2} parent=5 // pred_fallthru
      _
    %p211 = scmp.le.s32.totalorder 1, %s12
    %p212 = scmp.lt.s32.totalorder %s12, 3
    %p213 = pnand %p211, %p212
    %p214 = pneg %p213
    // Predicated region
    $region41: #{generator_forward.2} parent=5 // pred_check
      _
    $region42: #{generator_forward.2} parent=5 // pred_check_branch
      %216 = sbr.rel (%p213) target = $region44
    $region43: #{generator_forward.2} parent=5 // pred_region
      %s217 = ssub.s32 %s12, 1
      %p218 = scmp.lt.s32.totalorder %s17, 1
      %s219 = scalar_select %p218, %s17, 1
      %s220 = smul.addr %s219, 52
      %s221 = smul.addr %s220, 4
      %s222 = scalar_lea.vmem %s0, %s221
      %p223 = pneg %p38
      %p224 = pneg %p35
      %p225 = pneg %p59
      %p226 = pneg %p56
      %p227 = pneg %p80
      %p228 = pneg %p77
      %p229 = pneg %p101
      %p230 = pneg %p98
      %p231 = pneg %p122
      %p232 = pneg %p119
      %p233 = pneg %p143
      %p234 = pneg %p140
      %p235 = pneg %p169
      %p236 = pneg %p166
      %p237 = scmp.lt.s32.totalorder %s17, 1
      %s238 = scalar_select %p237, %s17, 1
      %s239 = smul.addr %s238, 24
      %s240 = smul.addr %s239, 4
      %s241 = scalar_lea.vmem %s6, %s240
      %p242 = scmp.lt.s32.totalorder %s17, 1
      %s243 = scalar_select %p242, %s17, 1
      %s244 = smul.addr %s243, 52
      %s245 = smul.addr %s244, 4
      %s246 = scalar_lea.vmem %s0, %s245
      %p247 = scmp.lt.s32.totalorder %s17, 1
      %s248 = scalar_select %p247, %s17, 1
      %s249 = smul.addr %s248, 24
      %s250 = smul.addr %s249, 4
      %s251 = scalar_lea.vmem %s6, %s250
      %v253 = vld [vmem:[%s246] sm:$0xf]
      %v254 = vld [vmem:[%s246 + $0x4] sm:$0xf]
      %v255 = vld [vmem:[%s246 + $0x8] sm:$0xf]
      %v256 = vld [vmem:[%s246 + $0xc] sm:$0xf]
      %v257 = vld [vmem:[%s246 + $0x10] sm:$0xf]
      %v258 = vld [vmem:[%s246 + $0x14] sm:$0xf]
      %v259 = vld [vmem:[%s246 + $0x18] sm:$0xf]
      %v260 = vld [vmem:[%s246 + $0x1c] sm:$0xf]
      %v261 = vld [vmem:[%s246 + $0x20] sm:$0xf]
      %v262 = vld [vmem:[%s246 + $0x24] sm:$0xf]
      %v263 = vld [vmem:[%s246 + $0x28] sm:$0xf]
      %v264 = vld [vmem:[%s246 + $0x2c] sm:$0xf]
      %v265 = vld [vmem:[%s246 + $0x30] sm:$0xf]
      %v266 = vld [vmem:[%s246 + $0x34] sm:$0xf]
      %v267 = vld [vmem:[%s246 + $0x38] sm:$0xf]
      %v268 = vld [vmem:[%s246 + $0x3c] sm:$0xf]
      %v269 = vld [vmem:[%s246 + $0x40] sm:$0xf]
      %v270 = vld [vmem:[%s246 + $0x44] sm:$0xf]
      %v271 = vld [vmem:[%s246 + $0x48] sm:$0xf]
      %v272 = vld [vmem:[%s246 + $0x4c] sm:$0xf]
      %v273 = vld [vmem:[%s246 + $0x50] sm:$0xf]
      %v274 = vld [vmem:[%s246 + $0x54] sm:$0xf]
      %v275 = vld [vmem:[%s246 + $0x58] sm:$0xf]
      %v276 = vld [vmem:[%s246 + $0x5c] sm:$0xf]
      %v277 = vld [vmem:[%s246 + $0x60] sm:$0xf]
      %v278 = vld [vmem:[%s246 + $0x64] sm:$0xf]
      %v279 = vld [vmem:[%s246 + $0x68] sm:$0xf]
      %v280 = vld [vmem:[%s246 + $0x6c] sm:$0xf]
      %v281 = vld [vmem:[%s246 + $0x70] sm:$0xf]
      %v282 = vld [vmem:[%s246 + $0x74] sm:$0xf]
      %v283 = vld [vmem:[%s246 + $0x78] sm:$0xf]
      %v284 = vld [vmem:[%s246 + $0x7c] sm:$0xf]
      %v285 = vld [vmem:[%s246 + $0x80] sm:$0xf]
      %v286 = vld [vmem:[%s246 + $0x84] sm:$0xf]
      %v287 = vld [vmem:[%s246 + $0x88] sm:$0xf]
      %v288 = vld [vmem:[%s246 + $0x8c] sm:$0xf]
      %v289 = vld [vmem:[%s246 + $0x90] sm:$0xf]
      %v290 = vld [vmem:[%s246 + $0x94] sm:$0xf]
      %v291 = vld [vmem:[%s246 + $0x98] sm:$0xf]
      %v292 = vld [vmem:[%s246 + $0x9c] sm:$0xf]
      %v293 = vld [vmem:[%s246 + $0xa0] sm:$0xf]
      %v294 = vld [vmem:[%s246 + $0xa4] sm:$0xf]
      %v295 = vld [vmem:[%s246 + $0xa8] sm:$0xf]
      %v296 = vld [vmem:[%s246 + $0xac] sm:$0xf]
      %v297 = vld [vmem:[%s246 + $0xb0] sm:$0xf]
      %v298 = vld [vmem:[%s246 + $0xb4] sm:$0xf]
      %v299 = vld [vmem:[%s246 + $0xb8] sm:$0xf]
      %v300 = vld [vmem:[%s246 + $0xbc] sm:$0xf]
      %v301 = vld [vmem:[%s246 + $0xc0] sm:$0xf]
      %v302 = vld [vmem:[%s246 + $0xc4] sm:$0xf]
      %v303 = vld [vmem:[%s246 + $0xc8] sm:$0xf]
      %v304 = vld [vmem:[%s246 + $0xcc] sm:$0xf]
      %v305 = vld [vmem:[%s1] sm:$0xf]
      %v306 = vld [vmem:[%s1 + $0x4] sm:$0xf]
      %v307 = vld [vmem:[%s1 + $0x8] sm:$0xf]
      %v308 = vld [vmem:[%s1 + $0xc] sm:$0xf]
      %v309 = vld [vmem:[%s1 + $0x10] sm:$0x3]
      %v310 = vld [vmem:[%s2] sm:$0x1]
      %v312 = vlaneseq
      %v313 = vshrl.u32 %v312, 7
      %v314 = vsub.s32 0, %v313
      %v315 = vrot.slane %v310, %v314
      %v369 = vunpack.c.l.b16 %v253
      %v370 = vunpack.c.l.b16 %v254
      %v371 = vunpack.c.l.b16 %v255
      %v372 = vunpack.c.l.b16 %v256
      %v373 = vunpack.c.l.b16 %v257
      %v374 = vunpack.c.l.b16 %v258
      %v375 = vunpack.c.l.b16 %v259
      %v376 = vunpack.c.l.b16 %v260
      %v377 = vunpack.c.l.b16 %v261
      %v378 = vunpack.c.l.b16 %v262
      %v379 = vunpack.c.l.b16 %v263
      %v380 = vunpack.c.l.b16 %v264
      %v381 = vunpack.c.l.b16 %v265
      %v382 = vunpack.c.l.b16 %v266
      %v383 = vunpack.c.l.b16 %v267
      %v384 = vunpack.c.l.b16 %v268
      %v385 = vunpack.c.l.b16 %v269
      %v386 = vunpack.c.l.b16 %v270
      %v387 = vunpack.c.l.b16 %v271
      %v388 = vunpack.c.l.b16 %v272
      %v389 = vunpack.c.l.b16 %v273
      %v390 = vunpack.c.l.b16 %v274
      %v391 = vunpack.c.l.b16 %v275
      %v392 = vunpack.c.l.b16 %v276
      %v393 = vunpack.c.l.b16 %v277
      %v394 = vunpack.c.l.b16 %v278
      %v395 = vunpack.c.l.b16 %v279
      %v396 = vunpack.c.l.b16 %v280
      %v397 = vunpack.c.l.b16 %v281
      %v398 = vunpack.c.l.b16 %v282
      %v399 = vunpack.c.l.b16 %v283
      %v400 = vunpack.c.l.b16 %v284
      %v401 = vunpack.c.l.b16 %v285
      %v402 = vunpack.c.l.b16 %v286
      %v403 = vunpack.c.l.b16 %v287
      %v404 = vunpack.c.l.b16 %v288
      %v405 = vunpack.c.l.b16 %v289
      %v406 = vunpack.c.l.b16 %v290
      %v407 = vunpack.c.l.b16 %v291
      %v408 = vunpack.c.l.b16 %v292
      %v409 = vunpack.c.l.b16 %v293
      %v410 = vunpack.c.l.b16 %v294
      %v411 = vunpack.c.l.b16 %v295
      %v412 = vunpack.c.l.b16 %v296
      %v413 = vunpack.c.l.b16 %v297
      %v414 = vunpack.c.l.b16 %v298
      %v415 = vunpack.c.l.b16 %v299
      %v416 = vunpack.c.l.b16 %v300
      %v417 = vunpack.c.l.b16 %v301
      %v418 = vunpack.c.l.b16 %v302
      %v419 = vunpack.c.l.b16 %v303
      %v420 = vunpack.c.l.b16 %v304
      %v421 = vpack.c.b16 %v370, %v369
      %v422 = vpack.c.b16 %v372, %v371
      %v423 = vpack.c.b16 %v374, %v373
      %v424 = vpack.c.b16 %v376, %v375
      %v425 = vpack.c.b16 %v378, %v377
      %v426 = vpack.c.b16 %v380, %v379
      %v427 = vpack.c.b16 %v382, %v381
      %v428 = vpack.c.b16 %v384, %v383
      %v429 = vpack.c.b16 %v386, %v385
      %v430 = vpack.c.b16 %v388, %v387
      %v431 = vpack.c.b16 %v390, %v389
      %v432 = vpack.c.b16 %v392, %v391
      %v433 = vpack.c.b16 %v394, %v393
      %v434 = vpack.c.b16 %v396, %v395
      %v435 = vpack.c.b16 %v398, %v397
      %v436 = vpack.c.b16 %v400, %v399
      %v437 = vpack.c.b16 %v402, %v401
      %v438 = vpack.c.b16 %v404, %v403
      %v439 = vpack.c.b16 %v406, %v405
      %v440 = vpack.c.b16 %v408, %v407
      %v441 = vpack.c.b16 %v410, %v409
      %v442 = vpack.c.b16 %v412, %v411
      %v443 = vpack.c.b16 %v414, %v413
      %v444 = vpack.c.b16 %v416, %v415
      %v445 = vpack.c.b16 %v418, %v417
      %v446 = vpack.c.b16 %v420, %v419
      %v452 = vunpack.c.l.b16 %v305
      %v453 = vunpack.c.l.b16 %v306
      %v454 = vunpack.c.l.b16 %v307
      %v455 = vunpack.c.l.b16 %v308
      %v456 = vunpack.c.l.b16 %v309
      %v457 = vpack.c.b16 %v453, %v452
      %v458 = vpack.c.b16 %v455, %v454
      %v459 = vpack.c.b16 %v456, %v456
      %vm462 = vcmask 293888
      %v464 = vsel %vm462, %v421, 0
      %v467 = vsel %vm462, %v422, 0
      %v470 = vsel %vm462, %v423, 0
      %v473 = vsel %vm462, %v424, 0
      %v476 = vsel %vm462, %v425, 0
      %v479 = vsel %vm462, %v426, 0
      %v482 = vsel %vm462, %v427, 0
      %v485 = vsel %vm462, %v428, 0
      %v488 = vsel %vm462, %v429, 0
      %v491 = vsel %vm462, %v430, 0
      %v494 = vsel %vm462, %v431, 0
      %v497 = vsel %vm462, %v432, 0
      %v500 = vsel %vm462, %v433, 0
      %v503 = vsel %vm462, %v434, 0
      %v506 = vsel %vm462, %v435, 0
      %v509 = vsel %vm462, %v436, 0
      %v512 = vsel %vm462, %v437, 0
      %v515 = vsel %vm462, %v438, 0
      %v518 = vsel %vm462, %v439, 0
      %v521 = vsel %vm462, %v440, 0
      %v524 = vsel %vm462, %v441, 0
      %v527 = vsel %vm462, %v442, 0
      %v530 = vsel %vm462, %v443, 0
      %v533 = vsel %vm462, %v444, 0
      %v536 = vsel %vm462, %v445, 0
      %v539 = vsel %vm462, %v446, 0
      %vm541 = vcmask 1041408
      %v543 = vsel %vm541, %v459, 0
      %545 = vmatprep.subr.bf16.mxu0 0
      %546 = vmatpush1.bf16.msra.mxu0 %v457
      %547 = vmatprep.subr.bf16.mxu0 0
      %548 = vmatpush1.bf16.msra.mxu0 %v458
      %549 = vmatprep.subr.bf16.mxu0 0
      %550 = vmatpush1.bf16.msra.mxu0 %v543
      %551 = vmatprep.subr.bf16.mxu0 0
      %552 = vmatpush1.bf16.msra.mxu0 0
      %553 = vmatprep.subr.bf16.mxu0 0
      %554 = vmatpush1.bf16.msra.mxu0 0
      %555 = vmatprep.subr.bf16.mxu0 0
      %556 = vmatpush1.bf16.msra.mxu0 0
      %557 = vmatprep.subr.bf16.mxu0 0
      %558 = vmatpush1.bf16.msra.mxu0 0
      %559 = vmatprep.subr.bf16.mxu0 0
      %560 = vmatpush1.bf16.msra.mxu0 0
      %561 = vmatprep.subr.bf16.mxu0 0
      %562 = vmatpush1.bf16.msra.mxu0 0
      %563 = vmatprep.subr.bf16.mxu0 0
      %564 = vmatpush1.bf16.msra.mxu0 0
      %565 = vmatprep.subr.bf16.mxu0 0
      %566 = vmatpush1.bf16.msra.mxu0 0
      %567 = vmatprep.subr.bf16.mxu0 0
      %568 = vmatpush1.bf16.msra.mxu0 0
      %569 = vmatprep.subr.bf16.mxu0 0
      %570 = vmatpush1.bf16.msra.mxu0 0
      %571 = vmatprep.subr.bf16.mxu0 0
      %572 = vmatpush1.bf16.msra.mxu0 0
      %573 = vmatprep.subr.bf16.mxu0 0
      %574 = vmatpush1.bf16.msra.mxu0 0
      %575 = vmatprep.subr.bf16.mxu0 0
      %576 = vmatpush1.bf16.msra.mxu0 0
      %577 = vmatprep.mubr.bf16.mxu0 0
      %578 = vmatmul.mubr.bf16.gmra.mrb[0].mxu0 %v464
      %v579 = vpop.f32.mrb[0].mxu0
      %v580 = vadd.f32 %v315, %v579
      %v581 = vpop.f32.mrb[0].mxu0
      %v582 = vpop.f32.mrb[0].mxu0
      %v583 = vadd.f32 %v315, %v582
      %v584 = vpop.f32.mrb[0].mxu0
      %585 = vmatprep.mubr.bf16.mxu0 0
      %586 = vmatmul.mubr.bf16.gmra.mrb[0].mxu0 %v467
      %v587 = vpop.f32.mrb[0].mxu0
      %v588 = vadd.f32 %v315, %v587
      %v589 = vpop.f32.mrb[0].mxu0
      %v590 = vpop.f32.mrb[0].mxu0
      %v591 = vadd.f32 %v315, %v590
      %v592 = vpop.f32.mrb[0].mxu0
      %593 = vmatprep.mubr.bf16.mxu0 0
      %594 = vmatmul.mubr.bf16.gmra.mrb[0].mxu0 %v470
      %v595 = vpop.f32.mrb[0].mxu0
      %v596 = vadd.f32 %v315, %v595
      %v597 = vpop.f32.mrb[0].mxu0
      %v598 = vpop.f32.mrb[0].mxu0
      %v599 = vadd.f32 %v315, %v598
      %v600 = vpop.f32.mrb[0].mxu0
      %601 = vmatprep.mubr.bf16.mxu0 0
      %602 = vmatmul.mubr.bf16.gmra.mrb[0].mxu0 %v473
      %v603 = vpop.f32.mrb[0].mxu0
      %v604 = vadd.f32 %v315, %v603
      %v605 = vpop.f32.mrb[0].mxu0
      %v606 = vpop.f32.mrb[0].mxu0
      %v607 = vadd.f32 %v315, %v606
      %v608 = vpop.f32.mrb[0].mxu0
      %609 = vmatprep.mubr.bf16.mxu0 0
      %610 = vmatmul.mubr.bf16.gmra.mrb[0].mxu0 %v476
      %v611 = vpop.f32.mrb[0].mxu0
      %v612 = vadd.f32 %v315, %v611
      %v613 = vpop.f32.mrb[0].mxu0
      %v614 = vpop.f32.mrb[0].mxu0
      %v615 = vadd.f32 %v315, %v614
      %v616 = vpop.f32.mrb[0].mxu0
      %617 = vmatprep.mubr.bf16.mxu0 0
      %618 = vmatmul.mubr.bf16.gmra.mrb[0].mxu0 %v479
      %v619 = vpop.f32.mrb[0].mxu0
      %v620 = vadd.f32 %v315, %v619
      %v621 = vpop.f32.mrb[0].mxu0
      %v622 = vpop.f32.mrb[0].mxu0
      %v623 = vadd.f32 %v315, %v622
      %v624 = vpop.f32.mrb[0].mxu0
      %625 = vmatprep.mubr.bf16.mxu0 0
      %626 = vmatmul.mubr.bf16.gmra.mrb[0].mxu0 %v482
      %v627 = vpop.f32.mrb[0].mxu0
      %v628 = vadd.f32 %v315, %v627
      %v629 = vpop.f32.mrb[0].mxu0
      %v630 = vpop.f32.mrb[0].mxu0
      %v631 = vadd.f32 %v315, %v630
      %v632 = vpop.f32.mrb[0].mxu0
      %633 = vmatprep.mubr.bf16.mxu0 0
      %634 = vmatmul.mubr.bf16.gmra.mrb[0].mxu0 %v485
      %v635 = vpop.f32.mrb[0].mxu0
      %v636 = vadd.f32 %v315, %v635
      %v637 = vpop.f32.mrb[0].mxu0
      %v638 = vpop.f32.mrb[0].mxu0
      %v639 = vadd.f32 %v315, %v638
      %v640 = vpop.f32.mrb[0].mxu0
      %641 = vmatprep.mubr.bf16.mxu0 0
      %642 = vmatmul.mubr.bf16.gmra.mrb[0].mxu0 %v488
      %v643 = vpop.f32.mrb[0].mxu0
      %v644 = vadd.f32 %v315, %v643
      %v645 = vpop.f32.mrb[0].mxu0
      %v646 = vpop.f32.mrb[0].mxu0
      %v647 = vadd.f32 %v315, %v646
      %v648 = vpop.f32.mrb[0].mxu0
      %649 = vmatprep.mubr.bf16.mxu0 0
      %650 = vmatmul.mubr.bf16.gmra.mrb[0].mxu0 %v491
      %v651 = vpop.f32.mrb[0].mxu0
      %v652 = vadd.f32 %v315, %v651
      %v653 = vpop.f32.mrb[0].mxu0
      %v654 = vpop.f32.mrb[0].mxu0
      %v655 = vadd.f32 %v315, %v654
      %v656 = vpop.f32.mrb[0].mxu0
      %657 = vmatprep.mubr.bf16.mxu0 0
      %658 = vmatmul.mubr.bf16.gmra.mrb[0].mxu0 %v494
      %v659 = vpop.f32.mrb[0].mxu0
      %v660 = vadd.f32 %v315, %v659
      %v661 = vpop.f32.mrb[0].mxu0
      %v662 = vpop.f32.mrb[0].mxu0
      %v663 = vadd.f32 %v315, %v662
      %v664 = vpop.f32.mrb[0].mxu0
      %665 = vmatprep.mubr.bf16.mxu0 0
      %666 = vmatmul.mubr.bf16.gmra.mrb[0].mxu0 %v497
      %v667 = vpop.f32.mrb[0].mxu0
      %v668 = vadd.f32 %v315, %v667
      %v669 = vpop.f32.mrb[0].mxu0
      %v670 = vpop.f32.mrb[0].mxu0
      %v671 = vadd.f32 %v315, %v670
      %v672 = vpop.f32.mrb[0].mxu0
      %673 = vmatprep.mubr.bf16.mxu0 0
      %674 = vmatmul.mubr.bf16.gmra.mrb[0].mxu0 %v500
      %v675 = vpop.f32.mrb[0].mxu0
      %v676 = vadd.f32 %v315, %v675
      %v677 = vpop.f32.mrb[0].mxu0
      %v678 = vpop.f32.mrb[0].mxu0
      %v679 = vadd.f32 %v315, %v678
      %v680 = vpop.f32.mrb[0].mxu0
      %681 = vmatprep.mubr.bf16.mxu0 0
      %682 = vmatmul.mubr.bf16.gmra.mrb[0].mxu0 %v503
      %v683 = vpop.f32.mrb[0].mxu0
      %v684 = vadd.f32 %v315, %v683
      %v685 = vpop.f32.mrb[0].mxu0
      %v686 = vpop.f32.mrb[0].mxu0
      %v687 = vadd.f32 %v315, %v686
      %v688 = vpop.f32.mrb[0].mxu0
      %689 = vmatprep.mubr.bf16.mxu0 0
      %690 = vmatmul.mubr.bf16.gmra.mrb[0].mxu0 %v506
      %v691 = vpop.f32.mrb[0].mxu0
      %v692 = vadd.f32 %v315, %v691
      %v693 = vpop.f32.mrb[0].mxu0
      %v694 = vpop.f32.mrb[0].mxu0
      %v695 = vadd.f32 %v315, %v694
      %v696 = vpop.f32.mrb[0].mxu0
      %697 = vmatprep.mubr.bf16.mxu0 0
      %698 = vmatmul.mubr.bf16.gmra.mrb[0].mxu0 %v509
      %v699 = vpop.f32.mrb[0].mxu0
      %v700 = vadd.f32 %v315, %v699
      %v701 = vpop.f32.mrb[0].mxu0
      %v702 = vpop.f32.mrb[0].mxu0
      %v703 = vadd.f32 %v315, %v702
      %v704 = vpop.f32.mrb[0].mxu0
      %705 = vmatprep.mubr.bf16.mxu0 0
      %706 = vmatmul.mubr.bf16.gmra.mrb[0].mxu0 %v512
      %v707 = vpop.f32.mrb[0].mxu0
      %v708 = vadd.f32 %v315, %v707
      %v709 = vpop.f32.mrb[0].mxu0
      %v710 = vpop.f32.mrb[0].mxu0
      %v711 = vadd.f32 %v315, %v710
      %v712 = vpop.f32.mrb[0].mxu0
      %713 = vmatprep.mubr.bf16.mxu0 0
      %714 = vmatmul.mubr.bf16.gmra.mrb[0].mxu0 %v515
      %v715 = vpop.f32.mrb[0].mxu0
      %v716 = vadd.f32 %v315, %v715
      %v717 = vpop.f32.mrb[0].mxu0
      %v718 = vpop.f32.mrb[0].mxu0
      %v719 = vadd.f32 %v315, %v718
      %v720 = vpop.f32.mrb[0].mxu0
      %721 = vmatprep.mubr.bf16.mxu0 0
      %722 = vmatmul.mubr.bf16.gmra.mrb[0].mxu0 %v518
      %v723 = vpop.f32.mrb[0].mxu0
      %v724 = vadd.f32 %v315, %v723
      %v725 = vpop.f32.mrb[0].mxu0
      %v726 = vpop.f32.mrb[0].mxu0
      %v727 = vadd.f32 %v315, %v726
      %v728 = vpop.f32.mrb[0].mxu0
      %729 = vmatprep.mubr.bf16.mxu0 0
      %730 = vmatmul.mubr.bf16.gmra.mrb[0].mxu0 %v521
      %v731 = vpop.f32.mrb[0].mxu0
      %v732 = vadd.f32 %v315, %v731
      %v733 = vpop.f32.mrb[0].mxu0
      %v734 = vpop.f32.mrb[0].mxu0
      %v735 = vadd.f32 %v315, %v734
      %v736 = vpop.f32.mrb[0].mxu0
      %737 = vmatprep.mubr.bf16.mxu0 0
      %738 = vmatmul.mubr.bf16.gmra.mrb[0].mxu0 %v524
      %v739 = vpop.f32.mrb[0].mxu0
      %v740 = vadd.f32 %v315, %v739
      %v741 = vpop.f32.mrb[0].mxu0
      %v742 = vpop.f32.mrb[0].mxu0
      %v743 = vadd.f32 %v315, %v742
      %v744 = vpop.f32.mrb[0].mxu0
      %745 = vmatprep.mubr.bf16.mxu0 0
      %746 = vmatmul.mubr.bf16.gmra.mrb[0].mxu0 %v527
      %v747 = vpop.f32.mrb[0].mxu0
      %v748 = vadd.f32 %v315, %v747
      %v749 = vpop.f32.mrb[0].mxu0
      %v750 = vpop.f32.mrb[0].mxu0
      %v751 = vadd.f32 %v315, %v750
      %v752 = vpop.f32.mrb[0].mxu0
      %753 = vmatprep.mubr.bf16.mxu0 0
      %754 = vmatmul.mubr.bf16.gmra.mrb[0].mxu0 %v530
      %v755 = vpop.f32.mrb[0].mxu0
      %v756 = vadd.f32 %v315, %v755
      %v757 = vpop.f32.mrb[0].mxu0
      %v758 = vpop.f32.mrb[0].mxu0
      %v759 = vadd.f32 %v315, %v758
      %v760 = vpop.f32.mrb[0].mxu0
      %761 = vmatprep.mubr.bf16.mxu0 0
      %762 = vmatmul.mubr.bf16.gmra.mrb[0].mxu0 %v533
      %v763 = vpop.f32.mrb[0].mxu0
      %v764 = vadd.f32 %v315, %v763
      %v765 = vpop.f32.mrb[0].mxu0
      %v766 = vpop.f32.mrb[0].mxu0
      %v767 = vadd.f32 %v315, %v766
      %v768 = vpop.f32.mrb[0].mxu0
      %769 = vmatprep.mubr.bf16.mxu0 0
      %770 = vmatmul.mubr.bf16.gmra.mrb[0].mxu0 %v536
      %v771 = vpop.f32.mrb[0].mxu0
      %v772 = vadd.f32 %v315, %v771
      %v773 = vpop.f32.mrb[0].mxu0
      %v774 = vpop.f32.mrb[0].mxu0
      %v775 = vadd.f32 %v315, %v774
      %v776 = vpop.f32.mrb[0].mxu0
      %777 = vmatprep.mubr.bf16.mxu0 0
      %778 = vmatmul.mubr.bf16.gmra.mrb[0].mxu0 %v539
      %v779 = vpop.f32.mrb[0].mxu0
      %v780 = vadd.f32 %v315, %v779
      %v781 = vpop.f32.mrb[0].mxu0
      %v782 = vpop.f32.mrb[0].mxu0
      %v783 = vadd.f32 %v315, %v782
      %v784 = vpop.f32.mrb[0].mxu0
      %785 = vdwg.mxu0
      %v786 = vmax.f32 %v580, 0.0
      %v787 = vmax.f32 %v583, 0.0
      %v788 = vmax.f32 %v588, 0.0
      %v789 = vmax.f32 %v591, 0.0
      %v790 = vmax.f32 %v596, 0.0
      %v791 = vmax.f32 %v599, 0.0
      %v792 = vmax.f32 %v604, 0.0
      %v793 = vmax.f32 %v607, 0.0
      %v794 = vmax.f32 %v612, 0.0
      %v795 = vmax.f32 %v615, 0.0
      %v796 = vmax.f32 %v620, 0.0
      %v797 = vmax.f32 %v623, 0.0
      %v798 = vmax.f32 %v628, 0.0
      %v799 = vmax.f32 %v631, 0.0
      %v800 = vmax.f32 %v636, 0.0
      %v801 = vmax.f32 %v639, 0.0
      %v802 = vmax.f32 %v644, 0.0
      %v803 = vmax.f32 %v647, 0.0
      %v804 = vmax.f32 %v652, 0.0
      %v805 = vmax.f32 %v655, 0.0
      %v806 = vmax.f32 %v660, 0.0
      %v807 = vmax.f32 %v663, 0.0
      %v808 = vmax.f32 %v668, 0.0
      %v809 = vmax.f32 %v671, 0.0
      %v810 = vmax.f32 %v676, 0.0
      %v811 = vmax.f32 %v679, 0.0
      %v812 = vmax.f32 %v684, 0.0
      %v813 = vmax.f32 %v687, 0.0
      %v814 = vmax.f32 %v692, 0.0
      %v815 = vmax.f32 %v695, 0.0
      %v816 = vmax.f32 %v700, 0.0
      %v817 = vmax.f32 %v703, 0.0
      %v818 = vmax.f32 %v708, 0.0
      %v819 = vmax.f32 %v711, 0.0
      %v820 = vmax.f32 %v716, 0.0
      %v821 = vmax.f32 %v719, 0.0
      %v822 = vmax.f32 %v724, 0.0
      %v823 = vmax.f32 %v727, 0.0
      %v824 = vmax.f32 %v732, 0.0
      %v825 = vmax.f32 %v735, 0.0
      %v826 = vmax.f32 %v740, 0.0
      %v827 = vmax.f32 %v743, 0.0
      %v828 = vmax.f32 %v748, 0.0
      %v829 = vmax.f32 %v751, 0.0
      %v830 = vmax.f32 %v756, 0.0
      %v831 = vmax.f32 %v759, 0.0
      %v832 = vmax.f32 %v764, 0.0
      %v833 = vmax.f32 %v767, 0.0
      %v834 = vmax.f32 %v772, 0.0
      %v835 = vmax.f32 %v775, 0.0
      %v836 = vmax.f32 %v780, 0.0
      %v837 = vmax.f32 %v783, 0.0
      %v838 = vpack.c.bf16 %v787, %v786
      %v839 = vpack.c.bf16 %v789, %v788
      %v840 = vpack.c.bf16 %v791, %v790
      %v841 = vpack.c.bf16 %v793, %v792
      %v842 = vpack.c.bf16 %v795, %v794
      %v843 = vpack.c.bf16 %v797, %v796
      %v844 = vpack.c.bf16 %v799, %v798
      %v845 = vpack.c.bf16 %v801, %v800
      %v846 = vpack.c.bf16 %v803, %v802
      %v847 = vpack.c.bf16 %v805, %v804
      %v848 = vpack.c.bf16 %v807, %v806
      %v849 = vpack.c.bf16 %v809, %v808
      %v850 = vpack.c.bf16 %v811, %v810
      %v851 = vpack.c.bf16 %v813, %v812
      %v852 = vpack.c.bf16 %v815, %v814
      %v853 = vpack.c.bf16 %v817, %v816
      %v854 = vpack.c.bf16 %v819, %v818
      %v855 = vpack.c.bf16 %v821, %v820
      %v856 = vpack.c.bf16 %v823, %v822
      %v857 = vpack.c.bf16 %v825, %v824
      %v858 = vpack.c.bf16 %v827, %v826
      %v859 = vpack.c.bf16 %v829, %v828
      %v860 = vpack.c.bf16 %v831, %v830
      %v861 = vpack.c.bf16 %v833, %v832
      %v862 = vpack.c.bf16 %v835, %v834
      %v863 = vpack.c.bf16 %v837, %v836
      %864 = vst [vmem:[#allocation2] sm:$0xff] %v838
      %865 = vst [vmem:[#allocation2 + $0x8] sm:$0xff] %v839
      %866 = vst [vmem:[#allocation2 + $0x10] sm:$0xff] %v840
      %867 = vst [vmem:[#allocation2 + $0x18] sm:$0xff] %v841
      %868 = vst [vmem:[#allocation2 + $0x20] sm:$0xff] %v842
      %869 = vst [vmem:[#allocation2 + $0x28] sm:$0xff] %v843
      %870 = vst [vmem:[#allocation2 + $0x30] sm:$0xff] %v844
      %871 = vst [vmem:[#allocation2 + $0x38] sm:$0xff] %v845
      %872 = vst [vmem:[#allocation2 + $0x40] sm:$0xff] %v846
      %873 = vst [vmem:[#allocation2 + $0x48] sm:$0xff] %v847
      %874 = vst [vmem:[#allocation2 + $0x50] sm:$0xff] %v848
      %875 = vst [vmem:[#allocation2 + $0x58] sm:$0xff] %v849
      %876 = vst [vmem:[#allocation2 + $0x60] sm:$0xff] %v850
      %877 = vst [vmem:[#allocation2 + $0x68] sm:$0xff] %v851
      %878 = vst [vmem:[#allocation2 + $0x70] sm:$0xff] %v852
      %879 = vst [vmem:[#allocation2 + $0x78] sm:$0xff] %v853
      %880 = vst [vmem:[#allocation2 + $0x80] sm:$0xff] %v854
      %881 = vst [vmem:[#allocation2 + $0x88] sm:$0xff] %v855
      %882 = vst [vmem:[#allocation2 + $0x90] sm:$0xff] %v856
      %883 = vst [vmem:[#allocation2 + $0x98] sm:$0xff] %v857
      %884 = vst [vmem:[#allocation2 + $0xa0] sm:$0xff] %v858
      %885 = vst [vmem:[#allocation2 + $0xa8] sm:$0xff] %v859
      %886 = vst [vmem:[#allocation2 + $0xb0] sm:$0xff] %v860
      %887 = vst [vmem:[#allocation2 + $0xb8] sm:$0xff] %v861
      %888 = vst [vmem:[#allocation2 + $0xc0] sm:$0xff] %v862
      %889 = vst [vmem:[#allocation2 + $0xc8] sm:$0xff] %v863
      %v890 = vld [vmem:[#allocation2] sm:$0xff]
      %v891 = vld [vmem:[#allocation2 + $0x8] sm:$0xff]
      %v892 = vld [vmem:[#allocation2 + $0x10] sm:$0xff]
      %v893 = vld [vmem:[#allocation2 + $0x18] sm:$0xff]
      %v894 = vld [vmem:[#allocation2 + $0x20] sm:$0xff]
      %v895 = vld [vmem:[#allocation2 + $0x28] sm:$0xff]
      %v896 = vld [vmem:[#allocation2 + $0x30] sm:$0xff]
      %v897 = vld [vmem:[#allocation2 + $0x38] sm:$0xff]
      %v898 = vld [vmem:[#allocation2 + $0x40] sm:$0xff]
      %v899 = vld [vmem:[#allocation2 + $0x48] sm:$0xff]
      %v900 = vld [vmem:[#allocation2 + $0x50] sm:$0xff]
      %v901 = vld [vmem:[#allocation2 + $0x58] sm:$0xff]
      %v902 = vld [vmem:[#allocation2 + $0x60] sm:$0xff]
      %v903 = vld [vmem:[#allocation2 + $0x68] sm:$0xff]
      %v904 = vld [vmem:[#allocation2 + $0x70] sm:$0xff]
      %v905 = vld [vmem:[#allocation2 + $0x78] sm:$0xff]
      %v906 = vld [vmem:[#allocation2 + $0x80] sm:$0xff]
      %v907 = vld [vmem:[#allocation2 + $0x88] sm:$0xff]
      %v908 = vld [vmem:[#allocation2 + $0x90] sm:$0xff]
      %v909 = vld [vmem:[#allocation2 + $0x98] sm:$0xff]
      %v910 = vld [vmem:[#allocation2 + $0xa0] sm:$0xff]
      %v911 = vld [vmem:[#allocation2 + $0xa8] sm:$0xff]
      %v912 = vld [vmem:[#allocation2 + $0xb0] sm:$0xff]
      %v913 = vld [vmem:[#allocation2 + $0xb8] sm:$0xff]
      %v914 = vld [vmem:[%s3] sm:$0xf]
      %v915 = vld [vmem:[%s3 + $0x4] sm:$0xf]
      %v916 = vld [vmem:[%s3 + $0x8] sm:$0xf]
      %v917 = vld [vmem:[%s3 + $0xc] sm:$0xf]
      %v918 = vld [vmem:[%s3 + $0x10] sm:$0xf]
      %v919 = vld [vmem:[%s3 + $0x14] sm:$0xf]
      %v920 = vld [vmem:[%s3 + $0x18] sm:$0xf]
      %v921 = vld [vmem:[%s3 + $0x1c] sm:$0xf]
      %v922 = vld [vmem:[%s3 + $0x20] sm:$0xf]
      %v923 = vld [vmem:[%s3 + $0x24] sm:$0xf]
      %v924 = vld [vmem:[%s3 + $0x28] sm:$0xf]
      %v925 = vld [vmem:[%s3 + $0x2c] sm:$0xf]
      %v926 = vld [vmem:[%s3 + $0x30] sm:$0xf]
      %v927 = vld [vmem:[%s3 + $0x34] sm:$0xf]
      %v928 = vld [vmem:[%s3 + $0x38] sm:$0xf]
      %v929 = vld [vmem:[%s3 + $0x3c] sm:$0xf]
      %v930 = vld [vmem:[#allocation2 + $0xc0] sm:$0xff]
      %s931 = scalar_lea.vmem %s3, 64
      %v932 = vld [vmem:[%s931] sm:$0xf]
      %v933 = vld [vmem:[%s931 + $0x4] sm:$0xf]
      %v934 = vld [vmem:[%s931 + $0x8] sm:$0xf]
      %v935 = vld [vmem:[%s931 + $0xc] sm:$0xf]
      %v936 = vld [vmem:[%s931 + $0x10] sm:$0xf]
      %v937 = vld [vmem:[%s931 + $0x14] sm:$0xf]
      %v938 = vld [vmem:[%s931 + $0x18] sm:$0xf]
      %v939 = vld [vmem:[%s931 + $0x1c] sm:$0xf]
      %v940 = vld [vmem:[%s931 + $0x20] sm:$0xf]
      %v941 = vld [vmem:[%s931 + $0x24] sm:$0xf]
      %v942 = vld [vmem:[%s931 + $0x28] sm:$0xf]
      %v943 = vld [vmem:[%s931 + $0x2c] sm:$0xf]
      %v944 = vld [vmem:[%s931 + $0x30] sm:$0xf]
      %v945 = vld [vmem:[%s931 + $0x34] sm:$0xf]
      %v946 = vld [vmem:[%s931 + $0x38] sm:$0xf]
      %v947 = vld [vmem:[%s931 + $0x3c] sm:$0xf]
      %v964 = vunpack.c.l.b16 %v932
      %v965 = vunpack.c.l.b16 %v933
      %v966 = vunpack.c.l.b16 %v934
      %v967 = vunpack.c.l.b16 %v935
      %v968 = vunpack.c.l.b16 %v936
      %v969 = vunpack.c.l.b16 %v937
      %v970 = vunpack.c.l.b16 %v938
      %v971 = vunpack.c.l.b16 %v939
      %v972 = vunpack.c.l.b16 %v940
      %v973 = vunpack.c.l.b16 %v941
      %v974 = vunpack.c.l.b16 %v942
      %v975 = vunpack.c.l.b16 %v943
      %v976 = vunpack.c.l.b16 %v944
      %v977 = vunpack.c.l.b16 %v945
      %v978 = vunpack.c.l.b16 %v946
      %v979 = vunpack.c.l.b16 %v947
      %v980 = vpack.c.b16 %v965, %v964
      %v981 = vpack.c.b16 %v967, %v966
      %v982 = vpack.c.b16 %v969, %v968
      %v983 = vpack.c.b16 %v971, %v970
      %v984 = vpack.c.b16 %v973, %v972
      %v985 = vpack.c.b16 %v975, %v974
      %v986 = vpack.c.b16 %v977, %v976
      %v987 = vpack.c.b16 %v979, %v978
      %996 = vmatprep.subr.bf16.mxu0 0
      %997 = vmatpush1.bf16.msra.mxu0 %v980
      %998 = vmatprep.subr.bf16.mxu0 0
      %999 = vmatpush1.bf16.msra.mxu0 %v981
      %1000 = vmatprep.subr.bf16.mxu0 0
      %1001 = vmatpush1.bf16.msra.mxu0 %v982
      %1002 = vmatprep.subr.bf16.mxu0 0
      %1003 = vmatpush1.bf16.msra.mxu0 %v983
      %1004 = vmatprep.subr.bf16.mxu0 0
      %1005 = vmatpush1.bf16.msra.mxu0 %v984
      %1006 = vmatprep.subr.bf16.mxu0 0
      %1007 = vmatpush1.bf16.msra.mxu0 %v985
      %1008 = vmatprep.subr.bf16.mxu0 0
      %1009 = vmatpush1.bf16.msra.mxu0 %v986
      %1010 = vmatprep.subr.bf16.mxu0 0
      %1011 = vmatpush1.bf16.msra.mxu0 %v987
      %1012 = vmatprep.subr.bf16.mxu0 0
      %1013 = vmatpush1.bf16.msra.mxu0 0
      %1014 = vmatprep.subr.bf16.mxu0 0
      %1015 = vmatpush1.bf16.msra.mxu0 0
      %1016 = vmatprep.subr.bf16.mxu0 0
      %1017 = vmatpush1.bf16.msra.mxu0 0
      %1018 = vmatprep.subr.bf16.mxu0 0
      %1019 = vmatpush1.bf16.msra.mxu0 0
      %1020 = vmatprep.subr.bf16.mxu0 0
      %1021 = vmatpush1.bf16.msra.mxu0 0
      %1022 = vmatprep.subr.bf16.mxu0 0
      %1023 = vmatpush1.bf16.msra.mxu0 0
      %1024 = vmatprep.subr.bf16.mxu0 0
      %1025 = vmatpush1.bf16.msra.mxu0 0
      %1026 = vmatprep.subr.bf16.mxu0 0
      %1027 = vmatpush1.bf16.msra.mxu0 0
      %1028 = vmatprep.mubr.bf16.mxu0 0
      %1029 = vmatmul.mubr.bf16.gmra.mrb[0].mxu0 %v891
      %v1030 = vpop.f32.mrb[0].mxu0
      %v1031 = vadd.f32 0.0, %v1030
      %v1032 = vpop.f32.mrb[0].mxu0
      %v1033 = vpop.f32.mrb[0].mxu0
      %v1034 = vadd.f32 0.0, %v1033
      %v1035 = vpop.f32.mrb[0].mxu0
      %1036 = vmatprep.mubr.bf16.mxu0 0
      %1037 = vmatmul.mubr.bf16.gmra.mrb[0].mxu0 %v892
      %v1038 = vpop.f32.mrb[0].mxu0
      %v1039 = vadd.f32 0.0, %v1038
      %v1040 = vpop.f32.mrb[0].mxu0
      %v1041 = vpop.f32.mrb[0].mxu0
      %v1042 = vadd.f32 0.0, %v1041
      %v1043 = vpop.f32.mrb[0].mxu0
      %1044 = vmatprep.mubr.bf16.mxu0 0
      %1045 = vmatmul.mubr.bf16.gmra.mrb[0].mxu0 %v893
      %v1046 = vpop.f32.mrb[0].mxu0
      %v1047 = vadd.f32 0.0, %v1046
      %v1048 = vpop.f32.mrb[0].mxu0
      %v1049 = vpop.f32.mrb[0].mxu0
      %v1050 = vadd.f32 0.0, %v1049
      %v1051 = vpop.f32.mrb[0].mxu0
      %1052 = vmatprep.mubr.bf16.mxu0 0
      %1053 = vmatmul.mubr.bf16.gmra.mrb[0].mxu0 %v894
      %v1054 = vpop.f32.mrb[0].mxu0
      %v1055 = vadd.f32 0.0, %v1054
      %v1056 = vpop.f32.mrb[0].mxu0
      %v1057 = vpop.f32.mrb[0].mxu0
      %v1058 = vadd.f32 0.0, %v1057
      %v1059 = vpop.f32.mrb[0].mxu0
      %1060 = vmatprep.mubr.bf16.mxu0 0
      %1061 = vmatmul.mubr.bf16.gmra.mrb[0].mxu0 %v895
      %v1062 = vpop.f32.mrb[0].mxu0
      %v1063 = vadd.f32 0.0, %v1062
      %v1064 = vpop.f32.mrb[0].mxu0
      %v1065 = vpop.f32.mrb[0].mxu0
      %v1066 = vadd.f32 0.0, %v1065
      %v1067 = vpop.f32.mrb[0].mxu0
      %1068 = vmatprep.mubr.bf16.mxu0 0
      %1069 = vmatmul.mubr.bf16.gmra.mrb[0].mxu0 %v896
      %v1070 = vpop.f32.mrb[0].mxu0
      %v1071 = vadd.f32 0.0, %v1070
      %v1072 = vpop.f32.mrb[0].mxu0
      %v1073 = vpop.f32.mrb[0].mxu0
      %v1074 = vadd.f32 0.0, %v1073
      %v1075 = vpop.f32.mrb[0].mxu0
      %1076 = vmatprep.mubr.bf16.mxu0 0
      %1077 = vmatmul.mubr.bf16.gmra.mrb[0].mxu0 %v897
      %v1078 = vpop.f32.mrb[0].mxu0
      %v1079 = vadd.f32 0.0, %v1078
      %v1080 = vpop.f32.mrb[0].mxu0
      %v1081 = vpop.f32.mrb[0].mxu0
      %v1082 = vadd.f32 0.0, %v1081
      %v1083 = vpop.f32.mrb[0].mxu0
      %1084 = vmatprep.mubr.bf16.mxu0 0
      %1085 = vmatmul.mubr.bf16.gmra.mrb[0].mxu0 %v898
      %v1086 = vpop.f32.mrb[0].mxu0
      %v1087 = vadd.f32 0.0, %v1086
      %v1088 = vpop.f32.mrb[0].mxu0
      %v1089 = vpop.f32.mrb[0].mxu0
      %v1090 = vadd.f32 0.0, %v1089
      %v1091 = vpop.f32.mrb[0].mxu0
      %1092 = vmatprep.mubr.bf16.mxu0 0
      %1093 = vmatmul.mubr.bf16.gmra.mrb[0].mxu0 %v899
      %v1094 = vpop.f32.mrb[0].mxu0
      %v1095 = vadd.f32 0.0, %v1094
      %v1096 = vpop.f32.mrb[0].mxu0
      %v1097 = vpop.f32.mrb[0].mxu0
      %v1098 = vadd.f32 0.0, %v1097
      %v1099 = vpop.f32.mrb[0].mxu0
      %1100 = vmatprep.mubr.bf16.mxu0 0
      %1101 = vmatmul.mubr.bf16.gmra.mrb[0].mxu0 %v900
      %v1102 = vpop.f32.mrb[0].mxu0
      %v1103 = vadd.f32 0.0, %v1102
      %v1104 = vpop.f32.mrb[0].mxu0
      %v1105 = vpop.f32.mrb[0].mxu0
      %v1106 = vadd.f32 0.0, %v1105
      %v1107 = vpop.f32.mrb[0].mxu0
      %1108 = vmatprep.mubr.bf16.mxu0 0
      %1109 = vmatmul.mubr.bf16.gmra.mrb[0].mxu0 %v901
      %v1110 = vpop.f32.mrb[0].mxu0
      %v1111 = vadd.f32 0.0, %v1110
      %v1112 = vpop.f32.mrb[0].mxu0
      %v1113 = vpop.f32.mrb[0].mxu0
      %v1114 = vadd.f32 0.0, %v1113
      %v1115 = vpop.f32.mrb[0].mxu0
      %1116 = vmatprep.mubr.bf16.mxu0 0
      %1117 = vmatmul.mubr.bf16.gmra.mrb[0].mxu0 %v902
      %v1118 = vpop.f32.mrb[0].mxu0
      %v1119 = vadd.f32 0.0, %v1118
      %v1120 = vpop.f32.mrb[0].mxu0
      %v1121 = vpop.f32.mrb[0].mxu0
      %v1122 = vadd.f32 0.0, %v1121
      %v1123 = vpop.f32.mrb[0].mxu0
      %1124 = vmatprep.mubr.bf16.mxu0 0
      %1125 = vmatmul.mubr.bf16.gmra.mrb[0].mxu0 %v903
      %v1126 = vpop.f32.mrb[0].mxu0
      %v1127 = vadd.f32 0.0, %v1126
      %v1128 = vpop.f32.mrb[0].mxu0
      %v1129 = vpop.f32.mrb[0].mxu0
      %v1130 = vadd.f32 0.0, %v1129
      %v1131 = vpop.f32.mrb[0].mxu0
      %1132 = vmatprep.mubr.bf16.mxu0 0
      %1133 = vmatmul.mubr.bf16.gmra.mrb[0].mxu0 %v904
      %v1134 = vpop.f32.mrb[0].mxu0
      %v1135 = vadd.f32 0.0, %v1134
      %v1136 = vpop.f32.mrb[0].mxu0
      %v1137 = vpop.f32.mrb[0].mxu0
      %v1138 = vadd.f32 0.0, %v1137
      %v1139 = vpop.f32.mrb[0].mxu0
      %1140 = vmatprep.mubr.bf16.mxu0 0
      %1141 = vmatmul.mubr.bf16.gmra.mrb[0].mxu0 %v905
      %v1142 = vpop.f32.mrb[0].mxu0
      %v1143 = vadd.f32 0.0, %v1142
      %v1144 = vpop.f32.mrb[0].mxu0
      %v1145 = vpop.f32.mrb[0].mxu0
      %v1146 = vadd.f32 0.0, %v1145
      %v1147 = vpop.f32.mrb[0].mxu0
      %1148 = vmatprep.mubr.bf16.mxu0 0
      %1149 = vmatmul.mubr.bf16.gmra.mrb[0].mxu0 %v906
      %v1150 = vpop.f32.mrb[0].mxu0
      %v1151 = vadd.f32 0.0, %v1150
      %v1152 = vpop.f32.mrb[0].mxu0
      %v1153 = vpop.f32.mrb[0].mxu0
      %v1154 = vadd.f32 0.0, %v1153
      %v1155 = vpop.f32.mrb[0].mxu0
      %1156 = vmatprep.mubr.bf16.mxu0 0
      %1157 = vmatmul.mubr.bf16.gmra.mrb[0].mxu0 %v907
      %v1158 = vpop.f32.mrb[0].mxu0
      %v1159 = vadd.f32 0.0, %v1158
      %v1160 = vpop.f32.mrb[0].mxu0
      %v1161 = vpop.f32.mrb[0].mxu0
      %v1162 = vadd.f32 0.0, %v1161
      %v1163 = vpop.f32.mrb[0].mxu0
      %1164 = vmatprep.mubr.bf16.mxu0 0
      %1165 = vmatmul.mubr.bf16.gmra.mrb[0].mxu0 %v908
      %v1166 = vpop.f32.mrb[0].mxu0
      %v1167 = vadd.f32 0.0, %v1166
      %v1168 = vpop.f32.mrb[0].mxu0
      %v1169 = vpop.f32.mrb[0].mxu0
      %v1170 = vadd.f32 0.0, %v1169
      %v1171 = vpop.f32.mrb[0].mxu0
      %1172 = vmatprep.mubr.bf16.mxu0 0
      %1173 = vmatmul.mubr.bf16.gmra.mrb[0].mxu0 %v909
      %v1174 = vpop.f32.mrb[0].mxu0
      %v1175 = vadd.f32 0.0, %v1174
      %v1176 = vpop.f32.mrb[0].mxu0
      %v1177 = vpop.f32.mrb[0].mxu0
      %v1178 = vadd.f32 0.0, %v1177
      %v1179 = vpop.f32.mrb[0].mxu0
      %1180 = vmatprep.mubr.bf16.mxu0 0
      %1181 = vmatmul.mubr.bf16.gmra.mrb[0].mxu0 %v910
      %v1182 = vpop.f32.mrb[0].mxu0
      %v1183 = vadd.f32 0.0, %v1182
      %v1184 = vpop.f32.mrb[0].mxu0
      %v1185 = vpop.f32.mrb[0].mxu0
      %v1186 = vadd.f32 0.0, %v1185
      %v1187 = vpop.f32.mrb[0].mxu0
      %1188 = vmatprep.mubr.bf16.mxu0 0
      %1189 = vmatmul.mubr.bf16.gmra.mrb[0].mxu0 %v911
      %v1190 = vpop.f32.mrb[0].mxu0
      %v1191 = vadd.f32 0.0, %v1190
      %v1192 = vpop.f32.mrb[0].mxu0
      %v1193 = vpop.f32.mrb[0].mxu0
      %v1194 = vadd.f32 0.0, %v1193
      %v1195 = vpop.f32.mrb[0].mxu0
      %1196 = vmatprep.mubr.bf16.mxu0 0
      %1197 = vmatmul.mubr.bf16.gmra.mrb[0].mxu0 %v912
      %v1198 = vpop.f32.mrb[0].mxu0
      %v1199 = vadd.f32 0.0, %v1198
      %v1200 = vpop.f32.mrb[0].mxu0
      %v1201 = vpop.f32.mrb[0].mxu0
      %v1202 = vadd.f32 0.0, %v1201
      %v1203 = vpop.f32.mrb[0].mxu0
      %1204 = vmatprep.mubr.bf16.mxu0 0
      %1205 = vmatmul.mubr.bf16.gmra.mrb[0].mxu0 %v913
      %v1206 = vpop.f32.mrb[0].mxu0
      %v1207 = vadd.f32 0.0, %v1206
      %v1208 = vpop.f32.mrb[0].mxu0
      %v1209 = vpop.f32.mrb[0].mxu0
      %v1210 = vadd.f32 0.0, %v1209
      %v1211 = vpop.f32.mrb[0].mxu0
      %1212 = vmatprep.mubr.bf16.mxu0 0
      %1213 = vmatmul.mubr.bf16.gmra.mrb[0].mxu0 %v930
      %v1214 = vpop.f32.mrb[0].mxu0
      %v1215 = vadd.f32 0.0, %v1214
      %v1216 = vpop.f32.mrb[0].mxu0
      %v1217 = vpop.f32.mrb[0].mxu0
      %v1218 = vadd.f32 0.0, %v1217
      %v1219 = vpop.f32.mrb[0].mxu0
      %1220 = vdwg.mxu0
      %v1237 = vunpack.c.l.b16 %v914
      %v1238 = vunpack.c.l.b16 %v915
      %v1239 = vunpack.c.l.b16 %v916
      %v1240 = vunpack.c.l.b16 %v917
      %v1241 = vunpack.c.l.b16 %v918
      %v1242 = vunpack.c.l.b16 %v919
      %v1243 = vunpack.c.l.b16 %v920
      %v1244 = vunpack.c.l.b16 %v921
      %v1245 = vunpack.c.l.b16 %v922
      %v1246 = vunpack.c.l.b16 %v923
      %v1247 = vunpack.c.l.b16 %v924
      %v1248 = vunpack.c.l.b16 %v925
      %v1249 = vunpack.c.l.b16 %v926
      %v1250 = vunpack.c.l.b16 %v927
      %v1251 = vunpack.c.l.b16 %v928
      %v1252 = vunpack.c.l.b16 %v929
      %v1253 = vpack.c.b16 %v1238, %v1237
      %v1254 = vpack.c.b16 %v1240, %v1239
      %v1255 = vpack.c.b16 %v1242, %v1241
      %v1256 = vpack.c.b16 %v1244, %v1243
      %v1257 = vpack.c.b16 %v1246, %v1245
      %v1258 = vpack.c.b16 %v1248, %v1247
      %v1259 = vpack.c.b16 %v1250, %v1249
      %v1260 = vpack.c.b16 %v1252, %v1251
      %1269 = vmatprep.subr.bf16.mxu0 0
      %1270 = vmatpush1.bf16.msra.mxu0 %v1253
      %1271 = vmatprep.subr.bf16.mxu0 0
      %1272 = vmatpush1.bf16.msra.mxu0 %v1254
      %1273 = vmatprep.subr.bf16.mxu0 0
      %1274 = vmatpush1.bf16.msra.mxu0 %v1255
      %1275 = vmatprep.subr.bf16.mxu0 0
      %1276 = vmatpush1.bf16.msra.mxu0 %v1256
      %1277 = vmatprep.subr.bf16.mxu0 0
      %1278 = vmatpush1.bf16.msra.mxu0 %v1257
      %1279 = vmatprep.subr.bf16.mxu0 0
      %1280 = vmatpush1.bf16.msra.mxu0 %v1258
      %1281 = vmatprep.subr.bf16.mxu0 0
      %1282 = vmatpush1.bf16.msra.mxu0 %v1259
      %1283 = vmatprep.subr.bf16.mxu0 0
      %1284 = vmatpush1.bf16.msra.mxu0 %v1260
      %1285 = vmatprep.subr.bf16.mxu0 0
      %1286 = vmatpush1.bf16.msra.mxu0 0
      %1287 = vmatprep.subr.bf16.mxu0 0
      %1288 = vmatpush1.bf16.msra.mxu0 0
      %1289 = vmatprep.subr.bf16.mxu0 0
      %1290 = vmatpush1.bf16.msra.mxu0 0
      %1291 = vmatprep.subr.bf16.mxu0 0
      %1292 = vmatpush1.bf16.msra.mxu0 0
      %1293 = vmatprep.subr.bf16.mxu0 0
      %1294 = vmatpush1.bf16.msra.mxu0 0
      %1295 = vmatprep.subr.bf16.mxu0 0
      %1296 = vmatpush1.bf16.msra.mxu0 0
      %1297 = vmatprep.subr.bf16.mxu0 0
      %1298 = vmatpush1.bf16.msra.mxu0 0
      %1299 = vmatprep.subr.bf16.mxu0 0
      %1300 = vmatpush1.bf16.msra.mxu0 0
      %1301 = vmatprep.mubr.bf16.mxu0 0
      %1302 = vmatmul.mubr.bf16.gmra.mrb[0].mxu0 %v890
      %v1303 = vpop.f32.mrb[0].mxu0
      %v1304 = vadd.f32 %v1031, %v1303
      %v1305 = vpop.f32.mrb[0].mxu0
      %v1306 = vpop.f32.mrb[0].mxu0
      %v1307 = vadd.f32 %v1034, %v1306
      %v1308 = vpop.f32.mrb[0].mxu0
      %1309 = vmatprep.mubr.bf16.mxu0 0
      %1310 = vmatmul.mubr.bf16.gmra.mrb[0].mxu0 %v891
      %v1311 = vpop.f32.mrb[0].mxu0
      %v1312 = vadd.f32 %v1039, %v1311
      %v1313 = vpop.f32.mrb[0].mxu0
      %v1314 = vpop.f32.mrb[0].mxu0
      %v1315 = vadd.f32 %v1042, %v1314
      %v1316 = vpop.f32.mrb[0].mxu0
      %1317 = vmatprep.mubr.bf16.mxu0 0
      %1318 = vmatmul.mubr.bf16.gmra.mrb[0].mxu0 %v892
      %v1319 = vpop.f32.mrb[0].mxu0
      %v1320 = vadd.f32 %v1047, %v1319
      %v1321 = vpop.f32.mrb[0].mxu0
      %v1322 = vpop.f32.mrb[0].mxu0
      %v1323 = vadd.f32 %v1050, %v1322
      %v1324 = vpop.f32.mrb[0].mxu0
      %1325 = vmatprep.mubr.bf16.mxu0 0
      %1326 = vmatmul.mubr.bf16.gmra.mrb[0].mxu0 %v893
      %v1327 = vpop.f32.mrb[0].mxu0
      %v1328 = vadd.f32 %v1055, %v1327
      %v1329 = vpop.f32.mrb[0].mxu0
      %v1330 = vpop.f32.mrb[0].mxu0
      %v1331 = vadd.f32 %v1058, %v1330
      %v1332 = vpop.f32.mrb[0].mxu0
      %1333 = vmatprep.mubr.bf16.mxu0 0
      %1334 = vmatmul.mubr.bf16.gmra.mrb[0].mxu0 %v894
      %v1335 = vpop.f32.mrb[0].mxu0
      %v1336 = vadd.f32 %v1063, %v1335
      %v1337 = vpop.f32.mrb[0].mxu0
      %v1338 = vpop.f32.mrb[0].mxu0
      %v1339 = vadd.f32 %v1066, %v1338
      %v1340 = vpop.f32.mrb[0].mxu0
      %1341 = vmatprep.mubr.bf16.mxu0 0
      %1342 = vmatmul.mubr.bf16.gmra.mrb[0].mxu0 %v895
      %v1343 = vpop.f32.mrb[0].mxu0
      %v1344 = vadd.f32 %v1071, %v1343
      %v1345 = vpop.f32.mrb[0].mxu0
      %v1346 = vpop.f32.mrb[0].mxu0
      %v1347 = vadd.f32 %v1074, %v1346
      %v1348 = vpop.f32.mrb[0].mxu0
      %1349 = vmatprep.mubr.bf16.mxu0 0
      %1350 = vmatmul.mubr.bf16.gmra.mrb[0].mxu0 %v896
      %v1351 = vpop.f32.mrb[0].mxu0
      %v1352 = vadd.f32 %v1079, %v1351
      %v1353 = vpop.f32.mrb[0].mxu0
      %v1354 = vpop.f32.mrb[0].mxu0
      %v1355 = vadd.f32 %v1082, %v1354
      %v1356 = vpop.f32.mrb[0].mxu0
      %1357 = vmatprep.mubr.bf16.mxu0 0
      %1358 = vmatmul.mubr.bf16.gmra.mrb[0].mxu0 %v897
      %v1359 = vpop.f32.mrb[0].mxu0
      %v1360 = vadd.f32 %v1087, %v1359
      %v1361 = vpop.f32.mrb[0].mxu0
      %v1362 = vpop.f32.mrb[0].mxu0
      %v1363 = vadd.f32 %v1090, %v1362
      %v1364 = vpop.f32.mrb[0].mxu0
      %1365 = vmatprep.mubr.bf16.mxu0 0
      %1366 = vmatmul.mubr.bf16.gmra.mrb[0].mxu0 %v898
      %v1367 = vpop.f32.mrb[0].mxu0
      %v1368 = vadd.f32 %v1095, %v1367
      %v1369 = vpop.f32.mrb[0].mxu0
      %v1370 = vpop.f32.mrb[0].mxu0
      %v1371 = vadd.f32 %v1098, %v1370
      %v1372 = vpop.f32.mrb[0].mxu0
      %1373 = vmatprep.mubr.bf16.mxu0 0
      %1374 = vmatmul.mubr.bf16.gmra.mrb[0].mxu0 %v899
      %v1375 = vpop.f32.mrb[0].mxu0
      %v1376 = vadd.f32 %v1103, %v1375
      %v1377 = vpop.f32.mrb[0].mxu0
      %v1378 = vpop.f32.mrb[0].mxu0
      %v1379 = vadd.f32 %v1106, %v1378
      %v1380 = vpop.f32.mrb[0].mxu0
      %1381 = vmatprep.mubr.bf16.mxu0 0
      %1382 = vmatmul.mubr.bf16.gmra.mrb[0].mxu0 %v900
      %v1383 = vpop.f32.mrb[0].mxu0
      %v1384 = vadd.f32 %v1111, %v1383
      %v1385 = vpop.f32.mrb[0].mxu0
      %v1386 = vpop.f32.mrb[0].mxu0
      %v1387 = vadd.f32 %v1114, %v1386
      %v1388 = vpop.f32.mrb[0].mxu0
      %1389 = vmatprep.mubr.bf16.mxu0 0
      %1390 = vmatmul.mubr.bf16.gmra.mrb[0].mxu0 %v901
      %v1391 = vpop.f32.mrb[0].mxu0
      %v1392 = vadd.f32 %v1119, %v1391
      %v1393 = vpop.f32.mrb[0].mxu0
      %v1394 = vpop.f32.mrb[0].mxu0
      %v1395 = vadd.f32 %v1122, %v1394
      %v1396 = vpop.f32.mrb[0].mxu0
      %1397 = vmatprep.mubr.bf16.mxu0 0
      %1398 = vmatmul.mubr.bf16.gmra.mrb[0].mxu0 %v902
      %v1399 = vpop.f32.mrb[0].mxu0
      %v1400 = vadd.f32 %v1127, %v1399
      %v1401 = vpop.f32.mrb[0].mxu0
      %v1402 = vpop.f32.mrb[0].mxu0
      %v1403 = vadd.f32 %v1130, %v1402
      %v1404 = vpop.f32.mrb[0].mxu0
      %1405 = vmatprep.mubr.bf16.mxu0 0
      %1406 = vmatmul.mubr.bf16.gmra.mrb[0].mxu0 %v903
      %v1407 = vpop.f32.mrb[0].mxu0
      %v1408 = vadd.f32 %v1135, %v1407
      %v1409 = vpop.f32.mrb[0].mxu0
      %v1410 = vpop.f32.mrb[0].mxu0
      %v1411 = vadd.f32 %v1138, %v1410
      %v1412 = vpop.f32.mrb[0].mxu0
      %1413 = vmatprep.mubr.bf16.mxu0 0
      %1414 = vmatmul.mubr.bf16.gmra.mrb[0].mxu0 %v904
      %v1415 = vpop.f32.mrb[0].mxu0
      %v1416 = vadd.f32 %v1143, %v1415
      %v1417 = vpop.f32.mrb[0].mxu0
      %v1418 = vpop.f32.mrb[0].mxu0
      %v1419 = vadd.f32 %v1146, %v1418
      %v1420 = vpop.f32.mrb[0].mxu0
      %1421 = vmatprep.mubr.bf16.mxu0 0
      %1422 = vmatmul.mubr.bf16.gmra.mrb[0].mxu0 %v905
      %v1423 = vpop.f32.mrb[0].mxu0
      %v1424 = vadd.f32 %v1151, %v1423
      %v1425 = vpop.f32.mrb[0].mxu0
      %v1426 = vpop.f32.mrb[0].mxu0
      %v1427 = vadd.f32 %v1154, %v1426
      %v1428 = vpop.f32.mrb[0].mxu0
      %1429 = vmatprep.mubr.bf16.mxu0 0
      %1430 = vmatmul.mubr.bf16.gmra.mrb[0].mxu0 %v906
      %v1431 = vpop.f32.mrb[0].mxu0
      %v1432 = vadd.f32 %v1159, %v1431
      %v1433 = vpop.f32.mrb[0].mxu0
      %v1434 = vpop.f32.mrb[0].mxu0
      %v1435 = vadd.f32 %v1162, %v1434
      %v1436 = vpop.f32.mrb[0].mxu0
      %1437 = vmatprep.mubr.bf16.mxu0 0
      %1438 = vmatmul.mubr.bf16.gmra.mrb[0].mxu0 %v907
      %v1439 = vpop.f32.mrb[0].mxu0
      %v1440 = vadd.f32 %v1167, %v1439
      %v1441 = vpop.f32.mrb[0].mxu0
      %v1442 = vpop.f32.mrb[0].mxu0
      %v1443 = vadd.f32 %v1170, %v1442
      %v1444 = vpop.f32.mrb[0].mxu0
      %1445 = vmatprep.mubr.bf16.mxu0 0
      %1446 = vmatmul.mubr.bf16.gmra.mrb[0].mxu0 %v908
      %v1447 = vpop.f32.mrb[0].mxu0
      %v1448 = vadd.f32 %v1175, %v1447
      %v1449 = vpop.f32.mrb[0].mxu0
      %v1450 = vpop.f32.mrb[0].mxu0
      %v1451 = vadd.f32 %v1178, %v1450
      %v1452 = vpop.f32.mrb[0].mxu0
      %1453 = vmatprep.mubr.bf16.mxu0 0
      %1454 = vmatmul.mubr.bf16.gmra.mrb[0].mxu0 %v909
      %v1455 = vpop.f32.mrb[0].mxu0
      %v1456 = vadd.f32 %v1183, %v1455
      %v1457 = vpop.f32.mrb[0].mxu0
      %v1458 = vpop.f32.mrb[0].mxu0
      %v1459 = vadd.f32 %v1186, %v1458
      %v1460 = vpop.f32.mrb[0].mxu0
      %1461 = vmatprep.mubr.bf16.mxu0 0
      %1462 = vmatmul.mubr.bf16.gmra.mrb[0].mxu0 %v910
      %v1463 = vpop.f32.mrb[0].mxu0
      %v1464 = vadd.f32 %v1191, %v1463
      %v1465 = vpop.f32.mrb[0].mxu0
      %v1466 = vpop.f32.mrb[0].mxu0
      %v1467 = vadd.f32 %v1194, %v1466
      %v1468 = vpop.f32.mrb[0].mxu0
      %1469 = vmatprep.mubr.bf16.mxu0 0
      %1470 = vmatmul.mubr.bf16.gmra.mrb[0].mxu0 %v911
      %v1471 = vpop.f32.mrb[0].mxu0
      %v1472 = vadd.f32 %v1199, %v1471
      %v1473 = vpop.f32.mrb[0].mxu0
      %v1474 = vpop.f32.mrb[0].mxu0
      %v1475 = vadd.f32 %v1202, %v1474
      %v1476 = vpop.f32.mrb[0].mxu0
      %1477 = vmatprep.mubr.bf16.mxu0 0
      %1478 = vmatmul.mubr.bf16.gmra.mrb[0].mxu0 %v912
      %v1479 = vpop.f32.mrb[0].mxu0
      %v1480 = vadd.f32 %v1207, %v1479
      %v1481 = vpop.f32.mrb[0].mxu0
      %v1482 = vpop.f32.mrb[0].mxu0
      %v1483 = vadd.f32 %v1210, %v1482
      %v1484 = vpop.f32.mrb[0].mxu0
      %1485 = vmatprep.mubr.bf16.mxu0 0
      %1486 = vmatmul.mubr.bf16.gmra.mrb[0].mxu0 %v913
      %v1487 = vpop.f32.mrb[0].mxu0
      %v1488 = vadd.f32 %v1215, %v1487
      %v1489 = vpop.f32.mrb[0].mxu0
      %v1490 = vpop.f32.mrb[0].mxu0
      %v1491 = vadd.f32 %v1218, %v1490
      %v1492 = vpop.f32.mrb[0].mxu0
      %1493 = vdwg.mxu0
      %v1494 = vld [vmem:[#allocation2 + $0x10] sm:$0xff]
      %v1495 = vld [vmem:[#allocation2 + $0x18] sm:$0xff]
      %v1496 = vld [vmem:[#allocation2 + $0x20] sm:$0xff]
      %v1497 = vld [vmem:[#allocation2 + $0x28] sm:$0xff]
      %v1498 = vld [vmem:[#allocation2 + $0x30] sm:$0xff]
      %v1499 = vld [vmem:[#allocation2 + $0x38] sm:$0xff]
      %v1500 = vld [vmem:[#allocation2 + $0x40] sm:$0xff]
      %v1501 = vld [vmem:[#allocation2 + $0x48] sm:$0xff]
      %v1502 = vld [vmem:[#allocation2 + $0x50] sm:$0xff]
      %v1503 = vld [vmem:[#allocation2 + $0x58] sm:$0xff]
      %v1504 = vld [vmem:[#allocation2 + $0x60] sm:$0xff]
      %v1505 = vld [vmem:[#allocation2 + $0x68] sm:$0xff]
      %v1506 = vld [vmem:[#allocation2 + $0x70] sm:$0xff]
      %v1507 = vld [vmem:[#allocation2 + $0x78] sm:$0xff]
      %v1508 = vld [vmem:[#allocation2 + $0x80] sm:$0xff]
      %v1509 = vld [vmem:[#allocation2 + $0x88] sm:$0xff]
      %v1510 = vld [vmem:[#allocation2 + $0x90] sm:$0xff]
      %v1511 = vld [vmem:[#allocation2 + $0x98] sm:$0xff]
      %v1512 = vld [vmem:[#allocation2 + $0xa0] sm:$0xff]
      %v1513 = vld [vmem:[#allocation2 + $0xa8] sm:$0xff]
      %v1514 = vld [vmem:[#allocation2 + $0xb0] sm:$0xff]
      %v1515 = vld [vmem:[#allocation2 + $0xb8] sm:$0xff]
      %v1516 = vld [vmem:[#allocation2 + $0xc0] sm:$0xff]
      %v1517 = vld [vmem:[#allocation2 + $0xc8] sm:$0xff]
      %s1518 = scalar_lea.vmem %s3, 128
      %v1519 = vld [vmem:[%s1518] sm:$0xf]
      %v1520 = vld [vmem:[%s1518 + $0x4] sm:$0xf]
      %v1521 = vld [vmem:[%s1518 + $0x8] sm:$0xf]
      %v1522 = vld [vmem:[%s1518 + $0xc] sm:$0xf]
      %v1523 = vld [vmem:[%s1518 + $0x10] sm:$0xf]
      %v1524 = vld [vmem:[%s1518 + $0x14] sm:$0xf]
      %v1525 = vld [vmem:[%s1518 + $0x18] sm:$0xf]
      %v1526 = vld [vmem:[%s1518 + $0x1c] sm:$0xf]
      %v1527 = vld [vmem:[%s1518 + $0x20] sm:$0xf]
      %v1528 = vld [vmem:[%s1518 + $0x24] sm:$0xf]
      %v1529 = vld [vmem:[%s1518 + $0x28] sm:$0xf]
      %v1530 = vld [vmem:[%s1518 + $0x2c] sm:$0xf]
      %v1531 = vld [vmem:[%s1518 + $0x30] sm:$0xf]
      %v1532 = vld [vmem:[%s1518 + $0x34] sm:$0xf]
      %v1533 = vld [vmem:[%s1518 + $0x38] sm:$0xf]
      %v1534 = vld [vmem:[%s1518 + $0x3c] sm:$0xf]
      %v1551 = vunpack.c.l.b16 %v1519
      %v1552 = vunpack.c.l.b16 %v1520
      %v1553 = vunpack.c.l.b16 %v1521
      %v1554 = vunpack.c.l.b16 %v1522
      %v1555 = vunpack.c.l.b16 %v1523
      %v1556 = vunpack.c.l.b16 %v1524
      %v1557 = vunpack.c.l.b16 %v1525
      %v1558 = vunpack.c.l.b16 %v1526
      %v1559 = vunpack.c.l.b16 %v1527
      %v1560 = vunpack.c.l.b16 %v1528
      %v1561 = vunpack.c.l.b16 %v1529
      %v1562 = vunpack.c.l.b16 %v1530
      %v1563 = vunpack.c.l.b16 %v1531
      %v1564 = vunpack.c.l.b16 %v1532
      %v1565 = vunpack.c.l.b16 %v1533
      %v1566 = vunpack.c.l.b16 %v1534
      %v1567 = vpack.c.b16 %v1552, %v1551
      %v1568 = vpack.c.b16 %v1554, %v1553
      %v1569 = vpack.c.b16 %v1556, %v1555
      %v1570 = vpack.c.b16 %v1558, %v1557
      %v1571 = vpack.c.b16 %v1560, %v1559
      %v1572 = vpack.c.b16 %v1562, %v1561
      %v1573 = vpack.c.b16 %v1564, %v1563
      %v1574 = vpack.c.b16 %v1566, %v1565
      %1583 = vmatprep.subr.bf16.mxu0 0
      %1584 = vmatpush1.bf16.msra.mxu0 %v1567
      %1585 = vmatprep.subr.bf16.mxu0 0
      %1586 = vmatpush1.bf16.msra.mxu0 %v1568
      %1587 = vmatprep.subr.bf16.mxu0 0
      %1588 = vmatpush1.bf16.msra.mxu0 %v1569
      %1589 = vmatprep.subr.bf16.mxu0 0
      %1590 = vmatpush1.bf16.msra.mxu0 %v1570
      %1591 = vmatprep.subr.bf16.mxu0 0
      %1592 = vmatpush1.bf16.msra.mxu0 %v1571
      %1593 = vmatprep.subr.bf16.mxu0 0
      %1594 = vmatpush1.bf16.msra.mxu0 %v1572
      %1595 = vmatprep.subr.bf16.mxu0 0
      %1596 = vmatpush1.bf16.msra.mxu0 %v1573
      %1597 = vmatprep.subr.bf16.mxu0 0
      %1598 = vmatpush1.bf16.msra.mxu0 %v1574
      %1599 = vmatprep.subr.bf16.mxu0 0
      %1600 = vmatpush1.bf16.msra.mxu0 0
      %1601 = vmatprep.subr.bf16.mxu0 0
      %1602 = vmatpush1.bf16.msra.mxu0 0
      %1603 = vmatprep.subr.bf16.mxu0 0
      %1604 = vmatpush1.bf16.msra.mxu0 0
      %1605 = vmatprep.subr.bf16.mxu0 0
      %1606 = vmatpush1.bf16.msra.mxu0 0
      %1607 = vmatprep.subr.bf16.mxu0 0
      %1608 = vmatpush1.bf16.msra.mxu0 0
      %1609 = vmatprep.subr.bf16.mxu0 0
      %1610 = vmatpush1.bf16.msra.mxu0 0
      %1611 = vmatprep.subr.bf16.mxu0 0
      %1612 = vmatpush1.bf16.msra.mxu0 0
      %1613 = vmatprep.subr.bf16.mxu0 0
      %1614 = vmatpush1.bf16.msra.mxu0 0
      %1615 = vmatprep.mubr.bf16.mxu0 0
      %1616 = vmatmul.mubr.bf16.gmra.mrb[0].mxu0 %v1494
      %v1617 = vpop.f32.mrb[0].mxu0
      %v1618 = vadd.f32 0.0, %v1617
      %v1619 = vpop.f32.mrb[0].mxu0
      %v1620 = vpop.f32.mrb[0].mxu0
      %v1621 = vadd.f32 0.0, %v1620
      %v1622 = vpop.f32.mrb[0].mxu0
      %1623 = vmatprep.mubr.bf16.mxu0 0
      %1624 = vmatmul.mubr.bf16.gmra.mrb[0].mxu0 %v1495
      %v1625 = vpop.f32.mrb[0].mxu0
      %v1626 = vadd.f32 0.0, %v1625
      %v1627 = vpop.f32.mrb[0].mxu0
      %v1628 = vpop.f32.mrb[0].mxu0
      %v1629 = vadd.f32 0.0, %v1628
      %v1630 = vpop.f32.mrb[0].mxu0
      %1631 = vmatprep.mubr.bf16.mxu0 0
      %1632 = vmatmul.mubr.bf16.gmra.mrb[0].mxu0 %v1496
      %v1633 = vpop.f32.mrb[0].mxu0
      %v1634 = vadd.f32 0.0, %v1633
      %v1635 = vpop.f32.mrb[0].mxu0
      %v1636 = vpop.f32.mrb[0].mxu0
      %v1637 = vadd.f32 0.0, %v1636
      %v1638 = vpop.f32.mrb[0].mxu0
      %1639 = vmatprep.mubr.bf16.mxu0 0
      %1640 = vmatmul.mubr.bf16.gmra.mrb[0].mxu0 %v1497
      %v1641 = vpop.f32.mrb[0].mxu0
      %v1642 = vadd.f32 0.0, %v1641
      %v1643 = vpop.f32.mrb[0].mxu0
      %v1644 = vpop.f32.mrb[0].mxu0
      %v1645 = vadd.f32 0.0, %v1644
      %v1646 = vpop.f32.mrb[0].mxu0
      %1647 = vmatprep.mubr.bf16.mxu0 0
      %1648 = vmatmul.mubr.bf16.gmra.mrb[0].mxu0 %v1498
      %v1649 = vpop.f32.mrb[0].mxu0
      %v1650 = vadd.f32 0.0, %v1649
      %v1651 = vpop.f32.mrb[0].mxu0
      %v1652 = vpop.f32.mrb[0].mxu0
      %v1653 = vadd.f32 0.0, %v1652
      %v1654 = vpop.f32.mrb[0].mxu0
      %1655 = vmatprep.mubr.bf16.mxu0 0
      %1656 = vmatmul.mubr.bf16.gmra.mrb[0].mxu0 %v1499
      %v1657 = vpop.f32.mrb[0].mxu0
      %v1658 = vadd.f32 0.0, %v1657
      %v1659 = vpop.f32.mrb[0].mxu0
      %v1660 = vpop.f32.mrb[0].mxu0
      %v1661 = vadd.f32 0.0, %v1660
      %v1662 = vpop.f32.mrb[0].mxu0
      %1663 = vmatprep.mubr.bf16.mxu0 0
      %1664 = vmatmul.mubr.bf16.gmra.mrb[0].mxu0 %v1500
      %v1665 = vpop.f32.mrb[0].mxu0
      %v1666 = vadd.f32 0.0, %v1665
      %v1667 = vpop.f32.mrb[0].mxu0
      %v1668 = vpop.f32.mrb[0].mxu0
      %v1669 = vadd.f32 0.0, %v1668
      %v1670 = vpop.f32.mrb[0].mxu0
      %1671 = vmatprep.mubr.bf16.mxu0 0
      %1672 = vmatmul.mubr.bf16.gmra.mrb[0].mxu0 %v1501
      %v1673 = vpop.f32.mrb[0].mxu0
      %v1674 = vadd.f32 0.0, %v1673
      %v1675 = vpop.f32.mrb[0].mxu0
      %v1676 = vpop.f32.mrb[0].mxu0
      %v1677 = vadd.f32 0.0, %v1676
      %v1678 = vpop.f32.mrb[0].mxu0
      %1679 = vmatprep.mubr.bf16.mxu0 0
      %1680 = vmatmul.mubr.bf16.gmra.mrb[0].mxu0 %v1502
      %v1681 = vpop.f32.mrb[0].mxu0
      %v1682 = vadd.f32 0.0, %v1681
      %v1683 = vpop.f32.mrb[0].mxu0
      %v1684 = vpop.f32.mrb[0].mxu0
      %v1685 = vadd.f32 0.0, %v1684
      %v1686 = vpop.f32.mrb[0].mxu0
      %1687 = vmatprep.mubr.bf16.mxu0 0
      %1688 = vmatmul.mubr.bf16.gmra.mrb[0].mxu0 %v1503
      %v1689 = vpop.f32.mrb[0].mxu0
      %v1690 = vadd.f32 0.0, %v1689
      %v1691 = vpop.f32.mrb[0].mxu0
      %v1692 = vpop.f32.mrb[0].mxu0
      %v1693 = vadd.f32 0.0, %v1692
      %v1694 = vpop.f32.mrb[0].mxu0
      %1695 = vmatprep.mubr.bf16.mxu0 0
      %1696 = vmatmul.mubr.bf16.gmra.mrb[0].mxu0 %v1504
      %v1697 = vpop.f32.mrb[0].mxu0
      %v1698 = vadd.f32 0.0, %v1697
      %v1699 = vpop.f32.mrb[0].mxu0
      %v1700 = vpop.f32.mrb[0].mxu0
      %v1701 = vadd.f32 0.0, %v1700
      %v1702 = vpop.f32.mrb[0].mxu0
      %1703 = vmatprep.mubr.bf16.mxu0 0
      %1704 = vmatmul.mubr.bf16.gmra.mrb[0].mxu0 %v1505
      %v1705 = vpop.f32.mrb[0].mxu0
      %v1706 = vadd.f32 0.0, %v1705
      %v1707 = vpop.f32.mrb[0].mxu0
      %v1708 = vpop.f32.mrb[0].mxu0
      %v1709 = vadd.f32 0.0, %v1708
      %v1710 = vpop.f32.mrb[0].mxu0
      %1711 = vmatprep.mubr.bf16.mxu0 0
      %1712 = vmatmul.mubr.bf16.gmra.mrb[0].mxu0 %v1506
      %v1713 = vpop.f32.mrb[0].mxu0
      %v1714 = vadd.f32 0.0, %v1713
      %v1715 = vpop.f32.mrb[0].mxu0
      %v1716 = vpop.f32.mrb[0].mxu0
      %v1717 = vadd.f32 0.0, %v1716
      %v1718 = vpop.f32.mrb[0].mxu0
      %1719 = vmatprep.mubr.bf16.mxu0 0
      %1720 = vmatmul.mubr.bf16.gmra.mrb[0].mxu0 %v1507
      %v1721 = vpop.f32.mrb[0].mxu0
      %v1722 = vadd.f32 0.0, %v1721
      %v1723 = vpop.f32.mrb[0].mxu0
      %v1724 = vpop.f32.mrb[0].mxu0
      %v1725 = vadd.f32 0.0, %v1724
      %v1726 = vpop.f32.mrb[0].mxu0
      %1727 = vmatprep.mubr.bf16.mxu0 0
      %1728 = vmatmul.mubr.bf16.gmra.mrb[0].mxu0 %v1508
      %v1729 = vpop.f32.mrb[0].mxu0
      %v1730 = vadd.f32 0.0, %v1729
      %v1731 = vpop.f32.mrb[0].mxu0
      %v1732 = vpop.f32.mrb[0].mxu0
      %v1733 = vadd.f32 0.0, %v1732
      %v1734 = vpop.f32.mrb[0].mxu0
      %1735 = vmatprep.mubr.bf16.mxu0 0
      %1736 = vmatmul.mubr.bf16.gmra.mrb[0].mxu0 %v1509
      %v1737 = vpop.f32.mrb[0].mxu0
      %v1738 = vadd.f32 0.0, %v1737
      %v1739 = vpop.f32.mrb[0].mxu0
      %v1740 = vpop.f32.mrb[0].mxu0
      %v1741 = vadd.f32 0.0, %v1740
      %v1742 = vpop.f32.mrb[0].mxu0
      %1743 = vmatprep.mubr.bf16.mxu0 0
      %1744 = vmatmul.mubr.bf16.gmra.mrb[0].mxu0 %v1510
      %v1745 = vpop.f32.mrb[0].mxu0
      %v1746 = vadd.f32 0.0, %v1745
      %v1747 = vpop.f32.mrb[0].mxu0
      %v1748 = vpop.f32.mrb[0].mxu0
      %v1749 = vadd.f32 0.0, %v1748
      %v1750 = vpop.f32.mrb[0].mxu0
      %1751 = vmatprep.mubr.bf16.mxu0 0
      %1752 = vmatmul.mubr.bf16.gmra.mrb[0].mxu0 %v1511
      %v1753 = vpop.f32.mrb[0].mxu0
      %v1754 = vadd.f32 0.0, %v1753
      %v1755 = vpop.f32.mrb[0].mxu0
      %v1756 = vpop.f32.mrb[0].mxu0
      %v1757 = vadd.f32 0.0, %v1756
      %v1758 = vpop.f32.mrb[0].mxu0
      %1759 = vmatprep.mubr.bf16.mxu0 0
      %1760 = vmatmul.mubr.bf16.gmra.mrb[0].mxu0 %v1512
      %v1761 = vpop.f32.mrb[0].mxu0
      %v1762 = vadd.f32 0.0, %v1761
      %v1763 = vpop.f32.mrb[0].mxu0
      %v1764 = vpop.f32.mrb[0].mxu0
      %v1765 = vadd.f32 0.0, %v1764
      %v1766 = vpop.f32.mrb[0].mxu0
      %1767 = vmatprep.mubr.bf16.mxu0 0
      %1768 = vmatmul.mubr.bf16.gmra.mrb[0].mxu0 %v1513
      %v1769 = vpop.f32.mrb[0].mxu0
      %v1770 = vadd.f32 0.0, %v1769
      %v1771 = vpop.f32.mrb[0].mxu0
      %v1772 = vpop.f32.mrb[0].mxu0
      %v1773 = vadd.f32 0.0, %v1772
      %v1774 = vpop.f32.mrb[0].mxu0
      %1775 = vmatprep.mubr.bf16.mxu0 0
      %1776 = vmatmul.mubr.bf16.gmra.mrb[0].mxu0 %v1514
      %v1777 = vpop.f32.mrb[0].mxu0
      %v1778 = vadd.f32 0.0, %v1777
      %v1779 = vpop.f32.mrb[0].mxu0
      %v1780 = vpop.f32.mrb[0].mxu0
      %v1781 = vadd.f32 0.0, %v1780
      %v1782 = vpop.f32.mrb[0].mxu0
      %1783 = vmatprep.mubr.bf16.mxu0 0
      %1784 = vmatmul.mubr.bf16.gmra.mrb[0].mxu0 %v1515
      %v1785 = vpop.f32.mrb[0].mxu0
      %v1786 = vadd.f32 0.0, %v1785
      %v1787 = vpop.f32.mrb[0].mxu0
      %v1788 = vpop.f32.mrb[0].mxu0
      %v1789 = vadd.f32 0.0, %v1788
      %v1790 = vpop.f32.mrb[0].mxu0
      %1791 = vmatprep.mubr.bf16.mxu0 0
      %1792 = vmatmul.mubr.bf16.gmra.mrb[0].mxu0 %v1516
      %v1793 = vpop.f32.mrb[0].mxu0
      %v1794 = vadd.f32 0.0, %v1793
      %v1795 = vpop.f32.mrb[0].mxu0
      %v1796 = vpop.f32.mrb[0].mxu0
      %v1797 = vadd.f32 0.0, %v1796
      %v1798 = vpop.f32.mrb[0].mxu0
      %1799 = vmatprep.mubr.bf16.mxu0 0
      %1800 = vmatmul.mubr.bf16.gmra.mrb[0].mxu0 %v1517
      %v1801 = vpop.f32.mrb[0].mxu0
      %v1802 = vadd.f32 0.0, %v1801
      %v1803 = vpop.f32.mrb[0].mxu0
      %v1804 = vpop.f32.mrb[0].mxu0
      %v1805 = vadd.f32 0.0, %v1804
      %v1806 = vpop.f32.mrb[0].mxu0
      %1807 = vdwg.mxu0
      %v1808 = vadd.f32 %v1304, %v1618
      %v1809 = vadd.f32 %v1307, %v1621
      %v1810 = vadd.f32 %v1312, %v1626
      %v1811 = vadd.f32 %v1315, %v1629
      %v1812 = vadd.f32 %v1320, %v1634
      %v1813 = vadd.f32 %v1323, %v1637
      %v1814 = vadd.f32 %v1328, %v1642
      %v1815 = vadd.f32 %v1331, %v1645
      %v1816 = vadd.f32 %v1336, %v1650
      %v1817 = vadd.f32 %v1339, %v1653
      %v1818 = vadd.f32 %v1344, %v1658
      %v1819 = vadd.f32 %v1347, %v1661
      %v1820 = vadd.f32 %v1352, %v1666
      %v1821 = vadd.f32 %v1355, %v1669
      %v1822 = vadd.f32 %v1360, %v1674
      %v1823 = vadd.f32 %v1363, %v1677
      %v1824 = vadd.f32 %v1368, %v1682
      %v1825 = vadd.f32 %v1371, %v1685
      %v1826 = vadd.f32 %v1376, %v1690
      %v1827 = vadd.f32 %v1379, %v1693
      %v1828 = vadd.f32 %v1384, %v1698
      %v1829 = vadd.f32 %v1387, %v1701
      %v1830 = vadd.f32 %v1392, %v1706
      %v1831 = vadd.f32 %v1395, %v1709
      %v1832 = vadd.f32 %v1400, %v1714
      %v1833 = vadd.f32 %v1403, %v1717
      %v1834 = vadd.f32 %v1408, %v1722
      %v1835 = vadd.f32 %v1411, %v1725
      %v1836 = vadd.f32 %v1416, %v1730
      %v1837 = vadd.f32 %v1419, %v1733
      %v1838 = vadd.f32 %v1424, %v1738
      %v1839 = vadd.f32 %v1427, %v1741
      %v1840 = vadd.f32 %v1432, %v1746
      %v1841 = vadd.f32 %v1435, %v1749
      %v1842 = vadd.f32 %v1440, %v1754
      %v1843 = vadd.f32 %v1443, %v1757
      %v1844 = vadd.f32 %v1448, %v1762
      %v1845 = vadd.f32 %v1451, %v1765
      %v1846 = vadd.f32 %v1456, %v1770
      %v1847 = vadd.f32 %v1459, %v1773
      %v1848 = vadd.f32 %v1464, %v1778
      %v1849 = vadd.f32 %v1467, %v1781
      %v1850 = vadd.f32 %v1472, %v1786
      %v1851 = vadd.f32 %v1475, %v1789
      %v1852 = vadd.f32 %v1480, %v1794
      %v1853 = vadd.f32 %v1483, %v1797
      %v1854 = vadd.f32 %v1488, %v1802
      %v1855 = vadd.f32 %v1491, %v1805
      %v1856 = vmax.f32 %v1808, %v1810
      %v1857 = vmax.f32 %v1809, %v1811
      %vm1858 = vcmask 523264
      %1859 = vst.msk [vmem:[#allocation3] sm:$0xff] %vm1858, %v1856
      %1860 = vst.msk [vmem:[#allocation3 + $0x8] sm:$0xff] %vm1858, %v1857
      %v1861 = vmax.f32 %v1812, %v1814
      %v1862 = vmax.f32 %v1813, %v1815
      %1863 = vst.msk [vmem:[#allocation3 + $0x10] sm:$0xff] %vm1858, %v1861
      %1864 = vst.msk [vmem:[#allocation3 + $0x18] sm:$0xff] %vm1858, %v1862
      %v1865 = vmax.f32 %v1816, %v1818
      %v1866 = vmax.f32 %v1817, %v1819
      %1867 = vst.msk [vmem:[#allocation3 + $0x20] sm:$0xff] %vm1858, %v1865
      %1868 = vst.msk [vmem:[#allocation3 + $0x28] sm:$0xff] %vm1858, %v1866
      %v1869 = vmax.f32 %v1820, %v1822
      %v1870 = vmax.f32 %v1821, %v1823
      %1871 = vst.msk [vmem:[#allocation3 + $0x30] sm:$0xff] %vm1858, %v1869
      %1872 = vst.msk [vmem:[#allocation3 + $0x38] sm:$0xff] %vm1858, %v1870
      %v1873 = vmax.f32 %v1824, %v1826
      %v1874 = vmax.f32 %v1825, %v1827
      %1875 = vst.msk [vmem:[#allocation3 + $0x40] sm:$0xff] %vm1858, %v1873
      %1876 = vst.msk [vmem:[#allocation3 + $0x48] sm:$0xff] %vm1858, %v1874
      %v1877 = vmax.f32 %v1828, %v1830
      %v1878 = vmax.f32 %v1829, %v1831
      %1879 = vst.msk [vmem:[#allocation3 + $0x50] sm:$0xff] %vm1858, %v1877
      %1880 = vst.msk [vmem:[#allocation3 + $0x58] sm:$0xff] %vm1858, %v1878
      %v1881 = vmax.f32 %v1832, %v1834
      %v1882 = vmax.f32 %v1833, %v1835
      %1883 = vst.msk [vmem:[#allocation3 + $0x60] sm:$0xff] %vm1858, %v1881
      %1884 = vst.msk [vmem:[#allocation3 + $0x68] sm:$0xff] %vm1858, %v1882
      %v1885 = vmax.f32 %v1836, %v1838
      %v1886 = vmax.f32 %v1837, %v1839
      %1887 = vst.msk [vmem:[#allocation3 + $0x70] sm:$0xff] %vm1858, %v1885
      %1888 = vst.msk [vmem:[#allocation3 + $0x78] sm:$0xff] %vm1858, %v1886
      %v1889 = vmax.f32 %v1840, %v1842
      %v1890 = vmax.f32 %v1841, %v1843
      %1891 = vst.msk [vmem:[#allocation3 + $0x80] sm:$0xff] %vm1858, %v1889
      %1892 = vst.msk [vmem:[#allocation3 + $0x88] sm:$0xff] %vm1858, %v1890
      %v1893 = vmax.f32 %v1844, %v1846
      %v1894 = vmax.f32 %v1845, %v1847
      %1895 = vst.msk [vmem:[#allocation3 + $0x90] sm:$0xff] %vm1858, %v1893
      %1896 = vst.msk [vmem:[#allocation3 + $0x98] sm:$0xff] %vm1858, %v1894
      %v1897 = vmax.f32 %v1848, %v1850
      %v1898 = vmax.f32 %v1849, %v1851
      %1899 = vst.msk [vmem:[#allocation3 + $0xa0] sm:$0xff] %vm1858, %v1897
      %1900 = vst.msk [vmem:[#allocation3 + $0xa8] sm:$0xff] %vm1858, %v1898
      %v1901 = vmax.f32 %v1852, %v1854
      %v1902 = vmax.f32 %v1853, %v1855
      %1903 = vst.msk [vmem:[#allocation3 + $0xb0] sm:$0xff] %vm1858, %v1901
      %1904 = vst.msk [vmem:[#allocation3 + $0xb8] sm:$0xff] %vm1858, %v1902
      %v1905 = vld [vmem:[#allocation2] sm:$0xff]
      %v1906 = vld [vmem:[#allocation2 + $0x8] sm:$0xff]
      %v1907 = vld [vmem:[#allocation2 + $0x10] sm:$0xff]
      %v1908 = vld [vmem:[#allocation2 + $0x18] sm:$0xff]
      %v1909 = vld [vmem:[#allocation2 + $0x20] sm:$0xff]
      %v1910 = vld [vmem:[#allocation2 + $0x28] sm:$0xff]
      %v1911 = vld [vmem:[#allocation2 + $0x30] sm:$0xff]
      %v1912 = vld [vmem:[#allocation2 + $0x38] sm:$0xff]
      %v1913 = vld [vmem:[#allocation2 + $0x40] sm:$0xff]
      %v1914 = vld [vmem:[#allocation2 + $0x48] sm:$0xff]
      %v1915 = vld [vmem:[#allocation2 + $0x50] sm:$0xff]
      %v1916 = vld [vmem:[#allocation2 + $0x58] sm:$0xff]
      %v1917 = vld [vmem:[#allocation2 + $0x60] sm:$0xff]
      %v1918 = vld [vmem:[#allocation2 + $0x68] sm:$0xff]
      %v1919 = vld [vmem:[#allocation2 + $0x70] sm:$0xff]
      %v1920 = vld [vmem:[#allocation2 + $0x78] sm:$0xff]
      %v1921 = vld [vmem:[#allocation2 + $0x80] sm:$0xff]
      %v1922 = vld [vmem:[#allocation2 + $0x88] sm:$0xff]
      %v1923 = vld [vmem:[#allocation2 + $0x90] sm:$0xff]
      %v1924 = vld [vmem:[#allocation2 + $0x98] sm:$0xff]
      %v1925 = vld [vmem:[#allocation2 + $0xa0] sm:$0xff]
      %v1926 = vld [vmem:[#allocation2 + $0xa8] sm:$0xff]
      %v1927 = vld [vmem:[#allocation2 + $0xb0] sm:$0xff]
      %v1928 = vld [vmem:[#allocation2 + $0xb8] sm:$0xff]
      %v1929 = vld [vmem:[%s4] sm:$0xf]
      %v1930 = vld [vmem:[%s4 + $0x4] sm:$0xf]
      %v1931 = vld [vmem:[%s4 + $0x8] sm:$0xf]
      %v1932 = vld [vmem:[%s4 + $0xc] sm:$0xf]
      %v1933 = vld [vmem:[%s4 + $0x10] sm:$0xf]
      %v1934 = vld [vmem:[%s4 + $0x14] sm:$0xf]
      %v1935 = vld [vmem:[%s4 + $0x18] sm:$0xf]
      %v1936 = vld [vmem:[%s4 + $0x1c] sm:$0xf]
      %v1937 = vld [vmem:[%s4 + $0x20] sm:$0xf]
      %v1938 = vld [vmem:[%s4 + $0x24] sm:$0xf]
      %v1939 = vld [vmem:[%s4 + $0x28] sm:$0xf]
      %v1940 = vld [vmem:[%s4 + $0x2c] sm:$0xf]
      %v1941 = vld [vmem:[%s4 + $0x30] sm:$0xf]
      %v1942 = vld [vmem:[%s4 + $0x34] sm:$0xf]
      %v1943 = vld [vmem:[%s4 + $0x38] sm:$0xf]
      %v1944 = vld [vmem:[%s4 + $0x3c] sm:$0xf]
      %v1945 = vld [vmem:[#allocation2 + $0xc0] sm:$0xff]
      %s1946 = scalar_lea.vmem %s4, 64
      %v1947 = vld [vmem:[%s1946] sm:$0xf]
      %v1948 = vld [vmem:[%s1946 + $0x4] sm:$0xf]
      %v1949 = vld [vmem:[%s1946 + $0x8] sm:$0xf]
      %v1950 = vld [vmem:[%s1946 + $0xc] sm:$0xf]
      %v1951 = vld [vmem:[%s1946 + $0x10] sm:$0xf]
      %v1952 = vld [vmem:[%s1946 + $0x14] sm:$0xf]
      %v1953 = vld [vmem:[%s1946 + $0x18] sm:$0xf]
      %v1954 = vld [vmem:[%s1946 + $0x1c] sm:$0xf]
      %v1955 = vld [vmem:[%s1946 + $0x20] sm:$0xf]
      %v1956 = vld [vmem:[%s1946 + $0x24] sm:$0xf]
      %v1957 = vld [vmem:[%s1946 + $0x28] sm:$0xf]
      %v1958 = vld [vmem:[%s1946 + $0x2c] sm:$0xf]
      %v1959 = vld [vmem:[%s1946 + $0x30] sm:$0xf]
      %v1960 = vld [vmem:[%s1946 + $0x34] sm:$0xf]
      %v1961 = vld [vmem:[%s1946 + $0x38] sm:$0xf]
      %v1962 = vld [vmem:[%s1946 + $0x3c] sm:$0xf]
      %v1979 = vunpack.c.l.b16 %v1947
      %v1980 = vunpack.c.l.b16 %v1948
      %v1981 = vunpack.c.l.b16 %v1949
      %v1982 = vunpack.c.l.b16 %v1950
      %v1983 = vunpack.c.l.b16 %v1951
      %v1984 = vunpack.c.l.b16 %v1952
      %v1985 = vunpack.c.l.b16 %v1953
      %v1986 = vunpack.c.l.b16 %v1954
      %v1987 = vunpack.c.l.b16 %v1955
      %v1988 = vunpack.c.l.b16 %v1956
      %v1989 = vunpack.c.l.b16 %v1957
      %v1990 = vunpack.c.l.b16 %v1958
      %v1991 = vunpack.c.l.b16 %v1959
      %v1992 = vunpack.c.l.b16 %v1960
      %v1993 = vunpack.c.l.b16 %v1961
      %v1994 = vunpack.c.l.b16 %v1962
      %v1995 = vpack.c.b16 %v1980, %v1979
      %v1996 = vpack.c.b16 %v1982, %v1981
      %v1997 = vpack.c.b16 %v1984, %v1983
      %v1998 = vpack.c.b16 %v1986, %v1985
      %v1999 = vpack.c.b16 %v1988, %v1987
      %v2000 = vpack.c.b16 %v1990, %v1989
      %v2001 = vpack.c.b16 %v1992, %v1991
      %v2002 = vpack.c.b16 %v1994, %v1993
      %2011 = vmatprep.subr.bf16.mxu0 0
      %2012 = vmatpush1.bf16.msra.mxu0 %v1995
      %2013 = vmatprep.subr.bf16.mxu0 0
      %2014 = vmatpush1.bf16.msra.mxu0 %v1996
      %2015 = vmatprep.subr.bf16.mxu0 0
      %2016 = vmatpush1.bf16.msra.mxu0 %v1997
      %2017 = vmatprep.subr.bf16.mxu0 0
      %2018 = vmatpush1.bf16.msra.mxu0 %v1998
      %2019 = vmatprep.subr.bf16.mxu0 0
      %2020 = vmatpush1.bf16.msra.mxu0 %v1999
      %2021 = vmatprep.subr.bf16.mxu0 0
      %2022 = vmatpush1.bf16.msra.mxu0 %v2000
      %2023 = vmatprep.subr.bf16.mxu0 0
      %2024 = vmatpush1.bf16.msra.mxu0 %v2001
      %2025 = vmatprep.subr.bf16.mxu0 0
      %2026 = vmatpush1.bf16.msra.mxu0 %v2002
      %2027 = vmatprep.subr.bf16.mxu0 0
      %2028 = vmatpush1.bf16.msra.mxu0 0
      %2029 = vmatprep.subr.bf16.mxu0 0
      %2030 = vmatpush1.bf16.msra.mxu0 0
      %2031 = vmatprep.subr.bf16.mxu0 0
      %2032 = vmatpush1.bf16.msra.mxu0 0
      %2033 = vmatprep.subr.bf16.mxu0 0
      %2034 = vmatpush1.bf16.msra.mxu0 0
      %2035 = vmatprep.subr.bf16.mxu0 0
      %2036 = vmatpush1.bf16.msra.mxu0 0
      %2037 = vmatprep.subr.bf16.mxu0 0
      %2038 = vmatpush1.bf16.msra.mxu0 0
      %2039 = vmatprep.subr.bf16.mxu0 0
      %2040 = vmatpush1.bf16.msra.mxu0 0
      %2041 = vmatprep.subr.bf16.mxu0 0
      %2042 = vmatpush1.bf16.msra.mxu0 0
      %2043 = vmatprep.mubr.bf16.mxu0 0
      %2044 = vmatmul.mubr.bf16.gmra.mrb[0].mxu0 %v1906
      %v2045 = vpop.f32.mrb[0].mxu0
      %v2046 = vadd.f32 0.0, %v2045
      %v2047 = vpop.f32.mrb[0].mxu0
      %v2048 = vpop.f32.mrb[0].mxu0
      %v2049 = vadd.f32 0.0, %v2048
      %v2050 = vpop.f32.mrb[0].mxu0
      %2051 = vmatprep.mubr.bf16.mxu0 0
      %2052 = vmatmul.mubr.bf16.gmra.mrb[0].mxu0 %v1907
      %v2053 = vpop.f32.mrb[0].mxu0
      %v2054 = vadd.f32 0.0, %v2053
      %v2055 = vpop.f32.mrb[0].mxu0
      %v2056 = vpop.f32.mrb[0].mxu0
      %v2057 = vadd.f32 0.0, %v2056
      %v2058 = vpop.f32.mrb[0].mxu0
      %2059 = vmatprep.mubr.bf16.mxu0 0
      %2060 = vmatmul.mubr.bf16.gmra.mrb[0].mxu0 %v1908
      %v2061 = vpop.f32.mrb[0].mxu0
      %v2062 = vadd.f32 0.0, %v2061
      %v2063 = vpop.f32.mrb[0].mxu0
      %v2064 = vpop.f32.mrb[0].mxu0
      %v2065 = vadd.f32 0.0, %v2064
      %v2066 = vpop.f32.mrb[0].mxu0
      %2067 = vmatprep.mubr.bf16.mxu0 0
      %2068 = vmatmul.mubr.bf16.gmra.mrb[0].mxu0 %v1909
      %v2069 = vpop.f32.mrb[0].mxu0
      %v2070 = vadd.f32 0.0, %v2069
      %v2071 = vpop.f32.mrb[0].mxu0
      %v2072 = vpop.f32.mrb[0].mxu0
      %v2073 = vadd.f32 0.0, %v2072
      %v2074 = vpop.f32.mrb[0].mxu0
      %2075 = vmatprep.mubr.bf16.mxu0 0
      %2076 = vmatmul.mubr.bf16.gmra.mrb[0].mxu0 %v1910
      %v2077 = vpop.f32.mrb[0].mxu0
      %v2078 = vadd.f32 0.0, %v2077
      %v2079 = vpop.f32.mrb[0].mxu0
      %v2080 = vpop.f32.mrb[0].mxu0
      %v2081 = vadd.f32 0.0, %v2080
      %v2082 = vpop.f32.mrb[0].mxu0
      %2083 = vmatprep.mubr.bf16.mxu0 0
      %2084 = vmatmul.mubr.bf16.gmra.mrb[0].mxu0 %v1911
      %v2085 = vpop.f32.mrb[0].mxu0
      %v2086 = vadd.f32 0.0, %v2085
      %v2087 = vpop.f32.mrb[0].mxu0
      %v2088 = vpop.f32.mrb[0].mxu0
      %v2089 = vadd.f32 0.0, %v2088
      %v2090 = vpop.f32.mrb[0].mxu0
      %2091 = vmatprep.mubr.bf16.mxu0 0
      %2092 = vmatmul.mubr.bf16.gmra.mrb[0].mxu0 %v1912
      %v2093 = vpop.f32.mrb[0].mxu0
      %v2094 = vadd.f32 0.0, %v2093
      %v2095 = vpop.f32.mrb[0].mxu0
      %v2096 = vpop.f32.mrb[0].mxu0
      %v2097 = vadd.f32 0.0, %v2096
      %v2098 = vpop.f32.mrb[0].mxu0
      %2099 = vmatprep.mubr.bf16.mxu0 0
      %2100 = vmatmul.mubr.bf16.gmra.mrb[0].mxu0 %v1913
      %v2101 = vpop.f32.mrb[0].mxu0
      %v2102 = vadd.f32 0.0, %v2101
      %v2103 = vpop.f32.mrb[0].mxu0
      %v2104 = vpop.f32.mrb[0].mxu0
      %v2105 = vadd.f32 0.0, %v2104
      %v2106 = vpop.f32.mrb[0].mxu0
      %2107 = vmatprep.mubr.bf16.mxu0 0
      %2108 = vmatmul.mubr.bf16.gmra.mrb[0].mxu0 %v1914
      %v2109 = vpop.f32.mrb[0].mxu0
      %v2110 = vadd.f32 0.0, %v2109
      %v2111 = vpop.f32.mrb[0].mxu0
      %v2112 = vpop.f32.mrb[0].mxu0
      %v2113 = vadd.f32 0.0, %v2112
      %v2114 = vpop.f32.mrb[0].mxu0
      %2115 = vmatprep.mubr.bf16.mxu0 0
      %2116 = vmatmul.mubr.bf16.gmra.mrb[0].mxu0 %v1915
      %v2117 = vpop.f32.mrb[0].mxu0
      %v2118 = vadd.f32 0.0, %v2117
      %v2119 = vpop.f32.mrb[0].mxu0
      %v2120 = vpop.f32.mrb[0].mxu0
      %v2121 = vadd.f32 0.0, %v2120
      %v2122 = vpop.f32.mrb[0].mxu0
      %2123 = vmatprep.mubr.bf16.mxu0 0
      %2124 = vmatmul.mubr.bf16.gmra.mrb[0].mxu0 %v1916
      %v2125 = vpop.f32.mrb[0].mxu0
      %v2126 = vadd.f32 0.0, %v2125
      %v2127 = vpop.f32.mrb[0].mxu0
      %v2128 = vpop.f32.mrb[0].mxu0
      %v2129 = vadd.f32 0.0, %v2128
      %v2130 = vpop.f32.mrb[0].mxu0
      %2131 = vmatprep.mubr.bf16.mxu0 0
      %2132 = vmatmul.mubr.bf16.gmra.mrb[0].mxu0 %v1917
      %v2133 = vpop.f32.mrb[0].mxu0
      %v2134 = vadd.f32 0.0, %v2133
      %v2135 = vpop.f32.mrb[0].mxu0
      %v2136 = vpop.f32.mrb[0].mxu0
      %v2137 = vadd.f32 0.0, %v2136
      %v2138 = vpop.f32.mrb[0].mxu0
      %2139 = vmatprep.mubr.bf16.mxu0 0
      %2140 = vmatmul.mubr.bf16.gmra.mrb[0].mxu0 %v1918
      %v2141 = vpop.f32.mrb[0].mxu0
      %v2142 = vadd.f32 0.0, %v2141
      %v2143 = vpop.f32.mrb[0].mxu0
      %v2144 = vpop.f32.mrb[0].mxu0
      %v2145 = vadd.f32 0.0, %v2144
      %v2146 = vpop.f32.mrb[0].mxu0
      %2147 = vmatprep.mubr.bf16.mxu0 0
      %2148 = vmatmul.mubr.bf16.gmra.mrb[0].mxu0 %v1919
      %v2149 = vpop.f32.mrb[0].mxu0
      %v2150 = vadd.f32 0.0, %v2149
      %v2151 = vpop.f32.mrb[0].mxu0
      %v2152 = vpop.f32.mrb[0].mxu0
      %v2153 = vadd.f32 0.0, %v2152
      %v2154 = vpop.f32.mrb[0].mxu0
      %2155 = vmatprep.mubr.bf16.mxu0 0
      %2156 = vmatmul.mubr.bf16.gmra.mrb[0].mxu0 %v1920
      %v2157 = vpop.f32.mrb[0].mxu0
      %v2158 = vadd.f32 0.0, %v2157
      %v2159 = vpop.f32.mrb[0].mxu0
      %v2160 = vpop.f32.mrb[0].mxu0
      %v2161 = vadd.f32 0.0, %v2160
      %v2162 = vpop.f32.mrb[0].mxu0
      %2163 = vmatprep.mubr.bf16.mxu0 0
      %2164 = vmatmul.mubr.bf16.gmra.mrb[0].mxu0 %v1921
      %v2165 = vpop.f32.mrb[0].mxu0
      %v2166 = vadd.f32 0.0, %v2165
      %v2167 = vpop.f32.mrb[0].mxu0
      %v2168 = vpop.f32.mrb[0].mxu0
      %v2169 = vadd.f32 0.0, %v2168
      %v2170 = vpop.f32.mrb[0].mxu0
      %2171 = vmatprep.mubr.bf16.mxu0 0
      %2172 = vmatmul.mubr.bf16.gmra.mrb[0].mxu0 %v1922
      %v2173 = vpop.f32.mrb[0].mxu0
      %v2174 = vadd.f32 0.0, %v2173
      %v2175 = vpop.f32.mrb[0].mxu0
      %v2176 = vpop.f32.mrb[0].mxu0
      %v2177 = vadd.f32 0.0, %v2176
      %v2178 = vpop.f32.mrb[0].mxu0
      %2179 = vmatprep.mubr.bf16.mxu0 0
      %2180 = vmatmul.mubr.bf16.gmra.mrb[0].mxu0 %v1923
      %v2181 = vpop.f32.mrb[0].mxu0
      %v2182 = vadd.f32 0.0, %v2181
      %v2183 = vpop.f32.mrb[0].mxu0
      %v2184 = vpop.f32.mrb[0].mxu0
      %v2185 = vadd.f32 0.0, %v2184
      %v2186 = vpop.f32.mrb[0].mxu0
      %2187 = vmatprep.mubr.bf16.mxu0 0
      %2188 = vmatmul.mubr.bf16.gmra.mrb[0].mxu0 %v1924
      %v2189 = vpop.f32.mrb[0].mxu0
      %v2190 = vadd.f32 0.0, %v2189
      %v2191 = vpop.f32.mrb[0].mxu0
      %v2192 = vpop.f32.mrb[0].mxu0
      %v2193 = vadd.f32 0.0, %v2192
      %v2194 = vpop.f32.mrb[0].mxu0
      %2195 = vmatprep.mubr.bf16.mxu0 0
      %2196 = vmatmul.mubr.bf16.gmra.mrb[0].mxu0 %v1925
      %v2197 = vpop.f32.mrb[0].mxu0
      %v2198 = vadd.f32 0.0, %v2197
      %v2199 = vpop.f32.mrb[0].mxu0
      %v2200 = vpop.f32.mrb[0].mxu0
      %v2201 = vadd.f32 0.0, %v2200
      %v2202 = vpop.f32.mrb[0].mxu0
      %2203 = vmatprep.mubr.bf16.mxu0 0
      %2204 = vmatmul.mubr.bf16.gmra.mrb[0].mxu0 %v1926
      %v2205 = vpop.f32.mrb[0].mxu0
      %v2206 = vadd.f32 0.0, %v2205
      %v2207 = vpop.f32.mrb[0].mxu0
      %v2208 = vpop.f32.mrb[0].mxu0
      %v2209 = vadd.f32 0.0, %v2208
      %v2210 = vpop.f32.mrb[0].mxu0
      %2211 = vmatprep.mubr.bf16.mxu0 0
      %2212 = vmatmul.mubr.bf16.gmra.mrb[0].mxu0 %v1927
      %v2213 = vpop.f32.mrb[0].mxu0
      %v2214 = vadd.f32 0.0, %v2213
      %v2215 = vpop.f32.mrb[0].mxu0
      %v2216 = vpop.f32.mrb[0].mxu0
      %v2217 = vadd.f32 0.0, %v2216
      %v2218 = vpop.f32.mrb[0].mxu0
      %2219 = vmatprep.mubr.bf16.mxu0 0
      %2220 = vmatmul.mubr.bf16.gmra.mrb[0].mxu0 %v1928
      %v2221 = vpop.f32.mrb[0].mxu0
      %v2222 = vadd.f32 0.0, %v2221
      %v2223 = vpop.f32.mrb[0].mxu0
      %v2224 = vpop.f32.mrb[0].mxu0
      %v2225 = vadd.f32 0.0, %v2224
      %v2226 = vpop.f32.mrb[0].mxu0
      %2227 = vmatprep.mubr.bf16.mxu0 0
      %2228 = vmatmul.mubr.bf16.gmra.mrb[0].mxu0 %v1945
      %v2229 = vpop.f32.mrb[0].mxu0
      %v2230 = vadd.f32 0.0, %v2229
      %v2231 = vpop.f32.mrb[0].mxu0
      %v2232 = vpop.f32.mrb[0].mxu0
      %v2233 = vadd.f32 0.0, %v2232
      %v2234 = vpop.f32.mrb[0].mxu0
      %2235 = vdwg.mxu0
      %v2252 = vunpack.c.l.b16 %v1929
      %v2253 = vunpack.c.l.b16 %v1930
      %v2254 = vunpack.c.l.b16 %v1931
      %v2255 = vunpack.c.l.b16 %v1932
      %v2256 = vunpack.c.l.b16 %v1933
      %v2257 = vunpack.c.l.b16 %v1934
      %v2258 = vunpack.c.l.b16 %v1935
      %v2259 = vunpack.c.l.b16 %v1936
      %v2260 = vunpack.c.l.b16 %v1937
      %v2261 = vunpack.c.l.b16 %v1938
      %v2262 = vunpack.c.l.b16 %v1939
      %v2263 = vunpack.c.l.b16 %v1940
      %v2264 = vunpack.c.l.b16 %v1941
      %v2265 = vunpack.c.l.b16 %v1942
      %v2266 = vunpack.c.l.b16 %v1943
      %v2267 = vunpack.c.l.b16 %v1944
      %v2268 = vpack.c.b16 %v2253, %v2252
      %v2269 = vpack.c.b16 %v2255, %v2254
      %v2270 = vpack.c.b16 %v2257, %v2256
      %v2271 = vpack.c.b16 %v2259, %v2258
      %v2272 = vpack.c.b16 %v2261, %v2260
      %v2273 = vpack.c.b16 %v2263, %v2262
      %v2274 = vpack.c.b16 %v2265, %v2264
      %v2275 = vpack.c.b16 %v2267, %v2266
      %2284 = vmatprep.subr.bf16.mxu0 0
      %2285 = vmatpush1.bf16.msra.mxu0 %v2268
      %2286 = vmatprep.subr.bf16.mxu0 0
      %2287 = vmatpush1.bf16.msra.mxu0 %v2269
      %2288 = vmatprep.subr.bf16.mxu0 0
      %2289 = vmatpush1.bf16.msra.mxu0 %v2270
      %2290 = vmatprep.subr.bf16.mxu0 0
      %2291 = vmatpush1.bf16.msra.mxu0 %v2271
      %2292 = vmatprep.subr.bf16.mxu0 0
      %2293 = vmatpush1.bf16.msra.mxu0 %v2272
      %2294 = vmatprep.subr.bf16.mxu0 0
      %2295 = vmatpush1.bf16.msra.mxu0 %v2273
      %2296 = vmatprep.subr.bf16.mxu0 0
      %2297 = vmatpush1.bf16.msra.mxu0 %v2274
      %2298 = vmatprep.subr.bf16.mxu0 0
      %2299 = vmatpush1.bf16.msra.mxu0 %v2275
      %2300 = vmatprep.subr.bf16.mxu0 0
      %2301 = vmatpush1.bf16.msra.mxu0 0
      %2302 = vmatprep.subr.bf16.mxu0 0
      %2303 = vmatpush1.bf16.msra.mxu0 0
      %2304 = vmatprep.subr.bf16.mxu0 0
      %2305 = vmatpush1.bf16.msra.mxu0 0
      %2306 = vmatprep.subr.bf16.mxu0 0
      %2307 = vmatpush1.bf16.msra.mxu0 0
      %2308 = vmatprep.subr.bf16.mxu0 0
      %2309 = vmatpush1.bf16.msra.mxu0 0
      %2310 = vmatprep.subr.bf16.mxu0 0
      %2311 = vmatpush1.bf16.msra.mxu0 0
      %2312 = vmatprep.subr.bf16.mxu0 0
      %2313 = vmatpush1.bf16.msra.mxu0 0
      %2314 = vmatprep.subr.bf16.mxu0 0
      %2315 = vmatpush1.bf16.msra.mxu0 0
      %2316 = vmatprep.mubr.bf16.mxu0 0
      %2317 = vmatmul.mubr.bf16.gmra.mrb[0].mxu0 %v1905
      %v2318 = vpop.f32.mrb[0].mxu0
      %v2319 = vadd.f32 %v2046, %v2318
      %v2320 = vpop.f32.mrb[0].mxu0
      %v2321 = vpop.f32.mrb[0].mxu0
      %v2322 = vadd.f32 %v2049, %v2321
      %v2323 = vpop.f32.mrb[0].mxu0
      %2324 = vmatprep.mubr.bf16.mxu0 0
      %2325 = vmatmul.mubr.bf16.gmra.mrb[0].mxu0 %v1906
      %v2326 = vpop.f32.mrb[0].mxu0
      %v2327 = vadd.f32 %v2054, %v2326
      %v2328 = vpop.f32.mrb[0].mxu0
      %v2329 = vpop.f32.mrb[0].mxu0
      %v2330 = vadd.f32 %v2057, %v2329
      %v2331 = vpop.f32.mrb[0].mxu0
      %2332 = vmatprep.mubr.bf16.mxu0 0
      %2333 = vmatmul.mubr.bf16.gmra.mrb[0].mxu0 %v1907
      %v2334 = vpop.f32.mrb[0].mxu0
      %v2335 = vadd.f32 %v2062, %v2334
      %v2336 = vpop.f32.mrb[0].mxu0
      %v2337 = vpop.f32.mrb[0].mxu0
      %v2338 = vadd.f32 %v2065, %v2337
      %v2339 = vpop.f32.mrb[0].mxu0
      %2340 = vmatprep.mubr.bf16.mxu0 0
      %2341 = vmatmul.mubr.bf16.gmra.mrb[0].mxu0 %v1908
      %v2342 = vpop.f32.mrb[0].mxu0
      %v2343 = vadd.f32 %v2070, %v2342
      %v2344 = vpop.f32.mrb[0].mxu0
      %v2345 = vpop.f32.mrb[0].mxu0
      %v2346 = vadd.f32 %v2073, %v2345
      %v2347 = vpop.f32.mrb[0].mxu0
      %2348 = vmatprep.mubr.bf16.mxu0 0
      %2349 = vmatmul.mubr.bf16.gmra.mrb[0].mxu0 %v1909
      %v2350 = vpop.f32.mrb[0].mxu0
      %v2351 = vadd.f32 %v2078, %v2350
      %v2352 = vpop.f32.mrb[0].mxu0
      %v2353 = vpop.f32.mrb[0].mxu0
      %v2354 = vadd.f32 %v2081, %v2353
      %v2355 = vpop.f32.mrb[0].mxu0
      %2356 = vmatprep.mubr.bf16.mxu0 0
      %2357 = vmatmul.mubr.bf16.gmra.mrb[0].mxu0 %v1910
      %v2358 = vpop.f32.mrb[0].mxu0
      %v2359 = vadd.f32 %v2086, %v2358
      %v2360 = vpop.f32.mrb[0].mxu0
      %v2361 = vpop.f32.mrb[0].mxu0
      %v2362 = vadd.f32 %v2089, %v2361
      %v2363 = vpop.f32.mrb[0].mxu0
      %2364 = vmatprep.mubr.bf16.mxu0 0
      %2365 = vmatmul.mubr.bf16.gmra.mrb[0].mxu0 %v1911
      %v2366 = vpop.f32.mrb[0].mxu0
      %v2367 = vadd.f32 %v2094, %v2366
      %v2368 = vpop.f32.mrb[0].mxu0
      %v2369 = vpop.f32.mrb[0].mxu0
      %v2370 = vadd.f32 %v2097, %v2369
      %v2371 = vpop.f32.mrb[0].mxu0
      %2372 = vmatprep.mubr.bf16.mxu0 0
      %2373 = vmatmul.mubr.bf16.gmra.mrb[0].mxu0 %v1912
      %v2374 = vpop.f32.mrb[0].mxu0
      %v2375 = vadd.f32 %v2102, %v2374
      %v2376 = vpop.f32.mrb[0].mxu0
      %v2377 = vpop.f32.mrb[0].mxu0
      %v2378 = vadd.f32 %v2105, %v2377
      %v2379 = vpop.f32.mrb[0].mxu0
      %2380 = vmatprep.mubr.bf16.mxu0 0
      %2381 = vmatmul.mubr.bf16.gmra.mrb[0].mxu0 %v1913
      %v2382 = vpop.f32.mrb[0].mxu0
      %v2383 = vadd.f32 %v2110, %v2382
      %v2384 = vpop.f32.mrb[0].mxu0
      %v2385 = vpop.f32.mrb[0].mxu0
      %v2386 = vadd.f32 %v2113, %v2385
      %v2387 = vpop.f32.mrb[0].mxu0
      %2388 = vmatprep.mubr.bf16.mxu0 0
      %2389 = vmatmul.mubr.bf16.gmra.mrb[0].mxu0 %v1914
      %v2390 = vpop.f32.mrb[0].mxu0
      %v2391 = vadd.f32 %v2118, %v2390
      %v2392 = vpop.f32.mrb[0].mxu0
      %v2393 = vpop.f32.mrb[0].mxu0
      %v2394 = vadd.f32 %v2121, %v2393
      %v2395 = vpop.f32.mrb[0].mxu0
      %2396 = vmatprep.mubr.bf16.mxu0 0
      %2397 = vmatmul.mubr.bf16.gmra.mrb[0].mxu0 %v1915
      %v2398 = vpop.f32.mrb[0].mxu0
      %v2399 = vadd.f32 %v2126, %v2398
      %v2400 = vpop.f32.mrb[0].mxu0
      %v2401 = vpop.f32.mrb[0].mxu0
      %v2402 = vadd.f32 %v2129, %v2401
      %v2403 = vpop.f32.mrb[0].mxu0
      %2404 = vmatprep.mubr.bf16.mxu0 0
      %2405 = vmatmul.mubr.bf16.gmra.mrb[0].mxu0 %v1916
      %v2406 = vpop.f32.mrb[0].mxu0
      %v2407 = vadd.f32 %v2134, %v2406
      %v2408 = vpop.f32.mrb[0].mxu0
      %v2409 = vpop.f32.mrb[0].mxu0
      %v2410 = vadd.f32 %v2137, %v2409
      %v2411 = vpop.f32.mrb[0].mxu0
      %2412 = vmatprep.mubr.bf16.mxu0 0
      %2413 = vmatmul.mubr.bf16.gmra.mrb[0].mxu0 %v1917
      %v2414 = vpop.f32.mrb[0].mxu0
      %v2415 = vadd.f32 %v2142, %v2414
      %v2416 = vpop.f32.mrb[0].mxu0
      %v2417 = vpop.f32.mrb[0].mxu0
      %v2418 = vadd.f32 %v2145, %v2417
      %v2419 = vpop.f32.mrb[0].mxu0
      %2420 = vmatprep.mubr.bf16.mxu0 0
      %2421 = vmatmul.mubr.bf16.gmra.mrb[0].mxu0 %v1918
      %v2422 = vpop.f32.mrb[0].mxu0
      %v2423 = vadd.f32 %v2150, %v2422
      %v2424 = vpop.f32.mrb[0].mxu0
      %v2425 = vpop.f32.mrb[0].mxu0
      %v2426 = vadd.f32 %v2153, %v2425
      %v2427 = vpop.f32.mrb[0].mxu0
      %2428 = vmatprep.mubr.bf16.mxu0 0
      %2429 = vmatmul.mubr.bf16.gmra.mrb[0].mxu0 %v1919
      %v2430 = vpop.f32.mrb[0].mxu0
      %v2431 = vadd.f32 %v2158, %v2430
      %v2432 = vpop.f32.mrb[0].mxu0
      %v2433 = vpop.f32.mrb[0].mxu0
      %v2434 = vadd.f32 %v2161, %v2433
      %v2435 = vpop.f32.mrb[0].mxu0
      %2436 = vmatprep.mubr.bf16.mxu0 0
      %2437 = vmatmul.mubr.bf16.gmra.mrb[0].mxu0 %v1920
      %v2438 = vpop.f32.mrb[0].mxu0
      %v2439 = vadd.f32 %v2166, %v2438
      %v2440 = vpop.f32.mrb[0].mxu0
      %v2441 = vpop.f32.mrb[0].mxu0
      %v2442 = vadd.f32 %v2169, %v2441
      %v2443 = vpop.f32.mrb[0].mxu0
      %2444 = vmatprep.mubr.bf16.mxu0 0
      %2445 = vmatmul.mubr.bf16.gmra.mrb[0].mxu0 %v1921
      %v2446 = vpop.f32.mrb[0].mxu0
      %v2447 = vadd.f32 %v2174, %v2446
      %v2448 = vpop.f32.mrb[0].mxu0
      %v2449 = vpop.f32.mrb[0].mxu0
      %v2450 = vadd.f32 %v2177, %v2449
      %v2451 = vpop.f32.mrb[0].mxu0
      %2452 = vmatprep.mubr.bf16.mxu0 0
      %2453 = vmatmul.mubr.bf16.gmra.mrb[0].mxu0 %v1922
      %v2454 = vpop.f32.mrb[0].mxu0
      %v2455 = vadd.f32 %v2182, %v2454
      %v2456 = vpop.f32.mrb[0].mxu0
      %v2457 = vpop.f32.mrb[0].mxu0
      %v2458 = vadd.f32 %v2185, %v2457
      %v2459 = vpop.f32.mrb[0].mxu0
      %2460 = vmatprep.mubr.bf16.mxu0 0
      %2461 = vmatmul.mubr.bf16.gmra.mrb[0].mxu0 %v1923
      %v2462 = vpop.f32.mrb[0].mxu0
      %v2463 = vadd.f32 %v2190, %v2462
      %v2464 = vpop.f32.mrb[0].mxu0
      %v2465 = vpop.f32.mrb[0].mxu0
      %v2466 = vadd.f32 %v2193, %v2465
      %v2467 = vpop.f32.mrb[0].mxu0
      %2468 = vmatprep.mubr.bf16.mxu0 0
      %2469 = vmatmul.mubr.bf16.gmra.mrb[0].mxu0 %v1924
      %v2470 = vpop.f32.mrb[0].mxu0
      %v2471 = vadd.f32 %v2198, %v2470
      %v2472 = vpop.f32.mrb[0].mxu0
      %v2473 = vpop.f32.mrb[0].mxu0
      %v2474 = vadd.f32 %v2201, %v2473
      %v2475 = vpop.f32.mrb[0].mxu0
      %2476 = vmatprep.mubr.bf16.mxu0 0
      %2477 = vmatmul.mubr.bf16.gmra.mrb[0].mxu0 %v1925
      %v2478 = vpop.f32.mrb[0].mxu0
      %v2479 = vadd.f32 %v2206, %v2478
      %v2480 = vpop.f32.mrb[0].mxu0
      %v2481 = vpop.f32.mrb[0].mxu0
      %v2482 = vadd.f32 %v2209, %v2481
      %v2483 = vpop.f32.mrb[0].mxu0
      %2484 = vmatprep.mubr.bf16.mxu0 0
      %2485 = vmatmul.mubr.bf16.gmra.mrb[0].mxu0 %v1926
      %v2486 = vpop.f32.mrb[0].mxu0
      %v2487 = vadd.f32 %v2214, %v2486
      %v2488 = vpop.f32.mrb[0].mxu0
      %v2489 = vpop.f32.mrb[0].mxu0
      %v2490 = vadd.f32 %v2217, %v2489
      %v2491 = vpop.f32.mrb[0].mxu0
      %2492 = vmatprep.mubr.bf16.mxu0 0
      %2493 = vmatmul.mubr.bf16.gmra.mrb[0].mxu0 %v1927
      %v2494 = vpop.f32.mrb[0].mxu0
      %v2495 = vadd.f32 %v2222, %v2494
      %v2496 = vpop.f32.mrb[0].mxu0
      %v2497 = vpop.f32.mrb[0].mxu0
      %v2498 = vadd.f32 %v2225, %v2497
      %v2499 = vpop.f32.mrb[0].mxu0
      %2500 = vmatprep.mubr.bf16.mxu0 0
      %2501 = vmatmul.mubr.bf16.gmra.mrb[0].mxu0 %v1928
      %v2502 = vpop.f32.mrb[0].mxu0
      %v2503 = vadd.f32 %v2230, %v2502
      %v2504 = vpop.f32.mrb[0].mxu0
      %v2505 = vpop.f32.mrb[0].mxu0
      %v2506 = vadd.f32 %v2233, %v2505
      %v2507 = vpop.f32.mrb[0].mxu0
      %2508 = vdwg.mxu0
      %v2509 = vld [vmem:[#allocation2 + $0x10] sm:$0xff]
      %v2510 = vld [vmem:[#allocation2 + $0x18] sm:$0xff]
      %v2511 = vld [vmem:[#allocation2 + $0x20] sm:$0xff]
      %v2512 = vld [vmem:[#allocation2 + $0x28] sm:$0xff]
      %v2513 = vld [vmem:[#allocation2 + $0x30] sm:$0xff]
      %v2514 = vld [vmem:[#allocation2 + $0x38] sm:$0xff]
      %v2515 = vld [vmem:[#allocation2 + $0x40] sm:$0xff]
      %v2516 = vld [vmem:[#allocation2 + $0x48] sm:$0xff]
      %v2517 = vld [vmem:[#allocation2 + $0x50] sm:$0xff]
      %v2518 = vld [vmem:[#allocation2 + $0x58] sm:$0xff]
      %v2519 = vld [vmem:[#allocation2 + $0x60] sm:$0xff]
      %v2520 = vld [vmem:[#allocation2 + $0x68] sm:$0xff]
      %v2521 = vld [vmem:[#allocation2 + $0x70] sm:$0xff]
      %v2522 = vld [vmem:[#allocation2 + $0x78] sm:$0xff]
      %v2523 = vld [vmem:[#allocation2 + $0x80] sm:$0xff]
      %v2524 = vld [vmem:[#allocation2 + $0x88] sm:$0xff]
      %v2525 = vld [vmem:[#allocation2 + $0x90] sm:$0xff]
      %v2526 = vld [vmem:[#allocation2 + $0x98] sm:$0xff]
      %v2527 = vld [vmem:[#allocation2 + $0xa0] sm:$0xff]
      %v2528 = vld [vmem:[#allocation2 + $0xa8] sm:$0xff]
      %v2529 = vld [vmem:[#allocation2 + $0xb0] sm:$0xff]
      %v2530 = vld [vmem:[#allocation2 + $0xb8] sm:$0xff]
      %v2531 = vld [vmem:[#allocation2 + $0xc0] sm:$0xff]
      %v2532 = vld [vmem:[#allocation2 + $0xc8] sm:$0xff]
      %s2533 = scalar_lea.vmem %s4, 128
      %v2534 = vld [vmem:[%s2533] sm:$0xf]
      %v2535 = vld [vmem:[%s2533 + $0x4] sm:$0xf]
      %v2536 = vld [vmem:[%s2533 + $0x8] sm:$0xf]
      %v2537 = vld [vmem:[%s2533 + $0xc] sm:$0xf]
      %v2538 = vld [vmem:[%s2533 + $0x10] sm:$0xf]
      %v2539 = vld [vmem:[%s2533 + $0x14] sm:$0xf]
      %v2540 = vld [vmem:[%s2533 + $0x18] sm:$0xf]
      %v2541 = vld [vmem:[%s2533 + $0x1c] sm:$0xf]
      %v2542 = vld [vmem:[%s2533 + $0x20] sm:$0xf]
      %v2543 = vld [vmem:[%s2533 + $0x24] sm:$0xf]
      %v2544 = vld [vmem:[%s2533 + $0x28] sm:$0xf]
      %v2545 = vld [vmem:[%s2533 + $0x2c] sm:$0xf]
      %v2546 = vld [vmem:[%s2533 + $0x30] sm:$0xf]
      %v2547 = vld [vmem:[%s2533 + $0x34] sm:$0xf]
      %v2548 = vld [vmem:[%s2533 + $0x38] sm:$0xf]
      %v2549 = vld [vmem:[%s2533 + $0x3c] sm:$0xf]
      %v2566 = vunpack.c.l.b16 %v2534
      %v2567 = vunpack.c.l.b16 %v2535
      %v2568 = vunpack.c.l.b16 %v2536
      %v2569 = vunpack.c.l.b16 %v2537
      %v2570 = vunpack.c.l.b16 %v2538
      %v2571 = vunpack.c.l.b16 %v2539
      %v2572 = vunpack.c.l.b16 %v2540
      %v2573 = vunpack.c.l.b16 %v2541
      %v2574 = vunpack.c.l.b16 %v2542
      %v2575 = vunpack.c.l.b16 %v2543
      %v2576 = vunpack.c.l.b16 %v2544
      %v2577 = vunpack.c.l.b16 %v2545
      %v2578 = vunpack.c.l.b16 %v2546
      %v2579 = vunpack.c.l.b16 %v2547
      %v2580 = vunpack.c.l.b16 %v2548
      %v2581 = vunpack.c.l.b16 %v2549
      %v2582 = vpack.c.b16 %v2567, %v2566
      %v2583 = vpack.c.b16 %v2569, %v2568
      %v2584 = vpack.c.b16 %v2571, %v2570
      %v2585 = vpack.c.b16 %v2573, %v2572
      %v2586 = vpack.c.b16 %v2575, %v2574
      %v2587 = vpack.c.b16 %v2577, %v2576
      %v2588 = vpack.c.b16 %v2579, %v2578
      %v2589 = vpack.c.b16 %v2581, %v2580
      %2598 = vmatprep.subr.bf16.mxu0 0
      %2599 = vmatpush1.bf16.msra.mxu0 %v2582
      %2600 = vmatprep.subr.bf16.mxu0 0
      %2601 = vmatpush1.bf16.msra.mxu0 %v2583
      %2602 = vmatprep.subr.bf16.mxu0 0
      %2603 = vmatpush1.bf16.msra.mxu0 %v2584
      %2604 = vmatprep.subr.bf16.mxu0 0
      %2605 = vmatpush1.bf16.msra.mxu0 %v2585
      %2606 = vmatprep.subr.bf16.mxu0 0
      %2607 = vmatpush1.bf16.msra.mxu0 %v2586
      %2608 = vmatprep.subr.bf16.mxu0 0
      %2609 = vmatpush1.bf16.msra.mxu0 %v2587
      %2610 = vmatprep.subr.bf16.mxu0 0
      %2611 = vmatpush1.bf16.msra.mxu0 %v2588
      %2612 = vmatprep.subr.bf16.mxu0 0
      %2613 = vmatpush1.bf16.msra.mxu0 %v2589
      %2614 = vmatprep.subr.bf16.mxu0 0
      %2615 = vmatpush1.bf16.msra.mxu0 0
      %2616 = vmatprep.subr.bf16.mxu0 0
      %2617 = vmatpush1.bf16.msra.mxu0 0
      %2618 = vmatprep.subr.bf16.mxu0 0
      %2619 = vmatpush1.bf16.msra.mxu0 0
      %2620 = vmatprep.subr.bf16.mxu0 0
      %2621 = vmatpush1.bf16.msra.mxu0 0
      %2622 = vmatprep.subr.bf16.mxu0 0
      %2623 = vmatpush1.bf16.msra.mxu0 0
      %2624 = vmatprep.subr.bf16.mxu0 0
      %2625 = vmatpush1.bf16.msra.mxu0 0
      %2626 = vmatprep.subr.bf16.mxu0 0
      %2627 = vmatpush1.bf16.msra.mxu0 0
      %2628 = vmatprep.subr.bf16.mxu0 0
      %2629 = vmatpush1.bf16.msra.mxu0 0
      %2630 = vmatprep.mubr.bf16.mxu0 0
      %2631 = vmatmul.mubr.bf16.gmra.mrb[0].mxu0 %v2509
      %v2632 = vpop.f32.mrb[0].mxu0
      %v2633 = vadd.f32 0.0, %v2632
      %v2634 = vpop.f32.mrb[0].mxu0
      %v2635 = vpop.f32.mrb[0].mxu0
      %v2636 = vadd.f32 0.0, %v2635
      %v2637 = vpop.f32.mrb[0].mxu0
      %2638 = vmatprep.mubr.bf16.mxu0 0
      %2639 = vmatmul.mubr.bf16.gmra.mrb[0].mxu0 %v2510
      %v2640 = vpop.f32.mrb[0].mxu0
      %v2641 = vadd.f32 0.0, %v2640
      %v2642 = vpop.f32.mrb[0].mxu0
      %v2643 = vpop.f32.mrb[0].mxu0
      %v2644 = vadd.f32 0.0, %v2643
      %v2645 = vpop.f32.mrb[0].mxu0
      %2646 = vmatprep.mubr.bf16.mxu0 0
      %2647 = vmatmul.mubr.bf16.gmra.mrb[0].mxu0 %v2511
      %v2648 = vpop.f32.mrb[0].mxu0
      %v2649 = vadd.f32 0.0, %v2648
      %v2650 = vpop.f32.mrb[0].mxu0
      %v2651 = vpop.f32.mrb[0].mxu0
      %v2652 = vadd.f32 0.0, %v2651
      %v2653 = vpop.f32.mrb[0].mxu0
      %2654 = vmatprep.mubr.bf16.mxu0 0
      %2655 = vmatmul.mubr.bf16.gmra.mrb[0].mxu0 %v2512
      %v2656 = vpop.f32.mrb[0].mxu0
      %v2657 = vadd.f32 0.0, %v2656
      %v2658 = vpop.f32.mrb[0].mxu0
      %v2659 = vpop.f32.mrb[0].mxu0
      %v2660 = vadd.f32 0.0, %v2659
      %v2661 = vpop.f32.mrb[0].mxu0
      %2662 = vmatprep.mubr.bf16.mxu0 0
      %2663 = vmatmul.mubr.bf16.gmra.mrb[0].mxu0 %v2513
      %v2664 = vpop.f32.mrb[0].mxu0
      %v2665 = vadd.f32 0.0, %v2664
      %v2666 = vpop.f32.mrb[0].mxu0
      %v2667 = vpop.f32.mrb[0].mxu0
      %v2668 = vadd.f32 0.0, %v2667
      %v2669 = vpop.f32.mrb[0].mxu0
      %2670 = vmatprep.mubr.bf16.mxu0 0
      %2671 = vmatmul.mubr.bf16.gmra.mrb[0].mxu0 %v2514
      %v2672 = vpop.f32.mrb[0].mxu0
      %v2673 = vadd.f32 0.0, %v2672
      %v2674 = vpop.f32.mrb[0].mxu0
      %v2675 = vpop.f32.mrb[0].mxu0
      %v2676 = vadd.f32 0.0, %v2675
      %v2677 = vpop.f32.mrb[0].mxu0
      %2678 = vmatprep.mubr.bf16.mxu0 0
      %2679 = vmatmul.mubr.bf16.gmra.mrb[0].mxu0 %v2515
      %v2680 = vpop.f32.mrb[0].mxu0
      %v2681 = vadd.f32 0.0, %v2680
      %v2682 = vpop.f32.mrb[0].mxu0
      %v2683 = vpop.f32.mrb[0].mxu0
      %v2684 = vadd.f32 0.0, %v2683
      %v2685 = vpop.f32.mrb[0].mxu0
      %2686 = vmatprep.mubr.bf16.mxu0 0
      %2687 = vmatmul.mubr.bf16.gmra.mrb[0].mxu0 %v2516
      %v2688 = vpop.f32.mrb[0].mxu0
      %v2689 = vadd.f32 0.0, %v2688
      %v2690 = vpop.f32.mrb[0].mxu0
      %v2691 = vpop.f32.mrb[0].mxu0
      %v2692 = vadd.f32 0.0, %v2691
      %v2693 = vpop.f32.mrb[0].mxu0
      %2694 = vmatprep.mubr.bf16.mxu0 0
      %2695 = vmatmul.mubr.bf16.gmra.mrb[0].mxu0 %v2517
      %v2696 = vpop.f32.mrb[0].mxu0
      %v2697 = vadd.f32 0.0, %v2696
      %v2698 = vpop.f32.mrb[0].mxu0
      %v2699 = vpop.f32.mrb[0].mxu0
      %v2700 = vadd.f32 0.0, %v2699
      %v2701 = vpop.f32.mrb[0].mxu0
      %2702 = vmatprep.mubr.bf16.mxu0 0
      %2703 = vmatmul.mubr.bf16.gmra.mrb[0].mxu0 %v2518
      %v2704 = vpop.f32.mrb[0].mxu0
      %v2705 = vadd.f32 0.0, %v2704
      %v2706 = vpop.f32.mrb[0].mxu0
      %v2707 = vpop.f32.mrb[0].mxu0
      %v2708 = vadd.f32 0.0, %v2707
      %v2709 = vpop.f32.mrb[0].mxu0
      %2710 = vmatprep.mubr.bf16.mxu0 0
      %2711 = vmatmul.mubr.bf16.gmra.mrb[0].mxu0 %v2519
      %v2712 = vpop.f32.mrb[0].mxu0
      %v2713 = vadd.f32 0.0, %v2712
      %v2714 = vpop.f32.mrb[0].mxu0
      %v2715 = vpop.f32.mrb[0].mxu0
      %v2716 = vadd.f32 0.0, %v2715
      %v2717 = vpop.f32.mrb[0].mxu0
      %2718 = vmatprep.mubr.bf16.mxu0 0
      %2719 = vmatmul.mubr.bf16.gmra.mrb[0].mxu0 %v2520
      %v2720 = vpop.f32.mrb[0].mxu0
      %v2721 = vadd.f32 0.0, %v2720
      %v2722 = vpop.f32.mrb[0].mxu0
      %v2723 = vpop.f32.mrb[0].mxu0
      %v2724 = vadd.f32 0.0, %v2723
      %v2725 = vpop.f32.mrb[0].mxu0
      %2726 = vmatprep.mubr.bf16.mxu0 0
      %2727 = vmatmul.mubr.bf16.gmra.mrb[0].mxu0 %v2521
      %v2728 = vpop.f32.mrb[0].mxu0
      %v2729 = vadd.f32 0.0, %v2728
      %v2730 = vpop.f32.mrb[0].mxu0
      %v2731 = vpop.f32.mrb[0].mxu0
      %v2732 = vadd.f32 0.0, %v2731
      %v2733 = vpop.f32.mrb[0].mxu0
      %2734 = vmatprep.mubr.bf16.mxu0 0
      %2735 = vmatmul.mubr.bf16.gmra.mrb[0].mxu0 %v2522
      %v2736 = vpop.f32.mrb[0].mxu0
      %v2737 = vadd.f32 0.0, %v2736
      %v2738 = vpop.f32.mrb[0].mxu0
      %v2739 = vpop.f32.mrb[0].mxu0
      %v2740 = vadd.f32 0.0, %v2739
      %v2741 = vpop.f32.mrb[0].mxu0
      %2742 = vmatprep.mubr.bf16.mxu0 0
      %2743 = vmatmul.mubr.bf16.gmra.mrb[0].mxu0 %v2523
      %v2744 = vpop.f32.mrb[0].mxu0
      %v2745 = vadd.f32 0.0, %v2744
      %v2746 = vpop.f32.mrb[0].mxu0
      %v2747 = vpop.f32.mrb[0].mxu0
      %v2748 = vadd.f32 0.0, %v2747
      %v2749 = vpop.f32.mrb[0].mxu0
      %2750 = vmatprep.mubr.bf16.mxu0 0
      %2751 = vmatmul.mubr.bf16.gmra.mrb[0].mxu0 %v2524
      %v2752 = vpop.f32.mrb[0].mxu0
      %v2753 = vadd.f32 0.0, %v2752
      %v2754 = vpop.f32.mrb[0].mxu0
      %v2755 = vpop.f32.mrb[0].mxu0
      %v2756 = vadd.f32 0.0, %v2755
      %v2757 = vpop.f32.mrb[0].mxu0
      %2758 = vmatprep.mubr.bf16.mxu0 0
      %2759 = vmatmul.mubr.bf16.gmra.mrb[0].mxu0 %v2525
      %v2760 = vpop.f32.mrb[0].mxu0
      %v2761 = vadd.f32 0.0, %v2760
      %v2762 = vpop.f32.mrb[0].mxu0
      %v2763 = vpop.f32.mrb[0].mxu0
      %v2764 = vadd.f32 0.0, %v2763
      %v2765 = vpop.f32.mrb[0].mxu0
      %2766 = vmatprep.mubr.bf16.mxu0 0
      %2767 = vmatmul.mubr.bf16.gmra.mrb[0].mxu0 %v2526
      %v2768 = vpop.f32.mrb[0].mxu0
      %v2769 = vadd.f32 0.0, %v2768
      %v2770 = vpop.f32.mrb[0].mxu0
      %v2771 = vpop.f32.mrb[0].mxu0
      %v2772 = vadd.f32 0.0, %v2771
      %v2773 = vpop.f32.mrb[0].mxu0
      %2774 = vmatprep.mubr.bf16.mxu0 0
      %2775 = vmatmul.mubr.bf16.gmra.mrb[0].mxu0 %v2527
      %v2776 = vpop.f32.mrb[0].mxu0
      %v2777 = vadd.f32 0.0, %v2776
      %v2778 = vpop.f32.mrb[0].mxu0
      %v2779 = vpop.f32.mrb[0].mxu0
      %v2780 = vadd.f32 0.0, %v2779
      %v2781 = vpop.f32.mrb[0].mxu0
      %2782 = vmatprep.mubr.bf16.mxu0 0
      %2783 = vmatmul.mubr.bf16.gmra.mrb[0].mxu0 %v2528
      %v2784 = vpop.f32.mrb[0].mxu0
      %v2785 = vadd.f32 0.0, %v2784
      %v2786 = vpop.f32.mrb[0].mxu0
      %v2787 = vpop.f32.mrb[0].mxu0
      %v2788 = vadd.f32 0.0, %v2787
      %v2789 = vpop.f32.mrb[0].mxu0
      %2790 = vmatprep.mubr.bf16.mxu0 0
      %2791 = vmatmul.mubr.bf16.gmra.mrb[0].mxu0 %v2529
      %v2792 = vpop.f32.mrb[0].mxu0
      %v2793 = vadd.f32 0.0, %v2792
      %v2794 = vpop.f32.mrb[0].mxu0
      %v2795 = vpop.f32.mrb[0].mxu0
      %v2796 = vadd.f32 0.0, %v2795
      %v2797 = vpop.f32.mrb[0].mxu0
      %2798 = vmatprep.mubr.bf16.mxu0 0
      %2799 = vmatmul.mubr.bf16.gmra.mrb[0].mxu0 %v2530
      %v2800 = vpop.f32.mrb[0].mxu0
      %v2801 = vadd.f32 0.0, %v2800
      %v2802 = vpop.f32.mrb[0].mxu0
      %v2803 = vpop.f32.mrb[0].mxu0
      %v2804 = vadd.f32 0.0, %v2803
      %v2805 = vpop.f32.mrb[0].mxu0
      %2806 = vmatprep.mubr.bf16.mxu0 0
      %2807 = vmatmul.mubr.bf16.gmra.mrb[0].mxu0 %v2531
      %v2808 = vpop.f32.mrb[0].mxu0
      %v2809 = vadd.f32 0.0, %v2808
      %v2810 = vpop.f32.mrb[0].mxu0
      %v2811 = vpop.f32.mrb[0].mxu0
      %v2812 = vadd.f32 0.0, %v2811
      %v2813 = vpop.f32.mrb[0].mxu0
      %2814 = vmatprep.mubr.bf16.mxu0 0
      %2815 = vmatmul.mubr.bf16.gmra.mrb[0].mxu0 %v2532
      %v2816 = vpop.f32.mrb[0].mxu0
      %v2817 = vadd.f32 0.0, %v2816
      %v2818 = vpop.f32.mrb[0].mxu0
      %v2819 = vpop.f32.mrb[0].mxu0
      %v2820 = vadd.f32 0.0, %v2819
      %v2821 = vpop.f32.mrb[0].mxu0
      %2822 = vdwg.mxu0
      %v2823 = vadd.f32 %v2319, %v2633
      %v2824 = vadd.f32 %v2322, %v2636
      %v2825 = vadd.f32 %v2327, %v2641
      %v2826 = vadd.f32 %v2330, %v2644
      %v2827 = vadd.f32 %v2335, %v2649
      %v2828 = vadd.f32 %v2338, %v2652
      %v2829 = vadd.f32 %v2343, %v2657
      %v2830 = vadd.f32 %v2346, %v2660
      %v2831 = vadd.f32 %v2351, %v2665
      %v2832 = vadd.f32 %v2354, %v2668
      %v2833 = vadd.f32 %v2359, %v2673
      %v2834 = vadd.f32 %v2362, %v2676
      %v2835 = vadd.f32 %v2367, %v2681
      %v2836 = vadd.f32 %v2370, %v2684
      %v2837 = vadd.f32 %v2375, %v2689
      %v2838 = vadd.f32 %v2378, %v2692
      %v2839 = vadd.f32 %v2383, %v2697
      %v2840 = vadd.f32 %v2386, %v2700
      %v2841 = vadd.f32 %v2391, %v2705
      %v2842 = vadd.f32 %v2394, %v2708
      %v2843 = vadd.f32 %v2399, %v2713
      %v2844 = vadd.f32 %v2402, %v2716
      %v2845 = vadd.f32 %v2407, %v2721
      %v2846 = vadd.f32 %v2410, %v2724
      %v2847 = vadd.f32 %v2415, %v2729
      %v2848 = vadd.f32 %v2418, %v2732
      %v2849 = vadd.f32 %v2423, %v2737
      %v2850 = vadd.f32 %v2426, %v2740
      %v2851 = vadd.f32 %v2431, %v2745
      %v2852 = vadd.f32 %v2434, %v2748
      %v2853 = vadd.f32 %v2439, %v2753
      %v2854 = vadd.f32 %v2442, %v2756
      %v2855 = vadd.f32 %v2447, %v2761
      %v2856 = vadd.f32 %v2450, %v2764
      %v2857 = vadd.f32 %v2455, %v2769
      %v2858 = vadd.f32 %v2458, %v2772
      %v2859 = vadd.f32 %v2463, %v2777
      %v2860 = vadd.f32 %v2466, %v2780
      %v2861 = vadd.f32 %v2471, %v2785
      %v2862 = vadd.f32 %v2474, %v2788
      %v2863 = vadd.f32 %v2479, %v2793
      %v2864 = vadd.f32 %v2482, %v2796
      %v2865 = vadd.f32 %v2487, %v2801
      %v2866 = vadd.f32 %v2490, %v2804
      %v2867 = vadd.f32 %v2495, %v2809
      %v2868 = vadd.f32 %v2498, %v2812
      %v2869 = vadd.f32 %v2503, %v2817
      %v2870 = vadd.f32 %v2506, %v2820
      %v2871 = vld [vmem:[%s5] sm:$0x1]
      %v2872 = vmax.f32 %v2823, %v2825
      %v2873 = vmax.f32 %v2824, %v2826
      %v2874 = vld [vmem:[#allocation3] sm:$0xff]
      %v2875 = vld [vmem:[#allocation3 + $0x8] sm:$0xff]
      %v2876 = vmax.f32 %v2872, %v2874
      %v2877 = vmax.f32 %v2873, %v2875
      %v2879 = vlaneseq
      %v2880 = vshrl.u32 %v2879, 7
      %v2881 = vsub.s32 0, %v2880
      %v2882 = vrot.slane %v2871, %v2881
      %v2884 = vadd.f32 %v2876, %v2882
      %v2885 = vadd.f32 %v2877, %v2882
      %v2886 = vmax.f32 %v2884, 0.0
      %v2887 = vmax.f32 %v2885, 0.0
      %v2888 = vpack.c.bf16 %v2887, %v2886
      %v2890 = vunpack.c.l.b16 %v2888
      %v2891 = vunpack.c.h.b16 %v2888
      %v2892 = vpack.c.b16 %v2890, %v2890
      %v2893 = vpack.c.b16 %v2891, %v2891
      %vm2896 = vcmask 519168
      %2897 = vst.msk [vmem:[%s251] sm:$0xf] %vm2896, %v2892
      %vm2898 = vcmask 517120
      %2899 = vst.msk [vmem:[%s251 + $0x4] sm:$0x3] %vm2898, %v2893
      %v2900 = vmax.f32 %v2827, %v2829
      %v2901 = vmax.f32 %v2828, %v2830
      %v2902 = vld [vmem:[#allocation3 + $0x10] sm:$0xff]
      %v2903 = vld [vmem:[#allocation3 + $0x18] sm:$0xff]
      %v2904 = vmax.f32 %v2900, %v2902
      %v2905 = vmax.f32 %v2901, %v2903
      %v2906 = vadd.f32 %v2904, %v2882
      %v2907 = vadd.f32 %v2905, %v2882
      %v2908 = vmax.f32 %v2906, 0.0
      %v2909 = vmax.f32 %v2907, 0.0
      %v2910 = vpack.c.bf16 %v2909, %v2908
      %v2912 = vunpack.c.l.b16 %v2910
      %v2913 = vunpack.c.h.b16 %v2910
      %v2914 = vpack.c.b16 %v2912, %v2912
      %v2915 = vpack.c.b16 %v2913, %v2913
      %s2918 = scalar_lea.vmem %s251, 8
      %2919 = vst.msk [vmem:[%s2918] sm:$0xf] %vm2896, %v2914
      %2920 = vst.msk [vmem:[%s2918 + $0x4] sm:$0x3] %vm2898, %v2915
      %v2921 = vmax.f32 %v2831, %v2833
      %v2922 = vmax.f32 %v2832, %v2834
      %v2923 = vld [vmem:[#allocation3 + $0x20] sm:$0xff]
      %v2924 = vld [vmem:[#allocation3 + $0x28] sm:$0xff]
      %v2925 = vmax.f32 %v2921, %v2923
      %v2926 = vmax.f32 %v2922, %v2924
      %v2927 = vadd.f32 %v2925, %v2882
      %v2928 = vadd.f32 %v2926, %v2882
      %v2929 = vmax.f32 %v2927, 0.0
      %v2930 = vmax.f32 %v2928, 0.0
      %v2931 = vpack.c.bf16 %v2930, %v2929
      %v2933 = vunpack.c.l.b16 %v2931
      %v2934 = vunpack.c.h.b16 %v2931
      %v2935 = vpack.c.b16 %v2933, %v2933
      %v2936 = vpack.c.b16 %v2934, %v2934
      %s2939 = scalar_lea.vmem %s251, 16
      %2940 = vst.msk [vmem:[%s2939] sm:$0xf] %vm2896, %v2935
      %2941 = vst.msk [vmem:[%s2939 + $0x4] sm:$0x3] %vm2898, %v2936
      %v2942 = vmax.f32 %v2835, %v2837
      %v2943 = vmax.f32 %v2836, %v2838
      %v2944 = vld [vmem:[#allocation3 + $0x30] sm:$0xff]
      %v2945 = vld [vmem:[#allocation3 + $0x38] sm:$0xff]
      %v2946 = vmax.f32 %v2942, %v2944
      %v2947 = vmax.f32 %v2943, %v2945
      %v2948 = vadd.f32 %v2946, %v2882
      %v2949 = vadd.f32 %v2947, %v2882
      %v2950 = vmax.f32 %v2948, 0.0
      %v2951 = vmax.f32 %v2949, 0.0
      %v2952 = vpack.c.bf16 %v2951, %v2950
      %v2954 = vunpack.c.l.b16 %v2952
      %v2955 = vunpack.c.h.b16 %v2952
      %v2956 = vpack.c.b16 %v2954, %v2954
      %v2957 = vpack.c.b16 %v2955, %v2955
      %s2960 = scalar_lea.vmem %s251, 24
      %2961 = vst.msk [vmem:[%s2960] sm:$0xf] %vm2896, %v2956
      %2962 = vst.msk [vmem:[%s2960 + $0x4] sm:$0x3] %vm2898, %v2957
      %v2963 = vmax.f32 %v2839, %v2841
      %v2964 = vmax.f32 %v2840, %v2842
      %v2965 = vld [vmem:[#allocation3 + $0x40] sm:$0xff]
      %v2966 = vld [vmem:[#allocation3 + $0x48] sm:$0xff]
      %v2967 = vmax.f32 %v2963, %v2965
      %v2968 = vmax.f32 %v2964, %v2966
      %v2969 = vadd.f32 %v2967, %v2882
      %v2970 = vadd.f32 %v2968, %v2882
      %v2971 = vmax.f32 %v2969, 0.0
      %v2972 = vmax.f32 %v2970, 0.0
      %v2973 = vpack.c.bf16 %v2972, %v2971
      %v2975 = vunpack.c.l.b16 %v2973
      %v2976 = vunpack.c.h.b16 %v2973
      %v2977 = vpack.c.b16 %v2975, %v2975
      %v2978 = vpack.c.b16 %v2976, %v2976
      %s2981 = scalar_lea.vmem %s251, 32
      %2982 = vst.msk [vmem:[%s2981] sm:$0xf] %vm2896, %v2977
      %2983 = vst.msk [vmem:[%s2981 + $0x4] sm:$0x3] %vm2898, %v2978
      %v2984 = vmax.f32 %v2843, %v2845
      %v2985 = vmax.f32 %v2844, %v2846
      %v2986 = vld [vmem:[#allocation3 + $0x50] sm:$0xff]
      %v2987 = vld [vmem:[#allocation3 + $0x58] sm:$0xff]
      %v2988 = vmax.f32 %v2984, %v2986
      %v2989 = vmax.f32 %v2985, %v2987
      %v2990 = vadd.f32 %v2988, %v2882
      %v2991 = vadd.f32 %v2989, %v2882
      %v2992 = vmax.f32 %v2990, 0.0
      %v2993 = vmax.f32 %v2991, 0.0
      %v2994 = vpack.c.bf16 %v2993, %v2992
      %v2996 = vunpack.c.l.b16 %v2994
      %v2997 = vunpack.c.h.b16 %v2994
      %v2998 = vpack.c.b16 %v2996, %v2996
      %v2999 = vpack.c.b16 %v2997, %v2997
      %s3002 = scalar_lea.vmem %s251, 40
      %3003 = vst.msk [vmem:[%s3002] sm:$0xf] %vm2896, %v2998
      %3004 = vst.msk [vmem:[%s3002 + $0x4] sm:$0x3] %vm2898, %v2999
      %v3005 = vmax.f32 %v2847, %v2849
      %v3006 = vmax.f32 %v2848, %v2850
      %v3007 = vld [vmem:[#allocation3 + $0x60] sm:$0xff]
      %v3008 = vld [vmem:[#allocation3 + $0x68] sm:$0xff]
      %v3009 = vmax.f32 %v3005, %v3007
      %v3010 = vmax.f32 %v3006, %v3008
      %v3011 = vadd.f32 %v3009, %v2882
      %v3012 = vadd.f32 %v3010, %v2882
      %v3013 = vmax.f32 %v3011, 0.0
      %v3014 = vmax.f32 %v3012, 0.0
      %v3015 = vpack.c.bf16 %v3014, %v3013
      %v3017 = vunpack.c.l.b16 %v3015
      %v3018 = vunpack.c.h.b16 %v3015
      %v3019 = vpack.c.b16 %v3017, %v3017
      %v3020 = vpack.c.b16 %v3018, %v3018
      %s3023 = scalar_lea.vmem %s251, 48
      %3024 = vst.msk [vmem:[%s3023] sm:$0xf] %vm2896, %v3019
      %3025 = vst.msk [vmem:[%s3023 + $0x4] sm:$0x3] %vm2898, %v3020
      %v3026 = vmax.f32 %v2851, %v2853
      %v3027 = vmax.f32 %v2852, %v2854
      %v3028 = vld [vmem:[#allocation3 + $0x70] sm:$0xff]
      %v3029 = vld [vmem:[#allocation3 + $0x78] sm:$0xff]
      %v3030 = vmax.f32 %v3026, %v3028
      %v3031 = vmax.f32 %v3027, %v3029
      %v3032 = vadd.f32 %v3030, %v2882
      %v3033 = vadd.f32 %v3031, %v2882
      %v3034 = vmax.f32 %v3032, 0.0
      %v3035 = vmax.f32 %v3033, 0.0
      %v3036 = vpack.c.bf16 %v3035, %v3034
      %v3038 = vunpack.c.l.b16 %v3036
      %v3039 = vunpack.c.h.b16 %v3036
      %v3040 = vpack.c.b16 %v3038, %v3038
      %v3041 = vpack.c.b16 %v3039, %v3039
      %s3044 = scalar_lea.vmem %s251, 56
      %3045 = vst.msk [vmem:[%s3044] sm:$0xf] %vm2896, %v3040
      %3046 = vst.msk [vmem:[%s3044 + $0x4] sm:$0x3] %vm2898, %v3041
      %v3047 = vmax.f32 %v2855, %v2857
      %v3048 = vmax.f32 %v2856, %v2858
      %v3049 = vld [vmem:[#allocation3 + $0x80] sm:$0xff]
      %v3050 = vld [vmem:[#allocation3 + $0x88] sm:$0xff]
      %v3051 = vmax.f32 %v3047, %v3049
      %v3052 = vmax.f32 %v3048, %v3050
      %v3053 = vadd.f32 %v3051, %v2882
      %v3054 = vadd.f32 %v3052, %v2882
      %v3055 = vmax.f32 %v3053, 0.0
      %v3056 = vmax.f32 %v3054, 0.0
      %v3057 = vpack.c.bf16 %v3056, %v3055
      %v3059 = vunpack.c.l.b16 %v3057
      %v3060 = vunpack.c.h.b16 %v3057
      %v3061 = vpack.c.b16 %v3059, %v3059
      %v3062 = vpack.c.b16 %v3060, %v3060
      %s3065 = scalar_lea.vmem %s251, 64
      %3066 = vst.msk [vmem:[%s3065] sm:$0xf] %vm2896, %v3061
      %3067 = vst.msk [vmem:[%s3065 + $0x4] sm:$0x3] %vm2898, %v3062
      %v3068 = vmax.f32 %v2859, %v2861
      %v3069 = vmax.f32 %v2860, %v2862
      %v3070 = vld [vmem:[#allocation3 + $0x90] sm:$0xff]
      %v3071 = vld [vmem:[#allocation3 + $0x98] sm:$0xff]
      %v3072 = vmax.f32 %v3068, %v3070
      %v3073 = vmax.f32 %v3069, %v3071
      %v3074 = vadd.f32 %v3072, %v2882
      %v3075 = vadd.f32 %v3073, %v2882
      %v3076 = vmax.f32 %v3074, 0.0
      %v3077 = vmax.f32 %v3075, 0.0
      %v3078 = vpack.c.bf16 %v3077, %v3076
      %v3080 = vunpack.c.l.b16 %v3078
      %v3081 = vunpack.c.h.b16 %v3078
      %v3082 = vpack.c.b16 %v3080, %v3080
      %v3083 = vpack.c.b16 %v3081, %v3081
      %s3086 = scalar_lea.vmem %s251, 72
      %3087 = vst.msk [vmem:[%s3086] sm:$0xf] %vm2896, %v3082
      %3088 = vst.msk [vmem:[%s3086 + $0x4] sm:$0x3] %vm2898, %v3083
      %v3089 = vmax.f32 %v2863, %v2865
      %v3090 = vmax.f32 %v2864, %v2866
      %v3091 = vld [vmem:[#allocation3 + $0xa0] sm:$0xff]
      %v3092 = vld [vmem:[#allocation3 + $0xa8] sm:$0xff]
      %v3093 = vmax.f32 %v3089, %v3091
      %v3094 = vmax.f32 %v3090, %v3092
      %v3095 = vadd.f32 %v3093, %v2882
      %v3096 = vadd.f32 %v3094, %v2882
      %v3097 = vmax.f32 %v3095, 0.0
      %v3098 = vmax.f32 %v3096, 0.0
      %v3099 = vpack.c.bf16 %v3098, %v3097
      %v3101 = vunpack.c.l.b16 %v3099
      %v3102 = vunpack.c.h.b16 %v3099
      %v3103 = vpack.c.b16 %v3101, %v3101
      %v3104 = vpack.c.b16 %v3102, %v3102
      %s3107 = scalar_lea.vmem %s251, 80
      %3108 = vst.msk [vmem:[%s3107] sm:$0xf] %vm2896, %v3103
      %3109 = vst.msk [vmem:[%s3107 + $0x4] sm:$0x3] %vm2898, %v3104
      %v3110 = vmax.f32 %v2867, %v2869
      %v3111 = vmax.f32 %v2868, %v2870
      %v3112 = vld [vmem:[#allocation3 + $0xb0] sm:$0xff]
      %v3113 = vld [vmem:[#allocation3 + $0xb8] sm:$0xff]
      %v3114 = vmax.f32 %v3110, %v3112
      %v3115 = vmax.f32 %v3111, %v3113
      %v3116 = vadd.f32 %v3114, %v2882
      %v3117 = vadd.f32 %v3115, %v2882
      %v3118 = vmax.f32 %v3116, 0.0
      %v3119 = vmax.f32 %v3117, 0.0
      %v3120 = vpack.c.bf16 %v3119, %v3118
      %v3122 = vunpack.c.l.b16 %v3120
      %v3123 = vunpack.c.h.b16 %v3120
      %v3124 = vpack.c.b16 %v3122, %v3122
      %v3125 = vpack.c.b16 %v3123, %v3123
      %s3128 = scalar_lea.vmem %s251, 88
      %3129 = vst.msk [vmem:[%s3128] sm:$0xf] %vm2896, %v3124
      %3130 = vst.msk [vmem:[%s3128 + $0x4] sm:$0x3] %vm2898, %v3125
      %p3131 = scmp.lt.s32.totalorder %s17, 1
      %s3132 = scalar_select %p3131, %s17, 1
      %s3133 = smul.addr %s3132, 24
      %s3134 = smul.addr %s3133, 4
      %s3135 = scalar_lea.vmem %s6, %s3134
      // Predicated region
      $region45: #{generator_forward.2} parent=43 // pred_check
        %p3136 = pneg %p166
      $region46: #{generator_forward.2} parent=43 // pred_check_branch
        %3138 = sbr.rel (%p3136) target = $region48
      $region47: #{generator_forward.2} parent=43 // pred_region
        _
      $region48: #{generator_forward.2} parent=43 // pred_fallthru
        _
    $region44: #{generator_forward.2} parent=5 // pred_fallthru
      _
    %p3139 = scmp.le.s32.totalorder 2, %s12
    // Predicated region
    $region49: #{generator_forward.2} parent=5 // pred_check
      %p3140 = pneg %p3139
    $region50: #{generator_forward.2} parent=5 // pred_check_branch
      %3142 = sbr.rel (%p3140) target = $region52
    $region51: #{generator_forward.2} parent=5 // pred_region
      %s3143 = ssub.s32 %s12, 2
      // Predicated region
      $region53: #{generator_forward.2} parent=51 // pred_check
        %p3144 = pneg %p172
      $region54: #{generator_forward.2} parent=51 // pred_check_branch
        %3146 = sbr.rel (%p3144) target = $region56
      $region55: #{generator_forward.2} parent=51 // pred_region
        %p3147 = scmp.lt.s32.totalorder %s18, 1
        %s3148 = scalar_select %p3147, %s18, 1
        %s3149 = smul.addr %s3148, 24
        %s3150 = smul.addr %s3149, 4
        %s3151 = scalar_lea.vmem %s6, %s3150
      $region56: #{generator_forward.2} parent=51 // pred_fallthru
        _
    $region52: #{generator_forward.2} parent=5 // pred_fallthru
      _
  $region6: #{generator_forward.2} parent=0 // loop_footer
    %s16 = sadd.s32 1, %s12
  $region7: #{generator_forward.2} parent=0 // loop_footer_branch
    %11 = sbr.rel target = $region3
  $region8: #{generator_forward.2} parent=0 // loop_exit
    _

// kernel: generator_forward.3
$region0: #{generator_forward.3}
  #allocation0 [shape = 'u32[]', space=smem, size = 0x4, offset = 0x4, fixed_abs, tag = 'smem constant byte address 0x4 - core index']
  #allocation1 [shape = 'u32[144,128]{1,0:T(1,128)}', space=vmem, size = 0x12000, scoped, tag = 'internal scratch']
  %s0 = inlined_call_operand.vmem [shape: bf16[2,9216], index: 0, kind: input, shape index: {}]
  %s1 = inlined_call_operand.vmem [shape: bf16[9216,128], index: 1, kind: input, shape index: {}]
  %s2 = inlined_call_operand.vmem [shape: f32[1,128], index: 2, kind: input, shape index: {}]
  %s3 = inlined_call_operand.vmem [shape: bf16[128,10], index: 3, kind: input, shape index: {}]
  %s4 = inlined_call_operand.vmem [shape: f32[1,10], index: 4, kind: input, shape index: {}]
  %s5 = inlined_call_operand.hbm [shape: f32[2,10], index: 5, kind: output, shape index: {0}]
  %s6 = inlined_call_operand.hbm [shape: f32[2,128], index: 6, kind: output, shape index: {1}]
  %7 = xla_tuple %s5, %s6
  %s8 = sld [smem:[#allocation0]]
  $region38: #{generator_forward.3} parent=0
    _
  %s10 = ssub.s32 1, %s8
  %s11 = scalar_select 0, %s10, %s8
  $region1: #{generator_forward.3} parent=0
    #allocation2 [shape = 'u8[1024]{0}', space=vmem, size = 0x400, scoped, tag = 'output window, operand 0, single buffered']
    #allocation3 [shape = 's32[1]{0}', space=sflag, size = 0x4, scoped, tag = 'scoped memory for generator_forward.3']
    #allocation4 [shape = 'u8[1024]{0}', space=vmem, size = 0x400, scoped, tag = 'output window, operand 1, single buffered']
    #allocation5 [shape = 's32[1]{0}', space=sflag, size = 0x4, scoped, tag = 'scoped memory for generator_forward.3']
    %12 = vsyncpa [#allocation3], 0
    %13 = vsyncpa [#allocation5], 0
    // Predicated region
    $region2: #{generator_forward.3} parent=1 // pred_check
      _
    $region3: #{generator_forward.3} parent=1 // pred_check_branch
      %15 = sbr.rel (0) target = $region5
    $region4: #{generator_forward.3} parent=1 // pred_region
      _
    $region5: #{generator_forward.3} parent=1 // pred_fallthru
      _
    // Predicated region
    $region6: #{generator_forward.3} parent=1 // pred_check
      _
    $region7: #{generator_forward.3} parent=1 // pred_check_branch
      %17 = sbr.rel (0) target = $region9
    $region8: #{generator_forward.3} parent=1 // pred_region
      _
    $region9: #{generator_forward.3} parent=1 // pred_fallthru
      _
    // Predicated region
    $region10: #{generator_forward.3} parent=1 // pred_check
      _
    $region11: #{generator_forward.3} parent=1 // pred_check_branch
      %19 = sbr.rel (0) target = $region13
    $region12: #{generator_forward.3} parent=1 // pred_region
      _
    $region13: #{generator_forward.3} parent=1 // pred_fallthru
      _
    // Predicated region
    $region14: #{generator_forward.3} parent=1 // pred_check
      _
    $region15: #{generator_forward.3} parent=1 // pred_check_branch
      %21 = sbr.rel (0) target = $region17
    $region16: #{generator_forward.3} parent=1 // pred_region
      _
    $region17: #{generator_forward.3} parent=1 // pred_fallthru
      _
    // Predicated region
    $region18: #{generator_forward.3} parent=1 // pred_check
      _
    $region19: #{generator_forward.3} parent=1 // pred_check_branch
      %23 = sbr.rel (0) target = $region21
    $region20: #{generator_forward.3} parent=1 // pred_region
      _
    $region21: #{generator_forward.3} parent=1 // pred_fallthru
      _
    %v25 = vld [vmem:[%s0] sm:$0xff]
    %v26 = vld [vmem:[%s0 + $0x8] sm:$0xff]
    %v27 = vld [vmem:[%s0 + $0x10] sm:$0xff]
    %v28 = vld [vmem:[%s0 + $0x18] sm:$0xff]
    %v29 = vld [vmem:[%s0 + $0x20] sm:$0xff]
    %v30 = vld [vmem:[%s0 + $0x28] sm:$0xff]
    %v31 = vld [vmem:[%s0 + $0x30] sm:$0xff]
    %v32 = vld [vmem:[%s0 + $0x38] sm:$0xff]
    %v33 = vld [vmem:[%s0 + $0x40] sm:$0xff]
    %v34 = vld [vmem:[%s1] sm:$0xf]
    %v35 = vld [vmem:[%s1 + $0x4] sm:$0xf]
    %v36 = vld [vmem:[%s1 + $0x8] sm:$0xf]
    %v37 = vld [vmem:[%s1 + $0xc] sm:$0xf]
    %v38 = vld [vmem:[%s1 + $0x10] sm:$0xf]
    %v39 = vld [vmem:[%s1 + $0x14] sm:$0xf]
    %v40 = vld [vmem:[%s1 + $0x18] sm:$0xf]
    %v41 = vld [vmem:[%s1 + $0x1c] sm:$0xf]
    %v42 = vld [vmem:[%s1 + $0x20] sm:$0xf]
    %v43 = vld [vmem:[%s1 + $0x24] sm:$0xf]
    %v44 = vld [vmem:[%s1 + $0x28] sm:$0xf]
    %v45 = vld [vmem:[%s1 + $0x2c] sm:$0xf]
    %v46 = vld [vmem:[%s1 + $0x30] sm:$0xf]
    %v47 = vld [vmem:[%s1 + $0x34] sm:$0xf]
    %v48 = vld [vmem:[%s1 + $0x38] sm:$0xf]
    %v49 = vld [vmem:[%s1 + $0x3c] sm:$0xf]
    %v50 = vld [vmem:[%s1 + $0x40] sm:$0xf]
    %v51 = vld [vmem:[%s1 + $0x44] sm:$0xf]
    %v52 = vld [vmem:[%s1 + $0x48] sm:$0xf]
    %v53 = vld [vmem:[%s1 + $0x4c] sm:$0xf]
    %v54 = vld [vmem:[%s1 + $0x50] sm:$0xf]
    %v55 = vld [vmem:[%s1 + $0x54] sm:$0xf]
    %v56 = vld [vmem:[%s1 + $0x58] sm:$0xf]
    %v57 = vld [vmem:[%s1 + $0x5c] sm:$0xf]
    %v58 = vld [vmem:[%s1 + $0x60] sm:$0xf]
    %v59 = vld [vmem:[%s1 + $0x64] sm:$0xf]
    %v60 = vld [vmem:[%s1 + $0x68] sm:$0xf]
    %v61 = vld [vmem:[%s1 + $0x6c] sm:$0xf]
    %v62 = vld [vmem:[%s1 + $0x70] sm:$0xf]
    %v63 = vld [vmem:[%s1 + $0x74] sm:$0xf]
    %v64 = vld [vmem:[%s1 + $0x78] sm:$0xf]
    %v65 = vld [vmem:[%s1 + $0x7c] sm:$0xf]
    %v66 = vld [vmem:[%s1 + $0x80] sm:$0xf]
    %v67 = vld [vmem:[%s1 + $0x84] sm:$0xf]
    %v68 = vld [vmem:[%s1 + $0x88] sm:$0xf]
    %v69 = vld [vmem:[%s1 + $0x8c] sm:$0xf]
    %v70 = vld [vmem:[%s1 + $0x90] sm:$0xf]
    %v71 = vld [vmem:[%s1 + $0x94] sm:$0xf]
    %v72 = vld [vmem:[%s1 + $0x98] sm:$0xf]
    %v73 = vld [vmem:[%s1 + $0x9c] sm:$0xf]
    %v74 = vld [vmem:[%s1 + $0xa0] sm:$0xf]
    %v75 = vld [vmem:[%s1 + $0xa4] sm:$0xf]
    %v76 = vld [vmem:[%s1 + $0xa8] sm:$0xf]
    %v77 = vld [vmem:[%s1 + $0xac] sm:$0xf]
    %v78 = vld [vmem:[%s1 + $0xb0] sm:$0xf]
    %v79 = vld [vmem:[%s1 + $0xb4] sm:$0xf]
    %v80 = vld [vmem:[%s1 + $0xb8] sm:$0xf]
    %v81 = vld [vmem:[%s1 + $0xbc] sm:$0xf]
    %v82 = vld [vmem:[%s1 + $0xc0] sm:$0xf]
    %v83 = vld [vmem:[%s1 + $0xc4] sm:$0xf]
    %v84 = vld [vmem:[%s1 + $0xc8] sm:$0xf]
    %v85 = vld [vmem:[%s1 + $0xcc] sm:$0xf]
    %v86 = vld [vmem:[%s1 + $0xd0] sm:$0xf]
    %v87 = vld [vmem:[%s1 + $0xd4] sm:$0xf]
    %v88 = vld [vmem:[%s1 + $0xd8] sm:$0xf]
    %v89 = vld [vmem:[%s1 + $0xdc] sm:$0xf]
    %v90 = vld [vmem:[%s1 + $0xe0] sm:$0xf]
    %v91 = vld [vmem:[%s1 + $0xe4] sm:$0xf]
    %v92 = vld [vmem:[%s1 + $0xe8] sm:$0xf]
    %v93 = vld [vmem:[%s1 + $0xec] sm:$0xf]
    %v94 = vld [vmem:[%s1 + $0xf0] sm:$0xf]
    %v95 = vld [vmem:[%s1 + $0xf4] sm:$0xf]
    %v96 = vld [vmem:[%s1 + $0xf8] sm:$0xf]
    %v97 = vld [vmem:[%s1 + $0xfc] sm:$0xf]
    %v98 = vld [vmem:[%s1 + $0x100] sm:$0xf]
    %v99 = vld [vmem:[%s1 + $0x104] sm:$0xf]
    %v100 = vld [vmem:[%s1 + $0x108] sm:$0xf]
    %v101 = vld [vmem:[%s1 + $0x10c] sm:$0xf]
    %v102 = vld [vmem:[%s1 + $0x110] sm:$0xf]
    %v103 = vld [vmem:[%s1 + $0x114] sm:$0xf]
    %v104 = vld [vmem:[%s1 + $0x118] sm:$0xf]
    %v105 = vld [vmem:[%s1 + $0x11c] sm:$0xf]
    %v106 = vld [vmem:[%s1 + $0x120] sm:$0xf]
    %v107 = vld [vmem:[%s1 + $0x124] sm:$0xf]
    %v108 = vld [vmem:[%s1 + $0x128] sm:$0xf]
    %v109 = vld [vmem:[%s1 + $0x12c] sm:$0xf]
    %v110 = vld [vmem:[%s1 + $0x130] sm:$0xf]
    %v111 = vld [vmem:[%s1 + $0x134] sm:$0xf]
    %v112 = vld [vmem:[%s1 + $0x138] sm:$0xf]
    %v113 = vld [vmem:[%s1 + $0x13c] sm:$0xf]
    %v114 = vld [vmem:[%s1 + $0x140] sm:$0xf]
    %v115 = vld [vmem:[%s1 + $0x144] sm:$0xf]
    %v116 = vld [vmem:[%s1 + $0x148] sm:$0xf]
    %v117 = vld [vmem:[%s1 + $0x14c] sm:$0xf]
    %v118 = vld [vmem:[%s1 + $0x150] sm:$0xf]
    %v119 = vld [vmem:[%s1 + $0x154] sm:$0xf]
    %v120 = vld [vmem:[%s1 + $0x158] sm:$0xf]
    %v121 = vld [vmem:[%s1 + $0x15c] sm:$0xf]
    %v122 = vld [vmem:[%s1 + $0x160] sm:$0xf]
    %v123 = vld [vmem:[%s1 + $0x164] sm:$0xf]
    %v124 = vld [vmem:[%s1 + $0x168] sm:$0xf]
    %v125 = vld [vmem:[%s1 + $0x16c] sm:$0xf]
    %v126 = vld [vmem:[%s1 + $0x170] sm:$0xf]
    %v127 = vld [vmem:[%s1 + $0x174] sm:$0xf]
    %v128 = vld [vmem:[%s1 + $0x178] sm:$0xf]
    %v129 = vld [vmem:[%s1 + $0x17c] sm:$0xf]
    %v130 = vld [vmem:[%s1 + $0x180] sm:$0xf]
    %v131 = vld [vmem:[%s1 + $0x184] sm:$0xf]
    %v132 = vld [vmem:[%s1 + $0x188] sm:$0xf]
    %v133 = vld [vmem:[%s1 + $0x18c] sm:$0xf]
    %v134 = vld [vmem:[%s1 + $0x190] sm:$0xf]
    %v135 = vld [vmem:[%s1 + $0x194] sm:$0xf]
    %v136 = vld [vmem:[%s1 + $0x198] sm:$0xf]
    %v137 = vld [vmem:[%s1 + $0x19c] sm:$0xf]
    %v138 = vld [vmem:[%s1 + $0x1a0] sm:$0xf]
    %v139 = vld [vmem:[%s1 + $0x1a4] sm:$0xf]
    %v140 = vld [vmem:[%s1 + $0x1a8] sm:$0xf]
    %v141 = vld [vmem:[%s1 + $0x1ac] sm:$0xf]
    %v142 = vld [vmem:[%s1 + $0x1b0] sm:$0xf]
    %v143 = vld [vmem:[%s1 + $0x1b4] sm:$0xf]
    %v144 = vld [vmem:[%s1 + $0x1b8] sm:$0xf]
    %v145 = vld [vmem:[%s1 + $0x1bc] sm:$0xf]
    %v146 = vld [vmem:[%s1 + $0x1c0] sm:$0xf]
    %v147 = vld [vmem:[%s1 + $0x1c4] sm:$0xf]
    %v148 = vld [vmem:[%s1 + $0x1c8] sm:$0xf]
    %v149 = vld [vmem:[%s1 + $0x1cc] sm:$0xf]
    %v150 = vld [vmem:[%s1 + $0x1d0] sm:$0xf]
    %v151 = vld [vmem:[%s1 + $0x1d4] sm:$0xf]
    %v152 = vld [vmem:[%s1 + $0x1d8] sm:$0xf]
    %v153 = vld [vmem:[%s1 + $0x1dc] sm:$0xf]
    %v154 = vld [vmem:[%s1 + $0x1e0] sm:$0xf]
    %v155 = vld [vmem:[%s1 + $0x1e4] sm:$0xf]
    %v156 = vld [vmem:[%s1 + $0x1e8] sm:$0xf]
    %v157 = vld [vmem:[%s1 + $0x1ec] sm:$0xf]
    %v158 = vld [vmem:[%s1 + $0x1f0] sm:$0xf]
    %v159 = vld [vmem:[%s1 + $0x1f4] sm:$0xf]
    %v160 = vld [vmem:[%s1 + $0x1f8] sm:$0xf]
    %v161 = vld [vmem:[%s1 + $0x1fc] sm:$0xf]
    %v162 = vld [vmem:[%s1 + $0x200] sm:$0xf]
    %v163 = vld [vmem:[%s1 + $0x204] sm:$0xf]
    %v164 = vld [vmem:[%s1 + $0x208] sm:$0xf]
    %v165 = vld [vmem:[%s1 + $0x20c] sm:$0xf]
    %v166 = vld [vmem:[%s1 + $0x210] sm:$0xf]
    %v167 = vld [vmem:[%s1 + $0x214] sm:$0xf]
    %v168 = vld [vmem:[%s1 + $0x218] sm:$0xf]
    %v169 = vld [vmem:[%s1 + $0x21c] sm:$0xf]
    %v170 = vld [vmem:[%s1 + $0x220] sm:$0xf]
    %v171 = vld [vmem:[%s1 + $0x224] sm:$0xf]
    %v172 = vld [vmem:[%s1 + $0x228] sm:$0xf]
    %v173 = vld [vmem:[%s1 + $0x22c] sm:$0xf]
    %v174 = vld [vmem:[%s1 + $0x230] sm:$0xf]
    %v175 = vld [vmem:[%s1 + $0x234] sm:$0xf]
    %v176 = vld [vmem:[%s1 + $0x238] sm:$0xf]
    %v177 = vld [vmem:[%s1 + $0x23c] sm:$0xf]
    %v178 = vld [vmem:[%s1 + $0x240] sm:$0xf]
    %v179 = vld [vmem:[%s1 + $0x244] sm:$0xf]
    %v180 = vld [vmem:[%s1 + $0x248] sm:$0xf]
    %v181 = vld [vmem:[%s1 + $0x24c] sm:$0xf]
    %v182 = vld [vmem:[%s1 + $0x250] sm:$0xf]
    %v183 = vld [vmem:[%s1 + $0x254] sm:$0xf]
    %v184 = vld [vmem:[%s1 + $0x258] sm:$0xf]
    %v185 = vld [vmem:[%s1 + $0x25c] sm:$0xf]
    %v186 = vld [vmem:[%s1 + $0x260] sm:$0xf]
    %v187 = vld [vmem:[%s1 + $0x264] sm:$0xf]
    %v188 = vld [vmem:[%s1 + $0x268] sm:$0xf]
    %v189 = vld [vmem:[%s1 + $0x26c] sm:$0xf]
    %v190 = vld [vmem:[%s1 + $0x270] sm:$0xf]
    %v191 = vld [vmem:[%s1 + $0x274] sm:$0xf]
    %v192 = vld [vmem:[%s1 + $0x278] sm:$0xf]
    %v193 = vld [vmem:[%s1 + $0x27c] sm:$0xf]
    %v194 = vld [vmem:[%s1 + $0x280] sm:$0xf]
    %v195 = vld [vmem:[%s1 + $0x284] sm:$0xf]
    %v196 = vld [vmem:[%s1 + $0x288] sm:$0xf]
    %v197 = vld [vmem:[%s1 + $0x28c] sm:$0xf]
    %v198 = vld [vmem:[%s1 + $0x290] sm:$0xf]
    %v199 = vld [vmem:[%s1 + $0x294] sm:$0xf]
    %v200 = vld [vmem:[%s1 + $0x298] sm:$0xf]
    %v201 = vld [vmem:[%s1 + $0x29c] sm:$0xf]
    %v202 = vld [vmem:[%s1 + $0x2a0] sm:$0xf]
    %v203 = vld [vmem:[%s1 + $0x2a4] sm:$0xf]
    %v204 = vld [vmem:[%s1 + $0x2a8] sm:$0xf]
    %v205 = vld [vmem:[%s1 + $0x2ac] sm:$0xf]
    %v206 = vld [vmem:[%s1 + $0x2b0] sm:$0xf]
    %v207 = vld [vmem:[%s1 + $0x2b4] sm:$0xf]
    %v208 = vld [vmem:[%s1 + $0x2b8] sm:$0xf]
    %v209 = vld [vmem:[%s1 + $0x2bc] sm:$0xf]
    %v210 = vld [vmem:[%s1 + $0x2c0] sm:$0xf]
    %v211 = vld [vmem:[%s1 + $0x2c4] sm:$0xf]
    %v212 = vld [vmem:[%s1 + $0x2c8] sm:$0xf]
    %v213 = vld [vmem:[%s1 + $0x2cc] sm:$0xf]
    %v214 = vld [vmem:[%s1 + $0x2d0] sm:$0xf]
    %v215 = vld [vmem:[%s1 + $0x2d4] sm:$0xf]
    %v216 = vld [vmem:[%s1 + $0x2d8] sm:$0xf]
    %v217 = vld [vmem:[%s1 + $0x2dc] sm:$0xf]
    %v218 = vld [vmem:[%s1 + $0x2e0] sm:$0xf]
    %v219 = vld [vmem:[%s1 + $0x2e4] sm:$0xf]
    %v220 = vld [vmem:[%s1 + $0x2e8] sm:$0xf]
    %v221 = vld [vmem:[%s1 + $0x2ec] sm:$0xf]
    %v222 = vld [vmem:[%s1 + $0x2f0] sm:$0xf]
    %v223 = vld [vmem:[%s1 + $0x2f4] sm:$0xf]
    %v224 = vld [vmem:[%s1 + $0x2f8] sm:$0xf]
    %v225 = vld [vmem:[%s1 + $0x2fc] sm:$0xf]
    %v226 = vld [vmem:[%s1 + $0x300] sm:$0xf]
    %v227 = vld [vmem:[%s1 + $0x304] sm:$0xf]
    %v228 = vld [vmem:[%s1 + $0x308] sm:$0xf]
    %v229 = vld [vmem:[%s1 + $0x30c] sm:$0xf]
    %v230 = vld [vmem:[%s1 + $0x310] sm:$0xf]
    %v231 = vld [vmem:[%s1 + $0x314] sm:$0xf]
    %v232 = vld [vmem:[%s1 + $0x318] sm:$0xf]
    %v233 = vld [vmem:[%s1 + $0x31c] sm:$0xf]
    %v234 = vld [vmem:[%s1 + $0x320] sm:$0xf]
    %v235 = vld [vmem:[%s1 + $0x324] sm:$0xf]
    %v236 = vld [vmem:[%s1 + $0x328] sm:$0xf]
    %v237 = vld [vmem:[%s1 + $0x32c] sm:$0xf]
    %v238 = vld [vmem:[%s1 + $0x330] sm:$0xf]
    %v239 = vld [vmem:[%s1 + $0x334] sm:$0xf]
    %v240 = vld [vmem:[%s1 + $0x338] sm:$0xf]
    %v241 = vld [vmem:[%s1 + $0x33c] sm:$0xf]
    %v242 = vld [vmem:[%s1 + $0x340] sm:$0xf]
    %v243 = vld [vmem:[%s1 + $0x344] sm:$0xf]
    %v244 = vld [vmem:[%s1 + $0x348] sm:$0xf]
    %v245 = vld [vmem:[%s1 + $0x34c] sm:$0xf]
    %v246 = vld [vmem:[%s1 + $0x350] sm:$0xf]
    %v247 = vld [vmem:[%s1 + $0x354] sm:$0xf]
    %v248 = vld [vmem:[%s1 + $0x358] sm:$0xf]
    %v249 = vld [vmem:[%s1 + $0x35c] sm:$0xf]
    %v250 = vld [vmem:[%s1 + $0x360] sm:$0xf]
    %v251 = vld [vmem:[%s1 + $0x364] sm:$0xf]
    %v252 = vld [vmem:[%s1 + $0x368] sm:$0xf]
    %v253 = vld [vmem:[%s1 + $0x36c] sm:$0xf]
    %v254 = vld [vmem:[%s1 + $0x370] sm:$0xf]
    %v255 = vld [vmem:[%s1 + $0x374] sm:$0xf]
    %v256 = vld [vmem:[%s1 + $0x378] sm:$0xf]
    %v257 = vld [vmem:[%s1 + $0x37c] sm:$0xf]
    %v258 = vld [vmem:[%s1 + $0x380] sm:$0xf]
    %v259 = vld [vmem:[%s1 + $0x384] sm:$0xf]
    %v260 = vld [vmem:[%s1 + $0x388] sm:$0xf]
    %v261 = vld [vmem:[%s1 + $0x38c] sm:$0xf]
    %v262 = vld [vmem:[%s1 + $0x390] sm:$0xf]
    %v263 = vld [vmem:[%s1 + $0x394] sm:$0xf]
    %v264 = vld [vmem:[%s1 + $0x398] sm:$0xf]
    %v265 = vld [vmem:[%s1 + $0x39c] sm:$0xf]
    %v266 = vld [vmem:[%s1 + $0x3a0] sm:$0xf]
    %v267 = vld [vmem:[%s1 + $0x3a4] sm:$0xf]
    %v268 = vld [vmem:[%s1 + $0x3a8] sm:$0xf]
    %v269 = vld [vmem:[%s1 + $0x3ac] sm:$0xf]
    %v270 = vld [vmem:[%s1 + $0x3b0] sm:$0xf]
    %v271 = vld [vmem:[%s1 + $0x3b4] sm:$0xf]
    %v272 = vld [vmem:[%s1 + $0x3b8] sm:$0xf]
    %v273 = vld [vmem:[%s1 + $0x3bc] sm:$0xf]
    %v274 = vld [vmem:[%s1 + $0x3c0] sm:$0xf]
    %v275 = vld [vmem:[%s1 + $0x3c4] sm:$0xf]
    %v276 = vld [vmem:[%s1 + $0x3c8] sm:$0xf]
    %v277 = vld [vmem:[%s1 + $0x3cc] sm:$0xf]
    %v278 = vld [vmem:[%s1 + $0x3d0] sm:$0xf]
    %v279 = vld [vmem:[%s1 + $0x3d4] sm:$0xf]
    %v280 = vld [vmem:[%s1 + $0x3d8] sm:$0xf]
    %v281 = vld [vmem:[%s1 + $0x3dc] sm:$0xf]
    %v282 = vld [vmem:[%s1 + $0x3e0] sm:$0xf]
    %v283 = vld [vmem:[%s1 + $0x3e4] sm:$0xf]
    %v284 = vld [vmem:[%s1 + $0x3e8] sm:$0xf]
    %v285 = vld [vmem:[%s1 + $0x3ec] sm:$0xf]
    %v286 = vld [vmem:[%s1 + $0x3f0] sm:$0xf]
    %v287 = vld [vmem:[%s1 + $0x3f4] sm:$0xf]
    %v288 = vld [vmem:[%s1 + $0x3f8] sm:$0xf]
    %v289 = vld [vmem:[%s1 + $0x3fc] sm:$0xf]
    %v290 = vld [vmem:[%s1 + $0x400] sm:$0xf]
    %v291 = vld [vmem:[%s1 + $0x404] sm:$0xf]
    %v292 = vld [vmem:[%s1 + $0x408] sm:$0xf]
    %v293 = vld [vmem:[%s1 + $0x40c] sm:$0xf]
    %v294 = vld [vmem:[%s1 + $0x410] sm:$0xf]
    %v295 = vld [vmem:[%s1 + $0x414] sm:$0xf]
    %v296 = vld [vmem:[%s1 + $0x418] sm:$0xf]
    %v297 = vld [vmem:[%s1 + $0x41c] sm:$0xf]
    %v298 = vld [vmem:[%s1 + $0x420] sm:$0xf]
    %v299 = vld [vmem:[%s1 + $0x424] sm:$0xf]
    %v300 = vld [vmem:[%s1 + $0x428] sm:$0xf]
    %v301 = vld [vmem:[%s1 + $0x42c] sm:$0xf]
    %v302 = vld [vmem:[%s1 + $0x430] sm:$0xf]
    %v303 = vld [vmem:[%s1 + $0x434] sm:$0xf]
    %v304 = vld [vmem:[%s1 + $0x438] sm:$0xf]
    %v305 = vld [vmem:[%s1 + $0x43c] sm:$0xf]
    %v306 = vld [vmem:[%s1 + $0x440] sm:$0xf]
    %v307 = vld [vmem:[%s1 + $0x444] sm:$0xf]
    %v308 = vld [vmem:[%s1 + $0x448] sm:$0xf]
    %v309 = vld [vmem:[%s1 + $0x44c] sm:$0xf]
    %v310 = vld [vmem:[%s1 + $0x450] sm:$0xf]
    %v311 = vld [vmem:[%s1 + $0x454] sm:$0xf]
    %v312 = vld [vmem:[%s1 + $0x458] sm:$0xf]
    %v313 = vld [vmem:[%s1 + $0x45c] sm:$0xf]
    %v314 = vld [vmem:[%s1 + $0x460] sm:$0xf]
    %v315 = vld [vmem:[%s1 + $0x464] sm:$0xf]
    %v316 = vld [vmem:[%s1 + $0x468] sm:$0xf]
    %v317 = vld [vmem:[%s1 + $0x46c] sm:$0xf]
    %v318 = vld [vmem:[%s1 + $0x470] sm:$0xf]
    %v319 = vld [vmem:[%s1 + $0x474] sm:$0xf]
    %v320 = vld [vmem:[%s1 + $0x478] sm:$0xf]
    %v321 = vld [vmem:[%s1 + $0x47c] sm:$0xf]
    %v322 = vld [vmem:[%s1 + $0x480] sm:$0xf]
    %v323 = vld [vmem:[%s1 + $0x484] sm:$0xf]
    %v324 = vld [vmem:[%s1 + $0x488] sm:$0xf]
    %v325 = vld [vmem:[%s1 + $0x48c] sm:$0xf]
    %v326 = vld [vmem:[%s1 + $0x490] sm:$0xf]
    %v327 = vld [vmem:[%s1 + $0x494] sm:$0xf]
    %v328 = vld [vmem:[%s1 + $0x498] sm:$0xf]
    %v329 = vld [vmem:[%s1 + $0x49c] sm:$0xf]
    %v330 = vld [vmem:[%s1 + $0x4a0] sm:$0xf]
    %v331 = vld [vmem:[%s1 + $0x4a4] sm:$0xf]
    %v332 = vld [vmem:[%s1 + $0x4a8] sm:$0xf]
    %v333 = vld [vmem:[%s1 + $0x4ac] sm:$0xf]
    %v334 = vld [vmem:[%s1 + $0x4b0] sm:$0xf]
    %v335 = vld [vmem:[%s1 + $0x4b4] sm:$0xf]
    %v336 = vld [vmem:[%s1 + $0x4b8] sm:$0xf]
    %v337 = vld [vmem:[%s1 + $0x4bc] sm:$0xf]
    %v338 = vld [vmem:[%s1 + $0x4c0] sm:$0xf]
    %v339 = vld [vmem:[%s1 + $0x4c4] sm:$0xf]
    %v340 = vld [vmem:[%s1 + $0x4c8] sm:$0xf]
    %v341 = vld [vmem:[%s1 + $0x4cc] sm:$0xf]
    %v342 = vld [vmem:[%s1 + $0x4d0] sm:$0xf]
    %v343 = vld [vmem:[%s1 + $0x4d4] sm:$0xf]
    %v344 = vld [vmem:[%s1 + $0x4d8] sm:$0xf]
    %v345 = vld [vmem:[%s1 + $0x4dc] sm:$0xf]
    %v346 = vld [vmem:[%s1 + $0x4e0] sm:$0xf]
    %v347 = vld [vmem:[%s1 + $0x4e4] sm:$0xf]
    %v348 = vld [vmem:[%s1 + $0x4e8] sm:$0xf]
    %v349 = vld [vmem:[%s1 + $0x4ec] sm:$0xf]
    %v350 = vld [vmem:[%s1 + $0x4f0] sm:$0xf]
    %v351 = vld [vmem:[%s1 + $0x4f4] sm:$0xf]
    %v352 = vld [vmem:[%s1 + $0x4f8] sm:$0xf]
    %v353 = vld [vmem:[%s1 + $0x4fc] sm:$0xf]
    %v354 = vld [vmem:[%s1 + $0x500] sm:$0xf]
    %v355 = vld [vmem:[%s1 + $0x504] sm:$0xf]
    %v356 = vld [vmem:[%s1 + $0x508] sm:$0xf]
    %v357 = vld [vmem:[%s1 + $0x50c] sm:$0xf]
    %v358 = vld [vmem:[%s1 + $0x510] sm:$0xf]
    %v359 = vld [vmem:[%s1 + $0x514] sm:$0xf]
    %v360 = vld [vmem:[%s1 + $0x518] sm:$0xf]
    %v361 = vld [vmem:[%s1 + $0x51c] sm:$0xf]
    %v362 = vld [vmem:[%s1 + $0x520] sm:$0xf]
    %v363 = vld [vmem:[%s1 + $0x524] sm:$0xf]
    %v364 = vld [vmem:[%s1 + $0x528] sm:$0xf]
    %v365 = vld [vmem:[%s1 + $0x52c] sm:$0xf]
    %v366 = vld [vmem:[%s1 + $0x530] sm:$0xf]
    %v367 = vld [vmem:[%s1 + $0x534] sm:$0xf]
    %v368 = vld [vmem:[%s1 + $0x538] sm:$0xf]
    %v369 = vld [vmem:[%s1 + $0x53c] sm:$0xf]
    %v370 = vld [vmem:[%s1 + $0x540] sm:$0xf]
    %v371 = vld [vmem:[%s1 + $0x544] sm:$0xf]
    %v372 = vld [vmem:[%s1 + $0x548] sm:$0xf]
    %v373 = vld [vmem:[%s1 + $0x54c] sm:$0xf]
    %v374 = vld [vmem:[%s1 + $0x550] sm:$0xf]
    %v375 = vld [vmem:[%s1 + $0x554] sm:$0xf]
    %v376 = vld [vmem:[%s1 + $0x558] sm:$0xf]
    %v377 = vld [vmem:[%s1 + $0x55c] sm:$0xf]
    %v378 = vld [vmem:[%s1 + $0x560] sm:$0xf]
    %v379 = vld [vmem:[%s1 + $0x564] sm:$0xf]
    %v380 = vld [vmem:[%s1 + $0x568] sm:$0xf]
    %v381 = vld [vmem:[%s1 + $0x56c] sm:$0xf]
    %v382 = vld [vmem:[%s1 + $0x570] sm:$0xf]
    %v383 = vld [vmem:[%s1 + $0x574] sm:$0xf]
    %v384 = vld [vmem:[%s1 + $0x578] sm:$0xf]
    %v385 = vld [vmem:[%s1 + $0x57c] sm:$0xf]
    %v386 = vld [vmem:[%s1 + $0x580] sm:$0xf]
    %v387 = vld [vmem:[%s1 + $0x584] sm:$0xf]
    %v388 = vld [vmem:[%s1 + $0x588] sm:$0xf]
    %v389 = vld [vmem:[%s1 + $0x58c] sm:$0xf]
    %v390 = vld [vmem:[%s1 + $0x590] sm:$0xf]
    %v391 = vld [vmem:[%s1 + $0x594] sm:$0xf]
    %v392 = vld [vmem:[%s1 + $0x598] sm:$0xf]
    %v393 = vld [vmem:[%s1 + $0x59c] sm:$0xf]
    %v394 = vld [vmem:[%s1 + $0x5a0] sm:$0xf]
    %v395 = vld [vmem:[%s1 + $0x5a4] sm:$0xf]
    %v396 = vld [vmem:[%s1 + $0x5a8] sm:$0xf]
    %v397 = vld [vmem:[%s1 + $0x5ac] sm:$0xf]
    %v398 = vld [vmem:[%s1 + $0x5b0] sm:$0xf]
    %v399 = vld [vmem:[%s1 + $0x5b4] sm:$0xf]
    %v400 = vld [vmem:[%s1 + $0x5b8] sm:$0xf]
    %v401 = vld [vmem:[%s1 + $0x5bc] sm:$0xf]
    %v402 = vld [vmem:[%s1 + $0x5c0] sm:$0xf]
    %v403 = vld [vmem:[%s1 + $0x5c4] sm:$0xf]
    %v404 = vld [vmem:[%s1 + $0x5c8] sm:$0xf]
    %v405 = vld [vmem:[%s1 + $0x5cc] sm:$0xf]
    %v406 = vld [vmem:[%s1 + $0x5d0] sm:$0xf]
    %v407 = vld [vmem:[%s1 + $0x5d4] sm:$0xf]
    %v408 = vld [vmem:[%s1 + $0x5d8] sm:$0xf]
    %v409 = vld [vmem:[%s1 + $0x5dc] sm:$0xf]
    %v410 = vld [vmem:[%s1 + $0x5e0] sm:$0xf]
    %v411 = vld [vmem:[%s1 + $0x5e4] sm:$0xf]
    %v412 = vld [vmem:[%s1 + $0x5e8] sm:$0xf]
    %v413 = vld [vmem:[%s1 + $0x5ec] sm:$0xf]
    %v414 = vld [vmem:[%s1 + $0x5f0] sm:$0xf]
    %v415 = vld [vmem:[%s1 + $0x5f4] sm:$0xf]
    %v416 = vld [vmem:[%s1 + $0x5f8] sm:$0xf]
    %v417 = vld [vmem:[%s1 + $0x5fc] sm:$0xf]
    %v418 = vld [vmem:[%s1 + $0x600] sm:$0xf]
    %v419 = vld [vmem:[%s1 + $0x604] sm:$0xf]
    %v420 = vld [vmem:[%s1 + $0x608] sm:$0xf]
    %v421 = vld [vmem:[%s1 + $0x60c] sm:$0xf]
    %v422 = vld [vmem:[%s1 + $0x610] sm:$0xf]
    %v423 = vld [vmem:[%s1 + $0x614] sm:$0xf]
    %v424 = vld [vmem:[%s1 + $0x618] sm:$0xf]
    %v425 = vld [vmem:[%s1 + $0x61c] sm:$0xf]
    %v426 = vld [vmem:[%s1 + $0x620] sm:$0xf]
    %v427 = vld [vmem:[%s1 + $0x624] sm:$0xf]
    %v428 = vld [vmem:[%s1 + $0x628] sm:$0xf]
    %v429 = vld [vmem:[%s1 + $0x62c] sm:$0xf]
    %v430 = vld [vmem:[%s1 + $0x630] sm:$0xf]
    %v431 = vld [vmem:[%s1 + $0x634] sm:$0xf]
    %v432 = vld [vmem:[%s1 + $0x638] sm:$0xf]
    %v433 = vld [vmem:[%s1 + $0x63c] sm:$0xf]
    %v434 = vld [vmem:[%s1 + $0x640] sm:$0xf]
    %v435 = vld [vmem:[%s1 + $0x644] sm:$0xf]
    %v436 = vld [vmem:[%s1 + $0x648] sm:$0xf]
    %v437 = vld [vmem:[%s1 + $0x64c] sm:$0xf]
    %v438 = vld [vmem:[%s1 + $0x650] sm:$0xf]
    %v439 = vld [vmem:[%s1 + $0x654] sm:$0xf]
    %v440 = vld [vmem:[%s1 + $0x658] sm:$0xf]
    %v441 = vld [vmem:[%s1 + $0x65c] sm:$0xf]
    %v442 = vld [vmem:[%s1 + $0x660] sm:$0xf]
    %v443 = vld [vmem:[%s1 + $0x664] sm:$0xf]
    %v444 = vld [vmem:[%s1 + $0x668] sm:$0xf]
    %v445 = vld [vmem:[%s1 + $0x66c] sm:$0xf]
    %v446 = vld [vmem:[%s1 + $0x670] sm:$0xf]
    %v447 = vld [vmem:[%s1 + $0x674] sm:$0xf]
    %v448 = vld [vmem:[%s1 + $0x678] sm:$0xf]
    %v449 = vld [vmem:[%s1 + $0x67c] sm:$0xf]
    %v450 = vld [vmem:[%s1 + $0x680] sm:$0xf]
    %v451 = vld [vmem:[%s1 + $0x684] sm:$0xf]
    %v452 = vld [vmem:[%s1 + $0x688] sm:$0xf]
    %v453 = vld [vmem:[%s1 + $0x68c] sm:$0xf]
    %v454 = vld [vmem:[%s1 + $0x690] sm:$0xf]
    %v455 = vld [vmem:[%s1 + $0x694] sm:$0xf]
    %v456 = vld [vmem:[%s1 + $0x698] sm:$0xf]
    %v457 = vld [vmem:[%s1 + $0x69c] sm:$0xf]
    %v458 = vld [vmem:[%s1 + $0x6a0] sm:$0xf]
    %v459 = vld [vmem:[%s1 + $0x6a4] sm:$0xf]
    %v460 = vld [vmem:[%s1 + $0x6a8] sm:$0xf]
    %v461 = vld [vmem:[%s1 + $0x6ac] sm:$0xf]
    %v462 = vld [vmem:[%s1 + $0x6b0] sm:$0xf]
    %v463 = vld [vmem:[%s1 + $0x6b4] sm:$0xf]
    %v464 = vld [vmem:[%s1 + $0x6b8] sm:$0xf]
    %v465 = vld [vmem:[%s1 + $0x6bc] sm:$0xf]
    %v466 = vld [vmem:[%s1 + $0x6c0] sm:$0xf]
    %v467 = vld [vmem:[%s1 + $0x6c4] sm:$0xf]
    %v468 = vld [vmem:[%s1 + $0x6c8] sm:$0xf]
    %v469 = vld [vmem:[%s1 + $0x6cc] sm:$0xf]
    %v470 = vld [vmem:[%s1 + $0x6d0] sm:$0xf]
    %v471 = vld [vmem:[%s1 + $0x6d4] sm:$0xf]
    %v472 = vld [vmem:[%s1 + $0x6d8] sm:$0xf]
    %v473 = vld [vmem:[%s1 + $0x6dc] sm:$0xf]
    %v474 = vld [vmem:[%s1 + $0x6e0] sm:$0xf]
    %v475 = vld [vmem:[%s1 + $0x6e4] sm:$0xf]
    %v476 = vld [vmem:[%s1 + $0x6e8] sm:$0xf]
    %v477 = vld [vmem:[%s1 + $0x6ec] sm:$0xf]
    %v478 = vld [vmem:[%s1 + $0x6f0] sm:$0xf]
    %v479 = vld [vmem:[%s1 + $0x6f4] sm:$0xf]
    %v480 = vld [vmem:[%s1 + $0x6f8] sm:$0xf]
    %v481 = vld [vmem:[%s1 + $0x6fc] sm:$0xf]
    %v482 = vld [vmem:[%s1 + $0x700] sm:$0xf]
    %v483 = vld [vmem:[%s1 + $0x704] sm:$0xf]
    %v484 = vld [vmem:[%s1 + $0x708] sm:$0xf]
    %v485 = vld [vmem:[%s1 + $0x70c] sm:$0xf]
    %v486 = vld [vmem:[%s1 + $0x710] sm:$0xf]
    %v487 = vld [vmem:[%s1 + $0x714] sm:$0xf]
    %v488 = vld [vmem:[%s1 + $0x718] sm:$0xf]
    %v489 = vld [vmem:[%s1 + $0x71c] sm:$0xf]
    %v490 = vld [vmem:[%s1 + $0x720] sm:$0xf]
    %v491 = vld [vmem:[%s1 + $0x724] sm:$0xf]
    %v492 = vld [vmem:[%s1 + $0x728] sm:$0xf]
    %v493 = vld [vmem:[%s1 + $0x72c] sm:$0xf]
    %v494 = vld [vmem:[%s1 + $0x730] sm:$0xf]
    %v495 = vld [vmem:[%s1 + $0x734] sm:$0xf]
    %v496 = vld [vmem:[%s1 + $0x738] sm:$0xf]
    %v497 = vld [vmem:[%s1 + $0x73c] sm:$0xf]
    %v498 = vld [vmem:[%s1 + $0x740] sm:$0xf]
    %v499 = vld [vmem:[%s1 + $0x744] sm:$0xf]
    %v500 = vld [vmem:[%s1 + $0x748] sm:$0xf]
    %v501 = vld [vmem:[%s1 + $0x74c] sm:$0xf]
    %v502 = vld [vmem:[%s1 + $0x750] sm:$0xf]
    %v503 = vld [vmem:[%s1 + $0x754] sm:$0xf]
    %v504 = vld [vmem:[%s1 + $0x758] sm:$0xf]
    %v505 = vld [vmem:[%s1 + $0x75c] sm:$0xf]
    %v506 = vld [vmem:[%s1 + $0x760] sm:$0xf]
    %v507 = vld [vmem:[%s1 + $0x764] sm:$0xf]
    %v508 = vld [vmem:[%s1 + $0x768] sm:$0xf]
    %v509 = vld [vmem:[%s1 + $0x76c] sm:$0xf]
    %v510 = vld [vmem:[%s1 + $0x770] sm:$0xf]
    %v511 = vld [vmem:[%s1 + $0x774] sm:$0xf]
    %v512 = vld [vmem:[%s1 + $0x778] sm:$0xf]
    %v513 = vld [vmem:[%s1 + $0x77c] sm:$0xf]
    %v514 = vld [vmem:[%s1 + $0x780] sm:$0xf]
    %v515 = vld [vmem:[%s1 + $0x784] sm:$0xf]
    %v516 = vld [vmem:[%s1 + $0x788] sm:$0xf]
    %v517 = vld [vmem:[%s1 + $0x78c] sm:$0xf]
    %v518 = vld [vmem:[%s1 + $0x790] sm:$0xf]
    %v519 = vld [vmem:[%s1 + $0x794] sm:$0xf]
    %v520 = vld [vmem:[%s1 + $0x798] sm:$0xf]
    %v521 = vld [vmem:[%s1 + $0x79c] sm:$0xf]
    %v522 = vld [vmem:[%s1 + $0x7a0] sm:$0xf]
    %v523 = vld [vmem:[%s1 + $0x7a4] sm:$0xf]
    %v524 = vld [vmem:[%s1 + $0x7a8] sm:$0xf]
    %v525 = vld [vmem:[%s1 + $0x7ac] sm:$0xf]
    %v526 = vld [vmem:[%s1 + $0x7b0] sm:$0xf]
    %v527 = vld [vmem:[%s1 + $0x7b4] sm:$0xf]
    %v528 = vld [vmem:[%s1 + $0x7b8] sm:$0xf]
    %v529 = vld [vmem:[%s1 + $0x7bc] sm:$0xf]
    %v530 = vld [vmem:[%s1 + $0x7c0] sm:$0xf]
    %v531 = vld [vmem:[%s1 + $0x7c4] sm:$0xf]
    %v532 = vld [vmem:[%s1 + $0x7c8] sm:$0xf]
    %v533 = vld [vmem:[%s1 + $0x7cc] sm:$0xf]
    %v534 = vld [vmem:[%s1 + $0x7d0] sm:$0xf]
    %v535 = vld [vmem:[%s1 + $0x7d4] sm:$0xf]
    %v536 = vld [vmem:[%s1 + $0x7d8] sm:$0xf]
    %v537 = vld [vmem:[%s1 + $0x7dc] sm:$0xf]
    %v538 = vld [vmem:[%s1 + $0x7e0] sm:$0xf]
    %v539 = vld [vmem:[%s1 + $0x7e4] sm:$0xf]
    %v540 = vld [vmem:[%s1 + $0x7e8] sm:$0xf]
    %v541 = vld [vmem:[%s1 + $0x7ec] sm:$0xf]
    %v542 = vld [vmem:[%s1 + $0x7f0] sm:$0xf]
    %v543 = vld [vmem:[%s1 + $0x7f4] sm:$0xf]
    %v544 = vld [vmem:[%s1 + $0x7f8] sm:$0xf]
    %v545 = vld [vmem:[%s1 + $0x7fc] sm:$0xf]
    %v546 = vld [vmem:[%s1 + $0x800] sm:$0xf]
    %v547 = vld [vmem:[%s1 + $0x804] sm:$0xf]
    %v548 = vld [vmem:[%s1 + $0x808] sm:$0xf]
    %v549 = vld [vmem:[%s1 + $0x80c] sm:$0xf]
    %v550 = vld [vmem:[%s1 + $0x810] sm:$0xf]
    %v551 = vld [vmem:[%s1 + $0x814] sm:$0xf]
    %v552 = vld [vmem:[%s1 + $0x818] sm:$0xf]
    %v553 = vld [vmem:[%s1 + $0x81c] sm:$0xf]
    %v554 = vld [vmem:[%s1 + $0x820] sm:$0xf]
    %v555 = vld [vmem:[%s1 + $0x824] sm:$0xf]
    %v556 = vld [vmem:[%s1 + $0x828] sm:$0xf]
    %v557 = vld [vmem:[%s1 + $0x82c] sm:$0xf]
    %v558 = vld [vmem:[%s1 + $0x830] sm:$0xf]
    %v559 = vld [vmem:[%s1 + $0x834] sm:$0xf]
    %v560 = vld [vmem:[%s1 + $0x838] sm:$0xf]
    %v561 = vld [vmem:[%s1 + $0x83c] sm:$0xf]
    %v562 = vld [vmem:[%s1 + $0x840] sm:$0xf]
    %v563 = vld [vmem:[%s1 + $0x844] sm:$0xf]
    %v564 = vld [vmem:[%s1 + $0x848] sm:$0xf]
    %v565 = vld [vmem:[%s1 + $0x84c] sm:$0xf]
    %v566 = vld [vmem:[%s1 + $0x850] sm:$0xf]
    %v567 = vld [vmem:[%s1 + $0x854] sm:$0xf]
    %v568 = vld [vmem:[%s1 + $0x858] sm:$0xf]
    %v569 = vld [vmem:[%s1 + $0x85c] sm:$0xf]
    %v570 = vld [vmem:[%s1 + $0x860] sm:$0xf]
    %v571 = vld [vmem:[%s1 + $0x864] sm:$0xf]
    %v572 = vld [vmem:[%s1 + $0x868] sm:$0xf]
    %v573 = vld [vmem:[%s1 + $0x86c] sm:$0xf]
    %v574 = vld [vmem:[%s1 + $0x870] sm:$0xf]
    %v575 = vld [vmem:[%s1 + $0x874] sm:$0xf]
    %v576 = vld [vmem:[%s1 + $0x878] sm:$0xf]
    %v577 = vld [vmem:[%s1 + $0x87c] sm:$0xf]
    %v578 = vld [vmem:[%s1 + $0x880] sm:$0xf]
    %v579 = vld [vmem:[%s1 + $0x884] sm:$0xf]
    %v580 = vld [vmem:[%s1 + $0x888] sm:$0xf]
    %v581 = vld [vmem:[%s1 + $0x88c] sm:$0xf]
    %v582 = vld [vmem:[%s1 + $0x890] sm:$0xf]
    %v583 = vld [vmem:[%s1 + $0x894] sm:$0xf]
    %v584 = vld [vmem:[%s1 + $0x898] sm:$0xf]
    %v585 = vld [vmem:[%s1 + $0x89c] sm:$0xf]
    %v586 = vld [vmem:[%s1 + $0x8a0] sm:$0xf]
    %v587 = vld [vmem:[%s1 + $0x8a4] sm:$0xf]
    %v588 = vld [vmem:[%s1 + $0x8a8] sm:$0xf]
    %v589 = vld [vmem:[%s1 + $0x8ac] sm:$0xf]
    %v590 = vld [vmem:[%s1 + $0x8b0] sm:$0xf]
    %v591 = vld [vmem:[%s1 + $0x8b4] sm:$0xf]
    %v592 = vld [vmem:[%s1 + $0x8b8] sm:$0xf]
    %v593 = vld [vmem:[%s1 + $0x8bc] sm:$0xf]
    %v594 = vld [vmem:[%s1 + $0x8c0] sm:$0xf]
    %v595 = vld [vmem:[%s1 + $0x8c4] sm:$0xf]
    %v596 = vld [vmem:[%s1 + $0x8c8] sm:$0xf]
    %v597 = vld [vmem:[%s1 + $0x8cc] sm:$0xf]
    %v598 = vld [vmem:[%s1 + $0x8d0] sm:$0xf]
    %v599 = vld [vmem:[%s1 + $0x8d4] sm:$0xf]
    %v600 = vld [vmem:[%s1 + $0x8d8] sm:$0xf]
    %v601 = vld [vmem:[%s1 + $0x8dc] sm:$0xf]
    %v602 = vld [vmem:[%s1 + $0x8e0] sm:$0xf]
    %v603 = vld [vmem:[%s1 + $0x8e4] sm:$0xf]
    %v604 = vld [vmem:[%s1 + $0x8e8] sm:$0xf]
    %v605 = vld [vmem:[%s1 + $0x8ec] sm:$0xf]
    %v606 = vld [vmem:[%s1 + $0x8f0] sm:$0xf]
    %v607 = vld [vmem:[%s1 + $0x8f4] sm:$0xf]
    %v608 = vld [vmem:[%s1 + $0x8f8] sm:$0xf]
    %v609 = vld [vmem:[%s1 + $0x8fc] sm:$0xf]
    %v610 = vld [vmem:[%s1 + $0x900] sm:$0xf]
    %v611 = vld [vmem:[%s1 + $0x904] sm:$0xf]
    %v612 = vld [vmem:[%s1 + $0x908] sm:$0xf]
    %v613 = vld [vmem:[%s1 + $0x90c] sm:$0xf]
    %v614 = vld [vmem:[%s1 + $0x910] sm:$0xf]
    %v615 = vld [vmem:[%s1 + $0x914] sm:$0xf]
    %v616 = vld [vmem:[%s1 + $0x918] sm:$0xf]
    %v617 = vld [vmem:[%s1 + $0x91c] sm:$0xf]
    %v618 = vld [vmem:[%s1 + $0x920] sm:$0xf]
    %v619 = vld [vmem:[%s1 + $0x924] sm:$0xf]
    %v620 = vld [vmem:[%s1 + $0x928] sm:$0xf]
    %v621 = vld [vmem:[%s1 + $0x92c] sm:$0xf]
    %v622 = vld [vmem:[%s1 + $0x930] sm:$0xf]
    %v623 = vld [vmem:[%s1 + $0x934] sm:$0xf]
    %v624 = vld [vmem:[%s1 + $0x938] sm:$0xf]
    %v625 = vld [vmem:[%s1 + $0x93c] sm:$0xf]
    %v626 = vld [vmem:[%s1 + $0x940] sm:$0xf]
    %v627 = vld [vmem:[%s1 + $0x944] sm:$0xf]
    %v628 = vld [vmem:[%s1 + $0x948] sm:$0xf]
    %v629 = vld [vmem:[%s1 + $0x94c] sm:$0xf]
    %v630 = vld [vmem:[%s1 + $0x950] sm:$0xf]
    %v631 = vld [vmem:[%s1 + $0x954] sm:$0xf]
    %v632 = vld [vmem:[%s1 + $0x958] sm:$0xf]
    %v633 = vld [vmem:[%s1 + $0x95c] sm:$0xf]
    %v634 = vld [vmem:[%s1 + $0x960] sm:$0xf]
    %v635 = vld [vmem:[%s1 + $0x964] sm:$0xf]
    %v636 = vld [vmem:[%s1 + $0x968] sm:$0xf]
    %v637 = vld [vmem:[%s1 + $0x96c] sm:$0xf]
    %v638 = vld [vmem:[%s1 + $0x970] sm:$0xf]
    %v639 = vld [vmem:[%s1 + $0x974] sm:$0xf]
    %v640 = vld [vmem:[%s1 + $0x978] sm:$0xf]
    %v641 = vld [vmem:[%s1 + $0x97c] sm:$0xf]
    %v642 = vld [vmem:[%s1 + $0x980] sm:$0xf]
    %v643 = vld [vmem:[%s1 + $0x984] sm:$0xf]
    %v644 = vld [vmem:[%s1 + $0x988] sm:$0xf]
    %v645 = vld [vmem:[%s1 + $0x98c] sm:$0xf]
    %v646 = vld [vmem:[%s1 + $0x990] sm:$0xf]
    %v647 = vld [vmem:[%s1 + $0x994] sm:$0xf]
    %v648 = vld [vmem:[%s1 + $0x998] sm:$0xf]
    %v649 = vld [vmem:[%s1 + $0x99c] sm:$0xf]
    %v650 = vld [vmem:[%s1 + $0x9a0] sm:$0xf]
    %v651 = vld [vmem:[%s1 + $0x9a4] sm:$0xf]
    %v652 = vld [vmem:[%s1 + $0x9a8] sm:$0xf]
    %v653 = vld [vmem:[%s1 + $0x9ac] sm:$0xf]
    %v654 = vld [vmem:[%s1 + $0x9b0] sm:$0xf]
    %v655 = vld [vmem:[%s1 + $0x9b4] sm:$0xf]
    %v656 = vld [vmem:[%s1 + $0x9b8] sm:$0xf]
    %v657 = vld [vmem:[%s1 + $0x9bc] sm:$0xf]
    %v658 = vld [vmem:[%s1 + $0x9c0] sm:$0xf]
    %v659 = vld [vmem:[%s1 + $0x9c4] sm:$0xf]
    %v660 = vld [vmem:[%s1 + $0x9c8] sm:$0xf]
    %v661 = vld [vmem:[%s1 + $0x9cc] sm:$0xf]
    %v662 = vld [vmem:[%s1 + $0x9d0] sm:$0xf]
    %v663 = vld [vmem:[%s1 + $0x9d4] sm:$0xf]
    %v664 = vld [vmem:[%s1 + $0x9d8] sm:$0xf]
    %v665 = vld [vmem:[%s1 + $0x9dc] sm:$0xf]
    %v666 = vld [vmem:[%s1 + $0x9e0] sm:$0xf]
    %v667 = vld [vmem:[%s1 + $0x9e4] sm:$0xf]
    %v668 = vld [vmem:[%s1 + $0x9e8] sm:$0xf]
    %v669 = vld [vmem:[%s1 + $0x9ec] sm:$0xf]
    %v670 = vld [vmem:[%s1 + $0x9f0] sm:$0xf]
    %v671 = vld [vmem:[%s1 + $0x9f4] sm:$0xf]
    %v672 = vld [vmem:[%s1 + $0x9f8] sm:$0xf]
    %v673 = vld [vmem:[%s1 + $0x9fc] sm:$0xf]
    %v674 = vld [vmem:[%s1 + $0xa00] sm:$0xf]
    %v675 = vld [vmem:[%s1 + $0xa04] sm:$0xf]
    %v676 = vld [vmem:[%s1 + $0xa08] sm:$0xf]
    %v677 = vld [vmem:[%s1 + $0xa0c] sm:$0xf]
    %v678 = vld [vmem:[%s1 + $0xa10] sm:$0xf]
    %v679 = vld [vmem:[%s1 + $0xa14] sm:$0xf]
    %v680 = vld [vmem:[%s1 + $0xa18] sm:$0xf]
    %v681 = vld [vmem:[%s1 + $0xa1c] sm:$0xf]
    %v682 = vld [vmem:[%s1 + $0xa20] sm:$0xf]
    %v683 = vld [vmem:[%s1 + $0xa24] sm:$0xf]
    %v684 = vld [vmem:[%s1 + $0xa28] sm:$0xf]
    %v685 = vld [vmem:[%s1 + $0xa2c] sm:$0xf]
    %v686 = vld [vmem:[%s1 + $0xa30] sm:$0xf]
    %v687 = vld [vmem:[%s1 + $0xa34] sm:$0xf]
    %v688 = vld [vmem:[%s1 + $0xa38] sm:$0xf]
    %v689 = vld [vmem:[%s1 + $0xa3c] sm:$0xf]
    %v690 = vld [vmem:[%s1 + $0xa40] sm:$0xf]
    %v691 = vld [vmem:[%s1 + $0xa44] sm:$0xf]
    %v692 = vld [vmem:[%s1 + $0xa48] sm:$0xf]
    %v693 = vld [vmem:[%s1 + $0xa4c] sm:$0xf]
    %v694 = vld [vmem:[%s1 + $0xa50] sm:$0xf]
    %v695 = vld [vmem:[%s1 + $0xa54] sm:$0xf]
    %v696 = vld [vmem:[%s1 + $0xa58] sm:$0xf]
    %v697 = vld [vmem:[%s1 + $0xa5c] sm:$0xf]
    %v698 = vld [vmem:[%s1 + $0xa60] sm:$0xf]
    %v699 = vld [vmem:[%s1 + $0xa64] sm:$0xf]
    %v700 = vld [vmem:[%s1 + $0xa68] sm:$0xf]
    %v701 = vld [vmem:[%s1 + $0xa6c] sm:$0xf]
    %v702 = vld [vmem:[%s1 + $0xa70] sm:$0xf]
    %v703 = vld [vmem:[%s1 + $0xa74] sm:$0xf]
    %v704 = vld [vmem:[%s1 + $0xa78] sm:$0xf]
    %v705 = vld [vmem:[%s1 + $0xa7c] sm:$0xf]
    %v706 = vld [vmem:[%s1 + $0xa80] sm:$0xf]
    %v707 = vld [vmem:[%s1 + $0xa84] sm:$0xf]
    %v708 = vld [vmem:[%s1 + $0xa88] sm:$0xf]
    %v709 = vld [vmem:[%s1 + $0xa8c] sm:$0xf]
    %v710 = vld [vmem:[%s1 + $0xa90] sm:$0xf]
    %v711 = vld [vmem:[%s1 + $0xa94] sm:$0xf]
    %v712 = vld [vmem:[%s1 + $0xa98] sm:$0xf]
    %v713 = vld [vmem:[%s1 + $0xa9c] sm:$0xf]
    %v714 = vld [vmem:[%s1 + $0xaa0] sm:$0xf]
    %v715 = vld [vmem:[%s1 + $0xaa4] sm:$0xf]
    %v716 = vld [vmem:[%s1 + $0xaa8] sm:$0xf]
    %v717 = vld [vmem:[%s1 + $0xaac] sm:$0xf]
    %v718 = vld [vmem:[%s1 + $0xab0] sm:$0xf]
    %v719 = vld [vmem:[%s1 + $0xab4] sm:$0xf]
    %v720 = vld [vmem:[%s1 + $0xab8] sm:$0xf]
    %v721 = vld [vmem:[%s1 + $0xabc] sm:$0xf]
    %v722 = vld [vmem:[%s1 + $0xac0] sm:$0xf]
    %v723 = vld [vmem:[%s1 + $0xac4] sm:$0xf]
    %v724 = vld [vmem:[%s1 + $0xac8] sm:$0xf]
    %v725 = vld [vmem:[%s1 + $0xacc] sm:$0xf]
    %v726 = vld [vmem:[%s1 + $0xad0] sm:$0xf]
    %v727 = vld [vmem:[%s1 + $0xad4] sm:$0xf]
    %v728 = vld [vmem:[%s1 + $0xad8] sm:$0xf]
    %v729 = vld [vmem:[%s1 + $0xadc] sm:$0xf]
    %v730 = vld [vmem:[%s1 + $0xae0] sm:$0xf]
    %v731 = vld [vmem:[%s1 + $0xae4] sm:$0xf]
    %v732 = vld [vmem:[%s1 + $0xae8] sm:$0xf]
    %v733 = vld [vmem:[%s1 + $0xaec] sm:$0xf]
    %v734 = vld [vmem:[%s1 + $0xaf0] sm:$0xf]
    %v735 = vld [vmem:[%s1 + $0xaf4] sm:$0xf]
    %v736 = vld [vmem:[%s1 + $0xaf8] sm:$0xf]
    %v737 = vld [vmem:[%s1 + $0xafc] sm:$0xf]
    %v738 = vld [vmem:[%s1 + $0xb00] sm:$0xf]
    %v739 = vld [vmem:[%s1 + $0xb04] sm:$0xf]
    %v740 = vld [vmem:[%s1 + $0xb08] sm:$0xf]
    %v741 = vld [vmem:[%s1 + $0xb0c] sm:$0xf]
    %v742 = vld [vmem:[%s1 + $0xb10] sm:$0xf]
    %v743 = vld [vmem:[%s1 + $0xb14] sm:$0xf]
    %v744 = vld [vmem:[%s1 + $0xb18] sm:$0xf]
    %v745 = vld [vmem:[%s1 + $0xb1c] sm:$0xf]
    %v746 = vld [vmem:[%s1 + $0xb20] sm:$0xf]
    %v747 = vld [vmem:[%s1 + $0xb24] sm:$0xf]
    %v748 = vld [vmem:[%s1 + $0xb28] sm:$0xf]
    %v749 = vld [vmem:[%s1 + $0xb2c] sm:$0xf]
    %v750 = vld [vmem:[%s1 + $0xb30] sm:$0xf]
    %v751 = vld [vmem:[%s1 + $0xb34] sm:$0xf]
    %v752 = vld [vmem:[%s1 + $0xb38] sm:$0xf]
    %v753 = vld [vmem:[%s1 + $0xb3c] sm:$0xf]
    %v754 = vld [vmem:[%s1 + $0xb40] sm:$0xf]
    %v755 = vld [vmem:[%s1 + $0xb44] sm:$0xf]
    %v756 = vld [vmem:[%s1 + $0xb48] sm:$0xf]
    %v757 = vld [vmem:[%s1 + $0xb4c] sm:$0xf]
    %v758 = vld [vmem:[%s1 + $0xb50] sm:$0xf]
    %v759 = vld [vmem:[%s1 + $0xb54] sm:$0xf]
    %v760 = vld [vmem:[%s1 + $0xb58] sm:$0xf]
    %v761 = vld [vmem:[%s1 + $0xb5c] sm:$0xf]
    %v762 = vld [vmem:[%s1 + $0xb60] sm:$0xf]
    %v763 = vld [vmem:[%s1 + $0xb64] sm:$0xf]
    %v764 = vld [vmem:[%s1 + $0xb68] sm:$0xf]
    %v765 = vld [vmem:[%s1 + $0xb6c] sm:$0xf]
    %v766 = vld [vmem:[%s1 + $0xb70] sm:$0xf]
    %v767 = vld [vmem:[%s1 + $0xb74] sm:$0xf]
    %v768 = vld [vmem:[%s1 + $0xb78] sm:$0xf]
    %v769 = vld [vmem:[%s1 + $0xb7c] sm:$0xf]
    %v770 = vld [vmem:[%s1 + $0xb80] sm:$0xf]
    %v771 = vld [vmem:[%s1 + $0xb84] sm:$0xf]
    %v772 = vld [vmem:[%s1 + $0xb88] sm:$0xf]
    %v773 = vld [vmem:[%s1 + $0xb8c] sm:$0xf]
    %v774 = vld [vmem:[%s1 + $0xb90] sm:$0xf]
    %v775 = vld [vmem:[%s1 + $0xb94] sm:$0xf]
    %v776 = vld [vmem:[%s1 + $0xb98] sm:$0xf]
    %v777 = vld [vmem:[%s1 + $0xb9c] sm:$0xf]
    %v778 = vld [vmem:[%s1 + $0xba0] sm:$0xf]
    %v779 = vld [vmem:[%s1 + $0xba4] sm:$0xf]
    %v780 = vld [vmem:[%s1 + $0xba8] sm:$0xf]
    %v781 = vld [vmem:[%s1 + $0xbac] sm:$0xf]
    %v782 = vld [vmem:[%s1 + $0xbb0] sm:$0xf]
    %v783 = vld [vmem:[%s1 + $0xbb4] sm:$0xf]
    %v784 = vld [vmem:[%s1 + $0xbb8] sm:$0xf]
    %v785 = vld [vmem:[%s1 + $0xbbc] sm:$0xf]
    %v786 = vld [vmem:[%s1 + $0xbc0] sm:$0xf]
    %v787 = vld [vmem:[%s1 + $0xbc4] sm:$0xf]
    %v788 = vld [vmem:[%s1 + $0xbc8] sm:$0xf]
    %v789 = vld [vmem:[%s1 + $0xbcc] sm:$0xf]
    %v790 = vld [vmem:[%s1 + $0xbd0] sm:$0xf]
    %v791 = vld [vmem:[%s1 + $0xbd4] sm:$0xf]
    %v792 = vld [vmem:[%s1 + $0xbd8] sm:$0xf]
    %v793 = vld [vmem:[%s1 + $0xbdc] sm:$0xf]
    %v794 = vld [vmem:[%s1 + $0xbe0] sm:$0xf]
    %v795 = vld [vmem:[%s1 + $0xbe4] sm:$0xf]
    %v796 = vld [vmem:[%s1 + $0xbe8] sm:$0xf]
    %v797 = vld [vmem:[%s1 + $0xbec] sm:$0xf]
    %v798 = vld [vmem:[%s1 + $0xbf0] sm:$0xf]
    %v799 = vld [vmem:[%s1 + $0xbf4] sm:$0xf]
    %v800 = vld [vmem:[%s1 + $0xbf8] sm:$0xf]
    %v801 = vld [vmem:[%s1 + $0xbfc] sm:$0xf]
    %v802 = vld [vmem:[%s1 + $0xc00] sm:$0xf]
    %v803 = vld [vmem:[%s1 + $0xc04] sm:$0xf]
    %v804 = vld [vmem:[%s1 + $0xc08] sm:$0xf]
    %v805 = vld [vmem:[%s1 + $0xc0c] sm:$0xf]
    %v806 = vld [vmem:[%s1 + $0xc10] sm:$0xf]
    %v807 = vld [vmem:[%s1 + $0xc14] sm:$0xf]
    %v808 = vld [vmem:[%s1 + $0xc18] sm:$0xf]
    %v809 = vld [vmem:[%s1 + $0xc1c] sm:$0xf]
    %v810 = vld [vmem:[%s1 + $0xc20] sm:$0xf]
    %v811 = vld [vmem:[%s1 + $0xc24] sm:$0xf]
    %v812 = vld [vmem:[%s1 + $0xc28] sm:$0xf]
    %v813 = vld [vmem:[%s1 + $0xc2c] sm:$0xf]
    %v814 = vld [vmem:[%s1 + $0xc30] sm:$0xf]
    %v815 = vld [vmem:[%s1 + $0xc34] sm:$0xf]
    %v816 = vld [vmem:[%s1 + $0xc38] sm:$0xf]
    %v817 = vld [vmem:[%s1 + $0xc3c] sm:$0xf]
    %v818 = vld [vmem:[%s1 + $0xc40] sm:$0xf]
    %v819 = vld [vmem:[%s1 + $0xc44] sm:$0xf]
    %v820 = vld [vmem:[%s1 + $0xc48] sm:$0xf]
    %v821 = vld [vmem:[%s1 + $0xc4c] sm:$0xf]
    %v822 = vld [vmem:[%s1 + $0xc50] sm:$0xf]
    %v823 = vld [vmem:[%s1 + $0xc54] sm:$0xf]
    %v824 = vld [vmem:[%s1 + $0xc58] sm:$0xf]
    %v825 = vld [vmem:[%s1 + $0xc5c] sm:$0xf]
    %v826 = vld [vmem:[%s1 + $0xc60] sm:$0xf]
    %v827 = vld [vmem:[%s1 + $0xc64] sm:$0xf]
    %v828 = vld [vmem:[%s1 + $0xc68] sm:$0xf]
    %v829 = vld [vmem:[%s1 + $0xc6c] sm:$0xf]
    %v830 = vld [vmem:[%s1 + $0xc70] sm:$0xf]
    %v831 = vld [vmem:[%s1 + $0xc74] sm:$0xf]
    %v832 = vld [vmem:[%s1 + $0xc78] sm:$0xf]
    %v833 = vld [vmem:[%s1 + $0xc7c] sm:$0xf]
    %v834 = vld [vmem:[%s1 + $0xc80] sm:$0xf]
    %v835 = vld [vmem:[%s1 + $0xc84] sm:$0xf]
    %v836 = vld [vmem:[%s1 + $0xc88] sm:$0xf]
    %v837 = vld [vmem:[%s1 + $0xc8c] sm:$0xf]
    %v838 = vld [vmem:[%s1 + $0xc90] sm:$0xf]
    %v839 = vld [vmem:[%s1 + $0xc94] sm:$0xf]
    %v840 = vld [vmem:[%s1 + $0xc98] sm:$0xf]
    %v841 = vld [vmem:[%s1 + $0xc9c] sm:$0xf]
    %v842 = vld [vmem:[%s1 + $0xca0] sm:$0xf]
    %v843 = vld [vmem:[%s1 + $0xca4] sm:$0xf]
    %v844 = vld [vmem:[%s1 + $0xca8] sm:$0xf]
    %v845 = vld [vmem:[%s1 + $0xcac] sm:$0xf]
    %v846 = vld [vmem:[%s1 + $0xcb0] sm:$0xf]
    %v847 = vld [vmem:[%s1 + $0xcb4] sm:$0xf]
    %v848 = vld [vmem:[%s1 + $0xcb8] sm:$0xf]
    %v849 = vld [vmem:[%s1 + $0xcbc] sm:$0xf]
    %v850 = vld [vmem:[%s1 + $0xcc0] sm:$0xf]
    %v851 = vld [vmem:[%s1 + $0xcc4] sm:$0xf]
    %v852 = vld [vmem:[%s1 + $0xcc8] sm:$0xf]
    %v853 = vld [vmem:[%s1 + $0xccc] sm:$0xf]
    %v854 = vld [vmem:[%s1 + $0xcd0] sm:$0xf]
    %v855 = vld [vmem:[%s1 + $0xcd4] sm:$0xf]
    %v856 = vld [vmem:[%s1 + $0xcd8] sm:$0xf]
    %v857 = vld [vmem:[%s1 + $0xcdc] sm:$0xf]
    %v858 = vld [vmem:[%s1 + $0xce0] sm:$0xf]
    %v859 = vld [vmem:[%s1 + $0xce4] sm:$0xf]
    %v860 = vld [vmem:[%s1 + $0xce8] sm:$0xf]
    %v861 = vld [vmem:[%s1 + $0xcec] sm:$0xf]
    %v862 = vld [vmem:[%s1 + $0xcf0] sm:$0xf]
    %v863 = vld [vmem:[%s1 + $0xcf4] sm:$0xf]
    %v864 = vld [vmem:[%s1 + $0xcf8] sm:$0xf]
    %v865 = vld [vmem:[%s1 + $0xcfc] sm:$0xf]
    %v866 = vld [vmem:[%s1 + $0xd00] sm:$0xf]
    %v867 = vld [vmem:[%s1 + $0xd04] sm:$0xf]
    %v868 = vld [vmem:[%s1 + $0xd08] sm:$0xf]
    %v869 = vld [vmem:[%s1 + $0xd0c] sm:$0xf]
    %v870 = vld [vmem:[%s1 + $0xd10] sm:$0xf]
    %v871 = vld [vmem:[%s1 + $0xd14] sm:$0xf]
    %v872 = vld [vmem:[%s1 + $0xd18] sm:$0xf]
    %v873 = vld [vmem:[%s1 + $0xd1c] sm:$0xf]
    %v874 = vld [vmem:[%s1 + $0xd20] sm:$0xf]
    %v875 = vld [vmem:[%s1 + $0xd24] sm:$0xf]
    %v876 = vld [vmem:[%s1 + $0xd28] sm:$0xf]
    %v877 = vld [vmem:[%s1 + $0xd2c] sm:$0xf]
    %v878 = vld [vmem:[%s1 + $0xd30] sm:$0xf]
    %v879 = vld [vmem:[%s1 + $0xd34] sm:$0xf]
    %v880 = vld [vmem:[%s1 + $0xd38] sm:$0xf]
    %v881 = vld [vmem:[%s1 + $0xd3c] sm:$0xf]
    %v882 = vld [vmem:[%s1 + $0xd40] sm:$0xf]
    %v883 = vld [vmem:[%s1 + $0xd44] sm:$0xf]
    %v884 = vld [vmem:[%s1 + $0xd48] sm:$0xf]
    %v885 = vld [vmem:[%s1 + $0xd4c] sm:$0xf]
    %v886 = vld [vmem:[%s1 + $0xd50] sm:$0xf]
    %v887 = vld [vmem:[%s1 + $0xd54] sm:$0xf]
    %v888 = vld [vmem:[%s1 + $0xd58] sm:$0xf]
    %v889 = vld [vmem:[%s1 + $0xd5c] sm:$0xf]
    %v890 = vld [vmem:[%s1 + $0xd60] sm:$0xf]
    %v891 = vld [vmem:[%s1 + $0xd64] sm:$0xf]
    %v892 = vld [vmem:[%s1 + $0xd68] sm:$0xf]
    %v893 = vld [vmem:[%s1 + $0xd6c] sm:$0xf]
    %v894 = vld [vmem:[%s1 + $0xd70] sm:$0xf]
    %v895 = vld [vmem:[%s1 + $0xd74] sm:$0xf]
    %v896 = vld [vmem:[%s1 + $0xd78] sm:$0xf]
    %v897 = vld [vmem:[%s1 + $0xd7c] sm:$0xf]
    %v898 = vld [vmem:[%s1 + $0xd80] sm:$0xf]
    %v899 = vld [vmem:[%s1 + $0xd84] sm:$0xf]
    %v900 = vld [vmem:[%s1 + $0xd88] sm:$0xf]
    %v901 = vld [vmem:[%s1 + $0xd8c] sm:$0xf]
    %v902 = vld [vmem:[%s1 + $0xd90] sm:$0xf]
    %v903 = vld [vmem:[%s1 + $0xd94] sm:$0xf]
    %v904 = vld [vmem:[%s1 + $0xd98] sm:$0xf]
    %v905 = vld [vmem:[%s1 + $0xd9c] sm:$0xf]
    %v906 = vld [vmem:[%s1 + $0xda0] sm:$0xf]
    %v907 = vld [vmem:[%s1 + $0xda4] sm:$0xf]
    %v908 = vld [vmem:[%s1 + $0xda8] sm:$0xf]
    %v909 = vld [vmem:[%s1 + $0xdac] sm:$0xf]
    %v910 = vld [vmem:[%s1 + $0xdb0] sm:$0xf]
    %v911 = vld [vmem:[%s1 + $0xdb4] sm:$0xf]
    %v912 = vld [vmem:[%s1 + $0xdb8] sm:$0xf]
    %v913 = vld [vmem:[%s1 + $0xdbc] sm:$0xf]
    %v914 = vld [vmem:[%s1 + $0xdc0] sm:$0xf]
    %v915 = vld [vmem:[%s1 + $0xdc4] sm:$0xf]
    %v916 = vld [vmem:[%s1 + $0xdc8] sm:$0xf]
    %v917 = vld [vmem:[%s1 + $0xdcc] sm:$0xf]
    %v918 = vld [vmem:[%s1 + $0xdd0] sm:$0xf]
    %v919 = vld [vmem:[%s1 + $0xdd4] sm:$0xf]
    %v920 = vld [vmem:[%s1 + $0xdd8] sm:$0xf]
    %v921 = vld [vmem:[%s1 + $0xddc] sm:$0xf]
    %v922 = vld [vmem:[%s1 + $0xde0] sm:$0xf]
    %v923 = vld [vmem:[%s1 + $0xde4] sm:$0xf]
    %v924 = vld [vmem:[%s1 + $0xde8] sm:$0xf]
    %v925 = vld [vmem:[%s1 + $0xdec] sm:$0xf]
    %v926 = vld [vmem:[%s1 + $0xdf0] sm:$0xf]
    %v927 = vld [vmem:[%s1 + $0xdf4] sm:$0xf]
    %v928 = vld [vmem:[%s1 + $0xdf8] sm:$0xf]
    %v929 = vld [vmem:[%s1 + $0xdfc] sm:$0xf]
    %v930 = vld [vmem:[%s1 + $0xe00] sm:$0xf]
    %v931 = vld [vmem:[%s1 + $0xe04] sm:$0xf]
    %v932 = vld [vmem:[%s1 + $0xe08] sm:$0xf]
    %v933 = vld [vmem:[%s1 + $0xe0c] sm:$0xf]
    %v934 = vld [vmem:[%s1 + $0xe10] sm:$0xf]
    %v935 = vld [vmem:[%s1 + $0xe14] sm:$0xf]
    %v936 = vld [vmem:[%s1 + $0xe18] sm:$0xf]
    %v937 = vld [vmem:[%s1 + $0xe1c] sm:$0xf]
    %v938 = vld [vmem:[%s1 + $0xe20] sm:$0xf]
    %v939 = vld [vmem:[%s1 + $0xe24] sm:$0xf]
    %v940 = vld [vmem:[%s1 + $0xe28] sm:$0xf]
    %v941 = vld [vmem:[%s1 + $0xe2c] sm:$0xf]
    %v942 = vld [vmem:[%s1 + $0xe30] sm:$0xf]
    %v943 = vld [vmem:[%s1 + $0xe34] sm:$0xf]
    %v944 = vld [vmem:[%s1 + $0xe38] sm:$0xf]
    %v945 = vld [vmem:[%s1 + $0xe3c] sm:$0xf]
    %v946 = vld [vmem:[%s1 + $0xe40] sm:$0xf]
    %v947 = vld [vmem:[%s1 + $0xe44] sm:$0xf]
    %v948 = vld [vmem:[%s1 + $0xe48] sm:$0xf]
    %v949 = vld [vmem:[%s1 + $0xe4c] sm:$0xf]
    %v950 = vld [vmem:[%s1 + $0xe50] sm:$0xf]
    %v951 = vld [vmem:[%s1 + $0xe54] sm:$0xf]
    %v952 = vld [vmem:[%s1 + $0xe58] sm:$0xf]
    %v953 = vld [vmem:[%s1 + $0xe5c] sm:$0xf]
    %v954 = vld [vmem:[%s1 + $0xe60] sm:$0xf]
    %v955 = vld [vmem:[%s1 + $0xe64] sm:$0xf]
    %v956 = vld [vmem:[%s1 + $0xe68] sm:$0xf]
    %v957 = vld [vmem:[%s1 + $0xe6c] sm:$0xf]
    %v958 = vld [vmem:[%s1 + $0xe70] sm:$0xf]
    %v959 = vld [vmem:[%s1 + $0xe74] sm:$0xf]
    %v960 = vld [vmem:[%s1 + $0xe78] sm:$0xf]
    %v961 = vld [vmem:[%s1 + $0xe7c] sm:$0xf]
    %v962 = vld [vmem:[%s1 + $0xe80] sm:$0xf]
    %v963 = vld [vmem:[%s1 + $0xe84] sm:$0xf]
    %v964 = vld [vmem:[%s1 + $0xe88] sm:$0xf]
    %v965 = vld [vmem:[%s1 + $0xe8c] sm:$0xf]
    %v966 = vld [vmem:[%s1 + $0xe90] sm:$0xf]
    %v967 = vld [vmem:[%s1 + $0xe94] sm:$0xf]
    %v968 = vld [vmem:[%s1 + $0xe98] sm:$0xf]
    %v969 = vld [vmem:[%s1 + $0xe9c] sm:$0xf]
    %v970 = vld [vmem:[%s1 + $0xea0] sm:$0xf]
    %v971 = vld [vmem:[%s1 + $0xea4] sm:$0xf]
    %v972 = vld [vmem:[%s1 + $0xea8] sm:$0xf]
    %v973 = vld [vmem:[%s1 + $0xeac] sm:$0xf]
    %v974 = vld [vmem:[%s1 + $0xeb0] sm:$0xf]
    %v975 = vld [vmem:[%s1 + $0xeb4] sm:$0xf]
    %v976 = vld [vmem:[%s1 + $0xeb8] sm:$0xf]
    %v977 = vld [vmem:[%s1 + $0xebc] sm:$0xf]
    %v978 = vld [vmem:[%s1 + $0xec0] sm:$0xf]
    %v979 = vld [vmem:[%s1 + $0xec4] sm:$0xf]
    %v980 = vld [vmem:[%s1 + $0xec8] sm:$0xf]
    %v981 = vld [vmem:[%s1 + $0xecc] sm:$0xf]
    %v982 = vld [vmem:[%s1 + $0xed0] sm:$0xf]
    %v983 = vld [vmem:[%s1 + $0xed4] sm:$0xf]
    %v984 = vld [vmem:[%s1 + $0xed8] sm:$0xf]
    %v985 = vld [vmem:[%s1 + $0xedc] sm:$0xf]
    %v986 = vld [vmem:[%s1 + $0xee0] sm:$0xf]
    %v987 = vld [vmem:[%s1 + $0xee4] sm:$0xf]
    %v988 = vld [vmem:[%s1 + $0xee8] sm:$0xf]
    %v989 = vld [vmem:[%s1 + $0xeec] sm:$0xf]
    %v990 = vld [vmem:[%s1 + $0xef0] sm:$0xf]
    %v991 = vld [vmem:[%s1 + $0xef4] sm:$0xf]
    %v992 = vld [vmem:[%s1 + $0xef8] sm:$0xf]
    %v993 = vld [vmem:[%s1 + $0xefc] sm:$0xf]
    %v994 = vld [vmem:[%s1 + $0xf00] sm:$0xf]
    %v995 = vld [vmem:[%s1 + $0xf04] sm:$0xf]
    %v996 = vld [vmem:[%s1 + $0xf08] sm:$0xf]
    %v997 = vld [vmem:[%s1 + $0xf0c] sm:$0xf]
    %v998 = vld [vmem:[%s1 + $0xf10] sm:$0xf]
    %v999 = vld [vmem:[%s1 + $0xf14] sm:$0xf]
    %v1000 = vld [vmem:[%s1 + $0xf18] sm:$0xf]
    %v1001 = vld [vmem:[%s1 + $0xf1c] sm:$0xf]
    %v1002 = vld [vmem:[%s1 + $0xf20] sm:$0xf]
    %v1003 = vld [vmem:[%s1 + $0xf24] sm:$0xf]
    %v1004 = vld [vmem:[%s1 + $0xf28] sm:$0xf]
    %v1005 = vld [vmem:[%s1 + $0xf2c] sm:$0xf]
    %v1006 = vld [vmem:[%s1 + $0xf30] sm:$0xf]
    %v1007 = vld [vmem:[%s1 + $0xf34] sm:$0xf]
    %v1008 = vld [vmem:[%s1 + $0xf38] sm:$0xf]
    %v1009 = vld [vmem:[%s1 + $0xf3c] sm:$0xf]
    %v1010 = vld [vmem:[%s1 + $0xf40] sm:$0xf]
    %v1011 = vld [vmem:[%s1 + $0xf44] sm:$0xf]
    %v1012 = vld [vmem:[%s1 + $0xf48] sm:$0xf]
    %v1013 = vld [vmem:[%s1 + $0xf4c] sm:$0xf]
    %v1014 = vld [vmem:[%s1 + $0xf50] sm:$0xf]
    %v1015 = vld [vmem:[%s1 + $0xf54] sm:$0xf]
    %v1016 = vld [vmem:[%s1 + $0xf58] sm:$0xf]
    %v1017 = vld [vmem:[%s1 + $0xf5c] sm:$0xf]
    %v1018 = vld [vmem:[%s1 + $0xf60] sm:$0xf]
    %v1019 = vld [vmem:[%s1 + $0xf64] sm:$0xf]
    %v1020 = vld [vmem:[%s1 + $0xf68] sm:$0xf]
    %v1021 = vld [vmem:[%s1 + $0xf6c] sm:$0xf]
    %v1022 = vld [vmem:[%s1 + $0xf70] sm:$0xf]
    %v1023 = vld [vmem:[%s1 + $0xf74] sm:$0xf]
    %v1024 = vld [vmem:[%s1 + $0xf78] sm:$0xf]
    %v1025 = vld [vmem:[%s1 + $0xf7c] sm:$0xf]
    %v1026 = vld [vmem:[%s1 + $0xf80] sm:$0xf]
    %v1027 = vld [vmem:[%s1 + $0xf84] sm:$0xf]
    %v1028 = vld [vmem:[%s1 + $0xf88] sm:$0xf]
    %v1029 = vld [vmem:[%s1 + $0xf8c] sm:$0xf]
    %v1030 = vld [vmem:[%s1 + $0xf90] sm:$0xf]
    %v1031 = vld [vmem:[%s1 + $0xf94] sm:$0xf]
    %v1032 = vld [vmem:[%s1 + $0xf98] sm:$0xf]
    %v1033 = vld [vmem:[%s1 + $0xf9c] sm:$0xf]
    %v1034 = vld [vmem:[%s1 + $0xfa0] sm:$0xf]
    %v1035 = vld [vmem:[%s1 + $0xfa4] sm:$0xf]
    %v1036 = vld [vmem:[%s1 + $0xfa8] sm:$0xf]
    %v1037 = vld [vmem:[%s1 + $0xfac] sm:$0xf]
    %v1038 = vld [vmem:[%s1 + $0xfb0] sm:$0xf]
    %v1039 = vld [vmem:[%s1 + $0xfb4] sm:$0xf]
    %v1040 = vld [vmem:[%s1 + $0xfb8] sm:$0xf]
    %v1041 = vld [vmem:[%s1 + $0xfbc] sm:$0xf]
    %v1042 = vld [vmem:[%s1 + $0xfc0] sm:$0xf]
    %v1043 = vld [vmem:[%s1 + $0xfc4] sm:$0xf]
    %v1044 = vld [vmem:[%s1 + $0xfc8] sm:$0xf]
    %v1045 = vld [vmem:[%s1 + $0xfcc] sm:$0xf]
    %v1046 = vld [vmem:[%s1 + $0xfd0] sm:$0xf]
    %v1047 = vld [vmem:[%s1 + $0xfd4] sm:$0xf]
    %v1048 = vld [vmem:[%s1 + $0xfd8] sm:$0xf]
    %v1049 = vld [vmem:[%s1 + $0xfdc] sm:$0xf]
    %v1050 = vld [vmem:[%s1 + $0xfe0] sm:$0xf]
    %v1051 = vld [vmem:[%s1 + $0xfe4] sm:$0xf]
    %v1052 = vld [vmem:[%s1 + $0xfe8] sm:$0xf]
    %v1053 = vld [vmem:[%s1 + $0xfec] sm:$0xf]
    %v1054 = vld [vmem:[%s1 + $0xff0] sm:$0xf]
    %v1055 = vld [vmem:[%s1 + $0xff4] sm:$0xf]
    %v1056 = vld [vmem:[%s1 + $0xff8] sm:$0xf]
    %v1057 = vld [vmem:[%s1 + $0xffc] sm:$0xf]
    %v1058 = vld [vmem:[%s1 + $0x1000] sm:$0xf]
    %v1059 = vld [vmem:[%s1 + $0x1004] sm:$0xf]
    %v1060 = vld [vmem:[%s1 + $0x1008] sm:$0xf]
    %v1061 = vld [vmem:[%s1 + $0x100c] sm:$0xf]
    %v1062 = vld [vmem:[%s1 + $0x1010] sm:$0xf]
    %v1063 = vld [vmem:[%s1 + $0x1014] sm:$0xf]
    %v1064 = vld [vmem:[%s1 + $0x1018] sm:$0xf]
    %v1065 = vld [vmem:[%s1 + $0x101c] sm:$0xf]
    %v1066 = vld [vmem:[%s1 + $0x1020] sm:$0xf]
    %v1067 = vld [vmem:[%s1 + $0x1024] sm:$0xf]
    %v1068 = vld [vmem:[%s1 + $0x1028] sm:$0xf]
    %v1069 = vld [vmem:[%s1 + $0x102c] sm:$0xf]
    %v1070 = vld [vmem:[%s1 + $0x1030] sm:$0xf]
    %v1071 = vld [vmem:[%s1 + $0x1034] sm:$0xf]
    %v1072 = vld [vmem:[%s1 + $0x1038] sm:$0xf]
    %v1073 = vld [vmem:[%s1 + $0x103c] sm:$0xf]
    %v1074 = vld [vmem:[%s1 + $0x1040] sm:$0xf]
    %v1075 = vld [vmem:[%s1 + $0x1044] sm:$0xf]
    %v1076 = vld [vmem:[%s1 + $0x1048] sm:$0xf]
    %v1077 = vld [vmem:[%s1 + $0x104c] sm:$0xf]
    %v1078 = vld [vmem:[%s1 + $0x1050] sm:$0xf]
    %v1079 = vld [vmem:[%s1 + $0x1054] sm:$0xf]
    %v1080 = vld [vmem:[%s1 + $0x1058] sm:$0xf]
    %v1081 = vld [vmem:[%s1 + $0x105c] sm:$0xf]
    %v1082 = vld [vmem:[%s1 + $0x1060] sm:$0xf]
    %v1083 = vld [vmem:[%s1 + $0x1064] sm:$0xf]
    %v1084 = vld [vmem:[%s1 + $0x1068] sm:$0xf]
    %v1085 = vld [vmem:[%s1 + $0x106c] sm:$0xf]
    %v1086 = vld [vmem:[%s1 + $0x1070] sm:$0xf]
    %v1087 = vld [vmem:[%s1 + $0x1074] sm:$0xf]
    %v1088 = vld [vmem:[%s1 + $0x1078] sm:$0xf]
    %v1089 = vld [vmem:[%s1 + $0x107c] sm:$0xf]
    %v1090 = vld [vmem:[%s1 + $0x1080] sm:$0xf]
    %v1091 = vld [vmem:[%s1 + $0x1084] sm:$0xf]
    %v1092 = vld [vmem:[%s1 + $0x1088] sm:$0xf]
    %v1093 = vld [vmem:[%s1 + $0x108c] sm:$0xf]
    %v1094 = vld [vmem:[%s1 + $0x1090] sm:$0xf]
    %v1095 = vld [vmem:[%s1 + $0x1094] sm:$0xf]
    %v1096 = vld [vmem:[%s1 + $0x1098] sm:$0xf]
    %v1097 = vld [vmem:[%s1 + $0x109c] sm:$0xf]
    %v1098 = vld [vmem:[%s1 + $0x10a0] sm:$0xf]
    %v1099 = vld [vmem:[%s1 + $0x10a4] sm:$0xf]
    %v1100 = vld [vmem:[%s1 + $0x10a8] sm:$0xf]
    %v1101 = vld [vmem:[%s1 + $0x10ac] sm:$0xf]
    %v1102 = vld [vmem:[%s1 + $0x10b0] sm:$0xf]
    %v1103 = vld [vmem:[%s1 + $0x10b4] sm:$0xf]
    %v1104 = vld [vmem:[%s1 + $0x10b8] sm:$0xf]
    %v1105 = vld [vmem:[%s1 + $0x10bc] sm:$0xf]
    %v1106 = vld [vmem:[%s1 + $0x10c0] sm:$0xf]
    %v1107 = vld [vmem:[%s1 + $0x10c4] sm:$0xf]
    %v1108 = vld [vmem:[%s1 + $0x10c8] sm:$0xf]
    %v1109 = vld [vmem:[%s1 + $0x10cc] sm:$0xf]
    %v1110 = vld [vmem:[%s1 + $0x10d0] sm:$0xf]
    %v1111 = vld [vmem:[%s1 + $0x10d4] sm:$0xf]
    %v1112 = vld [vmem:[%s1 + $0x10d8] sm:$0xf]
    %v1113 = vld [vmem:[%s1 + $0x10dc] sm:$0xf]
    %v1114 = vld [vmem:[%s1 + $0x10e0] sm:$0xf]
    %v1115 = vld [vmem:[%s1 + $0x10e4] sm:$0xf]
    %v1116 = vld [vmem:[%s1 + $0x10e8] sm:$0xf]
    %v1117 = vld [vmem:[%s1 + $0x10ec] sm:$0xf]
    %v1118 = vld [vmem:[%s1 + $0x10f0] sm:$0xf]
    %v1119 = vld [vmem:[%s1 + $0x10f4] sm:$0xf]
    %v1120 = vld [vmem:[%s1 + $0x10f8] sm:$0xf]
    %v1121 = vld [vmem:[%s1 + $0x10fc] sm:$0xf]
    %v1122 = vld [vmem:[%s1 + $0x1100] sm:$0xf]
    %v1123 = vld [vmem:[%s1 + $0x1104] sm:$0xf]
    %v1124 = vld [vmem:[%s1 + $0x1108] sm:$0xf]
    %v1125 = vld [vmem:[%s1 + $0x110c] sm:$0xf]
    %v1126 = vld [vmem:[%s1 + $0x1110] sm:$0xf]
    %v1127 = vld [vmem:[%s1 + $0x1114] sm:$0xf]
    %v1128 = vld [vmem:[%s1 + $0x1118] sm:$0xf]
    %v1129 = vld [vmem:[%s1 + $0x111c] sm:$0xf]
    %v1130 = vld [vmem:[%s1 + $0x1120] sm:$0xf]
    %v1131 = vld [vmem:[%s1 + $0x1124] sm:$0xf]
    %v1132 = vld [vmem:[%s1 + $0x1128] sm:$0xf]
    %v1133 = vld [vmem:[%s1 + $0x112c] sm:$0xf]
    %v1134 = vld [vmem:[%s1 + $0x1130] sm:$0xf]
    %v1135 = vld [vmem:[%s1 + $0x1134] sm:$0xf]
    %v1136 = vld [vmem:[%s1 + $0x1138] sm:$0xf]
    %v1137 = vld [vmem:[%s1 + $0x113c] sm:$0xf]
    %v1138 = vld [vmem:[%s1 + $0x1140] sm:$0xf]
    %v1139 = vld [vmem:[%s1 + $0x1144] sm:$0xf]
    %v1140 = vld [vmem:[%s1 + $0x1148] sm:$0xf]
    %v1141 = vld [vmem:[%s1 + $0x114c] sm:$0xf]
    %v1142 = vld [vmem:[%s1 + $0x1150] sm:$0xf]
    %v1143 = vld [vmem:[%s1 + $0x1154] sm:$0xf]
    %v1144 = vld [vmem:[%s1 + $0x1158] sm:$0xf]
    %v1145 = vld [vmem:[%s1 + $0x115c] sm:$0xf]
    %v1146 = vld [vmem:[%s1 + $0x1160] sm:$0xf]
    %v1147 = vld [vmem:[%s1 + $0x1164] sm:$0xf]
    %v1148 = vld [vmem:[%s1 + $0x1168] sm:$0xf]
    %v1149 = vld [vmem:[%s1 + $0x116c] sm:$0xf]
    %v1150 = vld [vmem:[%s1 + $0x1170] sm:$0xf]
    %v1151 = vld [vmem:[%s1 + $0x1174] sm:$0xf]
    %v1152 = vld [vmem:[%s1 + $0x1178] sm:$0xf]
    %v1153 = vld [vmem:[%s1 + $0x117c] sm:$0xf]
    %v1154 = vld [vmem:[%s1 + $0x1180] sm:$0xf]
    %v1155 = vld [vmem:[%s1 + $0x1184] sm:$0xf]
    %v1156 = vld [vmem:[%s1 + $0x1188] sm:$0xf]
    %v1157 = vld [vmem:[%s1 + $0x118c] sm:$0xf]
    %v1158 = vld [vmem:[%s1 + $0x1190] sm:$0xf]
    %v1159 = vld [vmem:[%s1 + $0x1194] sm:$0xf]
    %v1160 = vld [vmem:[%s1 + $0x1198] sm:$0xf]
    %v1161 = vld [vmem:[%s1 + $0x119c] sm:$0xf]
    %v1162 = vld [vmem:[%s1 + $0x11a0] sm:$0xf]
    %v1163 = vld [vmem:[%s1 + $0x11a4] sm:$0xf]
    %v1164 = vld [vmem:[%s1 + $0x11a8] sm:$0xf]
    %v1165 = vld [vmem:[%s1 + $0x11ac] sm:$0xf]
    %v1166 = vld [vmem:[%s1 + $0x11b0] sm:$0xf]
    %v1167 = vld [vmem:[%s1 + $0x11b4] sm:$0xf]
    %v1168 = vld [vmem:[%s1 + $0x11b8] sm:$0xf]
    %v1169 = vld [vmem:[%s1 + $0x11bc] sm:$0xf]
    %v1170 = vld [vmem:[%s1 + $0x11c0] sm:$0xf]
    %v1171 = vld [vmem:[%s1 + $0x11c4] sm:$0xf]
    %v1172 = vld [vmem:[%s1 + $0x11c8] sm:$0xf]
    %v1173 = vld [vmem:[%s1 + $0x11cc] sm:$0xf]
    %v1174 = vld [vmem:[%s1 + $0x11d0] sm:$0xf]
    %v1175 = vld [vmem:[%s1 + $0x11d4] sm:$0xf]
    %v1176 = vld [vmem:[%s1 + $0x11d8] sm:$0xf]
    %v1177 = vld [vmem:[%s1 + $0x11dc] sm:$0xf]
    %v1178 = vld [vmem:[%s1 + $0x11e0] sm:$0xf]
    %v1179 = vld [vmem:[%s1 + $0x11e4] sm:$0xf]
    %v1180 = vld [vmem:[%s1 + $0x11e8] sm:$0xf]
    %v1181 = vld [vmem:[%s1 + $0x11ec] sm:$0xf]
    %v1182 = vld [vmem:[%s1 + $0x11f0] sm:$0xf]
    %v1183 = vld [vmem:[%s1 + $0x11f4] sm:$0xf]
    %v1184 = vld [vmem:[%s1 + $0x11f8] sm:$0xf]
    %v1185 = vld [vmem:[%s1 + $0x11fc] sm:$0xf]
    %v1186 = vld [vmem:[%s2] sm:$0x1]
    %v1188 = vlaneseq
    %v1189 = vshrl.u32 %v1188, 7
    %v1190 = vsub.s32 0, %v1189
    %v1191 = vrot.slane %v1186, %v1190
    %v1202 = vcombine.high %v25, %v25
    %v1204 = vunpack.c.l.s4 1966171168
    %v1205 = vunpack.c.0.s8 %v1204
    %v1206 = vlaneseq
    %v1207 = vshrl.u32 %v1206, 7
    %v1208 = vsub.s32 %v1205, %v1207
    %v1209 = vrot.slane %v25, %v1208
    %v1211 = vunpack.c.l.s4 1966171168
    %v1212 = vunpack.c.0.s8 %v1211
    %v1213 = vlaneseq
    %v1214 = vshrl.u32 %v1213, 7
    %v1215 = vsub.s32 %v1212, %v1214
    %v1216 = vrot.slane %v1202, %v1215
    %v1217 = vcombine.high %v1209, %v1209
    %v1218 = vcombine.high %v1216, %v1216
    %v1220 = vunpack.c.l.s4 1966171168
    %v1221 = vunpack.c.0.s8 %v1220
    %v1222 = vlaneseq
    %v1223 = vshrl.u32 %v1222, 7
    %v1224 = vsub.s32 %v1221, %v1223
    %v1225 = vrot.slane %v1209, %v1224
    %v1227 = vunpack.c.l.s4 1966171168
    %v1228 = vunpack.c.0.s8 %v1227
    %v1229 = vlaneseq
    %v1230 = vshrl.u32 %v1229, 7
    %v1231 = vsub.s32 %v1228, %v1230
    %v1232 = vrot.slane %v1216, %v1231
    %v1234 = vunpack.c.l.s4 1966171168
    %v1235 = vunpack.c.0.s8 %v1234
    %v1236 = vlaneseq
    %v1237 = vshrl.u32 %v1236, 7
    %v1238 = vsub.s32 %v1235, %v1237
    %v1239 = vrot.slane %v1217, %v1238
    %v1241 = vunpack.c.l.s4 1966171168
    %v1242 = vunpack.c.0.s8 %v1241
    %v1243 = vlaneseq
    %v1244 = vshrl.u32 %v1243, 7
    %v1245 = vsub.s32 %v1242, %v1244
    %v1246 = vrot.slane %v1218, %v1245
    %v1247 = vcombine.high %v1225, %v1225
    %v1248 = vcombine.high %v1232, %v1232
    %v1249 = vcombine.high %v1239, %v1239
    %v1250 = vcombine.high %v1246, %v1246
    %v1251 = vcombine.high %v26, %v26
    %v1253 = vunpack.c.l.s4 1966171168
    %v1254 = vunpack.c.0.s8 %v1253
    %v1255 = vlaneseq
    %v1256 = vshrl.u32 %v1255, 7
    %v1257 = vsub.s32 %v1254, %v1256
    %v1258 = vrot.slane %v26, %v1257
    %v1260 = vunpack.c.l.s4 1966171168
    %v1261 = vunpack.c.0.s8 %v1260
    %v1262 = vlaneseq
    %v1263 = vshrl.u32 %v1262, 7
    %v1264 = vsub.s32 %v1261, %v1263
    %v1265 = vrot.slane %v1251, %v1264
    %v1266 = vcombine.high %v1258, %v1258
    %v1267 = vcombine.high %v1265, %v1265
    %v1269 = vunpack.c.l.s4 1966171168
    %v1270 = vunpack.c.0.s8 %v1269
    %v1271 = vlaneseq
    %v1272 = vshrl.u32 %v1271, 7
    %v1273 = vsub.s32 %v1270, %v1272
    %v1274 = vrot.slane %v1258, %v1273
    %v1276 = vunpack.c.l.s4 1966171168
    %v1277 = vunpack.c.0.s8 %v1276
    %v1278 = vlaneseq
    %v1279 = vshrl.u32 %v1278, 7
    %v1280 = vsub.s32 %v1277, %v1279
    %v1281 = vrot.slane %v1265, %v1280
    %v1283 = vunpack.c.l.s4 1966171168
    %v1284 = vunpack.c.0.s8 %v1283
    %v1285 = vlaneseq
    %v1286 = vshrl.u32 %v1285, 7
    %v1287 = vsub.s32 %v1284, %v1286
    %v1288 = vrot.slane %v1266, %v1287
    %v1290 = vunpack.c.l.s4 1966171168
    %v1291 = vunpack.c.0.s8 %v1290
    %v1292 = vlaneseq
    %v1293 = vshrl.u32 %v1292, 7
    %v1294 = vsub.s32 %v1291, %v1293
    %v1295 = vrot.slane %v1267, %v1294
    %v1296 = vcombine.high %v1274, %v1274
    %v1297 = vcombine.high %v1281, %v1281
    %v1298 = vcombine.high %v1288, %v1288
    %v1299 = vcombine.high %v1295, %v1295
    %v1300 = vcombine.high %v27, %v27
    %v1302 = vunpack.c.l.s4 1966171168
    %v1303 = vunpack.c.0.s8 %v1302
    %v1304 = vlaneseq
    %v1305 = vshrl.u32 %v1304, 7
    %v1306 = vsub.s32 %v1303, %v1305
    %v1307 = vrot.slane %v27, %v1306
    %v1309 = vunpack.c.l.s4 1966171168
    %v1310 = vunpack.c.0.s8 %v1309
    %v1311 = vlaneseq
    %v1312 = vshrl.u32 %v1311, 7
    %v1313 = vsub.s32 %v1310, %v1312
    %v1314 = vrot.slane %v1300, %v1313
    %v1315 = vcombine.high %v1307, %v1307
    %v1316 = vcombine.high %v1314, %v1314
    %v1318 = vunpack.c.l.s4 1966171168
    %v1319 = vunpack.c.0.s8 %v1318
    %v1320 = vlaneseq
    %v1321 = vshrl.u32 %v1320, 7
    %v1322 = vsub.s32 %v1319, %v1321
    %v1323 = vrot.slane %v1307, %v1322
    %v1325 = vunpack.c.l.s4 1966171168
    %v1326 = vunpack.c.0.s8 %v1325
    %v1327 = vlaneseq
    %v1328 = vshrl.u32 %v1327, 7
    %v1329 = vsub.s32 %v1326, %v1328
    %v1330 = vrot.slane %v1314, %v1329
    %v1332 = vunpack.c.l.s4 1966171168
    %v1333 = vunpack.c.0.s8 %v1332
    %v1334 = vlaneseq
    %v1335 = vshrl.u32 %v1334, 7
    %v1336 = vsub.s32 %v1333, %v1335
    %v1337 = vrot.slane %v1315, %v1336
    %v1339 = vunpack.c.l.s4 1966171168
    %v1340 = vunpack.c.0.s8 %v1339
    %v1341 = vlaneseq
    %v1342 = vshrl.u32 %v1341, 7
    %v1343 = vsub.s32 %v1340, %v1342
    %v1344 = vrot.slane %v1316, %v1343
    %v1345 = vcombine.high %v1323, %v1323
    %v1346 = vcombine.high %v1330, %v1330
    %v1347 = vcombine.high %v1337, %v1337
    %v1348 = vcombine.high %v1344, %v1344
    %v1349 = vcombine.high %v28, %v28
    %v1351 = vunpack.c.l.s4 1966171168
    %v1352 = vunpack.c.0.s8 %v1351
    %v1353 = vlaneseq
    %v1354 = vshrl.u32 %v1353, 7
    %v1355 = vsub.s32 %v1352, %v1354
    %v1356 = vrot.slane %v28, %v1355
    %v1358 = vunpack.c.l.s4 1966171168
    %v1359 = vunpack.c.0.s8 %v1358
    %v1360 = vlaneseq
    %v1361 = vshrl.u32 %v1360, 7
    %v1362 = vsub.s32 %v1359, %v1361
    %v1363 = vrot.slane %v1349, %v1362
    %v1364 = vcombine.high %v1356, %v1356
    %v1365 = vcombine.high %v1363, %v1363
    %v1367 = vunpack.c.l.s4 1966171168
    %v1368 = vunpack.c.0.s8 %v1367
    %v1369 = vlaneseq
    %v1370 = vshrl.u32 %v1369, 7
    %v1371 = vsub.s32 %v1368, %v1370
    %v1372 = vrot.slane %v1356, %v1371
    %v1374 = vunpack.c.l.s4 1966171168
    %v1375 = vunpack.c.0.s8 %v1374
    %v1376 = vlaneseq
    %v1377 = vshrl.u32 %v1376, 7
    %v1378 = vsub.s32 %v1375, %v1377
    %v1379 = vrot.slane %v1363, %v1378
    %v1381 = vunpack.c.l.s4 1966171168
    %v1382 = vunpack.c.0.s8 %v1381
    %v1383 = vlaneseq
    %v1384 = vshrl.u32 %v1383, 7
    %v1385 = vsub.s32 %v1382, %v1384
    %v1386 = vrot.slane %v1364, %v1385
    %v1388 = vunpack.c.l.s4 1966171168
    %v1389 = vunpack.c.0.s8 %v1388
    %v1390 = vlaneseq
    %v1391 = vshrl.u32 %v1390, 7
    %v1392 = vsub.s32 %v1389, %v1391
    %v1393 = vrot.slane %v1365, %v1392
    %v1394 = vcombine.high %v1372, %v1372
    %v1395 = vcombine.high %v1379, %v1379
    %v1396 = vcombine.high %v1386, %v1386
    %v1397 = vcombine.high %v1393, %v1393
    %v1398 = vcombine.high %v29, %v29
    %v1400 = vunpack.c.l.s4 1966171168
    %v1401 = vunpack.c.0.s8 %v1400
    %v1402 = vlaneseq
    %v1403 = vshrl.u32 %v1402, 7
    %v1404 = vsub.s32 %v1401, %v1403
    %v1405 = vrot.slane %v29, %v1404
    %v1407 = vunpack.c.l.s4 1966171168
    %v1408 = vunpack.c.0.s8 %v1407
    %v1409 = vlaneseq
    %v1410 = vshrl.u32 %v1409, 7
    %v1411 = vsub.s32 %v1408, %v1410
    %v1412 = vrot.slane %v1398, %v1411
    %v1413 = vcombine.high %v1405, %v1405
    %v1414 = vcombine.high %v1412, %v1412
    %v1416 = vunpack.c.l.s4 1966171168
    %v1417 = vunpack.c.0.s8 %v1416
    %v1418 = vlaneseq
    %v1419 = vshrl.u32 %v1418, 7
    %v1420 = vsub.s32 %v1417, %v1419
    %v1421 = vrot.slane %v1405, %v1420
    %v1423 = vunpack.c.l.s4 1966171168
    %v1424 = vunpack.c.0.s8 %v1423
    %v1425 = vlaneseq
    %v1426 = vshrl.u32 %v1425, 7
    %v1427 = vsub.s32 %v1424, %v1426
    %v1428 = vrot.slane %v1412, %v1427
    %v1430 = vunpack.c.l.s4 1966171168
    %v1431 = vunpack.c.0.s8 %v1430
    %v1432 = vlaneseq
    %v1433 = vshrl.u32 %v1432, 7
    %v1434 = vsub.s32 %v1431, %v1433
    %v1435 = vrot.slane %v1413, %v1434
    %v1437 = vunpack.c.l.s4 1966171168
    %v1438 = vunpack.c.0.s8 %v1437
    %v1439 = vlaneseq
    %v1440 = vshrl.u32 %v1439, 7
    %v1441 = vsub.s32 %v1438, %v1440
    %v1442 = vrot.slane %v1414, %v1441
    %v1443 = vcombine.high %v1421, %v1421
    %v1444 = vcombine.high %v1428, %v1428
    %v1445 = vcombine.high %v1435, %v1435
    %v1446 = vcombine.high %v1442, %v1442
    %v1447 = vcombine.high %v30, %v30
    %v1449 = vunpack.c.l.s4 1966171168
    %v1450 = vunpack.c.0.s8 %v1449
    %v1451 = vlaneseq
    %v1452 = vshrl.u32 %v1451, 7
    %v1453 = vsub.s32 %v1450, %v1452
    %v1454 = vrot.slane %v30, %v1453
    %v1456 = vunpack.c.l.s4 1966171168
    %v1457 = vunpack.c.0.s8 %v1456
    %v1458 = vlaneseq
    %v1459 = vshrl.u32 %v1458, 7
    %v1460 = vsub.s32 %v1457, %v1459
    %v1461 = vrot.slane %v1447, %v1460
    %v1462 = vcombine.high %v1454, %v1454
    %v1463 = vcombine.high %v1461, %v1461
    %v1465 = vunpack.c.l.s4 1966171168
    %v1466 = vunpack.c.0.s8 %v1465
    %v1467 = vlaneseq
    %v1468 = vshrl.u32 %v1467, 7
    %v1469 = vsub.s32 %v1466, %v1468
    %v1470 = vrot.slane %v1454, %v1469
    %v1472 = vunpack.c.l.s4 1966171168
    %v1473 = vunpack.c.0.s8 %v1472
    %v1474 = vlaneseq
    %v1475 = vshrl.u32 %v1474, 7
    %v1476 = vsub.s32 %v1473, %v1475
    %v1477 = vrot.slane %v1461, %v1476
    %v1479 = vunpack.c.l.s4 1966171168
    %v1480 = vunpack.c.0.s8 %v1479
    %v1481 = vlaneseq
    %v1482 = vshrl.u32 %v1481, 7
    %v1483 = vsub.s32 %v1480, %v1482
    %v1484 = vrot.slane %v1462, %v1483
    %v1486 = vunpack.c.l.s4 1966171168
    %v1487 = vunpack.c.0.s8 %v1486
    %v1488 = vlaneseq
    %v1489 = vshrl.u32 %v1488, 7
    %v1490 = vsub.s32 %v1487, %v1489
    %v1491 = vrot.slane %v1463, %v1490
    %v1492 = vcombine.high %v1470, %v1470
    %v1493 = vcombine.high %v1477, %v1477
    %v1494 = vcombine.high %v1484, %v1484
    %v1495 = vcombine.high %v1491, %v1491
    %v1496 = vcombine.high %v31, %v31
    %v1498 = vunpack.c.l.s4 1966171168
    %v1499 = vunpack.c.0.s8 %v1498
    %v1500 = vlaneseq
    %v1501 = vshrl.u32 %v1500, 7
    %v1502 = vsub.s32 %v1499, %v1501
    %v1503 = vrot.slane %v31, %v1502
    %v1505 = vunpack.c.l.s4 1966171168
    %v1506 = vunpack.c.0.s8 %v1505
    %v1507 = vlaneseq
    %v1508 = vshrl.u32 %v1507, 7
    %v1509 = vsub.s32 %v1506, %v1508
    %v1510 = vrot.slane %v1496, %v1509
    %v1511 = vcombine.high %v1503, %v1503
    %v1512 = vcombine.high %v1510, %v1510
    %v1514 = vunpack.c.l.s4 1966171168
    %v1515 = vunpack.c.0.s8 %v1514
    %v1516 = vlaneseq
    %v1517 = vshrl.u32 %v1516, 7
    %v1518 = vsub.s32 %v1515, %v1517
    %v1519 = vrot.slane %v1503, %v1518
    %v1521 = vunpack.c.l.s4 1966171168
    %v1522 = vunpack.c.0.s8 %v1521
    %v1523 = vlaneseq
    %v1524 = vshrl.u32 %v1523, 7
    %v1525 = vsub.s32 %v1522, %v1524
    %v1526 = vrot.slane %v1510, %v1525
    %v1528 = vunpack.c.l.s4 1966171168
    %v1529 = vunpack.c.0.s8 %v1528
    %v1530 = vlaneseq
    %v1531 = vshrl.u32 %v1530, 7
    %v1532 = vsub.s32 %v1529, %v1531
    %v1533 = vrot.slane %v1511, %v1532
    %v1535 = vunpack.c.l.s4 1966171168
    %v1536 = vunpack.c.0.s8 %v1535
    %v1537 = vlaneseq
    %v1538 = vshrl.u32 %v1537, 7
    %v1539 = vsub.s32 %v1536, %v1538
    %v1540 = vrot.slane %v1512, %v1539
    %v1541 = vcombine.high %v1519, %v1519
    %v1542 = vcombine.high %v1526, %v1526
    %v1543 = vcombine.high %v1533, %v1533
    %v1544 = vcombine.high %v1540, %v1540
    %v1545 = vcombine.high %v32, %v32
    %v1547 = vunpack.c.l.s4 1966171168
    %v1548 = vunpack.c.0.s8 %v1547
    %v1549 = vlaneseq
    %v1550 = vshrl.u32 %v1549, 7
    %v1551 = vsub.s32 %v1548, %v1550
    %v1552 = vrot.slane %v32, %v1551
    %v1554 = vunpack.c.l.s4 1966171168
    %v1555 = vunpack.c.0.s8 %v1554
    %v1556 = vlaneseq
    %v1557 = vshrl.u32 %v1556, 7
    %v1558 = vsub.s32 %v1555, %v1557
    %v1559 = vrot.slane %v1545, %v1558
    %v1560 = vcombine.high %v1552, %v1552
    %v1561 = vcombine.high %v1559, %v1559
    %v1563 = vunpack.c.l.s4 1966171168
    %v1564 = vunpack.c.0.s8 %v1563
    %v1565 = vlaneseq
    %v1566 = vshrl.u32 %v1565, 7
    %v1567 = vsub.s32 %v1564, %v1566
    %v1568 = vrot.slane %v1552, %v1567
    %v1570 = vunpack.c.l.s4 1966171168
    %v1571 = vunpack.c.0.s8 %v1570
    %v1572 = vlaneseq
    %v1573 = vshrl.u32 %v1572, 7
    %v1574 = vsub.s32 %v1571, %v1573
    %v1575 = vrot.slane %v1559, %v1574
    %v1577 = vunpack.c.l.s4 1966171168
    %v1578 = vunpack.c.0.s8 %v1577
    %v1579 = vlaneseq
    %v1580 = vshrl.u32 %v1579, 7
    %v1581 = vsub.s32 %v1578, %v1580
    %v1582 = vrot.slane %v1560, %v1581
    %v1584 = vunpack.c.l.s4 1966171168
    %v1585 = vunpack.c.0.s8 %v1584
    %v1586 = vlaneseq
    %v1587 = vshrl.u32 %v1586, 7
    %v1588 = vsub.s32 %v1585, %v1587
    %v1589 = vrot.slane %v1561, %v1588
    %v1590 = vcombine.high %v1568, %v1568
    %v1591 = vcombine.high %v1575, %v1575
    %v1592 = vcombine.high %v1582, %v1582
    %v1593 = vcombine.high %v1589, %v1589
    %v1594 = vcombine.high %v33, %v33
    %v1596 = vunpack.c.l.s4 1966171168
    %v1597 = vunpack.c.0.s8 %v1596
    %v1598 = vlaneseq
    %v1599 = vshrl.u32 %v1598, 7
    %v1600 = vsub.s32 %v1597, %v1599
    %v1601 = vrot.slane %v33, %v1600
    %v1603 = vunpack.c.l.s4 1966171168
    %v1604 = vunpack.c.0.s8 %v1603
    %v1605 = vlaneseq
    %v1606 = vshrl.u32 %v1605, 7
    %v1607 = vsub.s32 %v1604, %v1606
    %v1608 = vrot.slane %v1594, %v1607
    %v1609 = vcombine.high %v1601, %v1601
    %v1610 = vcombine.high %v1608, %v1608
    %v1612 = vunpack.c.l.s4 1966171168
    %v1613 = vunpack.c.0.s8 %v1612
    %v1614 = vlaneseq
    %v1615 = vshrl.u32 %v1614, 7
    %v1616 = vsub.s32 %v1613, %v1615
    %v1617 = vrot.slane %v1601, %v1616
    %v1619 = vunpack.c.l.s4 1966171168
    %v1620 = vunpack.c.0.s8 %v1619
    %v1621 = vlaneseq
    %v1622 = vshrl.u32 %v1621, 7
    %v1623 = vsub.s32 %v1620, %v1622
    %v1624 = vrot.slane %v1608, %v1623
    %v1626 = vunpack.c.l.s4 1966171168
    %v1627 = vunpack.c.0.s8 %v1626
    %v1628 = vlaneseq
    %v1629 = vshrl.u32 %v1628, 7
    %v1630 = vsub.s32 %v1627, %v1629
    %v1631 = vrot.slane %v1609, %v1630
    %v1633 = vunpack.c.l.s4 1966171168
    %v1634 = vunpack.c.0.s8 %v1633
    %v1635 = vlaneseq
    %v1636 = vshrl.u32 %v1635, 7
    %v1637 = vsub.s32 %v1634, %v1636
    %v1638 = vrot.slane %v1610, %v1637
    %v1639 = vcombine.high %v1617, %v1617
    %v1640 = vcombine.high %v1624, %v1624
    %v1641 = vcombine.high %v1631, %v1631
    %v1642 = vcombine.high %v1638, %v1638
    %v2867 = vunpack.c.l.b16 %v34
    %v2868 = vunpack.c.l.b16 %v35
    %v2869 = vunpack.c.l.b16 %v36
    %v2870 = vunpack.c.l.b16 %v37
    %v2871 = vunpack.c.l.b16 %v38
    %v2872 = vunpack.c.l.b16 %v39
    %v2873 = vunpack.c.l.b16 %v40
    %v2874 = vunpack.c.l.b16 %v41
    %v2875 = vunpack.c.l.b16 %v42
    %v2876 = vunpack.c.l.b16 %v43
    %v2877 = vunpack.c.l.b16 %v44
    %v2878 = vunpack.c.l.b16 %v45
    %v2879 = vunpack.c.l.b16 %v46
    %v2880 = vunpack.c.l.b16 %v47
    %v2881 = vunpack.c.l.b16 %v48
    %v2882 = vunpack.c.l.b16 %v49
    %v2883 = vunpack.c.l.b16 %v50
    %v2884 = vunpack.c.l.b16 %v51
    %v2885 = vunpack.c.l.b16 %v52
    %v2886 = vunpack.c.l.b16 %v53
    %v2887 = vunpack.c.l.b16 %v54
    %v2888 = vunpack.c.l.b16 %v55
    %v2889 = vunpack.c.l.b16 %v56
    %v2890 = vunpack.c.l.b16 %v57
    %v2891 = vunpack.c.l.b16 %v58
    %v2892 = vunpack.c.l.b16 %v59
    %v2893 = vunpack.c.l.b16 %v60
    %v2894 = vunpack.c.l.b16 %v61
    %v2895 = vunpack.c.l.b16 %v62
    %v2896 = vunpack.c.l.b16 %v63
    %v2897 = vunpack.c.l.b16 %v64
    %v2898 = vunpack.c.l.b16 %v65
    %v2899 = vunpack.c.l.b16 %v66
    %v2900 = vunpack.c.l.b16 %v67
    %v2901 = vunpack.c.l.b16 %v68
    %v2902 = vunpack.c.l.b16 %v69
    %v2903 = vunpack.c.l.b16 %v70
    %v2904 = vunpack.c.l.b16 %v71
    %v2905 = vunpack.c.l.b16 %v72
    %v2906 = vunpack.c.l.b16 %v73
    %v2907 = vunpack.c.l.b16 %v74
    %v2908 = vunpack.c.l.b16 %v75
    %v2909 = vunpack.c.l.b16 %v76
    %v2910 = vunpack.c.l.b16 %v77
    %v2911 = vunpack.c.l.b16 %v78
    %v2912 = vunpack.c.l.b16 %v79
    %v2913 = vunpack.c.l.b16 %v80
    %v2914 = vunpack.c.l.b16 %v81
    %v2915 = vunpack.c.l.b16 %v82
    %v2916 = vunpack.c.l.b16 %v83
    %v2917 = vunpack.c.l.b16 %v84
    %v2918 = vunpack.c.l.b16 %v85
    %v2919 = vunpack.c.l.b16 %v86
    %v2920 = vunpack.c.l.b16 %v87
    %v2921 = vunpack.c.l.b16 %v88
    %v2922 = vunpack.c.l.b16 %v89
    %v2923 = vunpack.c.l.b16 %v90
    %v2924 = vunpack.c.l.b16 %v91
    %v2925 = vunpack.c.l.b16 %v92
    %v2926 = vunpack.c.l.b16 %v93
    %v2927 = vunpack.c.l.b16 %v94
    %v2928 = vunpack.c.l.b16 %v95
    %v2929 = vunpack.c.l.b16 %v96
    %v2930 = vunpack.c.l.b16 %v97
    %v2931 = vunpack.c.l.b16 %v98
    %v2932 = vunpack.c.l.b16 %v99
    %v2933 = vunpack.c.l.b16 %v100
    %v2934 = vunpack.c.l.b16 %v101
    %v2935 = vunpack.c.l.b16 %v102
    %v2936 = vunpack.c.l.b16 %v103
    %v2937 = vunpack.c.l.b16 %v104
    %v2938 = vunpack.c.l.b16 %v105
    %v2939 = vunpack.c.l.b16 %v106
    %v2940 = vunpack.c.l.b16 %v107
    %v2941 = vunpack.c.l.b16 %v108
    %v2942 = vunpack.c.l.b16 %v109
    %v2943 = vunpack.c.l.b16 %v110
    %v2944 = vunpack.c.l.b16 %v111
    %v2945 = vunpack.c.l.b16 %v112
    %v2946 = vunpack.c.l.b16 %v113
    %v2947 = vunpack.c.l.b16 %v114
    %v2948 = vunpack.c.l.b16 %v115
    %v2949 = vunpack.c.l.b16 %v116
    %v2950 = vunpack.c.l.b16 %v117
    %v2951 = vunpack.c.l.b16 %v118
    %v2952 = vunpack.c.l.b16 %v119
    %v2953 = vunpack.c.l.b16 %v120
    %v2954 = vunpack.c.l.b16 %v121
    %v2955 = vunpack.c.l.b16 %v122
    %v2956 = vunpack.c.l.b16 %v123
    %v2957 = vunpack.c.l.b16 %v124
    %v2958 = vunpack.c.l.b16 %v125
    %v2959 = vunpack.c.l.b16 %v126
    %v2960 = vunpack.c.l.b16 %v127
    %v2961 = vunpack.c.l.b16 %v128
    %v2962 = vunpack.c.l.b16 %v129
    %v2963 = vunpack.c.l.b16 %v130
    %v2964 = vunpack.c.l.b16 %v131
    %v2965 = vunpack.c.l.b16 %v132
    %v2966 = vunpack.c.l.b16 %v133
    %v2967 = vunpack.c.l.b16 %v134
    %v2968 = vunpack.c.l.b16 %v135
    %v2969 = vunpack.c.l.b16 %v136
    %v2970 = vunpack.c.l.b16 %v137
    %v2971 = vunpack.c.l.b16 %v138
    %v2972 = vunpack.c.l.b16 %v139
    %v2973 = vunpack.c.l.b16 %v140
    %v2974 = vunpack.c.l.b16 %v141
    %v2975 = vunpack.c.l.b16 %v142
    %v2976 = vunpack.c.l.b16 %v143
    %v2977 = vunpack.c.l.b16 %v144
    %v2978 = vunpack.c.l.b16 %v145
    %v2979 = vunpack.c.l.b16 %v146
    %v2980 = vunpack.c.l.b16 %v147
    %v2981 = vunpack.c.l.b16 %v148
    %v2982 = vunpack.c.l.b16 %v149
    %v2983 = vunpack.c.l.b16 %v150
    %v2984 = vunpack.c.l.b16 %v151
    %v2985 = vunpack.c.l.b16 %v152
    %v2986 = vunpack.c.l.b16 %v153
    %v2987 = vunpack.c.l.b16 %v154
    %v2988 = vunpack.c.l.b16 %v155
    %v2989 = vunpack.c.l.b16 %v156
    %v2990 = vunpack.c.l.b16 %v157
    %v2991 = vunpack.c.l.b16 %v158
    %v2992 = vunpack.c.l.b16 %v159
    %v2993 = vunpack.c.l.b16 %v160
    %v2994 = vunpack.c.l.b16 %v161
    %v2995 = vunpack.c.l.b16 %v162
    %v2996 = vunpack.c.l.b16 %v163
    %v2997 = vunpack.c.l.b16 %v164
    %v2998 = vunpack.c.l.b16 %v165
    %v2999 = vunpack.c.l.b16 %v166
    %v3000 = vunpack.c.l.b16 %v167
    %v3001 = vunpack.c.l.b16 %v168
    %v3002 = vunpack.c.l.b16 %v169
    %v3003 = vunpack.c.l.b16 %v170
    %v3004 = vunpack.c.l.b16 %v171
    %v3005 = vunpack.c.l.b16 %v172
    %v3006 = vunpack.c.l.b16 %v173
    %v3007 = vunpack.c.l.b16 %v174
    %v3008 = vunpack.c.l.b16 %v175
    %v3009 = vunpack.c.l.b16 %v176
    %v3010 = vunpack.c.l.b16 %v177
    %v3011 = vunpack.c.l.b16 %v178
    %v3012 = vunpack.c.l.b16 %v179
    %v3013 = vunpack.c.l.b16 %v180
    %v3014 = vunpack.c.l.b16 %v181
    %v3015 = vunpack.c.l.b16 %v182
    %v3016 = vunpack.c.l.b16 %v183
    %v3017 = vunpack.c.l.b16 %v184
    %v3018 = vunpack.c.l.b16 %v185
    %v3019 = vunpack.c.l.b16 %v186
    %v3020 = vunpack.c.l.b16 %v187
    %v3021 = vunpack.c.l.b16 %v188
    %v3022 = vunpack.c.l.b16 %v189
    %v3023 = vunpack.c.l.b16 %v190
    %v3024 = vunpack.c.l.b16 %v191
    %v3025 = vunpack.c.l.b16 %v192
    %v3026 = vunpack.c.l.b16 %v193
    %v3027 = vunpack.c.l.b16 %v194
    %v3028 = vunpack.c.l.b16 %v195
    %v3029 = vunpack.c.l.b16 %v196
    %v3030 = vunpack.c.l.b16 %v197
    %v3031 = vunpack.c.l.b16 %v198
    %v3032 = vunpack.c.l.b16 %v199
    %v3033 = vunpack.c.l.b16 %v200
    %v3034 = vunpack.c.l.b16 %v201
    %v3035 = vunpack.c.l.b16 %v202
    %v3036 = vunpack.c.l.b16 %v203
    %v3037 = vunpack.c.l.b16 %v204
    %v3038 = vunpack.c.l.b16 %v205
    %v3039 = vunpack.c.l.b16 %v206
    %v3040 = vunpack.c.l.b16 %v207
    %v3041 = vunpack.c.l.b16 %v208
    %v3042 = vunpack.c.l.b16 %v209
    %v3043 = vunpack.c.l.b16 %v210
    %v3044 = vunpack.c.l.b16 %v211
    %v3045 = vunpack.c.l.b16 %v212
    %v3046 = vunpack.c.l.b16 %v213
    %v3047 = vunpack.c.l.b16 %v214
    %v3048 = vunpack.c.l.b16 %v215
    %v3049 = vunpack.c.l.b16 %v216
    %v3050 = vunpack.c.l.b16 %v217
    %v3051 = vunpack.c.l.b16 %v218
    %v3052 = vunpack.c.l.b16 %v219
    %v3053 = vunpack.c.l.b16 %v220
    %v3054 = vunpack.c.l.b16 %v221
    %v3055 = vunpack.c.l.b16 %v222
    %v3056 = vunpack.c.l.b16 %v223
    %v3057 = vunpack.c.l.b16 %v224
    %v3058 = vunpack.c.l.b16 %v225
    %v3059 = vunpack.c.l.b16 %v226
    %v3060 = vunpack.c.l.b16 %v227
    %v3061 = vunpack.c.l.b16 %v228
    %v3062 = vunpack.c.l.b16 %v229
    %v3063 = vunpack.c.l.b16 %v230
    %v3064 = vunpack.c.l.b16 %v231
    %v3065 = vunpack.c.l.b16 %v232
    %v3066 = vunpack.c.l.b16 %v233
    %v3067 = vunpack.c.l.b16 %v234
    %v3068 = vunpack.c.l.b16 %v235
    %v3069 = vunpack.c.l.b16 %v236
    %v3070 = vunpack.c.l.b16 %v237
    %v3071 = vunpack.c.l.b16 %v238
    %v3072 = vunpack.c.l.b16 %v239
    %v3073 = vunpack.c.l.b16 %v240
    %v3074 = vunpack.c.l.b16 %v241
    %v3075 = vunpack.c.l.b16 %v242
    %v3076 = vunpack.c.l.b16 %v243
    %v3077 = vunpack.c.l.b16 %v244
    %v3078 = vunpack.c.l.b16 %v245
    %v3079 = vunpack.c.l.b16 %v246
    %v3080 = vunpack.c.l.b16 %v247
    %v3081 = vunpack.c.l.b16 %v248
    %v3082 = vunpack.c.l.b16 %v249
    %v3083 = vunpack.c.l.b16 %v250
    %v3084 = vunpack.c.l.b16 %v251
    %v3085 = vunpack.c.l.b16 %v252
    %v3086 = vunpack.c.l.b16 %v253
    %v3087 = vunpack.c.l.b16 %v254
    %v3088 = vunpack.c.l.b16 %v255
    %v3089 = vunpack.c.l.b16 %v256
    %v3090 = vunpack.c.l.b16 %v257
    %v3091 = vunpack.c.l.b16 %v258
    %v3092 = vunpack.c.l.b16 %v259
    %v3093 = vunpack.c.l.b16 %v260
    %v3094 = vunpack.c.l.b16 %v261
    %v3095 = vunpack.c.l.b16 %v262
    %v3096 = vunpack.c.l.b16 %v263
    %v3097 = vunpack.c.l.b16 %v264
    %v3098 = vunpack.c.l.b16 %v265
    %v3099 = vunpack.c.l.b16 %v266
    %v3100 = vunpack.c.l.b16 %v267
    %v3101 = vunpack.c.l.b16 %v268
    %v3102 = vunpack.c.l.b16 %v269
    %v3103 = vunpack.c.l.b16 %v270
    %v3104 = vunpack.c.l.b16 %v271
    %v3105 = vunpack.c.l.b16 %v272
    %v3106 = vunpack.c.l.b16 %v273
    %v3107 = vunpack.c.l.b16 %v274
    %v3108 = vunpack.c.l.b16 %v275
    %v3109 = vunpack.c.l.b16 %v276
    %v3110 = vunpack.c.l.b16 %v277
    %v3111 = vunpack.c.l.b16 %v278
    %v3112 = vunpack.c.l.b16 %v279
    %v3113 = vunpack.c.l.b16 %v280
    %v3114 = vunpack.c.l.b16 %v281
    %v3115 = vunpack.c.l.b16 %v282
    %v3116 = vunpack.c.l.b16 %v283
    %v3117 = vunpack.c.l.b16 %v284
    %v3118 = vunpack.c.l.b16 %v285
    %v3119 = vunpack.c.l.b16 %v286
    %v3120 = vunpack.c.l.b16 %v287
    %v3121 = vunpack.c.l.b16 %v288
    %v3122 = vunpack.c.l.b16 %v289
    %v3123 = vunpack.c.l.b16 %v290
    %v3124 = vunpack.c.l.b16 %v291
    %v3125 = vunpack.c.l.b16 %v292
    %v3126 = vunpack.c.l.b16 %v293
    %v3127 = vunpack.c.l.b16 %v294
    %v3128 = vunpack.c.l.b16 %v295
    %v3129 = vunpack.c.l.b16 %v296
    %v3130 = vunpack.c.l.b16 %v297
    %v3131 = vunpack.c.l.b16 %v298
    %v3132 = vunpack.c.l.b16 %v299
    %v3133 = vunpack.c.l.b16 %v300
    %v3134 = vunpack.c.l.b16 %v301
    %v3135 = vunpack.c.l.b16 %v302
    %v3136 = vunpack.c.l.b16 %v303
    %v3137 = vunpack.c.l.b16 %v304
    %v3138 = vunpack.c.l.b16 %v305
    %v3139 = vunpack.c.l.b16 %v306
    %v3140 = vunpack.c.l.b16 %v307
    %v3141 = vunpack.c.l.b16 %v308
    %v3142 = vunpack.c.l.b16 %v309
    %v3143 = vunpack.c.l.b16 %v310
    %v3144 = vunpack.c.l.b16 %v311
    %v3145 = vunpack.c.l.b16 %v312
    %v3146 = vunpack.c.l.b16 %v313
    %v3147 = vunpack.c.l.b16 %v314
    %v3148 = vunpack.c.l.b16 %v315
    %v3149 = vunpack.c.l.b16 %v316
    %v3150 = vunpack.c.l.b16 %v317
    %v3151 = vunpack.c.l.b16 %v318
    %v3152 = vunpack.c.l.b16 %v319
    %v3153 = vunpack.c.l.b16 %v320
    %v3154 = vunpack.c.l.b16 %v321
    %v3155 = vunpack.c.l.b16 %v322
    %v3156 = vunpack.c.l.b16 %v323
    %v3157 = vunpack.c.l.b16 %v324
    %v3158 = vunpack.c.l.b16 %v325
    %v3159 = vunpack.c.l.b16 %v326
    %v3160 = vunpack.c.l.b16 %v327
    %v3161 = vunpack.c.l.b16 %v328
    %v3162 = vunpack.c.l.b16 %v329
    %v3163 = vunpack.c.l.b16 %v330
    %v3164 = vunpack.c.l.b16 %v331
    %v3165 = vunpack.c.l.b16 %v332
    %v3166 = vunpack.c.l.b16 %v333
    %v3167 = vunpack.c.l.b16 %v334
    %v3168 = vunpack.c.l.b16 %v335
    %v3169 = vunpack.c.l.b16 %v336
    %v3170 = vunpack.c.l.b16 %v337
    %v3171 = vunpack.c.l.b16 %v338
    %v3172 = vunpack.c.l.b16 %v339
    %v3173 = vunpack.c.l.b16 %v340
    %v3174 = vunpack.c.l.b16 %v341
    %v3175 = vunpack.c.l.b16 %v342
    %v3176 = vunpack.c.l.b16 %v343
    %v3177 = vunpack.c.l.b16 %v344
    %v3178 = vunpack.c.l.b16 %v345
    %v3179 = vunpack.c.l.b16 %v346
    %v3180 = vunpack.c.l.b16 %v347
    %v3181 = vunpack.c.l.b16 %v348
    %v3182 = vunpack.c.l.b16 %v349
    %v3183 = vunpack.c.l.b16 %v350
    %v3184 = vunpack.c.l.b16 %v351
    %v3185 = vunpack.c.l.b16 %v352
    %v3186 = vunpack.c.l.b16 %v353
    %v3187 = vunpack.c.l.b16 %v354
    %v3188 = vunpack.c.l.b16 %v355
    %v3189 = vunpack.c.l.b16 %v356
    %v3190 = vunpack.c.l.b16 %v357
    %v3191 = vunpack.c.l.b16 %v358
    %v3192 = vunpack.c.l.b16 %v359
    %v3193 = vunpack.c.l.b16 %v360
    %v3194 = vunpack.c.l.b16 %v361
    %v3195 = vunpack.c.l.b16 %v362
    %v3196 = vunpack.c.l.b16 %v363
    %v3197 = vunpack.c.l.b16 %v364
    %v3198 = vunpack.c.l.b16 %v365
    %v3199 = vunpack.c.l.b16 %v366
    %v3200 = vunpack.c.l.b16 %v367
    %v3201 = vunpack.c.l.b16 %v368
    %v3202 = vunpack.c.l.b16 %v369
    %v3203 = vunpack.c.l.b16 %v370
    %v3204 = vunpack.c.l.b16 %v371
    %v3205 = vunpack.c.l.b16 %v372
    %v3206 = vunpack.c.l.b16 %v373
    %v3207 = vunpack.c.l.b16 %v374
    %v3208 = vunpack.c.l.b16 %v375
    %v3209 = vunpack.c.l.b16 %v376
    %v3210 = vunpack.c.l.b16 %v377
    %v3211 = vunpack.c.l.b16 %v378
    %v3212 = vunpack.c.l.b16 %v379
    %v3213 = vunpack.c.l.b16 %v380
    %v3214 = vunpack.c.l.b16 %v381
    %v3215 = vunpack.c.l.b16 %v382
    %v3216 = vunpack.c.l.b16 %v383
    %v3217 = vunpack.c.l.b16 %v384
    %v3218 = vunpack.c.l.b16 %v385
    %v3219 = vunpack.c.l.b16 %v386
    %v3220 = vunpack.c.l.b16 %v387
    %v3221 = vunpack.c.l.b16 %v388
    %v3222 = vunpack.c.l.b16 %v389
    %v3223 = vunpack.c.l.b16 %v390
    %v3224 = vunpack.c.l.b16 %v391
    %v3225 = vunpack.c.l.b16 %v392
    %v3226 = vunpack.c.l.b16 %v393
    %v3227 = vunpack.c.l.b16 %v394
    %v3228 = vunpack.c.l.b16 %v395
    %v3229 = vunpack.c.l.b16 %v396
    %v3230 = vunpack.c.l.b16 %v397
    %v3231 = vunpack.c.l.b16 %v398
    %v3232 = vunpack.c.l.b16 %v399
    %v3233 = vunpack.c.l.b16 %v400
    %v3234 = vunpack.c.l.b16 %v401
    %v3235 = vunpack.c.l.b16 %v402
    %v3236 = vunpack.c.l.b16 %v403
    %v3237 = vunpack.c.l.b16 %v404
    %v3238 = vunpack.c.l.b16 %v405
    %v3239 = vunpack.c.l.b16 %v406
    %v3240 = vunpack.c.l.b16 %v407
    %v3241 = vunpack.c.l.b16 %v408
    %v3242 = vunpack.c.l.b16 %v409
    %v3243 = vunpack.c.l.b16 %v410
    %v3244 = vunpack.c.l.b16 %v411
    %v3245 = vunpack.c.l.b16 %v412
    %v3246 = vunpack.c.l.b16 %v413
    %v3247 = vunpack.c.l.b16 %v414
    %v3248 = vunpack.c.l.b16 %v415
    %v3249 = vunpack.c.l.b16 %v416
    %v3250 = vunpack.c.l.b16 %v417
    %v3251 = vunpack.c.l.b16 %v418
    %v3252 = vunpack.c.l.b16 %v419
    %v3253 = vunpack.c.l.b16 %v420
    %v3254 = vunpack.c.l.b16 %v421
    %v3255 = vunpack.c.l.b16 %v422
    %v3256 = vunpack.c.l.b16 %v423
    %v3257 = vunpack.c.l.b16 %v424
    %v3258 = vunpack.c.l.b16 %v425
    %v3259 = vunpack.c.l.b16 %v426
    %v3260 = vunpack.c.l.b16 %v427
    %v3261 = vunpack.c.l.b16 %v428
    %v3262 = vunpack.c.l.b16 %v429
    %v3263 = vunpack.c.l.b16 %v430
    %v3264 = vunpack.c.l.b16 %v431
    %v3265 = vunpack.c.l.b16 %v432
    %v3266 = vunpack.c.l.b16 %v433
    %v3267 = vunpack.c.l.b16 %v434
    %v3268 = vunpack.c.l.b16 %v435
    %v3269 = vunpack.c.l.b16 %v436
    %v3270 = vunpack.c.l.b16 %v437
    %v3271 = vunpack.c.l.b16 %v438
    %v3272 = vunpack.c.l.b16 %v439
    %v3273 = vunpack.c.l.b16 %v440
    %v3274 = vunpack.c.l.b16 %v441
    %v3275 = vunpack.c.l.b16 %v442
    %v3276 = vunpack.c.l.b16 %v443
    %v3277 = vunpack.c.l.b16 %v444
    %v3278 = vunpack.c.l.b16 %v445
    %v3279 = vunpack.c.l.b16 %v446
    %v3280 = vunpack.c.l.b16 %v447
    %v3281 = vunpack.c.l.b16 %v448
    %v3282 = vunpack.c.l.b16 %v449
    %v3283 = vunpack.c.l.b16 %v450
    %v3284 = vunpack.c.l.b16 %v451
    %v3285 = vunpack.c.l.b16 %v452
    %v3286 = vunpack.c.l.b16 %v453
    %v3287 = vunpack.c.l.b16 %v454
    %v3288 = vunpack.c.l.b16 %v455
    %v3289 = vunpack.c.l.b16 %v456
    %v3290 = vunpack.c.l.b16 %v457
    %v3291 = vunpack.c.l.b16 %v458
    %v3292 = vunpack.c.l.b16 %v459
    %v3293 = vunpack.c.l.b16 %v460
    %v3294 = vunpack.c.l.b16 %v461
    %v3295 = vunpack.c.l.b16 %v462
    %v3296 = vunpack.c.l.b16 %v463
    %v3297 = vunpack.c.l.b16 %v464
    %v3298 = vunpack.c.l.b16 %v465
    %v3299 = vunpack.c.l.b16 %v466
    %v3300 = vunpack.c.l.b16 %v467
    %v3301 = vunpack.c.l.b16 %v468
    %v3302 = vunpack.c.l.b16 %v469
    %v3303 = vunpack.c.l.b16 %v470
    %v3304 = vunpack.c.l.b16 %v471
    %v3305 = vunpack.c.l.b16 %v472
    %v3306 = vunpack.c.l.b16 %v473
    %v3307 = vunpack.c.l.b16 %v474
    %v3308 = vunpack.c.l.b16 %v475
    %v3309 = vunpack.c.l.b16 %v476
    %v3310 = vunpack.c.l.b16 %v477
    %v3311 = vunpack.c.l.b16 %v478
    %v3312 = vunpack.c.l.b16 %v479
    %v3313 = vunpack.c.l.b16 %v480
    %v3314 = vunpack.c.l.b16 %v481
    %v3315 = vunpack.c.l.b16 %v482
    %v3316 = vunpack.c.l.b16 %v483
    %v3317 = vunpack.c.l.b16 %v484
    %v3318 = vunpack.c.l.b16 %v485
    %v3319 = vunpack.c.l.b16 %v486
    %v3320 = vunpack.c.l.b16 %v487
    %v3321 = vunpack.c.l.b16 %v488
    %v3322 = vunpack.c.l.b16 %v489
    %v3323 = vunpack.c.l.b16 %v490
    %v3324 = vunpack.c.l.b16 %v491
    %v3325 = vunpack.c.l.b16 %v492
    %v3326 = vunpack.c.l.b16 %v493
    %v3327 = vunpack.c.l.b16 %v494
    %v3328 = vunpack.c.l.b16 %v495
    %v3329 = vunpack.c.l.b16 %v496
    %v3330 = vunpack.c.l.b16 %v497
    %v3331 = vunpack.c.l.b16 %v498
    %v3332 = vunpack.c.l.b16 %v499
    %v3333 = vunpack.c.l.b16 %v500
    %v3334 = vunpack.c.l.b16 %v501
    %v3335 = vunpack.c.l.b16 %v502
    %v3336 = vunpack.c.l.b16 %v503
    %v3337 = vunpack.c.l.b16 %v504
    %v3338 = vunpack.c.l.b16 %v505
    %v3339 = vunpack.c.l.b16 %v506
    %v3340 = vunpack.c.l.b16 %v507
    %v3341 = vunpack.c.l.b16 %v508
    %v3342 = vunpack.c.l.b16 %v509
    %v3343 = vunpack.c.l.b16 %v510
    %v3344 = vunpack.c.l.b16 %v511
    %v3345 = vunpack.c.l.b16 %v512
    %v3346 = vunpack.c.l.b16 %v513
    %v3347 = vunpack.c.l.b16 %v514
    %v3348 = vunpack.c.l.b16 %v515
    %v3349 = vunpack.c.l.b16 %v516
    %v3350 = vunpack.c.l.b16 %v517
    %v3351 = vunpack.c.l.b16 %v518
    %v3352 = vunpack.c.l.b16 %v519
    %v3353 = vunpack.c.l.b16 %v520
    %v3354 = vunpack.c.l.b16 %v521
    %v3355 = vunpack.c.l.b16 %v522
    %v3356 = vunpack.c.l.b16 %v523
    %v3357 = vunpack.c.l.b16 %v524
    %v3358 = vunpack.c.l.b16 %v525
    %v3359 = vunpack.c.l.b16 %v526
    %v3360 = vunpack.c.l.b16 %v527
    %v3361 = vunpack.c.l.b16 %v528
    %v3362 = vunpack.c.l.b16 %v529
    %v3363 = vunpack.c.l.b16 %v530
    %v3364 = vunpack.c.l.b16 %v531
    %v3365 = vunpack.c.l.b16 %v532
    %v3366 = vunpack.c.l.b16 %v533
    %v3367 = vunpack.c.l.b16 %v534
    %v3368 = vunpack.c.l.b16 %v535
    %v3369 = vunpack.c.l.b16 %v536
    %v3370 = vunpack.c.l.b16 %v537
    %v3371 = vunpack.c.l.b16 %v538
    %v3372 = vunpack.c.l.b16 %v539
    %v3373 = vunpack.c.l.b16 %v540
    %v3374 = vunpack.c.l.b16 %v541
    %v3375 = vunpack.c.l.b16 %v542
    %v3376 = vunpack.c.l.b16 %v543
    %v3377 = vunpack.c.l.b16 %v544
    %v3378 = vunpack.c.l.b16 %v545
    %v3379 = vunpack.c.l.b16 %v546
    %v3380 = vunpack.c.l.b16 %v547
    %v3381 = vunpack.c.l.b16 %v548
    %v3382 = vunpack.c.l.b16 %v549
    %v3383 = vunpack.c.l.b16 %v550
    %v3384 = vunpack.c.l.b16 %v551
    %v3385 = vunpack.c.l.b16 %v552
    %v3386 = vunpack.c.l.b16 %v553
    %v3387 = vunpack.c.l.b16 %v554
    %v3388 = vunpack.c.l.b16 %v555
    %v3389 = vunpack.c.l.b16 %v556
    %v3390 = vunpack.c.l.b16 %v557
    %v3391 = vunpack.c.l.b16 %v558
    %v3392 = vunpack.c.l.b16 %v559
    %v3393 = vunpack.c.l.b16 %v560
    %v3394 = vunpack.c.l.b16 %v561
    %v3395 = vunpack.c.l.b16 %v562
    %v3396 = vunpack.c.l.b16 %v563
    %v3397 = vunpack.c.l.b16 %v564
    %v3398 = vunpack.c.l.b16 %v565
    %v3399 = vunpack.c.l.b16 %v566
    %v3400 = vunpack.c.l.b16 %v567
    %v3401 = vunpack.c.l.b16 %v568
    %v3402 = vunpack.c.l.b16 %v569
    %v3403 = vunpack.c.l.b16 %v570
    %v3404 = vunpack.c.l.b16 %v571
    %v3405 = vunpack.c.l.b16 %v572
    %v3406 = vunpack.c.l.b16 %v573
    %v3407 = vunpack.c.l.b16 %v574
    %v3408 = vunpack.c.l.b16 %v575
    %v3409 = vunpack.c.l.b16 %v576
    %v3410 = vunpack.c.l.b16 %v577
    %v3411 = vunpack.c.l.b16 %v578
    %v3412 = vunpack.c.l.b16 %v579
    %v3413 = vunpack.c.l.b16 %v580
    %v3414 = vunpack.c.l.b16 %v581
    %v3415 = vunpack.c.l.b16 %v582
    %v3416 = vunpack.c.l.b16 %v583
    %v3417 = vunpack.c.l.b16 %v584
    %v3418 = vunpack.c.l.b16 %v585
    %v3419 = vunpack.c.l.b16 %v586
    %v3420 = vunpack.c.l.b16 %v587
    %v3421 = vunpack.c.l.b16 %v588
    %v3422 = vunpack.c.l.b16 %v589
    %v3423 = vunpack.c.l.b16 %v590
    %v3424 = vunpack.c.l.b16 %v591
    %v3425 = vunpack.c.l.b16 %v592
    %v3426 = vunpack.c.l.b16 %v593
    %v3427 = vunpack.c.l.b16 %v594
    %v3428 = vunpack.c.l.b16 %v595
    %v3429 = vunpack.c.l.b16 %v596
    %v3430 = vunpack.c.l.b16 %v597
    %v3431 = vunpack.c.l.b16 %v598
    %v3432 = vunpack.c.l.b16 %v599
    %v3433 = vunpack.c.l.b16 %v600
    %v3434 = vunpack.c.l.b16 %v601
    %v3435 = vunpack.c.l.b16 %v602
    %v3436 = vunpack.c.l.b16 %v603
    %v3437 = vunpack.c.l.b16 %v604
    %v3438 = vunpack.c.l.b16 %v605
    %v3439 = vunpack.c.l.b16 %v606
    %v3440 = vunpack.c.l.b16 %v607
    %v3441 = vunpack.c.l.b16 %v608
    %v3442 = vunpack.c.l.b16 %v609
    %v3443 = vunpack.c.l.b16 %v610
    %v3444 = vunpack.c.l.b16 %v611
    %v3445 = vunpack.c.l.b16 %v612
    %v3446 = vunpack.c.l.b16 %v613
    %v3447 = vunpack.c.l.b16 %v614
    %v3448 = vunpack.c.l.b16 %v615
    %v3449 = vunpack.c.l.b16 %v616
    %v3450 = vunpack.c.l.b16 %v617
    %v3451 = vunpack.c.l.b16 %v618
    %v3452 = vunpack.c.l.b16 %v619
    %v3453 = vunpack.c.l.b16 %v620
    %v3454 = vunpack.c.l.b16 %v621
    %v3455 = vunpack.c.l.b16 %v622
    %v3456 = vunpack.c.l.b16 %v623
    %v3457 = vunpack.c.l.b16 %v624
    %v3458 = vunpack.c.l.b16 %v625
    %v3459 = vunpack.c.l.b16 %v626
    %v3460 = vunpack.c.l.b16 %v627
    %v3461 = vunpack.c.l.b16 %v628
    %v3462 = vunpack.c.l.b16 %v629
    %v3463 = vunpack.c.l.b16 %v630
    %v3464 = vunpack.c.l.b16 %v631
    %v3465 = vunpack.c.l.b16 %v632
    %v3466 = vunpack.c.l.b16 %v633
    %v3467 = vunpack.c.l.b16 %v634
    %v3468 = vunpack.c.l.b16 %v635
    %v3469 = vunpack.c.l.b16 %v636
    %v3470 = vunpack.c.l.b16 %v637
    %v3471 = vunpack.c.l.b16 %v638
    %v3472 = vunpack.c.l.b16 %v639
    %v3473 = vunpack.c.l.b16 %v640
    %v3474 = vunpack.c.l.b16 %v641
    %v3475 = vunpack.c.l.b16 %v642
    %v3476 = vunpack.c.l.b16 %v643
    %v3477 = vunpack.c.l.b16 %v644
    %v3478 = vunpack.c.l.b16 %v645
    %v3479 = vunpack.c.l.b16 %v646
    %v3480 = vunpack.c.l.b16 %v647
    %v3481 = vunpack.c.l.b16 %v648
    %v3482 = vunpack.c.l.b16 %v649
    %v3483 = vunpack.c.l.b16 %v650
    %v3484 = vunpack.c.l.b16 %v651
    %v3485 = vunpack.c.l.b16 %v652
    %v3486 = vunpack.c.l.b16 %v653
    %v3487 = vunpack.c.l.b16 %v654
    %v3488 = vunpack.c.l.b16 %v655
    %v3489 = vunpack.c.l.b16 %v656
    %v3490 = vunpack.c.l.b16 %v657
    %v3491 = vunpack.c.l.b16 %v658
    %v3492 = vunpack.c.l.b16 %v659
    %v3493 = vunpack.c.l.b16 %v660
    %v3494 = vunpack.c.l.b16 %v661
    %v3495 = vunpack.c.l.b16 %v662
    %v3496 = vunpack.c.l.b16 %v663
    %v3497 = vunpack.c.l.b16 %v664
    %v3498 = vunpack.c.l.b16 %v665
    %v3499 = vunpack.c.l.b16 %v666
    %v3500 = vunpack.c.l.b16 %v667
    %v3501 = vunpack.c.l.b16 %v668
    %v3502 = vunpack.c.l.b16 %v669
    %v3503 = vunpack.c.l.b16 %v670
    %v3504 = vunpack.c.l.b16 %v671
    %v3505 = vunpack.c.l.b16 %v672
    %v3506 = vunpack.c.l.b16 %v673
    %v3507 = vunpack.c.l.b16 %v674
    %v3508 = vunpack.c.l.b16 %v675
    %v3509 = vunpack.c.l.b16 %v676
    %v3510 = vunpack.c.l.b16 %v677
    %v3511 = vunpack.c.l.b16 %v678
    %v3512 = vunpack.c.l.b16 %v679
    %v3513 = vunpack.c.l.b16 %v680
    %v3514 = vunpack.c.l.b16 %v681
    %v3515 = vunpack.c.l.b16 %v682
    %v3516 = vunpack.c.l.b16 %v683
    %v3517 = vunpack.c.l.b16 %v684
    %v3518 = vunpack.c.l.b16 %v685
    %v3519 = vunpack.c.l.b16 %v686
    %v3520 = vunpack.c.l.b16 %v687
    %v3521 = vunpack.c.l.b16 %v688
    %v3522 = vunpack.c.l.b16 %v689
    %v3523 = vunpack.c.l.b16 %v690
    %v3524 = vunpack.c.l.b16 %v691
    %v3525 = vunpack.c.l.b16 %v692
    %v3526 = vunpack.c.l.b16 %v693
    %v3527 = vunpack.c.l.b16 %v694
    %v3528 = vunpack.c.l.b16 %v695
    %v3529 = vunpack.c.l.b16 %v696
    %v3530 = vunpack.c.l.b16 %v697
    %v3531 = vunpack.c.l.b16 %v698
    %v3532 = vunpack.c.l.b16 %v699
    %v3533 = vunpack.c.l.b16 %v700
    %v3534 = vunpack.c.l.b16 %v701
    %v3535 = vunpack.c.l.b16 %v702
    %v3536 = vunpack.c.l.b16 %v703
    %v3537 = vunpack.c.l.b16 %v704
    %v3538 = vunpack.c.l.b16 %v705
    %v3539 = vunpack.c.l.b16 %v706
    %v3540 = vunpack.c.l.b16 %v707
    %v3541 = vunpack.c.l.b16 %v708
    %v3542 = vunpack.c.l.b16 %v709
    %v3543 = vunpack.c.l.b16 %v710
    %v3544 = vunpack.c.l.b16 %v711
    %v3545 = vunpack.c.l.b16 %v712
    %v3546 = vunpack.c.l.b16 %v713
    %v3547 = vunpack.c.l.b16 %v714
    %v3548 = vunpack.c.l.b16 %v715
    %v3549 = vunpack.c.l.b16 %v716
    %v3550 = vunpack.c.l.b16 %v717
    %v3551 = vunpack.c.l.b16 %v718
    %v3552 = vunpack.c.l.b16 %v719
    %v3553 = vunpack.c.l.b16 %v720
    %v3554 = vunpack.c.l.b16 %v721
    %v3555 = vunpack.c.l.b16 %v722
    %v3556 = vunpack.c.l.b16 %v723
    %v3557 = vunpack.c.l.b16 %v724
    %v3558 = vunpack.c.l.b16 %v725
    %v3559 = vunpack.c.l.b16 %v726
    %v3560 = vunpack.c.l.b16 %v727
    %v3561 = vunpack.c.l.b16 %v728
    %v3562 = vunpack.c.l.b16 %v729
    %v3563 = vunpack.c.l.b16 %v730
    %v3564 = vunpack.c.l.b16 %v731
    %v3565 = vunpack.c.l.b16 %v732
    %v3566 = vunpack.c.l.b16 %v733
    %v3567 = vunpack.c.l.b16 %v734
    %v3568 = vunpack.c.l.b16 %v735
    %v3569 = vunpack.c.l.b16 %v736
    %v3570 = vunpack.c.l.b16 %v737
    %v3571 = vunpack.c.l.b16 %v738
    %v3572 = vunpack.c.l.b16 %v739
    %v3573 = vunpack.c.l.b16 %v740
    %v3574 = vunpack.c.l.b16 %v741
    %v3575 = vunpack.c.l.b16 %v742
    %v3576 = vunpack.c.l.b16 %v743
    %v3577 = vunpack.c.l.b16 %v744
    %v3578 = vunpack.c.l.b16 %v745
    %v3579 = vunpack.c.l.b16 %v746
    %v3580 = vunpack.c.l.b16 %v747
    %v3581 = vunpack.c.l.b16 %v748
    %v3582 = vunpack.c.l.b16 %v749
    %v3583 = vunpack.c.l.b16 %v750
    %v3584 = vunpack.c.l.b16 %v751
    %v3585 = vunpack.c.l.b16 %v752
    %v3586 = vunpack.c.l.b16 %v753
    %v3587 = vunpack.c.l.b16 %v754
    %v3588 = vunpack.c.l.b16 %v755
    %v3589 = vunpack.c.l.b16 %v756
    %v3590 = vunpack.c.l.b16 %v757
    %v3591 = vunpack.c.l.b16 %v758
    %v3592 = vunpack.c.l.b16 %v759
    %v3593 = vunpack.c.l.b16 %v760
    %v3594 = vunpack.c.l.b16 %v761
    %v3595 = vunpack.c.l.b16 %v762
    %v3596 = vunpack.c.l.b16 %v763
    %v3597 = vunpack.c.l.b16 %v764
    %v3598 = vunpack.c.l.b16 %v765
    %v3599 = vunpack.c.l.b16 %v766
    %v3600 = vunpack.c.l.b16 %v767
    %v3601 = vunpack.c.l.b16 %v768
    %v3602 = vunpack.c.l.b16 %v769
    %v3603 = vunpack.c.l.b16 %v770
    %v3604 = vunpack.c.l.b16 %v771
    %v3605 = vunpack.c.l.b16 %v772
    %v3606 = vunpack.c.l.b16 %v773
    %v3607 = vunpack.c.l.b16 %v774
    %v3608 = vunpack.c.l.b16 %v775
    %v3609 = vunpack.c.l.b16 %v776
    %v3610 = vunpack.c.l.b16 %v777
    %v3611 = vunpack.c.l.b16 %v778
    %v3612 = vunpack.c.l.b16 %v779
    %v3613 = vunpack.c.l.b16 %v780
    %v3614 = vunpack.c.l.b16 %v781
    %v3615 = vunpack.c.l.b16 %v782
    %v3616 = vunpack.c.l.b16 %v783
    %v3617 = vunpack.c.l.b16 %v784
    %v3618 = vunpack.c.l.b16 %v785
    %v3619 = vunpack.c.l.b16 %v786
    %v3620 = vunpack.c.l.b16 %v787
    %v3621 = vunpack.c.l.b16 %v788
    %v3622 = vunpack.c.l.b16 %v789
    %v3623 = vunpack.c.l.b16 %v790
    %v3624 = vunpack.c.l.b16 %v791
    %v3625 = vunpack.c.l.b16 %v792
    %v3626 = vunpack.c.l.b16 %v793
    %v3627 = vunpack.c.l.b16 %v794
    %v3628 = vunpack.c.l.b16 %v795
    %v3629 = vunpack.c.l.b16 %v796
    %v3630 = vunpack.c.l.b16 %v797
    %v3631 = vunpack.c.l.b16 %v798
    %v3632 = vunpack.c.l.b16 %v799
    %v3633 = vunpack.c.l.b16 %v800
    %v3634 = vunpack.c.l.b16 %v801
    %v3635 = vunpack.c.l.b16 %v802
    %v3636 = vunpack.c.l.b16 %v803
    %v3637 = vunpack.c.l.b16 %v804
    %v3638 = vunpack.c.l.b16 %v805
    %v3639 = vunpack.c.l.b16 %v806
    %v3640 = vunpack.c.l.b16 %v807
    %v3641 = vunpack.c.l.b16 %v808
    %v3642 = vunpack.c.l.b16 %v809
    %v3643 = vunpack.c.l.b16 %v810
    %v3644 = vunpack.c.l.b16 %v811
    %v3645 = vunpack.c.l.b16 %v812
    %v3646 = vunpack.c.l.b16 %v813
    %v3647 = vunpack.c.l.b16 %v814
    %v3648 = vunpack.c.l.b16 %v815
    %v3649 = vunpack.c.l.b16 %v816
    %v3650 = vunpack.c.l.b16 %v817
    %v3651 = vunpack.c.l.b16 %v818
    %v3652 = vunpack.c.l.b16 %v819
    %v3653 = vunpack.c.l.b16 %v820
    %v3654 = vunpack.c.l.b16 %v821
    %v3655 = vunpack.c.l.b16 %v822
    %v3656 = vunpack.c.l.b16 %v823
    %v3657 = vunpack.c.l.b16 %v824
    %v3658 = vunpack.c.l.b16 %v825
    %v3659 = vunpack.c.l.b16 %v826
    %v3660 = vunpack.c.l.b16 %v827
    %v3661 = vunpack.c.l.b16 %v828
    %v3662 = vunpack.c.l.b16 %v829
    %v3663 = vunpack.c.l.b16 %v830
    %v3664 = vunpack.c.l.b16 %v831
    %v3665 = vunpack.c.l.b16 %v832
    %v3666 = vunpack.c.l.b16 %v833
    %v3667 = vunpack.c.l.b16 %v834
    %v3668 = vunpack.c.l.b16 %v835
    %v3669 = vunpack.c.l.b16 %v836
    %v3670 = vunpack.c.l.b16 %v837
    %v3671 = vunpack.c.l.b16 %v838
    %v3672 = vunpack.c.l.b16 %v839
    %v3673 = vunpack.c.l.b16 %v840
    %v3674 = vunpack.c.l.b16 %v841
    %v3675 = vunpack.c.l.b16 %v842
    %v3676 = vunpack.c.l.b16 %v843
    %v3677 = vunpack.c.l.b16 %v844
    %v3678 = vunpack.c.l.b16 %v845
    %v3679 = vunpack.c.l.b16 %v846
    %v3680 = vunpack.c.l.b16 %v847
    %v3681 = vunpack.c.l.b16 %v848
    %v3682 = vunpack.c.l.b16 %v849
    %v3683 = vunpack.c.l.b16 %v850
    %v3684 = vunpack.c.l.b16 %v851
    %v3685 = vunpack.c.l.b16 %v852
    %v3686 = vunpack.c.l.b16 %v853
    %v3687 = vunpack.c.l.b16 %v854
    %v3688 = vunpack.c.l.b16 %v855
    %v3689 = vunpack.c.l.b16 %v856
    %v3690 = vunpack.c.l.b16 %v857
    %v3691 = vunpack.c.l.b16 %v858
    %v3692 = vunpack.c.l.b16 %v859
    %v3693 = vunpack.c.l.b16 %v860
    %v3694 = vunpack.c.l.b16 %v861
    %v3695 = vunpack.c.l.b16 %v862
    %v3696 = vunpack.c.l.b16 %v863
    %v3697 = vunpack.c.l.b16 %v864
    %v3698 = vunpack.c.l.b16 %v865
    %v3699 = vunpack.c.l.b16 %v866
    %v3700 = vunpack.c.l.b16 %v867
    %v3701 = vunpack.c.l.b16 %v868
    %v3702 = vunpack.c.l.b16 %v869
    %v3703 = vunpack.c.l.b16 %v870
    %v3704 = vunpack.c.l.b16 %v871
    %v3705 = vunpack.c.l.b16 %v872
    %v3706 = vunpack.c.l.b16 %v873
    %v3707 = vunpack.c.l.b16 %v874
    %v3708 = vunpack.c.l.b16 %v875
    %v3709 = vunpack.c.l.b16 %v876
    %v3710 = vunpack.c.l.b16 %v877
    %v3711 = vunpack.c.l.b16 %v878
    %v3712 = vunpack.c.l.b16 %v879
    %v3713 = vunpack.c.l.b16 %v880
    %v3714 = vunpack.c.l.b16 %v881
    %v3715 = vunpack.c.l.b16 %v882
    %v3716 = vunpack.c.l.b16 %v883
    %v3717 = vunpack.c.l.b16 %v884
    %v3718 = vunpack.c.l.b16 %v885
    %v3719 = vunpack.c.l.b16 %v886
    %v3720 = vunpack.c.l.b16 %v887
    %v3721 = vunpack.c.l.b16 %v888
    %v3722 = vunpack.c.l.b16 %v889
    %v3723 = vunpack.c.l.b16 %v890
    %v3724 = vunpack.c.l.b16 %v891
    %v3725 = vunpack.c.l.b16 %v892
    %v3726 = vunpack.c.l.b16 %v893
    %v3727 = vunpack.c.l.b16 %v894
    %v3728 = vunpack.c.l.b16 %v895
    %v3729 = vunpack.c.l.b16 %v896
    %v3730 = vunpack.c.l.b16 %v897
    %v3731 = vunpack.c.l.b16 %v898
    %v3732 = vunpack.c.l.b16 %v899
    %v3733 = vunpack.c.l.b16 %v900
    %v3734 = vunpack.c.l.b16 %v901
    %v3735 = vunpack.c.l.b16 %v902
    %v3736 = vunpack.c.l.b16 %v903
    %v3737 = vunpack.c.l.b16 %v904
    %v3738 = vunpack.c.l.b16 %v905
    %v3739 = vunpack.c.l.b16 %v906
    %v3740 = vunpack.c.l.b16 %v907
    %v3741 = vunpack.c.l.b16 %v908
    %v3742 = vunpack.c.l.b16 %v909
    %v3743 = vunpack.c.l.b16 %v910
    %v3744 = vunpack.c.l.b16 %v911
    %v3745 = vunpack.c.l.b16 %v912
    %v3746 = vunpack.c.l.b16 %v913
    %v3747 = vunpack.c.l.b16 %v914
    %v3748 = vunpack.c.l.b16 %v915
    %v3749 = vunpack.c.l.b16 %v916
    %v3750 = vunpack.c.l.b16 %v917
    %v3751 = vunpack.c.l.b16 %v918
    %v3752 = vunpack.c.l.b16 %v919
    %v3753 = vunpack.c.l.b16 %v920
    %v3754 = vunpack.c.l.b16 %v921
    %v3755 = vunpack.c.l.b16 %v922
    %v3756 = vunpack.c.l.b16 %v923
    %v3757 = vunpack.c.l.b16 %v924
    %v3758 = vunpack.c.l.b16 %v925
    %v3759 = vunpack.c.l.b16 %v926
    %v3760 = vunpack.c.l.b16 %v927
    %v3761 = vunpack.c.l.b16 %v928
    %v3762 = vunpack.c.l.b16 %v929
    %v3763 = vunpack.c.l.b16 %v930
    %v3764 = vunpack.c.l.b16 %v931
    %v3765 = vunpack.c.l.b16 %v932
    %v3766 = vunpack.c.l.b16 %v933
    %v3767 = vunpack.c.l.b16 %v934
    %v3768 = vunpack.c.l.b16 %v935
    %v3769 = vunpack.c.l.b16 %v936
    %v3770 = vunpack.c.l.b16 %v937
    %v3771 = vunpack.c.l.b16 %v938
    %v3772 = vunpack.c.l.b16 %v939
    %v3773 = vunpack.c.l.b16 %v940
    %v3774 = vunpack.c.l.b16 %v941
    %v3775 = vunpack.c.l.b16 %v942
    %v3776 = vunpack.c.l.b16 %v943
    %v3777 = vunpack.c.l.b16 %v944
    %v3778 = vunpack.c.l.b16 %v945
    %v3779 = vunpack.c.l.b16 %v946
    %v3780 = vunpack.c.l.b16 %v947
    %v3781 = vunpack.c.l.b16 %v948
    %v3782 = vunpack.c.l.b16 %v949
    %v3783 = vunpack.c.l.b16 %v950
    %v3784 = vunpack.c.l.b16 %v951
    %v3785 = vunpack.c.l.b16 %v952
    %v3786 = vunpack.c.l.b16 %v953
    %v3787 = vunpack.c.l.b16 %v954
    %v3788 = vunpack.c.l.b16 %v955
    %v3789 = vunpack.c.l.b16 %v956
    %v3790 = vunpack.c.l.b16 %v957
    %v3791 = vunpack.c.l.b16 %v958
    %v3792 = vunpack.c.l.b16 %v959
    %v3793 = vunpack.c.l.b16 %v960
    %v3794 = vunpack.c.l.b16 %v961
    %v3795 = vunpack.c.l.b16 %v962
    %v3796 = vunpack.c.l.b16 %v963
    %v3797 = vunpack.c.l.b16 %v964
    %v3798 = vunpack.c.l.b16 %v965
    %v3799 = vunpack.c.l.b16 %v966
    %v3800 = vunpack.c.l.b16 %v967
    %v3801 = vunpack.c.l.b16 %v968
    %v3802 = vunpack.c.l.b16 %v969
    %v3803 = vunpack.c.l.b16 %v970
    %v3804 = vunpack.c.l.b16 %v971
    %v3805 = vunpack.c.l.b16 %v972
    %v3806 = vunpack.c.l.b16 %v973
    %v3807 = vunpack.c.l.b16 %v974
    %v3808 = vunpack.c.l.b16 %v975
    %v3809 = vunpack.c.l.b16 %v976
    %v3810 = vunpack.c.l.b16 %v977
    %v3811 = vunpack.c.l.b16 %v978
    %v3812 = vunpack.c.l.b16 %v979
    %v3813 = vunpack.c.l.b16 %v980
    %v3814 = vunpack.c.l.b16 %v981
    %v3815 = vunpack.c.l.b16 %v982
    %v3816 = vunpack.c.l.b16 %v983
    %v3817 = vunpack.c.l.b16 %v984
    %v3818 = vunpack.c.l.b16 %v985
    %v3819 = vunpack.c.l.b16 %v986
    %v3820 = vunpack.c.l.b16 %v987
    %v3821 = vunpack.c.l.b16 %v988
    %v3822 = vunpack.c.l.b16 %v989
    %v3823 = vunpack.c.l.b16 %v990
    %v3824 = vunpack.c.l.b16 %v991
    %v3825 = vunpack.c.l.b16 %v992
    %v3826 = vunpack.c.l.b16 %v993
    %v3827 = vunpack.c.l.b16 %v994
    %v3828 = vunpack.c.l.b16 %v995
    %v3829 = vunpack.c.l.b16 %v996
    %v3830 = vunpack.c.l.b16 %v997
    %v3831 = vunpack.c.l.b16 %v998
    %v3832 = vunpack.c.l.b16 %v999
    %v3833 = vunpack.c.l.b16 %v1000
    %v3834 = vunpack.c.l.b16 %v1001
    %v3835 = vunpack.c.l.b16 %v1002
    %v3836 = vunpack.c.l.b16 %v1003
    %v3837 = vunpack.c.l.b16 %v1004
    %v3838 = vunpack.c.l.b16 %v1005
    %v3839 = vunpack.c.l.b16 %v1006
    %v3840 = vunpack.c.l.b16 %v1007
    %v3841 = vunpack.c.l.b16 %v1008
    %v3842 = vunpack.c.l.b16 %v1009
    %v3843 = vunpack.c.l.b16 %v1010
    %v3844 = vunpack.c.l.b16 %v1011
    %v3845 = vunpack.c.l.b16 %v1012
    %v3846 = vunpack.c.l.b16 %v1013
    %v3847 = vunpack.c.l.b16 %v1014
    %v3848 = vunpack.c.l.b16 %v1015
    %v3849 = vunpack.c.l.b16 %v1016
    %v3850 = vunpack.c.l.b16 %v1017
    %v3851 = vunpack.c.l.b16 %v1018
    %v3852 = vunpack.c.l.b16 %v1019
    %v3853 = vunpack.c.l.b16 %v1020
    %v3854 = vunpack.c.l.b16 %v1021
    %v3855 = vunpack.c.l.b16 %v1022
    %v3856 = vunpack.c.l.b16 %v1023
    %v3857 = vunpack.c.l.b16 %v1024
    %v3858 = vunpack.c.l.b16 %v1025
    %v3859 = vunpack.c.l.b16 %v1026
    %v3860 = vunpack.c.l.b16 %v1027
    %v3861 = vunpack.c.l.b16 %v1028
    %v3862 = vunpack.c.l.b16 %v1029
    %v3863 = vunpack.c.l.b16 %v1030
    %v3864 = vunpack.c.l.b16 %v1031
    %v3865 = vunpack.c.l.b16 %v1032
    %v3866 = vunpack.c.l.b16 %v1033
    %v3867 = vunpack.c.l.b16 %v1034
    %v3868 = vunpack.c.l.b16 %v1035
    %v3869 = vunpack.c.l.b16 %v1036
    %v3870 = vunpack.c.l.b16 %v1037
    %v3871 = vunpack.c.l.b16 %v1038
    %v3872 = vunpack.c.l.b16 %v1039
    %v3873 = vunpack.c.l.b16 %v1040
    %v3874 = vunpack.c.l.b16 %v1041
    %v3875 = vunpack.c.l.b16 %v1042
    %v3876 = vunpack.c.l.b16 %v1043
    %v3877 = vunpack.c.l.b16 %v1044
    %v3878 = vunpack.c.l.b16 %v1045
    %v3879 = vunpack.c.l.b16 %v1046
    %v3880 = vunpack.c.l.b16 %v1047
    %v3881 = vunpack.c.l.b16 %v1048
    %v3882 = vunpack.c.l.b16 %v1049
    %v3883 = vunpack.c.l.b16 %v1050
    %v3884 = vunpack.c.l.b16 %v1051
    %v3885 = vunpack.c.l.b16 %v1052
    %v3886 = vunpack.c.l.b16 %v1053
    %v3887 = vunpack.c.l.b16 %v1054
    %v3888 = vunpack.c.l.b16 %v1055
    %v3889 = vunpack.c.l.b16 %v1056
    %v3890 = vunpack.c.l.b16 %v1057
    %v3891 = vunpack.c.l.b16 %v1058
    %v3892 = vunpack.c.l.b16 %v1059
    %v3893 = vunpack.c.l.b16 %v1060
    %v3894 = vunpack.c.l.b16 %v1061
    %v3895 = vunpack.c.l.b16 %v1062
    %v3896 = vunpack.c.l.b16 %v1063
    %v3897 = vunpack.c.l.b16 %v1064
    %v3898 = vunpack.c.l.b16 %v1065
    %v3899 = vunpack.c.l.b16 %v1066
    %v3900 = vunpack.c.l.b16 %v1067
    %v3901 = vunpack.c.l.b16 %v1068
    %v3902 = vunpack.c.l.b16 %v1069
    %v3903 = vunpack.c.l.b16 %v1070
    %v3904 = vunpack.c.l.b16 %v1071
    %v3905 = vunpack.c.l.b16 %v1072
    %v3906 = vunpack.c.l.b16 %v1073
    %v3907 = vunpack.c.l.b16 %v1074
    %v3908 = vunpack.c.l.b16 %v1075
    %v3909 = vunpack.c.l.b16 %v1076
    %v3910 = vunpack.c.l.b16 %v1077
    %v3911 = vunpack.c.l.b16 %v1078
    %v3912 = vunpack.c.l.b16 %v1079
    %v3913 = vunpack.c.l.b16 %v1080
    %v3914 = vunpack.c.l.b16 %v1081
    %v3915 = vunpack.c.l.b16 %v1082
    %v3916 = vunpack.c.l.b16 %v1083
    %v3917 = vunpack.c.l.b16 %v1084
    %v3918 = vunpack.c.l.b16 %v1085
    %v3919 = vunpack.c.l.b16 %v1086
    %v3920 = vunpack.c.l.b16 %v1087
    %v3921 = vunpack.c.l.b16 %v1088
    %v3922 = vunpack.c.l.b16 %v1089
    %v3923 = vunpack.c.l.b16 %v1090
    %v3924 = vunpack.c.l.b16 %v1091
    %v3925 = vunpack.c.l.b16 %v1092
    %v3926 = vunpack.c.l.b16 %v1093
    %v3927 = vunpack.c.l.b16 %v1094
    %v3928 = vunpack.c.l.b16 %v1095
    %v3929 = vunpack.c.l.b16 %v1096
    %v3930 = vunpack.c.l.b16 %v1097
    %v3931 = vunpack.c.l.b16 %v1098
    %v3932 = vunpack.c.l.b16 %v1099
    %v3933 = vunpack.c.l.b16 %v1100
    %v3934 = vunpack.c.l.b16 %v1101
    %v3935 = vunpack.c.l.b16 %v1102
    %v3936 = vunpack.c.l.b16 %v1103
    %v3937 = vunpack.c.l.b16 %v1104
    %v3938 = vunpack.c.l.b16 %v1105
    %v3939 = vunpack.c.l.b16 %v1106
    %v3940 = vunpack.c.l.b16 %v1107
    %v3941 = vunpack.c.l.b16 %v1108
    %v3942 = vunpack.c.l.b16 %v1109
    %v3943 = vunpack.c.l.b16 %v1110
    %v3944 = vunpack.c.l.b16 %v1111
    %v3945 = vunpack.c.l.b16 %v1112
    %v3946 = vunpack.c.l.b16 %v1113
    %v3947 = vunpack.c.l.b16 %v1114
    %v3948 = vunpack.c.l.b16 %v1115
    %v3949 = vunpack.c.l.b16 %v1116
    %v3950 = vunpack.c.l.b16 %v1117
    %v3951 = vunpack.c.l.b16 %v1118
    %v3952 = vunpack.c.l.b16 %v1119
    %v3953 = vunpack.c.l.b16 %v1120
    %v3954 = vunpack.c.l.b16 %v1121
    %v3955 = vunpack.c.l.b16 %v1122
    %v3956 = vunpack.c.l.b16 %v1123
    %v3957 = vunpack.c.l.b16 %v1124
    %v3958 = vunpack.c.l.b16 %v1125
    %v3959 = vunpack.c.l.b16 %v1126
    %v3960 = vunpack.c.l.b16 %v1127
    %v3961 = vunpack.c.l.b16 %v1128
    %v3962 = vunpack.c.l.b16 %v1129
    %v3963 = vunpack.c.l.b16 %v1130
    %v3964 = vunpack.c.l.b16 %v1131
    %v3965 = vunpack.c.l.b16 %v1132
    %v3966 = vunpack.c.l.b16 %v1133
    %v3967 = vunpack.c.l.b16 %v1134
    %v3968 = vunpack.c.l.b16 %v1135
    %v3969 = vunpack.c.l.b16 %v1136
    %v3970 = vunpack.c.l.b16 %v1137
    %v3971 = vunpack.c.l.b16 %v1138
    %v3972 = vunpack.c.l.b16 %v1139
    %v3973 = vunpack.c.l.b16 %v1140
    %v3974 = vunpack.c.l.b16 %v1141
    %v3975 = vunpack.c.l.b16 %v1142
    %v3976 = vunpack.c.l.b16 %v1143
    %v3977 = vunpack.c.l.b16 %v1144
    %v3978 = vunpack.c.l.b16 %v1145
    %v3979 = vunpack.c.l.b16 %v1146
    %v3980 = vunpack.c.l.b16 %v1147
    %v3981 = vunpack.c.l.b16 %v1148
    %v3982 = vunpack.c.l.b16 %v1149
    %v3983 = vunpack.c.l.b16 %v1150
    %v3984 = vunpack.c.l.b16 %v1151
    %v3985 = vunpack.c.l.b16 %v1152
    %v3986 = vunpack.c.l.b16 %v1153
    %v3987 = vunpack.c.l.b16 %v1154
    %v3988 = vunpack.c.l.b16 %v1155
    %v3989 = vunpack.c.l.b16 %v1156
    %v3990 = vunpack.c.l.b16 %v1157
    %v3991 = vunpack.c.l.b16 %v1158
    %v3992 = vunpack.c.l.b16 %v1159
    %v3993 = vunpack.c.l.b16 %v1160
    %v3994 = vunpack.c.l.b16 %v1161
    %v3995 = vunpack.c.l.b16 %v1162
    %v3996 = vunpack.c.l.b16 %v1163
    %v3997 = vunpack.c.l.b16 %v1164
    %v3998 = vunpack.c.l.b16 %v1165
    %v3999 = vunpack.c.l.b16 %v1166
    %v4000 = vunpack.c.l.b16 %v1167
    %v4001 = vunpack.c.l.b16 %v1168
    %v4002 = vunpack.c.l.b16 %v1169
    %v4003 = vunpack.c.l.b16 %v1170
    %v4004 = vunpack.c.l.b16 %v1171
    %v4005 = vunpack.c.l.b16 %v1172
    %v4006 = vunpack.c.l.b16 %v1173
    %v4007 = vunpack.c.l.b16 %v1174
    %v4008 = vunpack.c.l.b16 %v1175
    %v4009 = vunpack.c.l.b16 %v1176
    %v4010 = vunpack.c.l.b16 %v1177
    %v4011 = vunpack.c.l.b16 %v1178
    %v4012 = vunpack.c.l.b16 %v1179
    %v4013 = vunpack.c.l.b16 %v1180
    %v4014 = vunpack.c.l.b16 %v1181
    %v4015 = vunpack.c.l.b16 %v1182
    %v4016 = vunpack.c.l.b16 %v1183
    %v4017 = vunpack.c.l.b16 %v1184
    %v4018 = vunpack.c.l.b16 %v1185
    %v4019 = vpack.c.b16 %v2868, %v2867
    %v4020 = vpack.c.b16 %v2870, %v2869
    %v4021 = vpack.c.b16 %v2872, %v2871
    %v4022 = vpack.c.b16 %v2874, %v2873
    %v4023 = vpack.c.b16 %v2876, %v2875
    %v4024 = vpack.c.b16 %v2878, %v2877
    %v4025 = vpack.c.b16 %v2880, %v2879
    %v4026 = vpack.c.b16 %v2882, %v2881
    %v4027 = vpack.c.b16 %v2884, %v2883
    %v4028 = vpack.c.b16 %v2886, %v2885
    %v4029 = vpack.c.b16 %v2888, %v2887
    %v4030 = vpack.c.b16 %v2890, %v2889
    %v4031 = vpack.c.b16 %v2892, %v2891
    %v4032 = vpack.c.b16 %v2894, %v2893
    %v4033 = vpack.c.b16 %v2896, %v2895
    %v4034 = vpack.c.b16 %v2898, %v2897
    %v4035 = vpack.c.b16 %v2900, %v2899
    %v4036 = vpack.c.b16 %v2902, %v2901
    %v4037 = vpack.c.b16 %v2904, %v2903
    %v4038 = vpack.c.b16 %v2906, %v2905
    %v4039 = vpack.c.b16 %v2908, %v2907
    %v4040 = vpack.c.b16 %v2910, %v2909
    %v4041 = vpack.c.b16 %v2912, %v2911
    %v4042 = vpack.c.b16 %v2914, %v2913
    %v4043 = vpack.c.b16 %v2916, %v2915
    %v4044 = vpack.c.b16 %v2918, %v2917
    %v4045 = vpack.c.b16 %v2920, %v2919
    %v4046 = vpack.c.b16 %v2922, %v2921
    %v4047 = vpack.c.b16 %v2924, %v2923
    %v4048 = vpack.c.b16 %v2926, %v2925
    %v4049 = vpack.c.b16 %v2928, %v2927
    %v4050 = vpack.c.b16 %v2930, %v2929
    %v4051 = vpack.c.b16 %v2932, %v2931
    %v4052 = vpack.c.b16 %v2934, %v2933
    %v4053 = vpack.c.b16 %v2936, %v2935
    %v4054 = vpack.c.b16 %v2938, %v2937
    %v4055 = vpack.c.b16 %v2940, %v2939
    %v4056 = vpack.c.b16 %v2942, %v2941
    %v4057 = vpack.c.b16 %v2944, %v2943
    %v4058 = vpack.c.b16 %v2946, %v2945
    %v4059 = vpack.c.b16 %v2948, %v2947
    %v4060 = vpack.c.b16 %v2950, %v2949
    %v4061 = vpack.c.b16 %v2952, %v2951
    %v4062 = vpack.c.b16 %v2954, %v2953
    %v4063 = vpack.c.b16 %v2956, %v2955
    %v4064 = vpack.c.b16 %v2958, %v2957
    %v4065 = vpack.c.b16 %v2960, %v2959
    %v4066 = vpack.c.b16 %v2962, %v2961
    %v4067 = vpack.c.b16 %v2964, %v2963
    %v4068 = vpack.c.b16 %v2966, %v2965
    %v4069 = vpack.c.b16 %v2968, %v2967
    %v4070 = vpack.c.b16 %v2970, %v2969
    %v4071 = vpack.c.b16 %v2972, %v2971
    %v4072 = vpack.c.b16 %v2974, %v2973
    %v4073 = vpack.c.b16 %v2976, %v2975
    %v4074 = vpack.c.b16 %v2978, %v2977
    %v4075 = vpack.c.b16 %v2980, %v2979
    %v4076 = vpack.c.b16 %v2982, %v2981
    %v4077 = vpack.c.b16 %v2984, %v2983
    %v4078 = vpack.c.b16 %v2986, %v2985
    %v4079 = vpack.c.b16 %v2988, %v2987
    %v4080 = vpack.c.b16 %v2990, %v2989
    %v4081 = vpack.c.b16 %v2992, %v2991
    %v4082 = vpack.c.b16 %v2994, %v2993
    %v4083 = vpack.c.b16 %v2996, %v2995
    %v4084 = vpack.c.b16 %v2998, %v2997
    %v4085 = vpack.c.b16 %v3000, %v2999
    %v4086 = vpack.c.b16 %v3002, %v3001
    %v4087 = vpack.c.b16 %v3004, %v3003
    %v4088 = vpack.c.b16 %v3006, %v3005
    %v4089 = vpack.c.b16 %v3008, %v3007
    %v4090 = vpack.c.b16 %v3010, %v3009
    %v4091 = vpack.c.b16 %v3012, %v3011
    %v4092 = vpack.c.b16 %v3014, %v3013
    %v4093 = vpack.c.b16 %v3016, %v3015
    %v4094 = vpack.c.b16 %v3018, %v3017
    %v4095 = vpack.c.b16 %v3020, %v3019
    %v4096 = vpack.c.b16 %v3022, %v3021
    %v4097 = vpack.c.b16 %v3024, %v3023
    %v4098 = vpack.c.b16 %v3026, %v3025
    %v4099 = vpack.c.b16 %v3028, %v3027
    %v4100 = vpack.c.b16 %v3030, %v3029
    %v4101 = vpack.c.b16 %v3032, %v3031
    %v4102 = vpack.c.b16 %v3034, %v3033
    %v4103 = vpack.c.b16 %v3036, %v3035
    %v4104 = vpack.c.b16 %v3038, %v3037
    %v4105 = vpack.c.b16 %v3040, %v3039
    %v4106 = vpack.c.b16 %v3042, %v3041
    %v4107 = vpack.c.b16 %v3044, %v3043
    %v4108 = vpack.c.b16 %v3046, %v3045
    %v4109 = vpack.c.b16 %v3048, %v3047
    %v4110 = vpack.c.b16 %v3050, %v3049
    %v4111 = vpack.c.b16 %v3052, %v3051
    %v4112 = vpack.c.b16 %v3054, %v3053
    %v4113 = vpack.c.b16 %v3056, %v3055
    %v4114 = vpack.c.b16 %v3058, %v3057
    %v4115 = vpack.c.b16 %v3060, %v3059
    %v4116 = vpack.c.b16 %v3062, %v3061
    %v4117 = vpack.c.b16 %v3064, %v3063
    %v4118 = vpack.c.b16 %v3066, %v3065
    %v4119 = vpack.c.b16 %v3068, %v3067
    %v4120 = vpack.c.b16 %v3070, %v3069
    %v4121 = vpack.c.b16 %v3072, %v3071
    %v4122 = vpack.c.b16 %v3074, %v3073
    %v4123 = vpack.c.b16 %v3076, %v3075
    %v4124 = vpack.c.b16 %v3078, %v3077
    %v4125 = vpack.c.b16 %v3080, %v3079
    %v4126 = vpack.c.b16 %v3082, %v3081
    %v4127 = vpack.c.b16 %v3084, %v3083
    %v4128 = vpack.c.b16 %v3086, %v3085
    %v4129 = vpack.c.b16 %v3088, %v3087
    %v4130 = vpack.c.b16 %v3090, %v3089
    %v4131 = vpack.c.b16 %v3092, %v3091
    %v4132 = vpack.c.b16 %v3094, %v3093
    %v4133 = vpack.c.b16 %v3096, %v3095
    %v4134 = vpack.c.b16 %v3098, %v3097
    %v4135 = vpack.c.b16 %v3100, %v3099
    %v4136 = vpack.c.b16 %v3102, %v3101
    %v4137 = vpack.c.b16 %v3104, %v3103
    %v4138 = vpack.c.b16 %v3106, %v3105
    %v4139 = vpack.c.b16 %v3108, %v3107
    %v4140 = vpack.c.b16 %v3110, %v3109
    %v4141 = vpack.c.b16 %v3112, %v3111
    %v4142 = vpack.c.b16 %v3114, %v3113
    %v4143 = vpack.c.b16 %v3116, %v3115
    %v4144 = vpack.c.b16 %v3118, %v3117
    %v4145 = vpack.c.b16 %v3120, %v3119
    %v4146 = vpack.c.b16 %v3122, %v3121
    %v4147 = vpack.c.b16 %v3124, %v3123
    %v4148 = vpack.c.b16 %v3126, %v3125
    %v4149 = vpack.c.b16 %v3128, %v3127
    %v4150 = vpack.c.b16 %v3130, %v3129
    %v4151 = vpack.c.b16 %v3132, %v3131
    %v4152 = vpack.c.b16 %v3134, %v3133
    %v4153 = vpack.c.b16 %v3136, %v3135
    %v4154 = vpack.c.b16 %v3138, %v3137
    %v4155 = vpack.c.b16 %v3140, %v3139
    %v4156 = vpack.c.b16 %v3142, %v3141
    %v4157 = vpack.c.b16 %v3144, %v3143
    %v4158 = vpack.c.b16 %v3146, %v3145
    %v4159 = vpack.c.b16 %v3148, %v3147
    %v4160 = vpack.c.b16 %v3150, %v3149
    %v4161 = vpack.c.b16 %v3152, %v3151
    %v4162 = vpack.c.b16 %v3154, %v3153
    %v4163 = vpack.c.b16 %v3156, %v3155
    %v4164 = vpack.c.b16 %v3158, %v3157
    %v4165 = vpack.c.b16 %v3160, %v3159
    %v4166 = vpack.c.b16 %v3162, %v3161
    %v4167 = vpack.c.b16 %v3164, %v3163
    %v4168 = vpack.c.b16 %v3166, %v3165
    %v4169 = vpack.c.b16 %v3168, %v3167
    %v4170 = vpack.c.b16 %v3170, %v3169
    %v4171 = vpack.c.b16 %v3172, %v3171
    %v4172 = vpack.c.b16 %v3174, %v3173
    %v4173 = vpack.c.b16 %v3176, %v3175
    %v4174 = vpack.c.b16 %v3178, %v3177
    %v4175 = vpack.c.b16 %v3180, %v3179
    %v4176 = vpack.c.b16 %v3182, %v3181
    %v4177 = vpack.c.b16 %v3184, %v3183
    %v4178 = vpack.c.b16 %v3186, %v3185
    %v4179 = vpack.c.b16 %v3188, %v3187
    %v4180 = vpack.c.b16 %v3190, %v3189
    %v4181 = vpack.c.b16 %v3192, %v3191
    %v4182 = vpack.c.b16 %v3194, %v3193
    %v4183 = vpack.c.b16 %v3196, %v3195
    %v4184 = vpack.c.b16 %v3198, %v3197
    %v4185 = vpack.c.b16 %v3200, %v3199
    %v4186 = vpack.c.b16 %v3202, %v3201
    %v4187 = vpack.c.b16 %v3204, %v3203
    %v4188 = vpack.c.b16 %v3206, %v3205
    %v4189 = vpack.c.b16 %v3208, %v3207
    %v4190 = vpack.c.b16 %v3210, %v3209
    %v4191 = vpack.c.b16 %v3212, %v3211
    %v4192 = vpack.c.b16 %v3214, %v3213
    %v4193 = vpack.c.b16 %v3216, %v3215
    %v4194 = vpack.c.b16 %v3218, %v3217
    %v4195 = vpack.c.b16 %v3220, %v3219
    %v4196 = vpack.c.b16 %v3222, %v3221
    %v4197 = vpack.c.b16 %v3224, %v3223
    %v4198 = vpack.c.b16 %v3226, %v3225
    %v4199 = vpack.c.b16 %v3228, %v3227
    %v4200 = vpack.c.b16 %v3230, %v3229
    %v4201 = vpack.c.b16 %v3232, %v3231
    %v4202 = vpack.c.b16 %v3234, %v3233
    %v4203 = vpack.c.b16 %v3236, %v3235
    %v4204 = vpack.c.b16 %v3238, %v3237
    %v4205 = vpack.c.b16 %v3240, %v3239
    %v4206 = vpack.c.b16 %v3242, %v3241
    %v4207 = vpack.c.b16 %v3244, %v3243
    %v4208 = vpack.c.b16 %v3246, %v3245
    %v4209 = vpack.c.b16 %v3248, %v3247
    %v4210 = vpack.c.b16 %v3250, %v3249
    %v4211 = vpack.c.b16 %v3252, %v3251
    %v4212 = vpack.c.b16 %v3254, %v3253
    %v4213 = vpack.c.b16 %v3256, %v3255
    %v4214 = vpack.c.b16 %v3258, %v3257
    %v4215 = vpack.c.b16 %v3260, %v3259
    %v4216 = vpack.c.b16 %v3262, %v3261
    %v4217 = vpack.c.b16 %v3264, %v3263
    %v4218 = vpack.c.b16 %v3266, %v3265
    %v4219 = vpack.c.b16 %v3268, %v3267
    %v4220 = vpack.c.b16 %v3270, %v3269
    %v4221 = vpack.c.b16 %v3272, %v3271
    %v4222 = vpack.c.b16 %v3274, %v3273
    %v4223 = vpack.c.b16 %v3276, %v3275
    %v4224 = vpack.c.b16 %v3278, %v3277
    %v4225 = vpack.c.b16 %v3280, %v3279
    %v4226 = vpack.c.b16 %v3282, %v3281
    %v4227 = vpack.c.b16 %v3284, %v3283
    %v4228 = vpack.c.b16 %v3286, %v3285
    %v4229 = vpack.c.b16 %v3288, %v3287
    %v4230 = vpack.c.b16 %v3290, %v3289
    %v4231 = vpack.c.b16 %v3292, %v3291
    %v4232 = vpack.c.b16 %v3294, %v3293
    %v4233 = vpack.c.b16 %v3296, %v3295
    %v4234 = vpack.c.b16 %v3298, %v3297
    %v4235 = vpack.c.b16 %v3300, %v3299
    %v4236 = vpack.c.b16 %v3302, %v3301
    %v4237 = vpack.c.b16 %v3304, %v3303
    %v4238 = vpack.c.b16 %v3306, %v3305
    %v4239 = vpack.c.b16 %v3308, %v3307
    %v4240 = vpack.c.b16 %v3310, %v3309
    %v4241 = vpack.c.b16 %v3312, %v3311
    %v4242 = vpack.c.b16 %v3314, %v3313
    %v4243 = vpack.c.b16 %v3316, %v3315
    %v4244 = vpack.c.b16 %v3318, %v3317
    %v4245 = vpack.c.b16 %v3320, %v3319
    %v4246 = vpack.c.b16 %v3322, %v3321
    %v4247 = vpack.c.b16 %v3324, %v3323
    %v4248 = vpack.c.b16 %v3326, %v3325
    %v4249 = vpack.c.b16 %v3328, %v3327
    %v4250 = vpack.c.b16 %v3330, %v3329
    %v4251 = vpack.c.b16 %v3332, %v3331
    %v4252 = vpack.c.b16 %v3334, %v3333
    %v4253 = vpack.c.b16 %v3336, %v3335
    %v4254 = vpack.c.b16 %v3338, %v3337
    %v4255 = vpack.c.b16 %v3340, %v3339
    %v4256 = vpack.c.b16 %v3342, %v3341
    %v4257 = vpack.c.b16 %v3344, %v3343
    %v4258 = vpack.c.b16 %v3346, %v3345
    %v4259 = vpack.c.b16 %v3348, %v3347
    %v4260 = vpack.c.b16 %v3350, %v3349
    %v4261 = vpack.c.b16 %v3352, %v3351
    %v4262 = vpack.c.b16 %v3354, %v3353
    %v4263 = vpack.c.b16 %v3356, %v3355
    %v4264 = vpack.c.b16 %v3358, %v3357
    %v4265 = vpack.c.b16 %v3360, %v3359
    %v4266 = vpack.c.b16 %v3362, %v3361
    %v4267 = vpack.c.b16 %v3364, %v3363
    %v4268 = vpack.c.b16 %v3366, %v3365
    %v4269 = vpack.c.b16 %v3368, %v3367
    %v4270 = vpack.c.b16 %v3370, %v3369
    %v4271 = vpack.c.b16 %v3372, %v3371
    %v4272 = vpack.c.b16 %v3374, %v3373
    %v4273 = vpack.c.b16 %v3376, %v3375
    %v4274 = vpack.c.b16 %v3378, %v3377
    %v4275 = vpack.c.b16 %v3380, %v3379
    %v4276 = vpack.c.b16 %v3382, %v3381
    %v4277 = vpack.c.b16 %v3384, %v3383
    %v4278 = vpack.c.b16 %v3386, %v3385
    %v4279 = vpack.c.b16 %v3388, %v3387
    %v4280 = vpack.c.b16 %v3390, %v3389
    %v4281 = vpack.c.b16 %v3392, %v3391
    %v4282 = vpack.c.b16 %v3394, %v3393
    %v4283 = vpack.c.b16 %v3396, %v3395
    %v4284 = vpack.c.b16 %v3398, %v3397
    %v4285 = vpack.c.b16 %v3400, %v3399
    %v4286 = vpack.c.b16 %v3402, %v3401
    %v4287 = vpack.c.b16 %v3404, %v3403
    %v4288 = vpack.c.b16 %v3406, %v3405
    %v4289 = vpack.c.b16 %v3408, %v3407
    %v4290 = vpack.c.b16 %v3410, %v3409
    %v4291 = vpack.c.b16 %v3412, %v3411
    %v4292 = vpack.c.b16 %v3414, %v3413
    %v4293 = vpack.c.b16 %v3416, %v3415
    %v4294 = vpack.c.b16 %v3418, %v3417
    %v4295 = vpack.c.b16 %v3420, %v3419
    %v4296 = vpack.c.b16 %v3422, %v3421
    %v4297 = vpack.c.b16 %v3424, %v3423
    %v4298 = vpack.c.b16 %v3426, %v3425
    %v4299 = vpack.c.b16 %v3428, %v3427
    %v4300 = vpack.c.b16 %v3430, %v3429
    %v4301 = vpack.c.b16 %v3432, %v3431
    %v4302 = vpack.c.b16 %v3434, %v3433
    %v4303 = vpack.c.b16 %v3436, %v3435
    %v4304 = vpack.c.b16 %v3438, %v3437
    %v4305 = vpack.c.b16 %v3440, %v3439
    %v4306 = vpack.c.b16 %v3442, %v3441
    %v4307 = vpack.c.b16 %v3444, %v3443
    %v4308 = vpack.c.b16 %v3446, %v3445
    %v4309 = vpack.c.b16 %v3448, %v3447
    %v4310 = vpack.c.b16 %v3450, %v3449
    %v4311 = vpack.c.b16 %v3452, %v3451
    %v4312 = vpack.c.b16 %v3454, %v3453
    %v4313 = vpack.c.b16 %v3456, %v3455
    %v4314 = vpack.c.b16 %v3458, %v3457
    %v4315 = vpack.c.b16 %v3460, %v3459
    %v4316 = vpack.c.b16 %v3462, %v3461
    %v4317 = vpack.c.b16 %v3464, %v3463
    %v4318 = vpack.c.b16 %v3466, %v3465
    %v4319 = vpack.c.b16 %v3468, %v3467
    %v4320 = vpack.c.b16 %v3470, %v3469
    %v4321 = vpack.c.b16 %v3472, %v3471
    %v4322 = vpack.c.b16 %v3474, %v3473
    %v4323 = vpack.c.b16 %v3476, %v3475
    %v4324 = vpack.c.b16 %v3478, %v3477
    %v4325 = vpack.c.b16 %v3480, %v3479
    %v4326 = vpack.c.b16 %v3482, %v3481
    %v4327 = vpack.c.b16 %v3484, %v3483
    %v4328 = vpack.c.b16 %v3486, %v3485
    %v4329 = vpack.c.b16 %v3488, %v3487
    %v4330 = vpack.c.b16 %v3490, %v3489
    %v4331 = vpack.c.b16 %v3492, %v3491
    %v4332 = vpack.c.b16 %v3494, %v3493
    %v4333 = vpack.c.b16 %v3496, %v3495
    %v4334 = vpack.c.b16 %v3498, %v3497
    %v4335 = vpack.c.b16 %v3500, %v3499
    %v4336 = vpack.c.b16 %v3502, %v3501
    %v4337 = vpack.c.b16 %v3504, %v3503
    %v4338 = vpack.c.b16 %v3506, %v3505
    %v4339 = vpack.c.b16 %v3508, %v3507
    %v4340 = vpack.c.b16 %v3510, %v3509
    %v4341 = vpack.c.b16 %v3512, %v3511
    %v4342 = vpack.c.b16 %v3514, %v3513
    %v4343 = vpack.c.b16 %v3516, %v3515
    %v4344 = vpack.c.b16 %v3518, %v3517
    %v4345 = vpack.c.b16 %v3520, %v3519
    %v4346 = vpack.c.b16 %v3522, %v3521
    %v4347 = vpack.c.b16 %v3524, %v3523
    %v4348 = vpack.c.b16 %v3526, %v3525
    %v4349 = vpack.c.b16 %v3528, %v3527
    %v4350 = vpack.c.b16 %v3530, %v3529
    %v4351 = vpack.c.b16 %v3532, %v3531
    %v4352 = vpack.c.b16 %v3534, %v3533
    %v4353 = vpack.c.b16 %v3536, %v3535
    %v4354 = vpack.c.b16 %v3538, %v3537
    %v4355 = vpack.c.b16 %v3540, %v3539
    %v4356 = vpack.c.b16 %v3542, %v3541
    %v4357 = vpack.c.b16 %v3544, %v3543
    %v4358 = vpack.c.b16 %v3546, %v3545
    %v4359 = vpack.c.b16 %v3548, %v3547
    %v4360 = vpack.c.b16 %v3550, %v3549
    %v4361 = vpack.c.b16 %v3552, %v3551
    %v4362 = vpack.c.b16 %v3554, %v3553
    %v4363 = vpack.c.b16 %v3556, %v3555
    %v4364 = vpack.c.b16 %v3558, %v3557
    %v4365 = vpack.c.b16 %v3560, %v3559
    %v4366 = vpack.c.b16 %v3562, %v3561
    %v4367 = vpack.c.b16 %v3564, %v3563
    %v4368 = vpack.c.b16 %v3566, %v3565
    %v4369 = vpack.c.b16 %v3568, %v3567
    %v4370 = vpack.c.b16 %v3570, %v3569
    %v4371 = vpack.c.b16 %v3572, %v3571
    %v4372 = vpack.c.b16 %v3574, %v3573
    %v4373 = vpack.c.b16 %v3576, %v3575
    %v4374 = vpack.c.b16 %v3578, %v3577
    %v4375 = vpack.c.b16 %v3580, %v3579
    %v4376 = vpack.c.b16 %v3582, %v3581
    %v4377 = vpack.c.b16 %v3584, %v3583
    %v4378 = vpack.c.b16 %v3586, %v3585
    %v4379 = vpack.c.b16 %v3588, %v3587
    %v4380 = vpack.c.b16 %v3590, %v3589
    %v4381 = vpack.c.b16 %v3592, %v3591
    %v4382 = vpack.c.b16 %v3594, %v3593
    %v4383 = vpack.c.b16 %v3596, %v3595
    %v4384 = vpack.c.b16 %v3598, %v3597
    %v4385 = vpack.c.b16 %v3600, %v3599
    %v4386 = vpack.c.b16 %v3602, %v3601
    %v4387 = vpack.c.b16 %v3604, %v3603
    %v4388 = vpack.c.b16 %v3606, %v3605
    %v4389 = vpack.c.b16 %v3608, %v3607
    %v4390 = vpack.c.b16 %v3610, %v3609
    %v4391 = vpack.c.b16 %v3612, %v3611
    %v4392 = vpack.c.b16 %v3614, %v3613
    %v4393 = vpack.c.b16 %v3616, %v3615
    %v4394 = vpack.c.b16 %v3618, %v3617
    %v4395 = vpack.c.b16 %v3620, %v3619
    %v4396 = vpack.c.b16 %v3622, %v3621
    %v4397 = vpack.c.b16 %v3624, %v3623
    %v4398 = vpack.c.b16 %v3626, %v3625
    %v4399 = vpack.c.b16 %v3628, %v3627
    %v4400 = vpack.c.b16 %v3630, %v3629
    %v4401 = vpack.c.b16 %v3632, %v3631
    %v4402 = vpack.c.b16 %v3634, %v3633
    %v4403 = vpack.c.b16 %v3636, %v3635
    %v4404 = vpack.c.b16 %v3638, %v3637
    %v4405 = vpack.c.b16 %v3640, %v3639
    %v4406 = vpack.c.b16 %v3642, %v3641
    %v4407 = vpack.c.b16 %v3644, %v3643
    %v4408 = vpack.c.b16 %v3646, %v3645
    %v4409 = vpack.c.b16 %v3648, %v3647
    %v4410 = vpack.c.b16 %v3650, %v3649
    %v4411 = vpack.c.b16 %v3652, %v3651
    %v4412 = vpack.c.b16 %v3654, %v3653
    %v4413 = vpack.c.b16 %v3656, %v3655
    %v4414 = vpack.c.b16 %v3658, %v3657
    %v4415 = vpack.c.b16 %v3660, %v3659
    %v4416 = vpack.c.b16 %v3662, %v3661
    %v4417 = vpack.c.b16 %v3664, %v3663
    %v4418 = vpack.c.b16 %v3666, %v3665
    %v4419 = vpack.c.b16 %v3668, %v3667
    %v4420 = vpack.c.b16 %v3670, %v3669
    %v4421 = vpack.c.b16 %v3672, %v3671
    %v4422 = vpack.c.b16 %v3674, %v3673
    %v4423 = vpack.c.b16 %v3676, %v3675
    %v4424 = vpack.c.b16 %v3678, %v3677
    %v4425 = vpack.c.b16 %v3680, %v3679
    %v4426 = vpack.c.b16 %v3682, %v3681
    %v4427 = vpack.c.b16 %v3684, %v3683
    %v4428 = vpack.c.b16 %v3686, %v3685
    %v4429 = vpack.c.b16 %v3688, %v3687
    %v4430 = vpack.c.b16 %v3690, %v3689
    %v4431 = vpack.c.b16 %v3692, %v3691
    %v4432 = vpack.c.b16 %v3694, %v3693
    %v4433 = vpack.c.b16 %v3696, %v3695
    %v4434 = vpack.c.b16 %v3698, %v3697
    %v4435 = vpack.c.b16 %v3700, %v3699
    %v4436 = vpack.c.b16 %v3702, %v3701
    %v4437 = vpack.c.b16 %v3704, %v3703
    %v4438 = vpack.c.b16 %v3706, %v3705
    %v4439 = vpack.c.b16 %v3708, %v3707
    %v4440 = vpack.c.b16 %v3710, %v3709
    %v4441 = vpack.c.b16 %v3712, %v3711
    %v4442 = vpack.c.b16 %v3714, %v3713
    %v4443 = vpack.c.b16 %v3716, %v3715
    %v4444 = vpack.c.b16 %v3718, %v3717
    %v4445 = vpack.c.b16 %v3720, %v3719
    %v4446 = vpack.c.b16 %v3722, %v3721
    %v4447 = vpack.c.b16 %v3724, %v3723
    %v4448 = vpack.c.b16 %v3726, %v3725
    %v4449 = vpack.c.b16 %v3728, %v3727
    %v4450 = vpack.c.b16 %v3730, %v3729
    %v4451 = vpack.c.b16 %v3732, %v3731
    %v4452 = vpack.c.b16 %v3734, %v3733
    %v4453 = vpack.c.b16 %v3736, %v3735
    %v4454 = vpack.c.b16 %v3738, %v3737
    %v4455 = vpack.c.b16 %v3740, %v3739
    %v4456 = vpack.c.b16 %v3742, %v3741
    %v4457 = vpack.c.b16 %v3744, %v3743
    %v4458 = vpack.c.b16 %v3746, %v3745
    %v4459 = vpack.c.b16 %v3748, %v3747
    %v4460 = vpack.c.b16 %v3750, %v3749
    %v4461 = vpack.c.b16 %v3752, %v3751
    %v4462 = vpack.c.b16 %v3754, %v3753
    %v4463 = vpack.c.b16 %v3756, %v3755
    %v4464 = vpack.c.b16 %v3758, %v3757
    %v4465 = vpack.c.b16 %v3760, %v3759
    %v4466 = vpack.c.b16 %v3762, %v3761
    %v4467 = vpack.c.b16 %v3764, %v3763
    %v4468 = vpack.c.b16 %v3766, %v3765
    %v4469 = vpack.c.b16 %v3768, %v3767
    %v4470 = vpack.c.b16 %v3770, %v3769
    %v4471 = vpack.c.b16 %v3772, %v3771
    %v4472 = vpack.c.b16 %v3774, %v3773
    %v4473 = vpack.c.b16 %v3776, %v3775
    %v4474 = vpack.c.b16 %v3778, %v3777
    %v4475 = vpack.c.b16 %v3780, %v3779
    %v4476 = vpack.c.b16 %v3782, %v3781
    %v4477 = vpack.c.b16 %v3784, %v3783
    %v4478 = vpack.c.b16 %v3786, %v3785
    %v4479 = vpack.c.b16 %v3788, %v3787
    %v4480 = vpack.c.b16 %v3790, %v3789
    %v4481 = vpack.c.b16 %v3792, %v3791
    %v4482 = vpack.c.b16 %v3794, %v3793
    %v4483 = vpack.c.b16 %v3796, %v3795
    %v4484 = vpack.c.b16 %v3798, %v3797
    %v4485 = vpack.c.b16 %v3800, %v3799
    %v4486 = vpack.c.b16 %v3802, %v3801
    %v4487 = vpack.c.b16 %v3804, %v3803
    %v4488 = vpack.c.b16 %v3806, %v3805
    %v4489 = vpack.c.b16 %v3808, %v3807
    %v4490 = vpack.c.b16 %v3810, %v3809
    %v4491 = vpack.c.b16 %v3812, %v3811
    %v4492 = vpack.c.b16 %v3814, %v3813
    %v4493 = vpack.c.b16 %v3816, %v3815
    %v4494 = vpack.c.b16 %v3818, %v3817
    %v4495 = vpack.c.b16 %v3820, %v3819
    %v4496 = vpack.c.b16 %v3822, %v3821
    %v4497 = vpack.c.b16 %v3824, %v3823
    %v4498 = vpack.c.b16 %v3826, %v3825
    %v4499 = vpack.c.b16 %v3828, %v3827
    %v4500 = vpack.c.b16 %v3830, %v3829
    %v4501 = vpack.c.b16 %v3832, %v3831
    %v4502 = vpack.c.b16 %v3834, %v3833
    %v4503 = vpack.c.b16 %v3836, %v3835
    %v4504 = vpack.c.b16 %v3838, %v3837
    %v4505 = vpack.c.b16 %v3840, %v3839
    %v4506 = vpack.c.b16 %v3842, %v3841
    %v4507 = vpack.c.b16 %v3844, %v3843
    %v4508 = vpack.c.b16 %v3846, %v3845
    %v4509 = vpack.c.b16 %v3848, %v3847
    %v4510 = vpack.c.b16 %v3850, %v3849
    %v4511 = vpack.c.b16 %v3852, %v3851
    %v4512 = vpack.c.b16 %v3854, %v3853
    %v4513 = vpack.c.b16 %v3856, %v3855
    %v4514 = vpack.c.b16 %v3858, %v3857
    %v4515 = vpack.c.b16 %v3860, %v3859
    %v4516 = vpack.c.b16 %v3862, %v3861
    %v4517 = vpack.c.b16 %v3864, %v3863
    %v4518 = vpack.c.b16 %v3866, %v3865
    %v4519 = vpack.c.b16 %v3868, %v3867
    %v4520 = vpack.c.b16 %v3870, %v3869
    %v4521 = vpack.c.b16 %v3872, %v3871
    %v4522 = vpack.c.b16 %v3874, %v3873
    %v4523 = vpack.c.b16 %v3876, %v3875
    %v4524 = vpack.c.b16 %v3878, %v3877
    %v4525 = vpack.c.b16 %v3880, %v3879
    %v4526 = vpack.c.b16 %v3882, %v3881
    %v4527 = vpack.c.b16 %v3884, %v3883
    %v4528 = vpack.c.b16 %v3886, %v3885
    %v4529 = vpack.c.b16 %v3888, %v3887
    %v4530 = vpack.c.b16 %v3890, %v3889
    %v4531 = vpack.c.b16 %v3892, %v3891
    %v4532 = vpack.c.b16 %v3894, %v3893
    %v4533 = vpack.c.b16 %v3896, %v3895
    %v4534 = vpack.c.b16 %v3898, %v3897
    %v4535 = vpack.c.b16 %v3900, %v3899
    %v4536 = vpack.c.b16 %v3902, %v3901
    %v4537 = vpack.c.b16 %v3904, %v3903
    %v4538 = vpack.c.b16 %v3906, %v3905
    %v4539 = vpack.c.b16 %v3908, %v3907
    %v4540 = vpack.c.b16 %v3910, %v3909
    %v4541 = vpack.c.b16 %v3912, %v3911
    %v4542 = vpack.c.b16 %v3914, %v3913
    %v4543 = vpack.c.b16 %v3916, %v3915
    %v4544 = vpack.c.b16 %v3918, %v3917
    %v4545 = vpack.c.b16 %v3920, %v3919
    %v4546 = vpack.c.b16 %v3922, %v3921
    %v4547 = vpack.c.b16 %v3924, %v3923
    %v4548 = vpack.c.b16 %v3926, %v3925
    %v4549 = vpack.c.b16 %v3928, %v3927
    %v4550 = vpack.c.b16 %v3930, %v3929
    %v4551 = vpack.c.b16 %v3932, %v3931
    %v4552 = vpack.c.b16 %v3934, %v3933
    %v4553 = vpack.c.b16 %v3936, %v3935
    %v4554 = vpack.c.b16 %v3938, %v3937
    %v4555 = vpack.c.b16 %v3940, %v3939
    %v4556 = vpack.c.b16 %v3942, %v3941
    %v4557 = vpack.c.b16 %v3944, %v3943
    %v4558 = vpack.c.b16 %v3946, %v3945
    %v4559 = vpack.c.b16 %v3948, %v3947
    %v4560 = vpack.c.b16 %v3950, %v3949
    %v4561 = vpack.c.b16 %v3952, %v3951
    %v4562 = vpack.c.b16 %v3954, %v3953
    %v4563 = vpack.c.b16 %v3956, %v3955
    %v4564 = vpack.c.b16 %v3958, %v3957
    %v4565 = vpack.c.b16 %v3960, %v3959
    %v4566 = vpack.c.b16 %v3962, %v3961
    %v4567 = vpack.c.b16 %v3964, %v3963
    %v4568 = vpack.c.b16 %v3966, %v3965
    %v4569 = vpack.c.b16 %v3968, %v3967
    %v4570 = vpack.c.b16 %v3970, %v3969
    %v4571 = vpack.c.b16 %v3972, %v3971
    %v4572 = vpack.c.b16 %v3974, %v3973
    %v4573 = vpack.c.b16 %v3976, %v3975
    %v4574 = vpack.c.b16 %v3978, %v3977
    %v4575 = vpack.c.b16 %v3980, %v3979
    %v4576 = vpack.c.b16 %v3982, %v3981
    %v4577 = vpack.c.b16 %v3984, %v3983
    %v4578 = vpack.c.b16 %v3986, %v3985
    %v4579 = vpack.c.b16 %v3988, %v3987
    %v4580 = vpack.c.b16 %v3990, %v3989
    %v4581 = vpack.c.b16 %v3992, %v3991
    %v4582 = vpack.c.b16 %v3994, %v3993
    %v4583 = vpack.c.b16 %v3996, %v3995
    %v4584 = vpack.c.b16 %v3998, %v3997
    %v4585 = vpack.c.b16 %v4000, %v3999
    %v4586 = vpack.c.b16 %v4002, %v4001
    %v4587 = vpack.c.b16 %v4004, %v4003
    %v4588 = vpack.c.b16 %v4006, %v4005
    %v4589 = vpack.c.b16 %v4008, %v4007
    %v4590 = vpack.c.b16 %v4010, %v4009
    %v4591 = vpack.c.b16 %v4012, %v4011
    %v4592 = vpack.c.b16 %v4014, %v4013
    %v4593 = vpack.c.b16 %v4016, %v4015
    %v4594 = vpack.c.b16 %v4018, %v4017
    %5171 = vmatprep.subr.bf16.mxu0 0
    %5172 = vmatpush1.bf16.msra.mxu0 %v4019
    %5173 = vmatprep.subr.bf16.mxu0 0
    %5174 = vmatpush1.bf16.msra.mxu0 %v4020
    %5175 = vmatprep.subr.bf16.mxu0 0
    %5176 = vmatpush1.bf16.msra.mxu0 %v4021
    %5177 = vmatprep.subr.bf16.mxu0 0
    %5178 = vmatpush1.bf16.msra.mxu0 %v4022
    %5179 = vmatprep.subr.bf16.mxu0 0
    %5180 = vmatpush1.bf16.msra.mxu0 %v4023
    %5181 = vmatprep.subr.bf16.mxu0 0
    %5182 = vmatpush1.bf16.msra.mxu0 %v4024
    %5183 = vmatprep.subr.bf16.mxu0 0
    %5184 = vmatpush1.bf16.msra.mxu0 %v4025
    %5185 = vmatprep.subr.bf16.mxu0 0
    %5186 = vmatpush1.bf16.msra.mxu0 %v4026
    %5187 = vmatprep.subr.bf16.mxu0 0
    %5188 = vmatpush1.bf16.msra.mxu0 %v4027
    %5189 = vmatprep.subr.bf16.mxu0 0
    %5190 = vmatpush1.bf16.msra.mxu0 %v4028
    %5191 = vmatprep.subr.bf16.mxu0 0
    %5192 = vmatpush1.bf16.msra.mxu0 %v4029
    %5193 = vmatprep.subr.bf16.mxu0 0
    %5194 = vmatpush1.bf16.msra.mxu0 %v4030
    %5195 = vmatprep.subr.bf16.mxu0 0
    %5196 = vmatpush1.bf16.msra.mxu0 %v4031
    %5197 = vmatprep.subr.bf16.mxu0 0
    %5198 = vmatpush1.bf16.msra.mxu0 %v4032
    %5199 = vmatprep.subr.bf16.mxu0 0
    %5200 = vmatpush1.bf16.msra.mxu0 %v4033
    %5201 = vmatprep.subr.bf16.mxu0 0
    %5202 = vmatpush1.bf16.msra.mxu0 %v4034
    %5203 = vmatprep.mubr.bf16.mxu0 %v1239
    %5204 = vmatmul.mubr.bf16.gmra.mrb[0].mxu0 %v1225
    %v5205 = vpop.f32.mrb[0].mxu0
    %v5206 = vadd.f32 %v1191, %v5205
    %v5207 = vpop.f32.mrb[0].mxu0
    %v5208 = vpop.f32.mrb[0].mxu0
    %v5209 = vpop.f32.mrb[0].mxu0
    %5210 = vdwg.mxu0
    %5211 = vmatprep.subr.bf16.mxu0 0
    %5212 = vmatpush1.bf16.msra.mxu0 %v4035
    %5213 = vmatprep.subr.bf16.mxu0 0
    %5214 = vmatpush1.bf16.msra.mxu0 %v4036
    %5215 = vmatprep.subr.bf16.mxu0 0
    %5216 = vmatpush1.bf16.msra.mxu0 %v4037
    %5217 = vmatprep.subr.bf16.mxu0 0
    %5218 = vmatpush1.bf16.msra.mxu0 %v4038
    %5219 = vmatprep.subr.bf16.mxu0 0
    %5220 = vmatpush1.bf16.msra.mxu0 %v4039
    %5221 = vmatprep.subr.bf16.mxu0 0
    %5222 = vmatpush1.bf16.msra.mxu0 %v4040
    %5223 = vmatprep.subr.bf16.mxu0 0
    %5224 = vmatpush1.bf16.msra.mxu0 %v4041
    %5225 = vmatprep.subr.bf16.mxu0 0
    %5226 = vmatpush1.bf16.msra.mxu0 %v4042
    %5227 = vmatprep.subr.bf16.mxu0 0
    %5228 = vmatpush1.bf16.msra.mxu0 %v4043
    %5229 = vmatprep.subr.bf16.mxu0 0
    %5230 = vmatpush1.bf16.msra.mxu0 %v4044
    %5231 = vmatprep.subr.bf16.mxu0 0
    %5232 = vmatpush1.bf16.msra.mxu0 %v4045
    %5233 = vmatprep.subr.bf16.mxu0 0
    %5234 = vmatpush1.bf16.msra.mxu0 %v4046
    %5235 = vmatprep.subr.bf16.mxu0 0
    %5236 = vmatpush1.bf16.msra.mxu0 %v4047
    %5237 = vmatprep.subr.bf16.mxu0 0
    %5238 = vmatpush1.bf16.msra.mxu0 %v4048
    %5239 = vmatprep.subr.bf16.mxu0 0
    %5240 = vmatpush1.bf16.msra.mxu0 %v4049
    %5241 = vmatprep.subr.bf16.mxu0 0
    %5242 = vmatpush1.bf16.msra.mxu0 %v4050
    %5243 = vmatprep.mubr.bf16.mxu0 %v1249
    %5244 = vmatmul.mubr.bf16.gmra.mrb[0].mxu0 %v1247
    %v5245 = vpop.f32.mrb[0].mxu0
    %v5246 = vadd.f32 %v5206, %v5245
    %v5247 = vpop.f32.mrb[0].mxu0
    %v5248 = vpop.f32.mrb[0].mxu0
    %v5249 = vpop.f32.mrb[0].mxu0
    %5250 = vdwg.mxu0
    %5251 = vmatprep.subr.bf16.mxu0 0
    %5252 = vmatpush1.bf16.msra.mxu0 %v4051
    %5253 = vmatprep.subr.bf16.mxu0 0
    %5254 = vmatpush1.bf16.msra.mxu0 %v4052
    %5255 = vmatprep.subr.bf16.mxu0 0
    %5256 = vmatpush1.bf16.msra.mxu0 %v4053
    %5257 = vmatprep.subr.bf16.mxu0 0
    %5258 = vmatpush1.bf16.msra.mxu0 %v4054
    %5259 = vmatprep.subr.bf16.mxu0 0
    %5260 = vmatpush1.bf16.msra.mxu0 %v4055
    %5261 = vmatprep.subr.bf16.mxu0 0
    %5262 = vmatpush1.bf16.msra.mxu0 %v4056
    %5263 = vmatprep.subr.bf16.mxu0 0
    %5264 = vmatpush1.bf16.msra.mxu0 %v4057
    %5265 = vmatprep.subr.bf16.mxu0 0
    %5266 = vmatpush1.bf16.msra.mxu0 %v4058
    %5267 = vmatprep.subr.bf16.mxu0 0
    %5268 = vmatpush1.bf16.msra.mxu0 %v4059
    %5269 = vmatprep.subr.bf16.mxu0 0
    %5270 = vmatpush1.bf16.msra.mxu0 %v4060
    %5271 = vmatprep.subr.bf16.mxu0 0
    %5272 = vmatpush1.bf16.msra.mxu0 %v4061
    %5273 = vmatprep.subr.bf16.mxu0 0
    %5274 = vmatpush1.bf16.msra.mxu0 %v4062
    %5275 = vmatprep.subr.bf16.mxu0 0
    %5276 = vmatpush1.bf16.msra.mxu0 %v4063
    %5277 = vmatprep.subr.bf16.mxu0 0
    %5278 = vmatpush1.bf16.msra.mxu0 %v4064
    %5279 = vmatprep.subr.bf16.mxu0 0
    %5280 = vmatpush1.bf16.msra.mxu0 %v4065
    %5281 = vmatprep.subr.bf16.mxu0 0
    %5282 = vmatpush1.bf16.msra.mxu0 %v4066
    %5283 = vmatprep.mubr.bf16.mxu0 %v1246
    %5284 = vmatmul.mubr.bf16.gmra.mrb[0].mxu0 %v1232
    %v5285 = vpop.f32.mrb[0].mxu0
    %v5286 = vadd.f32 %v5246, %v5285
    %v5287 = vpop.f32.mrb[0].mxu0
    %v5288 = vpop.f32.mrb[0].mxu0
    %v5289 = vpop.f32.mrb[0].mxu0
    %5290 = vdwg.mxu0
    %5291 = vmatprep.subr.bf16.mxu0 0
    %5292 = vmatpush1.bf16.msra.mxu0 %v4067
    %5293 = vmatprep.subr.bf16.mxu0 0
    %5294 = vmatpush1.bf16.msra.mxu0 %v4068
    %5295 = vmatprep.subr.bf16.mxu0 0
    %5296 = vmatpush1.bf16.msra.mxu0 %v4069
    %5297 = vmatprep.subr.bf16.mxu0 0
    %5298 = vmatpush1.bf16.msra.mxu0 %v4070
    %5299 = vmatprep.subr.bf16.mxu0 0
    %5300 = vmatpush1.bf16.msra.mxu0 %v4071
    %5301 = vmatprep.subr.bf16.mxu0 0
    %5302 = vmatpush1.bf16.msra.mxu0 %v4072
    %5303 = vmatprep.subr.bf16.mxu0 0
    %5304 = vmatpush1.bf16.msra.mxu0 %v4073
    %5305 = vmatprep.subr.bf16.mxu0 0
    %5306 = vmatpush1.bf16.msra.mxu0 %v4074
    %5307 = vmatprep.subr.bf16.mxu0 0
    %5308 = vmatpush1.bf16.msra.mxu0 %v4075
    %5309 = vmatprep.subr.bf16.mxu0 0
    %5310 = vmatpush1.bf16.msra.mxu0 %v4076
    %5311 = vmatprep.subr.bf16.mxu0 0
    %5312 = vmatpush1.bf16.msra.mxu0 %v4077
    %5313 = vmatprep.subr.bf16.mxu0 0
    %5314 = vmatpush1.bf16.msra.mxu0 %v4078
    %5315 = vmatprep.subr.bf16.mxu0 0
    %5316 = vmatpush1.bf16.msra.mxu0 %v4079
    %5317 = vmatprep.subr.bf16.mxu0 0
    %5318 = vmatpush1.bf16.msra.mxu0 %v4080
    %5319 = vmatprep.subr.bf16.mxu0 0
    %5320 = vmatpush1.bf16.msra.mxu0 %v4081
    %5321 = vmatprep.subr.bf16.mxu0 0
    %5322 = vmatpush1.bf16.msra.mxu0 %v4082
    %5323 = vmatprep.mubr.bf16.mxu0 %v1250
    %5324 = vmatmul.mubr.bf16.gmra.mrb[0].mxu0 %v1248
    %v5325 = vpop.f32.mrb[0].mxu0
    %v5326 = vadd.f32 %v5286, %v5325
    %v5327 = vpop.f32.mrb[0].mxu0
    %v5328 = vpop.f32.mrb[0].mxu0
    %v5329 = vpop.f32.mrb[0].mxu0
    %5330 = vdwg.mxu0
    %5331 = vmatprep.subr.bf16.mxu0 0
    %5332 = vmatpush1.bf16.msra.mxu0 %v4083
    %5333 = vmatprep.subr.bf16.mxu0 0
    %5334 = vmatpush1.bf16.msra.mxu0 %v4084
    %5335 = vmatprep.subr.bf16.mxu0 0
    %5336 = vmatpush1.bf16.msra.mxu0 %v4085
    %5337 = vmatprep.subr.bf16.mxu0 0
    %5338 = vmatpush1.bf16.msra.mxu0 %v4086
    %5339 = vmatprep.subr.bf16.mxu0 0
    %5340 = vmatpush1.bf16.msra.mxu0 %v4087
    %5341 = vmatprep.subr.bf16.mxu0 0
    %5342 = vmatpush1.bf16.msra.mxu0 %v4088
    %5343 = vmatprep.subr.bf16.mxu0 0
    %5344 = vmatpush1.bf16.msra.mxu0 %v4089
    %5345 = vmatprep.subr.bf16.mxu0 0
    %5346 = vmatpush1.bf16.msra.mxu0 %v4090
    %5347 = vmatprep.subr.bf16.mxu0 0
    %5348 = vmatpush1.bf16.msra.mxu0 %v4091
    %5349 = vmatprep.subr.bf16.mxu0 0
    %5350 = vmatpush1.bf16.msra.mxu0 %v4092
    %5351 = vmatprep.subr.bf16.mxu0 0
    %5352 = vmatpush1.bf16.msra.mxu0 %v4093
    %5353 = vmatprep.subr.bf16.mxu0 0
    %5354 = vmatpush1.bf16.msra.mxu0 %v4094
    %5355 = vmatprep.subr.bf16.mxu0 0
    %5356 = vmatpush1.bf16.msra.mxu0 %v4095
    %5357 = vmatprep.subr.bf16.mxu0 0
    %5358 = vmatpush1.bf16.msra.mxu0 %v4096
    %5359 = vmatprep.subr.bf16.mxu0 0
    %5360 = vmatpush1.bf16.msra.mxu0 %v4097
    %5361 = vmatprep.subr.bf16.mxu0 0
    %5362 = vmatpush1.bf16.msra.mxu0 %v4098
    %5363 = vmatprep.mubr.bf16.mxu0 %v1288
    %5364 = vmatmul.mubr.bf16.gmra.mrb[0].mxu0 %v1274
    %v5365 = vpop.f32.mrb[0].mxu0
    %v5366 = vadd.f32 %v5326, %v5365
    %v5367 = vpop.f32.mrb[0].mxu0
    %v5368 = vpop.f32.mrb[0].mxu0
    %v5369 = vpop.f32.mrb[0].mxu0
    %5370 = vdwg.mxu0
    %5371 = vmatprep.subr.bf16.mxu0 0
    %5372 = vmatpush1.bf16.msra.mxu0 %v4099
    %5373 = vmatprep.subr.bf16.mxu0 0
    %5374 = vmatpush1.bf16.msra.mxu0 %v4100
    %5375 = vmatprep.subr.bf16.mxu0 0
    %5376 = vmatpush1.bf16.msra.mxu0 %v4101
    %5377 = vmatprep.subr.bf16.mxu0 0
    %5378 = vmatpush1.bf16.msra.mxu0 %v4102
    %5379 = vmatprep.subr.bf16.mxu0 0
    %5380 = vmatpush1.bf16.msra.mxu0 %v4103
    %5381 = vmatprep.subr.bf16.mxu0 0
    %5382 = vmatpush1.bf16.msra.mxu0 %v4104
    %5383 = vmatprep.subr.bf16.mxu0 0
    %5384 = vmatpush1.bf16.msra.mxu0 %v4105
    %5385 = vmatprep.subr.bf16.mxu0 0
    %5386 = vmatpush1.bf16.msra.mxu0 %v4106
    %5387 = vmatprep.subr.bf16.mxu0 0
    %5388 = vmatpush1.bf16.msra.mxu0 %v4107
    %5389 = vmatprep.subr.bf16.mxu0 0
    %5390 = vmatpush1.bf16.msra.mxu0 %v4108
    %5391 = vmatprep.subr.bf16.mxu0 0
    %5392 = vmatpush1.bf16.msra.mxu0 %v4109
    %5393 = vmatprep.subr.bf16.mxu0 0
    %5394 = vmatpush1.bf16.msra.mxu0 %v4110
    %5395 = vmatprep.subr.bf16.mxu0 0
    %5396 = vmatpush1.bf16.msra.mxu0 %v4111
    %5397 = vmatprep.subr.bf16.mxu0 0
    %5398 = vmatpush1.bf16.msra.mxu0 %v4112
    %5399 = vmatprep.subr.bf16.mxu0 0
    %5400 = vmatpush1.bf16.msra.mxu0 %v4113
    %5401 = vmatprep.subr.bf16.mxu0 0
    %5402 = vmatpush1.bf16.msra.mxu0 %v4114
    %5403 = vmatprep.mubr.bf16.mxu0 %v1298
    %5404 = vmatmul.mubr.bf16.gmra.mrb[0].mxu0 %v1296
    %v5405 = vpop.f32.mrb[0].mxu0
    %v5406 = vadd.f32 %v5366, %v5405
    %v5407 = vpop.f32.mrb[0].mxu0
    %v5408 = vpop.f32.mrb[0].mxu0
    %v5409 = vpop.f32.mrb[0].mxu0
    %5410 = vdwg.mxu0
    %5411 = vmatprep.subr.bf16.mxu0 0
    %5412 = vmatpush1.bf16.msra.mxu0 %v4115
    %5413 = vmatprep.subr.bf16.mxu0 0
    %5414 = vmatpush1.bf16.msra.mxu0 %v4116
    %5415 = vmatprep.subr.bf16.mxu0 0
    %5416 = vmatpush1.bf16.msra.mxu0 %v4117
    %5417 = vmatprep.subr.bf16.mxu0 0
    %5418 = vmatpush1.bf16.msra.mxu0 %v4118
    %5419 = vmatprep.subr.bf16.mxu0 0
    %5420 = vmatpush1.bf16.msra.mxu0 %v4119
    %5421 = vmatprep.subr.bf16.mxu0 0
    %5422 = vmatpush1.bf16.msra.mxu0 %v4120
    %5423 = vmatprep.subr.bf16.mxu0 0
    %5424 = vmatpush1.bf16.msra.mxu0 %v4121
    %5425 = vmatprep.subr.bf16.mxu0 0
    %5426 = vmatpush1.bf16.msra.mxu0 %v4122
    %5427 = vmatprep.subr.bf16.mxu0 0
    %5428 = vmatpush1.bf16.msra.mxu0 %v4123
    %5429 = vmatprep.subr.bf16.mxu0 0
    %5430 = vmatpush1.bf16.msra.mxu0 %v4124
    %5431 = vmatprep.subr.bf16.mxu0 0
    %5432 = vmatpush1.bf16.msra.mxu0 %v4125
    %5433 = vmatprep.subr.bf16.mxu0 0
    %5434 = vmatpush1.bf16.msra.mxu0 %v4126
    %5435 = vmatprep.subr.bf16.mxu0 0
    %5436 = vmatpush1.bf16.msra.mxu0 %v4127
    %5437 = vmatprep.subr.bf16.mxu0 0
    %5438 = vmatpush1.bf16.msra.mxu0 %v4128
    %5439 = vmatprep.subr.bf16.mxu0 0
    %5440 = vmatpush1.bf16.msra.mxu0 %v4129
    %5441 = vmatprep.subr.bf16.mxu0 0
    %5442 = vmatpush1.bf16.msra.mxu0 %v4130
    %5443 = vmatprep.mubr.bf16.mxu0 %v1295
    %5444 = vmatmul.mubr.bf16.gmra.mrb[0].mxu0 %v1281
    %v5445 = vpop.f32.mrb[0].mxu0
    %v5446 = vadd.f32 %v5406, %v5445
    %v5447 = vpop.f32.mrb[0].mxu0
    %v5448 = vpop.f32.mrb[0].mxu0
    %v5449 = vpop.f32.mrb[0].mxu0
    %5450 = vdwg.mxu0
    %5451 = vmatprep.subr.bf16.mxu0 0
    %5452 = vmatpush1.bf16.msra.mxu0 %v4131
    %5453 = vmatprep.subr.bf16.mxu0 0
    %5454 = vmatpush1.bf16.msra.mxu0 %v4132
    %5455 = vmatprep.subr.bf16.mxu0 0
    %5456 = vmatpush1.bf16.msra.mxu0 %v4133
    %5457 = vmatprep.subr.bf16.mxu0 0
    %5458 = vmatpush1.bf16.msra.mxu0 %v4134
    %5459 = vmatprep.subr.bf16.mxu0 0
    %5460 = vmatpush1.bf16.msra.mxu0 %v4135
    %5461 = vmatprep.subr.bf16.mxu0 0
    %5462 = vmatpush1.bf16.msra.mxu0 %v4136
    %5463 = vmatprep.subr.bf16.mxu0 0
    %5464 = vmatpush1.bf16.msra.mxu0 %v4137
    %5465 = vmatprep.subr.bf16.mxu0 0
    %5466 = vmatpush1.bf16.msra.mxu0 %v4138
    %5467 = vmatprep.subr.bf16.mxu0 0
    %5468 = vmatpush1.bf16.msra.mxu0 %v4139
    %5469 = vmatprep.subr.bf16.mxu0 0
    %5470 = vmatpush1.bf16.msra.mxu0 %v4140
    %5471 = vmatprep.subr.bf16.mxu0 0
    %5472 = vmatpush1.bf16.msra.mxu0 %v4141
    %5473 = vmatprep.subr.bf16.mxu0 0
    %5474 = vmatpush1.bf16.msra.mxu0 %v4142
    %5475 = vmatprep.subr.bf16.mxu0 0
    %5476 = vmatpush1.bf16.msra.mxu0 %v4143
    %5477 = vmatprep.subr.bf16.mxu0 0
    %5478 = vmatpush1.bf16.msra.mxu0 %v4144
    %5479 = vmatprep.subr.bf16.mxu0 0
    %5480 = vmatpush1.bf16.msra.mxu0 %v4145
    %5481 = vmatprep.subr.bf16.mxu0 0
    %5482 = vmatpush1.bf16.msra.mxu0 %v4146
    %5483 = vmatprep.mubr.bf16.mxu0 %v1299
    %5484 = vmatmul.mubr.bf16.gmra.mrb[0].mxu0 %v1297
    %v5485 = vpop.f32.mrb[0].mxu0
    %v5486 = vadd.f32 %v5446, %v5485
    %v5487 = vpop.f32.mrb[0].mxu0
    %v5488 = vpop.f32.mrb[0].mxu0
    %v5489 = vpop.f32.mrb[0].mxu0
    %5490 = vdwg.mxu0
    %5491 = vmatprep.subr.bf16.mxu0 0
    %5492 = vmatpush1.bf16.msra.mxu0 %v4147
    %5493 = vmatprep.subr.bf16.mxu0 0
    %5494 = vmatpush1.bf16.msra.mxu0 %v4148
    %5495 = vmatprep.subr.bf16.mxu0 0
    %5496 = vmatpush1.bf16.msra.mxu0 %v4149
    %5497 = vmatprep.subr.bf16.mxu0 0
    %5498 = vmatpush1.bf16.msra.mxu0 %v4150
    %5499 = vmatprep.subr.bf16.mxu0 0
    %5500 = vmatpush1.bf16.msra.mxu0 %v4151
    %5501 = vmatprep.subr.bf16.mxu0 0
    %5502 = vmatpush1.bf16.msra.mxu0 %v4152
    %5503 = vmatprep.subr.bf16.mxu0 0
    %5504 = vmatpush1.bf16.msra.mxu0 %v4153
    %5505 = vmatprep.subr.bf16.mxu0 0
    %5506 = vmatpush1.bf16.msra.mxu0 %v4154
    %5507 = vmatprep.subr.bf16.mxu0 0
    %5508 = vmatpush1.bf16.msra.mxu0 %v4155
    %5509 = vmatprep.subr.bf16.mxu0 0
    %5510 = vmatpush1.bf16.msra.mxu0 %v4156
    %5511 = vmatprep.subr.bf16.mxu0 0
    %5512 = vmatpush1.bf16.msra.mxu0 %v4157
    %5513 = vmatprep.subr.bf16.mxu0 0
    %5514 = vmatpush1.bf16.msra.mxu0 %v4158
    %5515 = vmatprep.subr.bf16.mxu0 0
    %5516 = vmatpush1.bf16.msra.mxu0 %v4159
    %5517 = vmatprep.subr.bf16.mxu0 0
    %5518 = vmatpush1.bf16.msra.mxu0 %v4160
    %5519 = vmatprep.subr.bf16.mxu0 0
    %5520 = vmatpush1.bf16.msra.mxu0 %v4161
    %5521 = vmatprep.subr.bf16.mxu0 0
    %5522 = vmatpush1.bf16.msra.mxu0 %v4162
    %5523 = vmatprep.mubr.bf16.mxu0 %v1337
    %5524 = vmatmul.mubr.bf16.gmra.mrb[0].mxu0 %v1323
    %v5525 = vpop.f32.mrb[0].mxu0
    %v5526 = vadd.f32 %v5486, %v5525
    %v5527 = vpop.f32.mrb[0].mxu0
    %v5528 = vpop.f32.mrb[0].mxu0
    %v5529 = vpop.f32.mrb[0].mxu0
    %5530 = vdwg.mxu0
    %5531 = vmatprep.subr.bf16.mxu0 0
    %5532 = vmatpush1.bf16.msra.mxu0 %v4163
    %5533 = vmatprep.subr.bf16.mxu0 0
    %5534 = vmatpush1.bf16.msra.mxu0 %v4164
    %5535 = vmatprep.subr.bf16.mxu0 0
    %5536 = vmatpush1.bf16.msra.mxu0 %v4165
    %5537 = vmatprep.subr.bf16.mxu0 0
    %5538 = vmatpush1.bf16.msra.mxu0 %v4166
    %5539 = vmatprep.subr.bf16.mxu0 0
    %5540 = vmatpush1.bf16.msra.mxu0 %v4167
    %5541 = vmatprep.subr.bf16.mxu0 0
    %5542 = vmatpush1.bf16.msra.mxu0 %v4168
    %5543 = vmatprep.subr.bf16.mxu0 0
    %5544 = vmatpush1.bf16.msra.mxu0 %v4169
    %5545 = vmatprep.subr.bf16.mxu0 0
    %5546 = vmatpush1.bf16.msra.mxu0 %v4170
    %5547 = vmatprep.subr.bf16.mxu0 0
    %5548 = vmatpush1.bf16.msra.mxu0 %v4171
    %5549 = vmatprep.subr.bf16.mxu0 0
    %5550 = vmatpush1.bf16.msra.mxu0 %v4172
    %5551 = vmatprep.subr.bf16.mxu0 0
    %5552 = vmatpush1.bf16.msra.mxu0 %v4173
    %5553 = vmatprep.subr.bf16.mxu0 0
    %5554 = vmatpush1.bf16.msra.mxu0 %v4174
    %5555 = vmatprep.subr.bf16.mxu0 0
    %5556 = vmatpush1.bf16.msra.mxu0 %v4175
    %5557 = vmatprep.subr.bf16.mxu0 0
    %5558 = vmatpush1.bf16.msra.mxu0 %v4176
    %5559 = vmatprep.subr.bf16.mxu0 0
    %5560 = vmatpush1.bf16.msra.mxu0 %v4177
    %5561 = vmatprep.subr.bf16.mxu0 0
    %5562 = vmatpush1.bf16.msra.mxu0 %v4178
    %5563 = vmatprep.mubr.bf16.mxu0 %v1347
    %5564 = vmatmul.mubr.bf16.gmra.mrb[0].mxu0 %v1345
    %v5565 = vpop.f32.mrb[0].mxu0
    %v5566 = vadd.f32 %v5526, %v5565
    %v5567 = vpop.f32.mrb[0].mxu0
    %v5568 = vpop.f32.mrb[0].mxu0
    %v5569 = vpop.f32.mrb[0].mxu0
    %5570 = vdwg.mxu0
    %5571 = vmatprep.subr.bf16.mxu0 0
    %5572 = vmatpush1.bf16.msra.mxu0 %v4179
    %5573 = vmatprep.subr.bf16.mxu0 0
    %5574 = vmatpush1.bf16.msra.mxu0 %v4180
    %5575 = vmatprep.subr.bf16.mxu0 0
    %5576 = vmatpush1.bf16.msra.mxu0 %v4181
    %5577 = vmatprep.subr.bf16.mxu0 0
    %5578 = vmatpush1.bf16.msra.mxu0 %v4182
    %5579 = vmatprep.subr.bf16.mxu0 0
    %5580 = vmatpush1.bf16.msra.mxu0 %v4183
    %5581 = vmatprep.subr.bf16.mxu0 0
    %5582 = vmatpush1.bf16.msra.mxu0 %v4184
    %5583 = vmatprep.subr.bf16.mxu0 0
    %5584 = vmatpush1.bf16.msra.mxu0 %v4185
    %5585 = vmatprep.subr.bf16.mxu0 0
    %5586 = vmatpush1.bf16.msra.mxu0 %v4186
    %5587 = vmatprep.subr.bf16.mxu0 0
    %5588 = vmatpush1.bf16.msra.mxu0 %v4187
    %5589 = vmatprep.subr.bf16.mxu0 0
    %5590 = vmatpush1.bf16.msra.mxu0 %v4188
    %5591 = vmatprep.subr.bf16.mxu0 0
    %5592 = vmatpush1.bf16.msra.mxu0 %v4189
    %5593 = vmatprep.subr.bf16.mxu0 0
    %5594 = vmatpush1.bf16.msra.mxu0 %v4190
    %5595 = vmatprep.subr.bf16.mxu0 0
    %5596 = vmatpush1.bf16.msra.mxu0 %v4191
    %5597 = vmatprep.subr.bf16.mxu0 0
    %5598 = vmatpush1.bf16.msra.mxu0 %v4192
    %5599 = vmatprep.subr.bf16.mxu0 0
    %5600 = vmatpush1.bf16.msra.mxu0 %v4193
    %5601 = vmatprep.subr.bf16.mxu0 0
    %5602 = vmatpush1.bf16.msra.mxu0 %v4194
    %5603 = vmatprep.mubr.bf16.mxu0 %v1344
    %5604 = vmatmul.mubr.bf16.gmra.mrb[0].mxu0 %v1330
    %v5605 = vpop.f32.mrb[0].mxu0
    %v5606 = vadd.f32 %v5566, %v5605
    %v5607 = vpop.f32.mrb[0].mxu0
    %v5608 = vpop.f32.mrb[0].mxu0
    %v5609 = vpop.f32.mrb[0].mxu0
    %5610 = vdwg.mxu0
    %5611 = vmatprep.subr.bf16.mxu0 0
    %5612 = vmatpush1.bf16.msra.mxu0 %v4195
    %5613 = vmatprep.subr.bf16.mxu0 0
    %5614 = vmatpush1.bf16.msra.mxu0 %v4196
    %5615 = vmatprep.subr.bf16.mxu0 0
    %5616 = vmatpush1.bf16.msra.mxu0 %v4197
    %5617 = vmatprep.subr.bf16.mxu0 0
    %5618 = vmatpush1.bf16.msra.mxu0 %v4198
    %5619 = vmatprep.subr.bf16.mxu0 0
    %5620 = vmatpush1.bf16.msra.mxu0 %v4199
    %5621 = vmatprep.subr.bf16.mxu0 0
    %5622 = vmatpush1.bf16.msra.mxu0 %v4200
    %5623 = vmatprep.subr.bf16.mxu0 0
    %5624 = vmatpush1.bf16.msra.mxu0 %v4201
    %5625 = vmatprep.subr.bf16.mxu0 0
    %5626 = vmatpush1.bf16.msra.mxu0 %v4202
    %5627 = vmatprep.subr.bf16.mxu0 0
    %5628 = vmatpush1.bf16.msra.mxu0 %v4203
    %5629 = vmatprep.subr.bf16.mxu0 0
    %5630 = vmatpush1.bf16.msra.mxu0 %v4204
    %5631 = vmatprep.subr.bf16.mxu0 0
    %5632 = vmatpush1.bf16.msra.mxu0 %v4205
    %5633 = vmatprep.subr.bf16.mxu0 0
    %5634 = vmatpush1.bf16.msra.mxu0 %v4206
    %5635 = vmatprep.subr.bf16.mxu0 0
    %5636 = vmatpush1.bf16.msra.mxu0 %v4207
    %5637 = vmatprep.subr.bf16.mxu0 0
    %5638 = vmatpush1.bf16.msra.mxu0 %v4208
    %5639 = vmatprep.subr.bf16.mxu0 0
    %5640 = vmatpush1.bf16.msra.mxu0 %v4209
    %5641 = vmatprep.subr.bf16.mxu0 0
    %5642 = vmatpush1.bf16.msra.mxu0 %v4210
    %5643 = vmatprep.mubr.bf16.mxu0 %v1348
    %5644 = vmatmul.mubr.bf16.gmra.mrb[0].mxu0 %v1346
    %v5645 = vpop.f32.mrb[0].mxu0
    %v5646 = vadd.f32 %v5606, %v5645
    %v5647 = vpop.f32.mrb[0].mxu0
    %v5648 = vpop.f32.mrb[0].mxu0
    %v5649 = vpop.f32.mrb[0].mxu0
    %5650 = vdwg.mxu0
    %5651 = vmatprep.subr.bf16.mxu0 0
    %5652 = vmatpush1.bf16.msra.mxu0 %v4211
    %5653 = vmatprep.subr.bf16.mxu0 0
    %5654 = vmatpush1.bf16.msra.mxu0 %v4212
    %5655 = vmatprep.subr.bf16.mxu0 0
    %5656 = vmatpush1.bf16.msra.mxu0 %v4213
    %5657 = vmatprep.subr.bf16.mxu0 0
    %5658 = vmatpush1.bf16.msra.mxu0 %v4214
    %5659 = vmatprep.subr.bf16.mxu0 0
    %5660 = vmatpush1.bf16.msra.mxu0 %v4215
    %5661 = vmatprep.subr.bf16.mxu0 0
    %5662 = vmatpush1.bf16.msra.mxu0 %v4216
    %5663 = vmatprep.subr.bf16.mxu0 0
    %5664 = vmatpush1.bf16.msra.mxu0 %v4217
    %5665 = vmatprep.subr.bf16.mxu0 0
    %5666 = vmatpush1.bf16.msra.mxu0 %v4218
    %5667 = vmatprep.subr.bf16.mxu0 0
    %5668 = vmatpush1.bf16.msra.mxu0 %v4219
    %5669 = vmatprep.subr.bf16.mxu0 0
    %5670 = vmatpush1.bf16.msra.mxu0 %v4220
    %5671 = vmatprep.subr.bf16.mxu0 0
    %5672 = vmatpush1.bf16.msra.mxu0 %v4221
    %5673 = vmatprep.subr.bf16.mxu0 0
    %5674 = vmatpush1.bf16.msra.mxu0 %v4222
    %5675 = vmatprep.subr.bf16.mxu0 0
    %5676 = vmatpush1.bf16.msra.mxu0 %v4223
    %5677 = vmatprep.subr.bf16.mxu0 0
    %5678 = vmatpush1.bf16.msra.mxu0 %v4224
    %5679 = vmatprep.subr.bf16.mxu0 0
    %5680 = vmatpush1.bf16.msra.mxu0 %v4225
    %5681 = vmatprep.subr.bf16.mxu0 0
    %5682 = vmatpush1.bf16.msra.mxu0 %v4226
    %5683 = vmatprep.mubr.bf16.mxu0 %v1386
    %5684 = vmatmul.mubr.bf16.gmra.mrb[0].mxu0 %v1372
    %v5685 = vpop.f32.mrb[0].mxu0
    %v5686 = vadd.f32 %v5646, %v5685
    %v5687 = vpop.f32.mrb[0].mxu0
    %v5688 = vpop.f32.mrb[0].mxu0
    %v5689 = vpop.f32.mrb[0].mxu0
    %5690 = vdwg.mxu0
    %5691 = vmatprep.subr.bf16.mxu0 0
    %5692 = vmatpush1.bf16.msra.mxu0 %v4227
    %5693 = vmatprep.subr.bf16.mxu0 0
    %5694 = vmatpush1.bf16.msra.mxu0 %v4228
    %5695 = vmatprep.subr.bf16.mxu0 0
    %5696 = vmatpush1.bf16.msra.mxu0 %v4229
    %5697 = vmatprep.subr.bf16.mxu0 0
    %5698 = vmatpush1.bf16.msra.mxu0 %v4230
    %5699 = vmatprep.subr.bf16.mxu0 0
    %5700 = vmatpush1.bf16.msra.mxu0 %v4231
    %5701 = vmatprep.subr.bf16.mxu0 0
    %5702 = vmatpush1.bf16.msra.mxu0 %v4232
    %5703 = vmatprep.subr.bf16.mxu0 0
    %5704 = vmatpush1.bf16.msra.mxu0 %v4233
    %5705 = vmatprep.subr.bf16.mxu0 0
    %5706 = vmatpush1.bf16.msra.mxu0 %v4234
    %5707 = vmatprep.subr.bf16.mxu0 0
    %5708 = vmatpush1.bf16.msra.mxu0 %v4235
    %5709 = vmatprep.subr.bf16.mxu0 0
    %5710 = vmatpush1.bf16.msra.mxu0 %v4236
    %5711 = vmatprep.subr.bf16.mxu0 0
    %5712 = vmatpush1.bf16.msra.mxu0 %v4237
    %5713 = vmatprep.subr.bf16.mxu0 0
    %5714 = vmatpush1.bf16.msra.mxu0 %v4238
    %5715 = vmatprep.subr.bf16.mxu0 0
    %5716 = vmatpush1.bf16.msra.mxu0 %v4239
    %5717 = vmatprep.subr.bf16.mxu0 0
    %5718 = vmatpush1.bf16.msra.mxu0 %v4240
    %5719 = vmatprep.subr.bf16.mxu0 0
    %5720 = vmatpush1.bf16.msra.mxu0 %v4241
    %5721 = vmatprep.subr.bf16.mxu0 0
    %5722 = vmatpush1.bf16.msra.mxu0 %v4242
    %5723 = vmatprep.mubr.bf16.mxu0 %v1396
    %5724 = vmatmul.mubr.bf16.gmra.mrb[0].mxu0 %v1394
    %v5725 = vpop.f32.mrb[0].mxu0
    %v5726 = vadd.f32 %v5686, %v5725
    %v5727 = vpop.f32.mrb[0].mxu0
    %v5728 = vpop.f32.mrb[0].mxu0
    %v5729 = vpop.f32.mrb[0].mxu0
    %5730 = vdwg.mxu0
    %5731 = vmatprep.subr.bf16.mxu0 0
    %5732 = vmatpush1.bf16.msra.mxu0 %v4243
    %5733 = vmatprep.subr.bf16.mxu0 0
    %5734 = vmatpush1.bf16.msra.mxu0 %v4244
    %5735 = vmatprep.subr.bf16.mxu0 0
    %5736 = vmatpush1.bf16.msra.mxu0 %v4245
    %5737 = vmatprep.subr.bf16.mxu0 0
    %5738 = vmatpush1.bf16.msra.mxu0 %v4246
    %5739 = vmatprep.subr.bf16.mxu0 0
    %5740 = vmatpush1.bf16.msra.mxu0 %v4247
    %5741 = vmatprep.subr.bf16.mxu0 0
    %5742 = vmatpush1.bf16.msra.mxu0 %v4248
    %5743 = vmatprep.subr.bf16.mxu0 0
    %5744 = vmatpush1.bf16.msra.mxu0 %v4249
    %5745 = vmatprep.subr.bf16.mxu0 0
    %5746 = vmatpush1.bf16.msra.mxu0 %v4250
    %5747 = vmatprep.subr.bf16.mxu0 0
    %5748 = vmatpush1.bf16.msra.mxu0 %v4251
    %5749 = vmatprep.subr.bf16.mxu0 0
    %5750 = vmatpush1.bf16.msra.mxu0 %v4252
    %5751 = vmatprep.subr.bf16.mxu0 0
    %5752 = vmatpush1.bf16.msra.mxu0 %v4253
    %5753 = vmatprep.subr.bf16.mxu0 0
    %5754 = vmatpush1.bf16.msra.mxu0 %v4254
    %5755 = vmatprep.subr.bf16.mxu0 0
    %5756 = vmatpush1.bf16.msra.mxu0 %v4255
    %5757 = vmatprep.subr.bf16.mxu0 0
    %5758 = vmatpush1.bf16.msra.mxu0 %v4256
    %5759 = vmatprep.subr.bf16.mxu0 0
    %5760 = vmatpush1.bf16.msra.mxu0 %v4257
    %5761 = vmatprep.subr.bf16.mxu0 0
    %5762 = vmatpush1.bf16.msra.mxu0 %v4258
    %5763 = vmatprep.mubr.bf16.mxu0 %v1393
    %5764 = vmatmul.mubr.bf16.gmra.mrb[0].mxu0 %v1379
    %v5765 = vpop.f32.mrb[0].mxu0
    %v5766 = vadd.f32 %v5726, %v5765
    %v5767 = vpop.f32.mrb[0].mxu0
    %v5768 = vpop.f32.mrb[0].mxu0
    %v5769 = vpop.f32.mrb[0].mxu0
    %5770 = vdwg.mxu0
    %5771 = vmatprep.subr.bf16.mxu0 0
    %5772 = vmatpush1.bf16.msra.mxu0 %v4259
    %5773 = vmatprep.subr.bf16.mxu0 0
    %5774 = vmatpush1.bf16.msra.mxu0 %v4260
    %5775 = vmatprep.subr.bf16.mxu0 0
    %5776 = vmatpush1.bf16.msra.mxu0 %v4261
    %5777 = vmatprep.subr.bf16.mxu0 0
    %5778 = vmatpush1.bf16.msra.mxu0 %v4262
    %5779 = vmatprep.subr.bf16.mxu0 0
    %5780 = vmatpush1.bf16.msra.mxu0 %v4263
    %5781 = vmatprep.subr.bf16.mxu0 0
    %5782 = vmatpush1.bf16.msra.mxu0 %v4264
    %5783 = vmatprep.subr.bf16.mxu0 0
    %5784 = vmatpush1.bf16.msra.mxu0 %v4265
    %5785 = vmatprep.subr.bf16.mxu0 0
    %5786 = vmatpush1.bf16.msra.mxu0 %v4266
    %5787 = vmatprep.subr.bf16.mxu0 0
    %5788 = vmatpush1.bf16.msra.mxu0 %v4267
    %5789 = vmatprep.subr.bf16.mxu0 0
    %5790 = vmatpush1.bf16.msra.mxu0 %v4268
    %5791 = vmatprep.subr.bf16.mxu0 0
    %5792 = vmatpush1.bf16.msra.mxu0 %v4269
    %5793 = vmatprep.subr.bf16.mxu0 0
    %5794 = vmatpush1.bf16.msra.mxu0 %v4270
    %5795 = vmatprep.subr.bf16.mxu0 0
    %5796 = vmatpush1.bf16.msra.mxu0 %v4271
    %5797 = vmatprep.subr.bf16.mxu0 0
    %5798 = vmatpush1.bf16.msra.mxu0 %v4272
    %5799 = vmatprep.subr.bf16.mxu0 0
    %5800 = vmatpush1.bf16.msra.mxu0 %v4273
    %5801 = vmatprep.subr.bf16.mxu0 0
    %5802 = vmatpush1.bf16.msra.mxu0 %v4274
    %5803 = vmatprep.mubr.bf16.mxu0 %v1397
    %5804 = vmatmul.mubr.bf16.gmra.mrb[0].mxu0 %v1395
    %v5805 = vpop.f32.mrb[0].mxu0
    %v5806 = vadd.f32 %v5766, %v5805
    %v5807 = vpop.f32.mrb[0].mxu0
    %v5808 = vpop.f32.mrb[0].mxu0
    %v5809 = vpop.f32.mrb[0].mxu0
    %5810 = vdwg.mxu0
    %5811 = vmatprep.subr.bf16.mxu0 0
    %5812 = vmatpush1.bf16.msra.mxu0 %v4275
    %5813 = vmatprep.subr.bf16.mxu0 0
    %5814 = vmatpush1.bf16.msra.mxu0 %v4276
    %5815 = vmatprep.subr.bf16.mxu0 0
    %5816 = vmatpush1.bf16.msra.mxu0 %v4277
    %5817 = vmatprep.subr.bf16.mxu0 0
    %5818 = vmatpush1.bf16.msra.mxu0 %v4278
    %5819 = vmatprep.subr.bf16.mxu0 0
    %5820 = vmatpush1.bf16.msra.mxu0 %v4279
    %5821 = vmatprep.subr.bf16.mxu0 0
    %5822 = vmatpush1.bf16.msra.mxu0 %v4280
    %5823 = vmatprep.subr.bf16.mxu0 0
    %5824 = vmatpush1.bf16.msra.mxu0 %v4281
    %5825 = vmatprep.subr.bf16.mxu0 0
    %5826 = vmatpush1.bf16.msra.mxu0 %v4282
    %5827 = vmatprep.subr.bf16.mxu0 0
    %5828 = vmatpush1.bf16.msra.mxu0 %v4283
    %5829 = vmatprep.subr.bf16.mxu0 0
    %5830 = vmatpush1.bf16.msra.mxu0 %v4284
    %5831 = vmatprep.subr.bf16.mxu0 0
    %5832 = vmatpush1.bf16.msra.mxu0 %v4285
    %5833 = vmatprep.subr.bf16.mxu0 0
    %5834 = vmatpush1.bf16.msra.mxu0 %v4286
    %5835 = vmatprep.subr.bf16.mxu0 0
    %5836 = vmatpush1.bf16.msra.mxu0 %v4287
    %5837 = vmatprep.subr.bf16.mxu0 0
    %5838 = vmatpush1.bf16.msra.mxu0 %v4288
    %5839 = vmatprep.subr.bf16.mxu0 0
    %5840 = vmatpush1.bf16.msra.mxu0 %v4289
    %5841 = vmatprep.subr.bf16.mxu0 0
    %5842 = vmatpush1.bf16.msra.mxu0 %v4290
    %5843 = vmatprep.mubr.bf16.mxu0 %v1435
    %5844 = vmatmul.mubr.bf16.gmra.mrb[0].mxu0 %v1421
    %v5845 = vpop.f32.mrb[0].mxu0
    %v5846 = vadd.f32 %v5806, %v5845
    %v5847 = vpop.f32.mrb[0].mxu0
    %v5848 = vpop.f32.mrb[0].mxu0
    %v5849 = vpop.f32.mrb[0].mxu0
    %5850 = vdwg.mxu0
    %5851 = vmatprep.subr.bf16.mxu0 0
    %5852 = vmatpush1.bf16.msra.mxu0 %v4291
    %5853 = vmatprep.subr.bf16.mxu0 0
    %5854 = vmatpush1.bf16.msra.mxu0 %v4292
    %5855 = vmatprep.subr.bf16.mxu0 0
    %5856 = vmatpush1.bf16.msra.mxu0 %v4293
    %5857 = vmatprep.subr.bf16.mxu0 0
    %5858 = vmatpush1.bf16.msra.mxu0 %v4294
    %5859 = vmatprep.subr.bf16.mxu0 0
    %5860 = vmatpush1.bf16.msra.mxu0 %v4295
    %5861 = vmatprep.subr.bf16.mxu0 0
    %5862 = vmatpush1.bf16.msra.mxu0 %v4296
    %5863 = vmatprep.subr.bf16.mxu0 0
    %5864 = vmatpush1.bf16.msra.mxu0 %v4297
    %5865 = vmatprep.subr.bf16.mxu0 0
    %5866 = vmatpush1.bf16.msra.mxu0 %v4298
    %5867 = vmatprep.subr.bf16.mxu0 0
    %5868 = vmatpush1.bf16.msra.mxu0 %v4299
    %5869 = vmatprep.subr.bf16.mxu0 0
    %5870 = vmatpush1.bf16.msra.mxu0 %v4300
    %5871 = vmatprep.subr.bf16.mxu0 0
    %5872 = vmatpush1.bf16.msra.mxu0 %v4301
    %5873 = vmatprep.subr.bf16.mxu0 0
    %5874 = vmatpush1.bf16.msra.mxu0 %v4302
    %5875 = vmatprep.subr.bf16.mxu0 0
    %5876 = vmatpush1.bf16.msra.mxu0 %v4303
    %5877 = vmatprep.subr.bf16.mxu0 0
    %5878 = vmatpush1.bf16.msra.mxu0 %v4304
    %5879 = vmatprep.subr.bf16.mxu0 0
    %5880 = vmatpush1.bf16.msra.mxu0 %v4305
    %5881 = vmatprep.subr.bf16.mxu0 0
    %5882 = vmatpush1.bf16.msra.mxu0 %v4306
    %5883 = vmatprep.mubr.bf16.mxu0 %v1445
    %5884 = vmatmul.mubr.bf16.gmra.mrb[0].mxu0 %v1443
    %v5885 = vpop.f32.mrb[0].mxu0
    %v5886 = vadd.f32 %v5846, %v5885
    %v5887 = vpop.f32.mrb[0].mxu0
    %v5888 = vpop.f32.mrb[0].mxu0
    %v5889 = vpop.f32.mrb[0].mxu0
    %5890 = vdwg.mxu0
    %5891 = vmatprep.subr.bf16.mxu0 0
    %5892 = vmatpush1.bf16.msra.mxu0 %v4307
    %5893 = vmatprep.subr.bf16.mxu0 0
    %5894 = vmatpush1.bf16.msra.mxu0 %v4308
    %5895 = vmatprep.subr.bf16.mxu0 0
    %5896 = vmatpush1.bf16.msra.mxu0 %v4309
    %5897 = vmatprep.subr.bf16.mxu0 0
    %5898 = vmatpush1.bf16.msra.mxu0 %v4310
    %5899 = vmatprep.subr.bf16.mxu0 0
    %5900 = vmatpush1.bf16.msra.mxu0 %v4311
    %5901 = vmatprep.subr.bf16.mxu0 0
    %5902 = vmatpush1.bf16.msra.mxu0 %v4312
    %5903 = vmatprep.subr.bf16.mxu0 0
    %5904 = vmatpush1.bf16.msra.mxu0 %v4313
    %5905 = vmatprep.subr.bf16.mxu0 0
    %5906 = vmatpush1.bf16.msra.mxu0 %v4314
    %5907 = vmatprep.subr.bf16.mxu0 0
    %5908 = vmatpush1.bf16.msra.mxu0 %v4315
    %5909 = vmatprep.subr.bf16.mxu0 0
    %5910 = vmatpush1.bf16.msra.mxu0 %v4316
    %5911 = vmatprep.subr.bf16.mxu0 0
    %5912 = vmatpush1.bf16.msra.mxu0 %v4317
    %5913 = vmatprep.subr.bf16.mxu0 0
    %5914 = vmatpush1.bf16.msra.mxu0 %v4318
    %5915 = vmatprep.subr.bf16.mxu0 0
    %5916 = vmatpush1.bf16.msra.mxu0 %v4319
    %5917 = vmatprep.subr.bf16.mxu0 0
    %5918 = vmatpush1.bf16.msra.mxu0 %v4320
    %5919 = vmatprep.subr.bf16.mxu0 0
    %5920 = vmatpush1.bf16.msra.mxu0 %v4321
    %5921 = vmatprep.subr.bf16.mxu0 0
    %5922 = vmatpush1.bf16.msra.mxu0 %v4322
    %5923 = vmatprep.mubr.bf16.mxu0 %v1442
    %5924 = vmatmul.mubr.bf16.gmra.mrb[0].mxu0 %v1428
    %v5925 = vpop.f32.mrb[0].mxu0
    %v5926 = vadd.f32 %v5886, %v5925
    %v5927 = vpop.f32.mrb[0].mxu0
    %v5928 = vpop.f32.mrb[0].mxu0
    %v5929 = vpop.f32.mrb[0].mxu0
    %5930 = vdwg.mxu0
    %5931 = vmatprep.subr.bf16.mxu0 0
    %5932 = vmatpush1.bf16.msra.mxu0 %v4323
    %5933 = vmatprep.subr.bf16.mxu0 0
    %5934 = vmatpush1.bf16.msra.mxu0 %v4324
    %5935 = vmatprep.subr.bf16.mxu0 0
    %5936 = vmatpush1.bf16.msra.mxu0 %v4325
    %5937 = vmatprep.subr.bf16.mxu0 0
    %5938 = vmatpush1.bf16.msra.mxu0 %v4326
    %5939 = vmatprep.subr.bf16.mxu0 0
    %5940 = vmatpush1.bf16.msra.mxu0 %v4327
    %5941 = vmatprep.subr.bf16.mxu0 0
    %5942 = vmatpush1.bf16.msra.mxu0 %v4328
    %5943 = vmatprep.subr.bf16.mxu0 0
    %5944 = vmatpush1.bf16.msra.mxu0 %v4329
    %5945 = vmatprep.subr.bf16.mxu0 0
    %5946 = vmatpush1.bf16.msra.mxu0 %v4330
    %5947 = vmatprep.subr.bf16.mxu0 0
    %5948 = vmatpush1.bf16.msra.mxu0 %v4331
    %5949 = vmatprep.subr.bf16.mxu0 0
    %5950 = vmatpush1.bf16.msra.mxu0 %v4332
    %5951 = vmatprep.subr.bf16.mxu0 0
    %5952 = vmatpush1.bf16.msra.mxu0 %v4333
    %5953 = vmatprep.subr.bf16.mxu0 0
    %5954 = vmatpush1.bf16.msra.mxu0 %v4334
    %5955 = vmatprep.subr.bf16.mxu0 0
    %5956 = vmatpush1.bf16.msra.mxu0 %v4335
    %5957 = vmatprep.subr.bf16.mxu0 0
    %5958 = vmatpush1.bf16.msra.mxu0 %v4336
    %5959 = vmatprep.subr.bf16.mxu0 0
    %5960 = vmatpush1.bf16.msra.mxu0 %v4337
    %5961 = vmatprep.subr.bf16.mxu0 0
    %5962 = vmatpush1.bf16.msra.mxu0 %v4338
    %5963 = vmatprep.mubr.bf16.mxu0 %v1446
    %5964 = vmatmul.mubr.bf16.gmra.mrb[0].mxu0 %v1444
    %v5965 = vpop.f32.mrb[0].mxu0
    %v5966 = vadd.f32 %v5926, %v5965
    %v5967 = vpop.f32.mrb[0].mxu0
    %v5968 = vpop.f32.mrb[0].mxu0
    %v5969 = vpop.f32.mrb[0].mxu0
    %5970 = vdwg.mxu0
    %5971 = vmatprep.subr.bf16.mxu0 0
    %5972 = vmatpush1.bf16.msra.mxu0 %v4339
    %5973 = vmatprep.subr.bf16.mxu0 0
    %5974 = vmatpush1.bf16.msra.mxu0 %v4340
    %5975 = vmatprep.subr.bf16.mxu0 0
    %5976 = vmatpush1.bf16.msra.mxu0 %v4341
    %5977 = vmatprep.subr.bf16.mxu0 0
    %5978 = vmatpush1.bf16.msra.mxu0 %v4342
    %5979 = vmatprep.subr.bf16.mxu0 0
    %5980 = vmatpush1.bf16.msra.mxu0 %v4343
    %5981 = vmatprep.subr.bf16.mxu0 0
    %5982 = vmatpush1.bf16.msra.mxu0 %v4344
    %5983 = vmatprep.subr.bf16.mxu0 0
    %5984 = vmatpush1.bf16.msra.mxu0 %v4345
    %5985 = vmatprep.subr.bf16.mxu0 0
    %5986 = vmatpush1.bf16.msra.mxu0 %v4346
    %5987 = vmatprep.subr.bf16.mxu0 0
    %5988 = vmatpush1.bf16.msra.mxu0 %v4347
    %5989 = vmatprep.subr.bf16.mxu0 0
    %5990 = vmatpush1.bf16.msra.mxu0 %v4348
    %5991 = vmatprep.subr.bf16.mxu0 0
    %5992 = vmatpush1.bf16.msra.mxu0 %v4349
    %5993 = vmatprep.subr.bf16.mxu0 0
    %5994 = vmatpush1.bf16.msra.mxu0 %v4350
    %5995 = vmatprep.subr.bf16.mxu0 0
    %5996 = vmatpush1.bf16.msra.mxu0 %v4351
    %5997 = vmatprep.subr.bf16.mxu0 0
    %5998 = vmatpush1.bf16.msra.mxu0 %v4352
    %5999 = vmatprep.subr.bf16.mxu0 0
    %6000 = vmatpush1.bf16.msra.mxu0 %v4353
    %6001 = vmatprep.subr.bf16.mxu0 0
    %6002 = vmatpush1.bf16.msra.mxu0 %v4354
    %6003 = vmatprep.mubr.bf16.mxu0 %v1484
    %6004 = vmatmul.mubr.bf16.gmra.mrb[0].mxu0 %v1470
    %v6005 = vpop.f32.mrb[0].mxu0
    %v6006 = vadd.f32 %v5966, %v6005
    %v6007 = vpop.f32.mrb[0].mxu0
    %v6008 = vpop.f32.mrb[0].mxu0
    %v6009 = vpop.f32.mrb[0].mxu0
    %6010 = vdwg.mxu0
    %6011 = vmatprep.subr.bf16.mxu0 0
    %6012 = vmatpush1.bf16.msra.mxu0 %v4355
    %6013 = vmatprep.subr.bf16.mxu0 0
    %6014 = vmatpush1.bf16.msra.mxu0 %v4356
    %6015 = vmatprep.subr.bf16.mxu0 0
    %6016 = vmatpush1.bf16.msra.mxu0 %v4357
    %6017 = vmatprep.subr.bf16.mxu0 0
    %6018 = vmatpush1.bf16.msra.mxu0 %v4358
    %6019 = vmatprep.subr.bf16.mxu0 0
    %6020 = vmatpush1.bf16.msra.mxu0 %v4359
    %6021 = vmatprep.subr.bf16.mxu0 0
    %6022 = vmatpush1.bf16.msra.mxu0 %v4360
    %6023 = vmatprep.subr.bf16.mxu0 0
    %6024 = vmatpush1.bf16.msra.mxu0 %v4361
    %6025 = vmatprep.subr.bf16.mxu0 0
    %6026 = vmatpush1.bf16.msra.mxu0 %v4362
    %6027 = vmatprep.subr.bf16.mxu0 0
    %6028 = vmatpush1.bf16.msra.mxu0 %v4363
    %6029 = vmatprep.subr.bf16.mxu0 0
    %6030 = vmatpush1.bf16.msra.mxu0 %v4364
    %6031 = vmatprep.subr.bf16.mxu0 0
    %6032 = vmatpush1.bf16.msra.mxu0 %v4365
    %6033 = vmatprep.subr.bf16.mxu0 0
    %6034 = vmatpush1.bf16.msra.mxu0 %v4366
    %6035 = vmatprep.subr.bf16.mxu0 0
    %6036 = vmatpush1.bf16.msra.mxu0 %v4367
    %6037 = vmatprep.subr.bf16.mxu0 0
    %6038 = vmatpush1.bf16.msra.mxu0 %v4368
    %6039 = vmatprep.subr.bf16.mxu0 0
    %6040 = vmatpush1.bf16.msra.mxu0 %v4369
    %6041 = vmatprep.subr.bf16.mxu0 0
    %6042 = vmatpush1.bf16.msra.mxu0 %v4370
    %6043 = vmatprep.mubr.bf16.mxu0 %v1494
    %6044 = vmatmul.mubr.bf16.gmra.mrb[0].mxu0 %v1492
    %v6045 = vpop.f32.mrb[0].mxu0
    %v6046 = vadd.f32 %v6006, %v6045
    %v6047 = vpop.f32.mrb[0].mxu0
    %v6048 = vpop.f32.mrb[0].mxu0
    %v6049 = vpop.f32.mrb[0].mxu0
    %6050 = vdwg.mxu0
    %6051 = vmatprep.subr.bf16.mxu0 0
    %6052 = vmatpush1.bf16.msra.mxu0 %v4371
    %6053 = vmatprep.subr.bf16.mxu0 0
    %6054 = vmatpush1.bf16.msra.mxu0 %v4372
    %6055 = vmatprep.subr.bf16.mxu0 0
    %6056 = vmatpush1.bf16.msra.mxu0 %v4373
    %6057 = vmatprep.subr.bf16.mxu0 0
    %6058 = vmatpush1.bf16.msra.mxu0 %v4374
    %6059 = vmatprep.subr.bf16.mxu0 0
    %6060 = vmatpush1.bf16.msra.mxu0 %v4375
    %6061 = vmatprep.subr.bf16.mxu0 0
    %6062 = vmatpush1.bf16.msra.mxu0 %v4376
    %6063 = vmatprep.subr.bf16.mxu0 0
    %6064 = vmatpush1.bf16.msra.mxu0 %v4377
    %6065 = vmatprep.subr.bf16.mxu0 0
    %6066 = vmatpush1.bf16.msra.mxu0 %v4378
    %6067 = vmatprep.subr.bf16.mxu0 0
    %6068 = vmatpush1.bf16.msra.mxu0 %v4379
    %6069 = vmatprep.subr.bf16.mxu0 0
    %6070 = vmatpush1.bf16.msra.mxu0 %v4380
    %6071 = vmatprep.subr.bf16.mxu0 0
    %6072 = vmatpush1.bf16.msra.mxu0 %v4381
    %6073 = vmatprep.subr.bf16.mxu0 0
    %6074 = vmatpush1.bf16.msra.mxu0 %v4382
    %6075 = vmatprep.subr.bf16.mxu0 0
    %6076 = vmatpush1.bf16.msra.mxu0 %v4383
    %6077 = vmatprep.subr.bf16.mxu0 0
    %6078 = vmatpush1.bf16.msra.mxu0 %v4384
    %6079 = vmatprep.subr.bf16.mxu0 0
    %6080 = vmatpush1.bf16.msra.mxu0 %v4385
    %6081 = vmatprep.subr.bf16.mxu0 0
    %6082 = vmatpush1.bf16.msra.mxu0 %v4386
    %6083 = vmatprep.mubr.bf16.mxu0 %v1491
    %6084 = vmatmul.mubr.bf16.gmra.mrb[0].mxu0 %v1477
    %v6085 = vpop.f32.mrb[0].mxu0
    %v6086 = vadd.f32 %v6046, %v6085
    %v6087 = vpop.f32.mrb[0].mxu0
    %v6088 = vpop.f32.mrb[0].mxu0
    %v6089 = vpop.f32.mrb[0].mxu0
    %6090 = vdwg.mxu0
    %6091 = vmatprep.subr.bf16.mxu0 0
    %6092 = vmatpush1.bf16.msra.mxu0 %v4387
    %6093 = vmatprep.subr.bf16.mxu0 0
    %6094 = vmatpush1.bf16.msra.mxu0 %v4388
    %6095 = vmatprep.subr.bf16.mxu0 0
    %6096 = vmatpush1.bf16.msra.mxu0 %v4389
    %6097 = vmatprep.subr.bf16.mxu0 0
    %6098 = vmatpush1.bf16.msra.mxu0 %v4390
    %6099 = vmatprep.subr.bf16.mxu0 0
    %6100 = vmatpush1.bf16.msra.mxu0 %v4391
    %6101 = vmatprep.subr.bf16.mxu0 0
    %6102 = vmatpush1.bf16.msra.mxu0 %v4392
    %6103 = vmatprep.subr.bf16.mxu0 0
    %6104 = vmatpush1.bf16.msra.mxu0 %v4393
    %6105 = vmatprep.subr.bf16.mxu0 0
    %6106 = vmatpush1.bf16.msra.mxu0 %v4394
    %6107 = vmatprep.subr.bf16.mxu0 0
    %6108 = vmatpush1.bf16.msra.mxu0 %v4395
    %6109 = vmatprep.subr.bf16.mxu0 0
    %6110 = vmatpush1.bf16.msra.mxu0 %v4396
    %6111 = vmatprep.subr.bf16.mxu0 0
    %6112 = vmatpush1.bf16.msra.mxu0 %v4397
    %6113 = vmatprep.subr.bf16.mxu0 0
    %6114 = vmatpush1.bf16.msra.mxu0 %v4398
    %6115 = vmatprep.subr.bf16.mxu0 0
    %6116 = vmatpush1.bf16.msra.mxu0 %v4399
    %6117 = vmatprep.subr.bf16.mxu0 0
    %6118 = vmatpush1.bf16.msra.mxu0 %v4400
    %6119 = vmatprep.subr.bf16.mxu0 0
    %6120 = vmatpush1.bf16.msra.mxu0 %v4401
    %6121 = vmatprep.subr.bf16.mxu0 0
    %6122 = vmatpush1.bf16.msra.mxu0 %v4402
    %6123 = vmatprep.mubr.bf16.mxu0 %v1495
    %6124 = vmatmul.mubr.bf16.gmra.mrb[0].mxu0 %v1493
    %v6125 = vpop.f32.mrb[0].mxu0
    %v6126 = vadd.f32 %v6086, %v6125
    %v6127 = vpop.f32.mrb[0].mxu0
    %v6128 = vpop.f32.mrb[0].mxu0
    %v6129 = vpop.f32.mrb[0].mxu0
    %6130 = vdwg.mxu0
    %6131 = vmatprep.subr.bf16.mxu0 0
    %6132 = vmatpush1.bf16.msra.mxu0 %v4403
    %6133 = vmatprep.subr.bf16.mxu0 0
    %6134 = vmatpush1.bf16.msra.mxu0 %v4404
    %6135 = vmatprep.subr.bf16.mxu0 0
    %6136 = vmatpush1.bf16.msra.mxu0 %v4405
    %6137 = vmatprep.subr.bf16.mxu0 0
    %6138 = vmatpush1.bf16.msra.mxu0 %v4406
    %6139 = vmatprep.subr.bf16.mxu0 0
    %6140 = vmatpush1.bf16.msra.mxu0 %v4407
    %6141 = vmatprep.subr.bf16.mxu0 0
    %6142 = vmatpush1.bf16.msra.mxu0 %v4408
    %6143 = vmatprep.subr.bf16.mxu0 0
    %6144 = vmatpush1.bf16.msra.mxu0 %v4409
    %6145 = vmatprep.subr.bf16.mxu0 0
    %6146 = vmatpush1.bf16.msra.mxu0 %v4410
    %6147 = vmatprep.subr.bf16.mxu0 0
    %6148 = vmatpush1.bf16.msra.mxu0 %v4411
    %6149 = vmatprep.subr.bf16.mxu0 0
    %6150 = vmatpush1.bf16.msra.mxu0 %v4412
    %6151 = vmatprep.subr.bf16.mxu0 0
    %6152 = vmatpush1.bf16.msra.mxu0 %v4413
    %6153 = vmatprep.subr.bf16.mxu0 0
    %6154 = vmatpush1.bf16.msra.mxu0 %v4414
    %6155 = vmatprep.subr.bf16.mxu0 0
    %6156 = vmatpush1.bf16.msra.mxu0 %v4415
    %6157 = vmatprep.subr.bf16.mxu0 0
    %6158 = vmatpush1.bf16.msra.mxu0 %v4416
    %6159 = vmatprep.subr.bf16.mxu0 0
    %6160 = vmatpush1.bf16.msra.mxu0 %v4417
    %6161 = vmatprep.subr.bf16.mxu0 0
    %6162 = vmatpush1.bf16.msra.mxu0 %v4418
    %6163 = vmatprep.mubr.bf16.mxu0 %v1533
    %6164 = vmatmul.mubr.bf16.gmra.mrb[0].mxu0 %v1519
    %v6165 = vpop.f32.mrb[0].mxu0
    %v6166 = vadd.f32 %v6126, %v6165
    %v6167 = vpop.f32.mrb[0].mxu0
    %v6168 = vpop.f32.mrb[0].mxu0
    %v6169 = vpop.f32.mrb[0].mxu0
    %6170 = vdwg.mxu0
    %6171 = vmatprep.subr.bf16.mxu0 0
    %6172 = vmatpush1.bf16.msra.mxu0 %v4419
    %6173 = vmatprep.subr.bf16.mxu0 0
    %6174 = vmatpush1.bf16.msra.mxu0 %v4420
    %6175 = vmatprep.subr.bf16.mxu0 0
    %6176 = vmatpush1.bf16.msra.mxu0 %v4421
    %6177 = vmatprep.subr.bf16.mxu0 0
    %6178 = vmatpush1.bf16.msra.mxu0 %v4422
    %6179 = vmatprep.subr.bf16.mxu0 0
    %6180 = vmatpush1.bf16.msra.mxu0 %v4423
    %6181 = vmatprep.subr.bf16.mxu0 0
    %6182 = vmatpush1.bf16.msra.mxu0 %v4424
    %6183 = vmatprep.subr.bf16.mxu0 0
    %6184 = vmatpush1.bf16.msra.mxu0 %v4425
    %6185 = vmatprep.subr.bf16.mxu0 0
    %6186 = vmatpush1.bf16.msra.mxu0 %v4426
    %6187 = vmatprep.subr.bf16.mxu0 0
    %6188 = vmatpush1.bf16.msra.mxu0 %v4427
    %6189 = vmatprep.subr.bf16.mxu0 0
    %6190 = vmatpush1.bf16.msra.mxu0 %v4428
    %6191 = vmatprep.subr.bf16.mxu0 0
    %6192 = vmatpush1.bf16.msra.mxu0 %v4429
    %6193 = vmatprep.subr.bf16.mxu0 0
    %6194 = vmatpush1.bf16.msra.mxu0 %v4430
    %6195 = vmatprep.subr.bf16.mxu0 0
    %6196 = vmatpush1.bf16.msra.mxu0 %v4431
    %6197 = vmatprep.subr.bf16.mxu0 0
    %6198 = vmatpush1.bf16.msra.mxu0 %v4432
    %6199 = vmatprep.subr.bf16.mxu0 0
    %6200 = vmatpush1.bf16.msra.mxu0 %v4433
    %6201 = vmatprep.subr.bf16.mxu0 0
    %6202 = vmatpush1.bf16.msra.mxu0 %v4434
    %6203 = vmatprep.mubr.bf16.mxu0 %v1543
    %6204 = vmatmul.mubr.bf16.gmra.mrb[0].mxu0 %v1541
    %v6205 = vpop.f32.mrb[0].mxu0
    %v6206 = vadd.f32 %v6166, %v6205
    %v6207 = vpop.f32.mrb[0].mxu0
    %v6208 = vpop.f32.mrb[0].mxu0
    %v6209 = vpop.f32.mrb[0].mxu0
    %6210 = vdwg.mxu0
    %6211 = vmatprep.subr.bf16.mxu0 0
    %6212 = vmatpush1.bf16.msra.mxu0 %v4435
    %6213 = vmatprep.subr.bf16.mxu0 0
    %6214 = vmatpush1.bf16.msra.mxu0 %v4436
    %6215 = vmatprep.subr.bf16.mxu0 0
    %6216 = vmatpush1.bf16.msra.mxu0 %v4437
    %6217 = vmatprep.subr.bf16.mxu0 0
    %6218 = vmatpush1.bf16.msra.mxu0 %v4438
    %6219 = vmatprep.subr.bf16.mxu0 0
    %6220 = vmatpush1.bf16.msra.mxu0 %v4439
    %6221 = vmatprep.subr.bf16.mxu0 0
    %6222 = vmatpush1.bf16.msra.mxu0 %v4440
    %6223 = vmatprep.subr.bf16.mxu0 0
    %6224 = vmatpush1.bf16.msra.mxu0 %v4441
    %6225 = vmatprep.subr.bf16.mxu0 0
    %6226 = vmatpush1.bf16.msra.mxu0 %v4442
    %6227 = vmatprep.subr.bf16.mxu0 0
    %6228 = vmatpush1.bf16.msra.mxu0 %v4443
    %6229 = vmatprep.subr.bf16.mxu0 0
    %6230 = vmatpush1.bf16.msra.mxu0 %v4444
    %6231 = vmatprep.subr.bf16.mxu0 0
    %6232 = vmatpush1.bf16.msra.mxu0 %v4445
    %6233 = vmatprep.subr.bf16.mxu0 0
    %6234 = vmatpush1.bf16.msra.mxu0 %v4446
    %6235 = vmatprep.subr.bf16.mxu0 0
    %6236 = vmatpush1.bf16.msra.mxu0 %v4447
    %6237 = vmatprep.subr.bf16.mxu0 0
    %6238 = vmatpush1.bf16.msra.mxu0 %v4448
    %6239 = vmatprep.subr.bf16.mxu0 0
    %6240 = vmatpush1.bf16.msra.mxu0 %v4449
    %6241 = vmatprep.subr.bf16.mxu0 0
    %6242 = vmatpush1.bf16.msra.mxu0 %v4450
    %6243 = vmatprep.mubr.bf16.mxu0 %v1540
    %6244 = vmatmul.mubr.bf16.gmra.mrb[0].mxu0 %v1526
    %v6245 = vpop.f32.mrb[0].mxu0
    %v6246 = vadd.f32 %v6206, %v6245
    %v6247 = vpop.f32.mrb[0].mxu0
    %v6248 = vpop.f32.mrb[0].mxu0
    %v6249 = vpop.f32.mrb[0].mxu0
    %6250 = vdwg.mxu0
    %6251 = vmatprep.subr.bf16.mxu0 0
    %6252 = vmatpush1.bf16.msra.mxu0 %v4451
    %6253 = vmatprep.subr.bf16.mxu0 0
    %6254 = vmatpush1.bf16.msra.mxu0 %v4452
    %6255 = vmatprep.subr.bf16.mxu0 0
    %6256 = vmatpush1.bf16.msra.mxu0 %v4453
    %6257 = vmatprep.subr.bf16.mxu0 0
    %6258 = vmatpush1.bf16.msra.mxu0 %v4454
    %6259 = vmatprep.subr.bf16.mxu0 0
    %6260 = vmatpush1.bf16.msra.mxu0 %v4455
    %6261 = vmatprep.subr.bf16.mxu0 0
    %6262 = vmatpush1.bf16.msra.mxu0 %v4456
    %6263 = vmatprep.subr.bf16.mxu0 0
    %6264 = vmatpush1.bf16.msra.mxu0 %v4457
    %6265 = vmatprep.subr.bf16.mxu0 0
    %6266 = vmatpush1.bf16.msra.mxu0 %v4458
    %6267 = vmatprep.subr.bf16.mxu0 0
    %6268 = vmatpush1.bf16.msra.mxu0 %v4459
    %6269 = vmatprep.subr.bf16.mxu0 0
    %6270 = vmatpush1.bf16.msra.mxu0 %v4460
    %6271 = vmatprep.subr.bf16.mxu0 0
    %6272 = vmatpush1.bf16.msra.mxu0 %v4461
    %6273 = vmatprep.subr.bf16.mxu0 0
    %6274 = vmatpush1.bf16.msra.mxu0 %v4462
    %6275 = vmatprep.subr.bf16.mxu0 0
    %6276 = vmatpush1.bf16.msra.mxu0 %v4463
    %6277 = vmatprep.subr.bf16.mxu0 0
    %6278 = vmatpush1.bf16.msra.mxu0 %v4464
    %6279 = vmatprep.subr.bf16.mxu0 0
    %6280 = vmatpush1.bf16.msra.mxu0 %v4465
    %6281 = vmatprep.subr.bf16.mxu0 0
    %6282 = vmatpush1.bf16.msra.mxu0 %v4466
    %6283 = vmatprep.mubr.bf16.mxu0 %v1544
    %6284 = vmatmul.mubr.bf16.gmra.mrb[0].mxu0 %v1542
    %v6285 = vpop.f32.mrb[0].mxu0
    %v6286 = vadd.f32 %v6246, %v6285
    %v6287 = vpop.f32.mrb[0].mxu0
    %v6288 = vpop.f32.mrb[0].mxu0
    %v6289 = vpop.f32.mrb[0].mxu0
    %6290 = vdwg.mxu0
    %6291 = vmatprep.subr.bf16.mxu0 0
    %6292 = vmatpush1.bf16.msra.mxu0 %v4467
    %6293 = vmatprep.subr.bf16.mxu0 0
    %6294 = vmatpush1.bf16.msra.mxu0 %v4468
    %6295 = vmatprep.subr.bf16.mxu0 0
    %6296 = vmatpush1.bf16.msra.mxu0 %v4469
    %6297 = vmatprep.subr.bf16.mxu0 0
    %6298 = vmatpush1.bf16.msra.mxu0 %v4470
    %6299 = vmatprep.subr.bf16.mxu0 0
    %6300 = vmatpush1.bf16.msra.mxu0 %v4471
    %6301 = vmatprep.subr.bf16.mxu0 0
    %6302 = vmatpush1.bf16.msra.mxu0 %v4472
    %6303 = vmatprep.subr.bf16.mxu0 0
    %6304 = vmatpush1.bf16.msra.mxu0 %v4473
    %6305 = vmatprep.subr.bf16.mxu0 0
    %6306 = vmatpush1.bf16.msra.mxu0 %v4474
    %6307 = vmatprep.subr.bf16.mxu0 0
    %6308 = vmatpush1.bf16.msra.mxu0 %v4475
    %6309 = vmatprep.subr.bf16.mxu0 0
    %6310 = vmatpush1.bf16.msra.mxu0 %v4476
    %6311 = vmatprep.subr.bf16.mxu0 0
    %6312 = vmatpush1.bf16.msra.mxu0 %v4477
    %6313 = vmatprep.subr.bf16.mxu0 0
    %6314 = vmatpush1.bf16.msra.mxu0 %v4478
    %6315 = vmatprep.subr.bf16.mxu0 0
    %6316 = vmatpush1.bf16.msra.mxu0 %v4479
    %6317 = vmatprep.subr.bf16.mxu0 0
    %6318 = vmatpush1.bf16.msra.mxu0 %v4480
    %6319 = vmatprep.subr.bf16.mxu0 0
    %6320 = vmatpush1.bf16.msra.mxu0 %v4481
    %6321 = vmatprep.subr.bf16.mxu0 0
    %6322 = vmatpush1.bf16.msra.mxu0 %v4482
    %6323 = vmatprep.mubr.bf16.mxu0 %v1582
    %6324 = vmatmul.mubr.bf16.gmra.mrb[0].mxu0 %v1568
    %v6325 = vpop.f32.mrb[0].mxu0
    %v6326 = vadd.f32 %v6286, %v6325
    %v6327 = vpop.f32.mrb[0].mxu0
    %v6328 = vpop.f32.mrb[0].mxu0
    %v6329 = vpop.f32.mrb[0].mxu0
    %6330 = vdwg.mxu0
    %6331 = vmatprep.subr.bf16.mxu0 0
    %6332 = vmatpush1.bf16.msra.mxu0 %v4483
    %6333 = vmatprep.subr.bf16.mxu0 0
    %6334 = vmatpush1.bf16.msra.mxu0 %v4484
    %6335 = vmatprep.subr.bf16.mxu0 0
    %6336 = vmatpush1.bf16.msra.mxu0 %v4485
    %6337 = vmatprep.subr.bf16.mxu0 0
    %6338 = vmatpush1.bf16.msra.mxu0 %v4486
    %6339 = vmatprep.subr.bf16.mxu0 0
    %6340 = vmatpush1.bf16.msra.mxu0 %v4487
    %6341 = vmatprep.subr.bf16.mxu0 0
    %6342 = vmatpush1.bf16.msra.mxu0 %v4488
    %6343 = vmatprep.subr.bf16.mxu0 0
    %6344 = vmatpush1.bf16.msra.mxu0 %v4489
    %6345 = vmatprep.subr.bf16.mxu0 0
    %6346 = vmatpush1.bf16.msra.mxu0 %v4490
    %6347 = vmatprep.subr.bf16.mxu0 0
    %6348 = vmatpush1.bf16.msra.mxu0 %v4491
    %6349 = vmatprep.subr.bf16.mxu0 0
    %6350 = vmatpush1.bf16.msra.mxu0 %v4492
    %6351 = vmatprep.subr.bf16.mxu0 0
    %6352 = vmatpush1.bf16.msra.mxu0 %v4493
    %6353 = vmatprep.subr.bf16.mxu0 0
    %6354 = vmatpush1.bf16.msra.mxu0 %v4494
    %6355 = vmatprep.subr.bf16.mxu0 0
    %6356 = vmatpush1.bf16.msra.mxu0 %v4495
    %6357 = vmatprep.subr.bf16.mxu0 0
    %6358 = vmatpush1.bf16.msra.mxu0 %v4496
    %6359 = vmatprep.subr.bf16.mxu0 0
    %6360 = vmatpush1.bf16.msra.mxu0 %v4497
    %6361 = vmatprep.subr.bf16.mxu0 0
    %6362 = vmatpush1.bf16.msra.mxu0 %v4498
    %6363 = vmatprep.mubr.bf16.mxu0 %v1592
    %6364 = vmatmul.mubr.bf16.gmra.mrb[0].mxu0 %v1590
    %v6365 = vpop.f32.mrb[0].mxu0
    %v6366 = vadd.f32 %v6326, %v6365
    %v6367 = vpop.f32.mrb[0].mxu0
    %v6368 = vpop.f32.mrb[0].mxu0
    %v6369 = vpop.f32.mrb[0].mxu0
    %6370 = vdwg.mxu0
    %6371 = vmatprep.subr.bf16.mxu0 0
    %6372 = vmatpush1.bf16.msra.mxu0 %v4499
    %6373 = vmatprep.subr.bf16.mxu0 0
    %6374 = vmatpush1.bf16.msra.mxu0 %v4500
    %6375 = vmatprep.subr.bf16.mxu0 0
    %6376 = vmatpush1.bf16.msra.mxu0 %v4501
    %6377 = vmatprep.subr.bf16.mxu0 0
    %6378 = vmatpush1.bf16.msra.mxu0 %v4502
    %6379 = vmatprep.subr.bf16.mxu0 0
    %6380 = vmatpush1.bf16.msra.mxu0 %v4503
    %6381 = vmatprep.subr.bf16.mxu0 0
    %6382 = vmatpush1.bf16.msra.mxu0 %v4504
    %6383 = vmatprep.subr.bf16.mxu0 0
    %6384 = vmatpush1.bf16.msra.mxu0 %v4505
    %6385 = vmatprep.subr.bf16.mxu0 0
    %6386 = vmatpush1.bf16.msra.mxu0 %v4506
    %6387 = vmatprep.subr.bf16.mxu0 0
    %6388 = vmatpush1.bf16.msra.mxu0 %v4507
    %6389 = vmatprep.subr.bf16.mxu0 0
    %6390 = vmatpush1.bf16.msra.mxu0 %v4508
    %6391 = vmatprep.subr.bf16.mxu0 0
    %6392 = vmatpush1.bf16.msra.mxu0 %v4509
    %6393 = vmatprep.subr.bf16.mxu0 0
    %6394 = vmatpush1.bf16.msra.mxu0 %v4510
    %6395 = vmatprep.subr.bf16.mxu0 0
    %6396 = vmatpush1.bf16.msra.mxu0 %v4511
    %6397 = vmatprep.subr.bf16.mxu0 0
    %6398 = vmatpush1.bf16.msra.mxu0 %v4512
    %6399 = vmatprep.subr.bf16.mxu0 0
    %6400 = vmatpush1.bf16.msra.mxu0 %v4513
    %6401 = vmatprep.subr.bf16.mxu0 0
    %6402 = vmatpush1.bf16.msra.mxu0 %v4514
    %6403 = vmatprep.mubr.bf16.mxu0 %v1589
    %6404 = vmatmul.mubr.bf16.gmra.mrb[0].mxu0 %v1575
    %v6405 = vpop.f32.mrb[0].mxu0
    %v6406 = vadd.f32 %v6366, %v6405
    %v6407 = vpop.f32.mrb[0].mxu0
    %v6408 = vpop.f32.mrb[0].mxu0
    %v6409 = vpop.f32.mrb[0].mxu0
    %6410 = vdwg.mxu0
    %6411 = vmatprep.subr.bf16.mxu0 0
    %6412 = vmatpush1.bf16.msra.mxu0 %v4515
    %6413 = vmatprep.subr.bf16.mxu0 0
    %6414 = vmatpush1.bf16.msra.mxu0 %v4516
    %6415 = vmatprep.subr.bf16.mxu0 0
    %6416 = vmatpush1.bf16.msra.mxu0 %v4517
    %6417 = vmatprep.subr.bf16.mxu0 0
    %6418 = vmatpush1.bf16.msra.mxu0 %v4518
    %6419 = vmatprep.subr.bf16.mxu0 0
    %6420 = vmatpush1.bf16.msra.mxu0 %v4519
    %6421 = vmatprep.subr.bf16.mxu0 0
    %6422 = vmatpush1.bf16.msra.mxu0 %v4520
    %6423 = vmatprep.subr.bf16.mxu0 0
    %6424 = vmatpush1.bf16.msra.mxu0 %v4521
    %6425 = vmatprep.subr.bf16.mxu0 0
    %6426 = vmatpush1.bf16.msra.mxu0 %v4522
    %6427 = vmatprep.subr.bf16.mxu0 0
    %6428 = vmatpush1.bf16.msra.mxu0 %v4523
    %6429 = vmatprep.subr.bf16.mxu0 0
    %6430 = vmatpush1.bf16.msra.mxu0 %v4524
    %6431 = vmatprep.subr.bf16.mxu0 0
    %6432 = vmatpush1.bf16.msra.mxu0 %v4525
    %6433 = vmatprep.subr.bf16.mxu0 0
    %6434 = vmatpush1.bf16.msra.mxu0 %v4526
    %6435 = vmatprep.subr.bf16.mxu0 0
    %6436 = vmatpush1.bf16.msra.mxu0 %v4527
    %6437 = vmatprep.subr.bf16.mxu0 0
    %6438 = vmatpush1.bf16.msra.mxu0 %v4528
    %6439 = vmatprep.subr.bf16.mxu0 0
    %6440 = vmatpush1.bf16.msra.mxu0 %v4529
    %6441 = vmatprep.subr.bf16.mxu0 0
    %6442 = vmatpush1.bf16.msra.mxu0 %v4530
    %6443 = vmatprep.mubr.bf16.mxu0 %v1593
    %6444 = vmatmul.mubr.bf16.gmra.mrb[0].mxu0 %v1591
    %v6445 = vpop.f32.mrb[0].mxu0
    %v6446 = vadd.f32 %v6406, %v6445
    %v6447 = vpop.f32.mrb[0].mxu0
    %v6448 = vpop.f32.mrb[0].mxu0
    %v6449 = vpop.f32.mrb[0].mxu0
    %6450 = vdwg.mxu0
    %6451 = vmatprep.subr.bf16.mxu0 0
    %6452 = vmatpush1.bf16.msra.mxu0 %v4531
    %6453 = vmatprep.subr.bf16.mxu0 0
    %6454 = vmatpush1.bf16.msra.mxu0 %v4532
    %6455 = vmatprep.subr.bf16.mxu0 0
    %6456 = vmatpush1.bf16.msra.mxu0 %v4533
    %6457 = vmatprep.subr.bf16.mxu0 0
    %6458 = vmatpush1.bf16.msra.mxu0 %v4534
    %6459 = vmatprep.subr.bf16.mxu0 0
    %6460 = vmatpush1.bf16.msra.mxu0 %v4535
    %6461 = vmatprep.subr.bf16.mxu0 0
    %6462 = vmatpush1.bf16.msra.mxu0 %v4536
    %6463 = vmatprep.subr.bf16.mxu0 0
    %6464 = vmatpush1.bf16.msra.mxu0 %v4537
    %6465 = vmatprep.subr.bf16.mxu0 0
    %6466 = vmatpush1.bf16.msra.mxu0 %v4538
    %6467 = vmatprep.subr.bf16.mxu0 0
    %6468 = vmatpush1.bf16.msra.mxu0 %v4539
    %6469 = vmatprep.subr.bf16.mxu0 0
    %6470 = vmatpush1.bf16.msra.mxu0 %v4540
    %6471 = vmatprep.subr.bf16.mxu0 0
    %6472 = vmatpush1.bf16.msra.mxu0 %v4541
    %6473 = vmatprep.subr.bf16.mxu0 0
    %6474 = vmatpush1.bf16.msra.mxu0 %v4542
    %6475 = vmatprep.subr.bf16.mxu0 0
    %6476 = vmatpush1.bf16.msra.mxu0 %v4543
    %6477 = vmatprep.subr.bf16.mxu0 0
    %6478 = vmatpush1.bf16.msra.mxu0 %v4544
    %6479 = vmatprep.subr.bf16.mxu0 0
    %6480 = vmatpush1.bf16.msra.mxu0 %v4545
    %6481 = vmatprep.subr.bf16.mxu0 0
    %6482 = vmatpush1.bf16.msra.mxu0 %v4546
    %6483 = vmatprep.mubr.bf16.mxu0 %v1631
    %6484 = vmatmul.mubr.bf16.gmra.mrb[0].mxu0 %v1617
    %v6485 = vpop.f32.mrb[0].mxu0
    %v6486 = vadd.f32 %v6446, %v6485
    %v6487 = vpop.f32.mrb[0].mxu0
    %v6488 = vpop.f32.mrb[0].mxu0
    %v6489 = vpop.f32.mrb[0].mxu0
    %6490 = vdwg.mxu0
    %6491 = vmatprep.subr.bf16.mxu0 0
    %6492 = vmatpush1.bf16.msra.mxu0 %v4547
    %6493 = vmatprep.subr.bf16.mxu0 0
    %6494 = vmatpush1.bf16.msra.mxu0 %v4548
    %6495 = vmatprep.subr.bf16.mxu0 0
    %6496 = vmatpush1.bf16.msra.mxu0 %v4549
    %6497 = vmatprep.subr.bf16.mxu0 0
    %6498 = vmatpush1.bf16.msra.mxu0 %v4550
    %6499 = vmatprep.subr.bf16.mxu0 0
    %6500 = vmatpush1.bf16.msra.mxu0 %v4551
    %6501 = vmatprep.subr.bf16.mxu0 0
    %6502 = vmatpush1.bf16.msra.mxu0 %v4552
    %6503 = vmatprep.subr.bf16.mxu0 0
    %6504 = vmatpush1.bf16.msra.mxu0 %v4553
    %6505 = vmatprep.subr.bf16.mxu0 0
    %6506 = vmatpush1.bf16.msra.mxu0 %v4554
    %6507 = vmatprep.subr.bf16.mxu0 0
    %6508 = vmatpush1.bf16.msra.mxu0 %v4555
    %6509 = vmatprep.subr.bf16.mxu0 0
    %6510 = vmatpush1.bf16.msra.mxu0 %v4556
    %6511 = vmatprep.subr.bf16.mxu0 0
    %6512 = vmatpush1.bf16.msra.mxu0 %v4557
    %6513 = vmatprep.subr.bf16.mxu0 0
    %6514 = vmatpush1.bf16.msra.mxu0 %v4558
    %6515 = vmatprep.subr.bf16.mxu0 0
    %6516 = vmatpush1.bf16.msra.mxu0 %v4559
    %6517 = vmatprep.subr.bf16.mxu0 0
    %6518 = vmatpush1.bf16.msra.mxu0 %v4560
    %6519 = vmatprep.subr.bf16.mxu0 0
    %6520 = vmatpush1.bf16.msra.mxu0 %v4561
    %6521 = vmatprep.subr.bf16.mxu0 0
    %6522 = vmatpush1.bf16.msra.mxu0 %v4562
    %6523 = vmatprep.mubr.bf16.mxu0 %v1641
    %6524 = vmatmul.mubr.bf16.gmra.mrb[0].mxu0 %v1639
    %v6525 = vpop.f32.mrb[0].mxu0
    %v6526 = vadd.f32 %v6486, %v6525
    %v6527 = vpop.f32.mrb[0].mxu0
    %v6528 = vpop.f32.mrb[0].mxu0
    %v6529 = vpop.f32.mrb[0].mxu0
    %6530 = vdwg.mxu0
    %6531 = vmatprep.subr.bf16.mxu0 0
    %6532 = vmatpush1.bf16.msra.mxu0 %v4563
    %6533 = vmatprep.subr.bf16.mxu0 0
    %6534 = vmatpush1.bf16.msra.mxu0 %v4564
    %6535 = vmatprep.subr.bf16.mxu0 0
    %6536 = vmatpush1.bf16.msra.mxu0 %v4565
    %6537 = vmatprep.subr.bf16.mxu0 0
    %6538 = vmatpush1.bf16.msra.mxu0 %v4566
    %6539 = vmatprep.subr.bf16.mxu0 0
    %6540 = vmatpush1.bf16.msra.mxu0 %v4567
    %6541 = vmatprep.subr.bf16.mxu0 0
    %6542 = vmatpush1.bf16.msra.mxu0 %v4568
    %6543 = vmatprep.subr.bf16.mxu0 0
    %6544 = vmatpush1.bf16.msra.mxu0 %v4569
    %6545 = vmatprep.subr.bf16.mxu0 0
    %6546 = vmatpush1.bf16.msra.mxu0 %v4570
    %6547 = vmatprep.subr.bf16.mxu0 0
    %6548 = vmatpush1.bf16.msra.mxu0 %v4571
    %6549 = vmatprep.subr.bf16.mxu0 0
    %6550 = vmatpush1.bf16.msra.mxu0 %v4572
    %6551 = vmatprep.subr.bf16.mxu0 0
    %6552 = vmatpush1.bf16.msra.mxu0 %v4573
    %6553 = vmatprep.subr.bf16.mxu0 0
    %6554 = vmatpush1.bf16.msra.mxu0 %v4574
    %6555 = vmatprep.subr.bf16.mxu0 0
    %6556 = vmatpush1.bf16.msra.mxu0 %v4575
    %6557 = vmatprep.subr.bf16.mxu0 0
    %6558 = vmatpush1.bf16.msra.mxu0 %v4576
    %6559 = vmatprep.subr.bf16.mxu0 0
    %6560 = vmatpush1.bf16.msra.mxu0 %v4577
    %6561 = vmatprep.subr.bf16.mxu0 0
    %6562 = vmatpush1.bf16.msra.mxu0 %v4578
    %6563 = vmatprep.mubr.bf16.mxu0 %v1638
    %6564 = vmatmul.mubr.bf16.gmra.mrb[0].mxu0 %v1624
    %v6565 = vpop.f32.mrb[0].mxu0
    %v6566 = vadd.f32 %v6526, %v6565
    %v6567 = vpop.f32.mrb[0].mxu0
    %v6568 = vpop.f32.mrb[0].mxu0
    %v6569 = vpop.f32.mrb[0].mxu0
    %6570 = vdwg.mxu0
    %6571 = vmatprep.subr.bf16.mxu0 0
    %6572 = vmatpush1.bf16.msra.mxu0 %v4579
    %6573 = vmatprep.subr.bf16.mxu0 0
    %6574 = vmatpush1.bf16.msra.mxu0 %v4580
    %6575 = vmatprep.subr.bf16.mxu0 0
    %6576 = vmatpush1.bf16.msra.mxu0 %v4581
    %6577 = vmatprep.subr.bf16.mxu0 0
    %6578 = vmatpush1.bf16.msra.mxu0 %v4582
    %6579 = vmatprep.subr.bf16.mxu0 0
    %6580 = vmatpush1.bf16.msra.mxu0 %v4583
    %6581 = vmatprep.subr.bf16.mxu0 0
    %6582 = vmatpush1.bf16.msra.mxu0 %v4584
    %6583 = vmatprep.subr.bf16.mxu0 0
    %6584 = vmatpush1.bf16.msra.mxu0 %v4585
    %6585 = vmatprep.subr.bf16.mxu0 0
    %6586 = vmatpush1.bf16.msra.mxu0 %v4586
    %6587 = vmatprep.subr.bf16.mxu0 0
    %6588 = vmatpush1.bf16.msra.mxu0 %v4587
    %6589 = vmatprep.subr.bf16.mxu0 0
    %6590 = vmatpush1.bf16.msra.mxu0 %v4588
    %6591 = vmatprep.subr.bf16.mxu0 0
    %6592 = vmatpush1.bf16.msra.mxu0 %v4589
    %6593 = vmatprep.subr.bf16.mxu0 0
    %6594 = vmatpush1.bf16.msra.mxu0 %v4590
    %6595 = vmatprep.subr.bf16.mxu0 0
    %6596 = vmatpush1.bf16.msra.mxu0 %v4591
    %6597 = vmatprep.subr.bf16.mxu0 0
    %6598 = vmatpush1.bf16.msra.mxu0 %v4592
    %6599 = vmatprep.subr.bf16.mxu0 0
    %6600 = vmatpush1.bf16.msra.mxu0 %v4593
    %6601 = vmatprep.subr.bf16.mxu0 0
    %6602 = vmatpush1.bf16.msra.mxu0 %v4594
    %6603 = vmatprep.mubr.bf16.mxu0 %v1642
    %6604 = vmatmul.mubr.bf16.gmra.mrb[0].mxu0 %v1640
    %v6605 = vpop.f32.mrb[0].mxu0
    %v6606 = vadd.f32 %v6566, %v6605
    %v6607 = vpop.f32.mrb[0].mxu0
    %v6608 = vpop.f32.mrb[0].mxu0
    %v6609 = vpop.f32.mrb[0].mxu0
    %6610 = vdwg.mxu0
    %v6611 = vtanh.pop %v6606
    %6612 = vst [vmem:[#allocation4] sm:$0x3] %v6611
    %v6613 = vpack.c.bf16 %v6611, %v6611
    %v6614 = vld [vmem:[%s3] sm:$0xf]
    %v6615 = vld [vmem:[%s3 + $0x4] sm:$0xf]
    %v6616 = vld [vmem:[%s3 + $0x8] sm:$0xf]
    %v6617 = vld [vmem:[%s3 + $0xc] sm:$0xf]
    %v6618 = vld [vmem:[%s3 + $0x10] sm:$0xf]
    %v6619 = vld [vmem:[%s3 + $0x14] sm:$0xf]
    %v6620 = vld [vmem:[%s3 + $0x18] sm:$0xf]
    %v6621 = vld [vmem:[%s3 + $0x1c] sm:$0xf]
    %v6622 = vld [vmem:[%s3 + $0x20] sm:$0xf]
    %v6623 = vld [vmem:[%s3 + $0x24] sm:$0xf]
    %v6624 = vld [vmem:[%s3 + $0x28] sm:$0xf]
    %v6625 = vld [vmem:[%s3 + $0x2c] sm:$0xf]
    %v6626 = vld [vmem:[%s3 + $0x30] sm:$0xf]
    %v6627 = vld [vmem:[%s3 + $0x34] sm:$0xf]
    %v6628 = vld [vmem:[%s3 + $0x38] sm:$0xf]
    %v6629 = vld [vmem:[%s3 + $0x3c] sm:$0xf]
    %v6630 = vld [vmem:[%s4] sm:$0x1]
    %v6632 = vlaneseq
    %v6633 = vshrl.u32 %v6632, 7
    %v6634 = vsub.s32 0, %v6633
    %v6635 = vrot.slane %v6630, %v6634
    %v6653 = vunpack.c.l.b16 %v6614
    %v6654 = vunpack.c.l.b16 %v6615
    %v6655 = vunpack.c.l.b16 %v6616
    %v6656 = vunpack.c.l.b16 %v6617
    %v6657 = vunpack.c.l.b16 %v6618
    %v6658 = vunpack.c.l.b16 %v6619
    %v6659 = vunpack.c.l.b16 %v6620
    %v6660 = vunpack.c.l.b16 %v6621
    %v6661 = vunpack.c.l.b16 %v6622
    %v6662 = vunpack.c.l.b16 %v6623
    %v6663 = vunpack.c.l.b16 %v6624
    %v6664 = vunpack.c.l.b16 %v6625
    %v6665 = vunpack.c.l.b16 %v6626
    %v6666 = vunpack.c.l.b16 %v6627
    %v6667 = vunpack.c.l.b16 %v6628
    %v6668 = vunpack.c.l.b16 %v6629
    %v6669 = vpack.c.b16 %v6654, %v6653
    %v6670 = vpack.c.b16 %v6656, %v6655
    %v6671 = vpack.c.b16 %v6658, %v6657
    %v6672 = vpack.c.b16 %v6660, %v6659
    %v6673 = vpack.c.b16 %v6662, %v6661
    %v6674 = vpack.c.b16 %v6664, %v6663
    %v6675 = vpack.c.b16 %v6666, %v6665
    %v6676 = vpack.c.b16 %v6668, %v6667
    %6685 = vmatprep.subr.bf16.mxu0 0
    %6686 = vmatpush1.bf16.msra.mxu0 %v6669
    %6687 = vmatprep.subr.bf16.mxu0 0
    %6688 = vmatpush1.bf16.msra.mxu0 %v6670
    %6689 = vmatprep.subr.bf16.mxu0 0
    %6690 = vmatpush1.bf16.msra.mxu0 %v6671
    %6691 = vmatprep.subr.bf16.mxu0 0
    %6692 = vmatpush1.bf16.msra.mxu0 %v6672
    %6693 = vmatprep.subr.bf16.mxu0 0
    %6694 = vmatpush1.bf16.msra.mxu0 %v6673
    %6695 = vmatprep.subr.bf16.mxu0 0
    %6696 = vmatpush1.bf16.msra.mxu0 %v6674
    %6697 = vmatprep.subr.bf16.mxu0 0
    %6698 = vmatpush1.bf16.msra.mxu0 %v6675
    %6699 = vmatprep.subr.bf16.mxu0 0
    %6700 = vmatpush1.bf16.msra.mxu0 %v6676
    %6701 = vmatprep.subr.bf16.mxu0 0
    %6702 = vmatpush1.bf16.msra.mxu0 0
    %6703 = vmatprep.subr.bf16.mxu0 0
    %6704 = vmatpush1.bf16.msra.mxu0 0
    %6705 = vmatprep.subr.bf16.mxu0 0
    %6706 = vmatpush1.bf16.msra.mxu0 0
    %6707 = vmatprep.subr.bf16.mxu0 0
    %6708 = vmatpush1.bf16.msra.mxu0 0
    %6709 = vmatprep.subr.bf16.mxu0 0
    %6710 = vmatpush1.bf16.msra.mxu0 0
    %6711 = vmatprep.subr.bf16.mxu0 0
    %6712 = vmatpush1.bf16.msra.mxu0 0
    %6713 = vmatprep.subr.bf16.mxu0 0
    %6714 = vmatpush1.bf16.msra.mxu0 0
    %6715 = vmatprep.subr.bf16.mxu0 0
    %6716 = vmatpush1.bf16.msra.mxu0 0
    %6717 = vmatprep.mubr.bf16.mxu0 0
    %6718 = vmatmul.mubr.bf16.gmra.mrb[0].mxu0 %v6613
    %v6719 = vpop.f32.mrb[0].mxu0
    %v6720 = vadd.f32 %v6635, %v6719
    %v6721 = vpop.f32.mrb[0].mxu0
    %v6722 = vpop.f32.mrb[0].mxu0
    %v6723 = vpop.f32.mrb[0].mxu0
    %6724 = vdwg.mxu0
    %vm6725 = vcmask 74752
    %v6726 = vsel %vm6725, %v6720, -inf
    %6727 = vmax.xlane.f32.xlu0 %v6726
    %v6728 = vpop.xlane.xlu0 %6727
    %v6729 = vsub.f32 %v6720, %v6728
    %v6730 = vmul.f32 %v6729, 1.442695
    %v6731 = vpow.pop %v6730
    %v6732 = vsel %vm6725, %v6731, 0.0
    %6733 = vadd.xlane.f32.xlu0 %v6732
    %v6734 = vpop.xlane.xlu0 %6733
    %v6735 = vrcp.pop %v6734
    %v6736 = vmul.f32 %v6731, %v6735
    %6737 = vst.msk [vmem:[#allocation2] sm:$0x3] %vm6725, %v6736
    // Predicated region
    $region22: #{generator_forward.3} parent=1 // pred_check
      _
    $region23: #{generator_forward.3} parent=1 // pred_check_branch
      %6739 = sbr.rel (0) target = $region25
    $region24: #{generator_forward.3} parent=1 // pred_region
      %s6741 = ssub.s32 32, 32
      %6742 = vsyncadd [#allocation3], %s6741
      %s6744 = sshll.u32 [#allocation2], 4
      %s6745 = int_to_ptr.vmem [resolvable:$true] %s6744
      %6747 = dma.vmem_to_hbm [thread:$0]  %s6745, 32, %s5, [#allocation3]
    $region25: #{generator_forward.3} parent=1 // pred_fallthru
      _
    // Predicated region
    $region26: #{generator_forward.3} parent=1 // pred_check
      _
    $region27: #{generator_forward.3} parent=1 // pred_check_branch
      %6749 = sbr.rel (0) target = $region29
    $region28: #{generator_forward.3} parent=1 // pred_region
      %s6751 = ssub.s32 32, 32
      %6752 = vsyncadd [#allocation5], %s6751
      %s6754 = sshll.u32 [#allocation4], 4
      %s6755 = int_to_ptr.vmem [resolvable:$true] %s6754
      %6757 = dma.vmem_to_hbm [thread:$0]  %s6755, 32, %s6, [#allocation5]
    $region29: #{generator_forward.3} parent=1 // pred_fallthru
      _
    // Predicated region
    $region30: #{generator_forward.3} parent=1 // pred_check
      _
    $region31: #{generator_forward.3} parent=1 // pred_check_branch
      %6759 = sbr.rel (0) target = $region33
    $region32: #{generator_forward.3} parent=1 // pred_region
      %6760 = dma.done [#allocation3], 32
    $region33: #{generator_forward.3} parent=1 // pred_fallthru
      _
    // Predicated region
    $region34: #{generator_forward.3} parent=1 // pred_check
      _
    $region35: #{generator_forward.3} parent=1 // pred_check_branch
      %6762 = sbr.rel (0) target = $region37
    $region36: #{generator_forward.3} parent=1 // pred_region
      %6763 = dma.done [#allocation5], 32
    $region37: #{generator_forward.3} parent=1 // pred_fallthru
      _
    %6764 = vsyncpa [#allocation3], 1
    %6765 = vsyncpa [#allocation5], 1

</llo_original>
